<compile_context>
chip_gen: v5e
topology: v5e:2x2
jax: 0.10.0
libtpu: 0.0.40
codegen_flags: <defaults>
</compile_context>

<pallas_src>
from functools import partial

import jax
import jax.numpy as jnp
from jax.experimental import pallas as pl
from jax.experimental.pallas import tpu as pltpu


# ----------------------------------------------------------------------------
# Fused Pallas kernel: conv+BN+ReLU6 -> conv+BN+ReLU6 -> conv+BN -> softmax
# ----------------------------------------------------------------------------

def _fov_kernel(x_ref, w1_ref, s1_ref, b1_ref,
                w2_ref, s2_ref, b2_ref,
                w3_ref, s3_ref, b3_ref,
                o_ref,
                xp_scr, l1_scr, l2_scr,
                *, H, W, log_softmax):
    """One batch image per grid step; all intermediates stay in VMEM."""

    def conv3x3(src_ref, w_ref):
        # src_ref: (H+2, W+2, Csrc) zero-padded VMEM scratch (f32)
        # w_ref  : (9, Csrc, Cdst) bf16 weights
        w_all = w_ref[...]                       # load once, outside the taps
        cdst = w_all.shape[-1]
        acc = jnp.zeros((H * W, cdst), jnp.float32)
        for k in range(9):                       # unrolled 9-tap MAC on the MXU
            kh, kw = divmod(k, 3)
            patch = src_ref[kh:kh + H, kw:kw + W, :]
            patch2d = patch.reshape(H * W, patch.shape[-1]).astype(jnp.bfloat16)
            acc = acc + jnp.dot(patch2d, w_all[k],
                                preferred_element_type=jnp.float32)
        return acc                               # (H*W, Cdst) f32

    C1 = w1_ref.shape[-1]
    Cout = w3_ref.shape[-1]

    # ---- pad input into VMEM (zero border == conv padding=1) ----------------
    xp_scr[...] = jnp.zeros(xp_scr.shape, xp_scr.dtype)
    xp_scr[1:H + 1, 1:W + 1, :] = x_ref[...][0]

    # ---- layer1 = ReLU6(BN1(conv1(x))) ---------------------------------------
    y1 = conv3x3(xp_scr, w1_ref) * s1_ref[...] + b1_ref[...]
    l1_scr[...] = jnp.zeros(l1_scr.shape, l1_scr.dtype)
    l1_scr[1:H + 1, 1:W + 1, :] = jnp.clip(y1, 0.0, 6.0).reshape(H, W, C1)

    # ---- layer2 = ReLU6(BN2(conv2(layer1))) ----------------------------------
    y2 = conv3x3(l1_scr, w2_ref) * s2_ref[...] + b2_ref[...]
    l2_scr[...] = jnp.zeros(l2_scr.shape, l2_scr.dtype)
    l2_scr[1:H + 1, 1:W + 1, :] = jnp.clip(y2, 0.0, 6.0).reshape(H, W, C1)

    # ---- layer3 = BN3(conv3(layer2)); softmax over the channel axis ----------
    y3 = conv3x3(l2_scr, w3_ref) * s3_ref[...] + b3_ref[...]
    m = jnp.max(y3, axis=-1, keepdims=True)
    e = jnp.exp(y3 - m)
    denom = jnp.sum(e, axis=-1, keepdims=True)
    if log_softmax:                              # gumbel_softmax cfg path
        out = (y3 - m) - jnp.log(denom)
    else:
        out = e / denom
    o_ref[...] = out.reshape(1, H, W, Cout)


# ----------------------------------------------------------------------------
# Public wrapper (NCHW in / NCHW out, like the PyTorch module)
# ----------------------------------------------------------------------------

def foveation_forward(params, x_nchw, log_softmax=False):
    x = jnp.transpose(x_nchw, (0, 2, 3, 1)).astype(jnp.float32)   # NCHW -> NHWC
    N, H, W, Cin = x.shape
    C1 = params['w1'].shape[-1]
    Cout = params['w3'].shape[-1]

    def full(shape):
        return pl.BlockSpec(shape, lambda n: (0,) * len(shape))

    out = pl.pallas_call(
        partial(_fov_kernel, H=H, W=W, log_softmax=log_softmax),
        out_shape=jax.ShapeDtypeStruct((N, H, W, Cout), jnp.float32),
        grid=(N,),
        in_specs=[
            pl.BlockSpec((1, H, W, Cin), lambda n: (n, 0, 0, 0)),
            full((9, Cin, C1)), full((1, C1)), full((1, C1)),
            full((9, C1, C1)), full((1, C1)), full((1, C1)),
            full((9, C1, Cout)), full((1, Cout)), full((1, Cout)),
        ],
        out_specs=pl.BlockSpec((1, H, W, Cout), lambda n: (n, 0, 0, 0)),
        scratch_shapes=[
            pltpu.VMEM((H + 2, W + 2, Cin), jnp.float32),   # padded input
            pltpu.VMEM((H + 2, W + 2, C1), jnp.float32),    # padded layer1
            pltpu.VMEM((H + 2, W + 2, C1), jnp.float32),    # padded layer2
        ],
        compiler_params=pltpu.CompilerParams(
            dimension_semantics=("parallel",)),
    )(x, params['w1'], params['s1'], params['b1'],
      params['w2'], params['s2'], params['b2'],
      params['w3'], params['s3'], params['b3'])
    return jnp.transpose(out, (0, 3, 1, 2))                       # NHWC -> NCHW


# ----------------------------------------------------------------------------
# Parameters (random, deterministic) — BN folded into scale/bias (eval mode)
# ----------------------------------------------------------------------------

def _bn_fold(key, c):
    k1, k2, k3, k4 = jax.random.split(key, 4)
    gamma = 1.0 + 0.1 * jax.random.normal(k1, (c,), jnp.float32)
    beta = 0.1 * jax.random.normal(k2, (c,), jnp.float32)
    mean = 0.1 * jax.random.normal(k3, (c,), jnp.float32)
    var = 1.0 + 0.1 * jax.random.uniform(k4, (c,), jnp.float32)
    scale = gamma / jnp.sqrt(var + 1e-5)
    bias = beta - mean * scale
    return scale.reshape(1, c), bias.reshape(1, c)


def build_params(key, in_channels, out_channels):
    C1 = 8 * out_channels
    keys = jax.random.split(key, 6)

    def conv_w(k, cin, cout):   # (9, Cin, Cout) = (kh*3+kw, in, out), bf16 in HBM
        w = jax.random.normal(k, (9, cin, cout), jnp.float32) / jnp.sqrt(9.0 * cin)
        return w.astype(jnp.bfloat16)

    params = {}
    params['w1'] = conv_w(keys[0], in_channels, C1)
    params['s1'], params['b1'] = _bn_fold(keys[1], C1)
    params['w2'] = conv_w(keys[2], C1, C1)
    params['s2'], params['b2'] = _bn_fold(keys[3], C1)
    params['w3'] = conv_w(keys[4], C1, out_channels)
    params['s3'], params['b3'] = _bn_fold(keys[5], out_channels)
    return params


# ----------------------------------------------------------------------------
# Pure-JAX reference (same bf16 weights / bf16 MXU inputs, f32 accumulation)
# ----------------------------------------------------------------------------

def reference_forward(params, x_nchw, log_softmax=False):
    x = jnp.transpose(x_nchw, (0, 2, 3, 1)).astype(jnp.float32)

    def conv(h, w9):
        k = w9.reshape(3, 3, w9.shape[1], w9.shape[2])            # HWIO, bf16
        return jax.lax.conv_general_dilated(
            h.astype(jnp.bfloat16), k, window_strides=(1, 1),
            padding=((1, 1), (1, 1)),
            dimension_numbers=('NHWC', 'HWIO', 'NHWC'),
            preferred_element_type=jnp.float32)

    y = jnp.clip(conv(x, params['w1']) * params['s1'] + params['b1'], 0.0, 6.0)
    y = jnp.clip(conv(y, params['w2']) * params['s2'] + params['b2'], 0.0, 6.0)
    y = conv(y, params['w3']) * params['s3'] + params['b3']
    y = jax.nn.log_softmax(y, axis=-1) if log_softmax else jax.nn.softmax(y, axis=-1)
    return jnp.transpose(y, (0, 3, 1, 2))


if __name__ == "__main__":
    key = jax.random.PRNGKey(0)
    pkey, xkey = jax.random.split(key)
    in_channels, out_channels = 4, 4          # hidden width = 8*out_channels = 32
    params = build_params(pkey, in_channels, out_channels)
    x = jax.random.normal(xkey, (2, in_channels, 16, 16), jnp.float32)

    fwd = jax.jit(foveation_forward)
    out = jax.block_until_ready(fwd(params, x))

    assert out.shape == (2, out_channels, 16, 16), out.shape
    assert bool(jnp.all(jnp.isfinite(out)))
    # softmax over the channel dim sums to 1
    assert bool(jnp.allclose(jnp.sum(out, axis=1), 1.0, atol=1e-3))
    # compare against the pure-JAX reference
    ref = jax.block_until_ready(jax.jit(reference_forward)(params, x))
    assert bool(jnp.allclose(out, ref, atol=5e-3, rtol=5e-3)), \
        float(jnp.max(jnp.abs(out - ref)))
    print("KERNEL_OK")
</pallas_src>

<mosaic_0001>
module attributes {stable_mosaic.version = 11 : i64} {
  func.func @_fov_kernel(%arg0: i32, %arg1: memref<1x16x16x4xf32, #tpu.memory_space<vmem>>, %arg2: memref<9x4x32xbf16, #tpu.memory_space<vmem>>, %arg3: memref<1x32xf32, #tpu.memory_space<vmem>>, %arg4: memref<1x32xf32, #tpu.memory_space<vmem>>, %arg5: memref<9x32x32xbf16, #tpu.memory_space<vmem>>, %arg6: memref<1x32xf32, #tpu.memory_space<vmem>>, %arg7: memref<1x32xf32, #tpu.memory_space<vmem>>, %arg8: memref<9x32x4xbf16, #tpu.memory_space<vmem>>, %arg9: memref<1x4xf32, #tpu.memory_space<vmem>>, %arg10: memref<1x4xf32, #tpu.memory_space<vmem>>, %arg11: memref<1x16x16x4xf32, #tpu.memory_space<vmem>>, %arg12: memref<18x18x4xf32, #tpu.memory_space<vmem>>, %arg13: memref<18x18x32xf32, #tpu.memory_space<vmem>>, %arg14: memref<18x18x32xf32, #tpu.memory_space<vmem>>) attributes {dimension_semantics = [#tpu.dimension_semantics<parallel>], iteration_bounds = array<i64: 2>, scalar_prefetch = 0 : i64, scratch_operands = 3 : i64, tpu.core_type = #tpu.core_type<tc>, window_params = [{transform_indices = @transform_0, window_bounds = array<i64: 1, 16, 16, 4>}, {pipeline_mode = #tpu.pipeline_mode<synchronous>, transform_indices = @transform_1, window_bounds = array<i64: 9, 4, 32>}, {pipeline_mode = #tpu.pipeline_mode<synchronous>, transform_indices = @transform_2, window_bounds = array<i64: 1, 32>}, {pipeline_mode = #tpu.pipeline_mode<synchronous>, transform_indices = @transform_3, window_bounds = array<i64: 1, 32>}, {pipeline_mode = #tpu.pipeline_mode<synchronous>, transform_indices = @transform_4, window_bounds = array<i64: 9, 32, 32>}, {pipeline_mode = #tpu.pipeline_mode<synchronous>, transform_indices = @transform_5, window_bounds = array<i64: 1, 32>}, {pipeline_mode = #tpu.pipeline_mode<synchronous>, transform_indices = @transform_6, window_bounds = array<i64: 1, 32>}, {pipeline_mode = #tpu.pipeline_mode<synchronous>, transform_indices = @transform_7, window_bounds = array<i64: 9, 32, 4>}, {pipeline_mode = #tpu.pipeline_mode<synchronous>, transform_indices = @transform_8, window_bounds = array<i64: 1, 4>}, {pipeline_mode = #tpu.pipeline_mode<synchronous>, transform_indices = @transform_9, window_bounds = array<i64: 1, 4>}, {transform_indices = @transform_10, window_bounds = array<i64: 1, 16, 16, 4>}]} {
    %cst = arith.constant 0.000000e+00 : f32
    %0 = vector.broadcast %cst : f32 to vector<18x18x4xf32>
    %c0 = arith.constant 0 : index
    %c0_0 = arith.constant 0 : index
    %c0_1 = arith.constant 0 : index
    %1 = vector.load %arg12[%c0, %c0_0, %c0_1] : memref<18x18x4xf32, #tpu.memory_space<vmem>>, vector<18x18x4xf32>
    tpu.vector_store %arg12[%c0, %c0_0, %c0_1], %0 {strides = array<i32>} : memref<18x18x4xf32, #tpu.memory_space<vmem>>, vector<18x18x4xf32>,
    %c0_2 = arith.constant 0 : index
    %c0_3 = arith.constant 0 : index
    %c0_4 = arith.constant 0 : index
    %c0_5 = arith.constant 0 : index
    %2 = vector.load %arg1[%c0_2, %c0_3, %c0_4, %c0_5] : memref<1x16x16x4xf32, #tpu.memory_space<vmem>>, vector<1x16x16x4xf32>
    %3 = vector.shape_cast %2 : vector<1x16x16x4xf32> to vector<16x16x4xf32>
    %c1 = arith.constant 1 : index
    %c1_6 = arith.constant 1 : index
    %c0_7 = arith.constant 0 : index
    %4 = vector.load %arg12[%c1, %c1_6, %c0_7] : memref<18x18x4xf32, #tpu.memory_space<vmem>>, vector<16x16x4xf32>
    tpu.vector_store %arg12[%c1, %c1_6, %c0_7], %3 {strides = array<i32>} : memref<18x18x4xf32, #tpu.memory_space<vmem>>, vector<16x16x4xf32>,
    %c0_8 = arith.constant 0 : index
    %c0_9 = arith.constant 0 : index
    %c0_10 = arith.constant 0 : index
    %5 = vector.load %arg2[%c0_8, %c0_9, %c0_10] : memref<9x4x32xbf16, #tpu.memory_space<vmem>>, vector<9x4x32xbf16>
    %cst_11 = arith.constant 0.000000e+00 : f32
    %6 = vector.broadcast %cst_11 : f32 to vector<256x32xf32>
    %c0_12 = arith.constant 0 : index
    %c0_13 = arith.constant 0 : index
    %c0_14 = arith.constant 0 : index
    %7 = vector.load %arg12[%c0_12, %c0_13, %c0_14] : memref<18x18x4xf32, #tpu.memory_space<vmem>>, vector<16x16x4xf32>
    %8 = vector.shape_cast %7 : vector<16x16x4xf32> to vector<256x4xf32>
    %9 = arith.truncf %8 : vector<256x4xf32> to vector<256x4xbf16>
    %10 = vector.extract_strided_slice %5 {offsets = [0, 0, 0], sizes = [1, 4, 32], strides = [1, 1, 1]} : vector<9x4x32xbf16> to vector<1x4x32xbf16>
    %11 = vector.shape_cast %10 : vector<1x4x32xbf16> to vector<4x32xbf16>
    %cst_15 = arith.constant dense<0.000000e+00> : vector<256x32xf32>
    %12 = tpu.matmul %9, %11, %cst_15 {dimension_numbers = #tpu.dot_dimension_numbers<[1], [0], [0], [1], [0, 0, 1, 1], [], []>} : vector<256x4xbf16>, vector<4x32xbf16>, vector<256x32xf32> -> vector<256x32xf32>
    %13 = arith.addf %6, %12 : vector<256x32xf32>
    %c0_16 = arith.constant 0 : index
    %c1_17 = arith.constant 1 : index
    %c0_18 = arith.constant 0 : index
    %14 = vector.load %arg12[%c0_16, %c1_17, %c0_18] : memref<18x18x4xf32, #tpu.memory_space<vmem>>, vector<16x16x4xf32>
    %15 = vector.shape_cast %14 : vector<16x16x4xf32> to vector<256x4xf32>
    %16 = arith.truncf %15 : vector<256x4xf32> to vector<256x4xbf16>
    %17 = vector.extract_strided_slice %5 {offsets = [1, 0, 0], sizes = [1, 4, 32], strides = [1, 1, 1]} : vector<9x4x32xbf16> to vector<1x4x32xbf16>
    %18 = vector.shape_cast %17 : vector<1x4x32xbf16> to vector<4x32xbf16>
    %cst_19 = arith.constant dense<0.000000e+00> : vector<256x32xf32>
    %19 = tpu.matmul %16, %18, %cst_19 {dimension_numbers = #tpu.dot_dimension_numbers<[1], [0], [0], [1], [0, 0, 1, 1], [], []>} : vector<256x4xbf16>, vector<4x32xbf16>, vector<256x32xf32> -> vector<256x32xf32>
    %20 = arith.addf %13, %19 : vector<256x32xf32>
    %c0_20 = arith.constant 0 : index
    %c2 = arith.constant 2 : index
    %c0_21 = arith.constant 0 : index
    %21 = vector.load %arg12[%c0_20, %c2, %c0_21] : memref<18x18x4xf32, #tpu.memory_space<vmem>>, vector<16x16x4xf32>
    %22 = vector.shape_cast %21 : vector<16x16x4xf32> to vector<256x4xf32>
    %23 = arith.truncf %22 : vector<256x4xf32> to vector<256x4xbf16>
    %24 = vector.extract_strided_slice %5 {offsets = [2, 0, 0], sizes = [1, 4, 32], strides = [1, 1, 1]} : vector<9x4x32xbf16> to vector<1x4x32xbf16>
    %25 = vector.shape_cast %24 : vector<1x4x32xbf16> to vector<4x32xbf16>
    %cst_22 = arith.constant dense<0.000000e+00> : vector<256x32xf32>
    %26 = tpu.matmul %23, %25, %cst_22 {dimension_numbers = #tpu.dot_dimension_numbers<[1], [0], [0], [1], [0, 0, 1, 1], [], []>} : vector<256x4xbf16>, vector<4x32xbf16>, vector<256x32xf32> -> vector<256x32xf32>
    %27 = arith.addf %20, %26 : vector<256x32xf32>
    %c1_23 = arith.constant 1 : index
    %c0_24 = arith.constant 0 : index
    %c0_25 = arith.constant 0 : index
    %28 = vector.load %arg12[%c1_23, %c0_24, %c0_25] : memref<18x18x4xf32, #tpu.memory_space<vmem>>, vector<16x16x4xf32>
    %29 = vector.shape_cast %28 : vector<16x16x4xf32> to vector<256x4xf32>
    %30 = arith.truncf %29 : vector<256x4xf32> to vector<256x4xbf16>
    %31 = vector.extract_strided_slice %5 {offsets = [3, 0, 0], sizes = [1, 4, 32], strides = [1, 1, 1]} : vector<9x4x32xbf16> to vector<1x4x32xbf16>
    %32 = vector.shape_cast %31 : vector<1x4x32xbf16> to vector<4x32xbf16>
    %cst_26 = arith.constant dense<0.000000e+00> : vector<256x32xf32>
    %33 = tpu.matmul %30, %32, %cst_26 {dimension_numbers = #tpu.dot_dimension_numbers<[1], [0], [0], [1], [0, 0, 1, 1], [], []>} : vector<256x4xbf16>, vector<4x32xbf16>, vector<256x32xf32> -> vector<256x32xf32>
    %34 = arith.addf %27, %33 : vector<256x32xf32>
    %c1_27 = arith.constant 1 : index
    %c1_28 = arith.constant 1 : index
    %c0_29 = arith.constant 0 : index
    %35 = vector.load %arg12[%c1_27, %c1_28, %c0_29] : memref<18x18x4xf32, #tpu.memory_space<vmem>>, vector<16x16x4xf32>
    %36 = vector.shape_cast %35 : vector<16x16x4xf32> to vector<256x4xf32>
    %37 = arith.truncf %36 : vector<256x4xf32> to vector<256x4xbf16>
    %38 = vector.extract_strided_slice %5 {offsets = [4, 0, 0], sizes = [1, 4, 32], strides = [1, 1, 1]} : vector<9x4x32xbf16> to vector<1x4x32xbf16>
    %39 = vector.shape_cast %38 : vector<1x4x32xbf16> to vector<4x32xbf16>
    %cst_30 = arith.constant dense<0.000000e+00> : vector<256x32xf32>
    %40 = tpu.matmul %37, %39, %cst_30 {dimension_numbers = #tpu.dot_dimension_numbers<[1], [0], [0], [1], [0, 0, 1, 1], [], []>} : vector<256x4xbf16>, vector<4x32xbf16>, vector<256x32xf32> -> vector<256x32xf32>
    %41 = arith.addf %34, %40 : vector<256x32xf32>
    %c1_31 = arith.constant 1 : index
    %c2_32 = arith.constant 2 : index
    %c0_33 = arith.constant 0 : index
    %42 = vector.load %arg12[%c1_31, %c2_32, %c0_33] : memref<18x18x4xf32, #tpu.memory_space<vmem>>, vector<16x16x4xf32>
    %43 = vector.shape_cast %42 : vector<16x16x4xf32> to vector<256x4xf32>
    %44 = arith.truncf %43 : vector<256x4xf32> to vector<256x4xbf16>
    %45 = vector.extract_strided_slice %5 {offsets = [5, 0, 0], sizes = [1, 4, 32], strides = [1, 1, 1]} : vector<9x4x32xbf16> to vector<1x4x32xbf16>
    %46 = vector.shape_cast %45 : vector<1x4x32xbf16> to vector<4x32xbf16>
    %cst_34 = arith.constant dense<0.000000e+00> : vector<256x32xf32>
    %47 = tpu.matmul %44, %46, %cst_34 {dimension_numbers = #tpu.dot_dimension_numbers<[1], [0], [0], [1], [0, 0, 1, 1], [], []>} : vector<256x4xbf16>, vector<4x32xbf16>, vector<256x32xf32> -> vector<256x32xf32>
    %48 = arith.addf %41, %47 : vector<256x32xf32>
    %c2_35 = arith.constant 2 : index
    %c0_36 = arith.constant 0 : index
    %c0_37 = arith.constant 0 : index
    %49 = vector.load %arg12[%c2_35, %c0_36, %c0_37] : memref<18x18x4xf32, #tpu.memory_space<vmem>>, vector<16x16x4xf32>
    %50 = vector.shape_cast %49 : vector<16x16x4xf32> to vector<256x4xf32>
    %51 = arith.truncf %50 : vector<256x4xf32> to vector<256x4xbf16>
    %52 = vector.extract_strided_slice %5 {offsets = [6, 0, 0], sizes = [1, 4, 32], strides = [1, 1, 1]} : vector<9x4x32xbf16> to vector<1x4x32xbf16>
    %53 = vector.shape_cast %52 : vector<1x4x32xbf16> to vector<4x32xbf16>
    %cst_38 = arith.constant dense<0.000000e+00> : vector<256x32xf32>
    %54 = tpu.matmul %51, %53, %cst_38 {dimension_numbers = #tpu.dot_dimension_numbers<[1], [0], [0], [1], [0, 0, 1, 1], [], []>} : vector<256x4xbf16>, vector<4x32xbf16>, vector<256x32xf32> -> vector<256x32xf32>
    %55 = arith.addf %48, %54 : vector<256x32xf32>
    %c2_39 = arith.constant 2 : index
    %c1_40 = arith.constant 1 : index
    %c0_41 = arith.constant 0 : index
    %56 = vector.load %arg12[%c2_39, %c1_40, %c0_41] : memref<18x18x4xf32, #tpu.memory_space<vmem>>, vector<16x16x4xf32>
    %57 = vector.shape_cast %56 : vector<16x16x4xf32> to vector<256x4xf32>
    %58 = arith.truncf %57 : vector<256x4xf32> to vector<256x4xbf16>
    %59 = vector.extract_strided_slice %5 {offsets = [7, 0, 0], sizes = [1, 4, 32], strides = [1, 1, 1]} : vector<9x4x32xbf16> to vector<1x4x32xbf16>
    %60 = vector.shape_cast %59 : vector<1x4x32xbf16> to vector<4x32xbf16>
    %cst_42 = arith.constant dense<0.000000e+00> : vector<256x32xf32>
    %61 = tpu.matmul %58, %60, %cst_42 {dimension_numbers = #tpu.dot_dimension_numbers<[1], [0], [0], [1], [0, 0, 1, 1], [], []>} : vector<256x4xbf16>, vector<4x32xbf16>, vector<256x32xf32> -> vector<256x32xf32>
    %62 = arith.addf %55, %61 : vector<256x32xf32>
    %c2_43 = arith.constant 2 : index
    %c2_44 = arith.constant 2 : index
    %c0_45 = arith.constant 0 : index
    %63 = vector.load %arg12[%c2_43, %c2_44, %c0_45] : memref<18x18x4xf32, #tpu.memory_space<vmem>>, vector<16x16x4xf32>
    %64 = vector.shape_cast %63 : vector<16x16x4xf32> to vector<256x4xf32>
    %65 = arith.truncf %64 : vector<256x4xf32> to vector<256x4xbf16>
    %66 = vector.extract_strided_slice %5 {offsets = [8, 0, 0], sizes = [1, 4, 32], strides = [1, 1, 1]} : vector<9x4x32xbf16> to vector<1x4x32xbf16>
    %67 = vector.shape_cast %66 : vector<1x4x32xbf16> to vector<4x32xbf16>
    %cst_46 = arith.constant dense<0.000000e+00> : vector<256x32xf32>
    %68 = tpu.matmul %65, %67, %cst_46 {dimension_numbers = #tpu.dot_dimension_numbers<[1], [0], [0], [1], [0, 0, 1, 1], [], []>} : vector<256x4xbf16>, vector<4x32xbf16>, vector<256x32xf32> -> vector<256x32xf32>
    %69 = arith.addf %62, %68 : vector<256x32xf32>
    %c0_47 = arith.constant 0 : index
    %c0_48 = arith.constant 0 : index
    %70 = vector.load %arg3[%c0_47, %c0_48] : memref<1x32xf32, #tpu.memory_space<vmem>>, vector<1x32xf32>
    %71 = vector.broadcast %70 : vector<1x32xf32> to vector<256x32xf32>
    %72 = arith.mulf %69, %71 : vector<256x32xf32>
    %c0_49 = arith.constant 0 : index
    %c0_50 = arith.constant 0 : index
    %73 = vector.load %arg4[%c0_49, %c0_50] : memref<1x32xf32, #tpu.memory_space<vmem>>, vector<1x32xf32>
    %74 = vector.broadcast %73 : vector<1x32xf32> to vector<256x32xf32>
    %75 = arith.addf %72, %74 : vector<256x32xf32>
    %cst_51 = arith.constant 0.000000e+00 : f32
    %76 = vector.broadcast %cst_51 : f32 to vector<18x18x32xf32>
    %c0_52 = arith.constant 0 : index
    %c0_53 = arith.constant 0 : index
    %c0_54 = arith.constant 0 : index
    %77 = vector.load %arg13[%c0_52, %c0_53, %c0_54] : memref<18x18x32xf32, #tpu.memory_space<vmem>>, vector<18x18x32xf32>
    tpu.vector_store %arg13[%c0_52, %c0_53, %c0_54], %76 {strides = array<i32>} : memref<18x18x32xf32, #tpu.memory_space<vmem>>, vector<18x18x32xf32>,
    %cst_55 = arith.constant 0.000000e+00 : f32
    %cst_56 = arith.constant 6.000000e+00 : f32
    %78 = vector.broadcast %cst_55 : f32 to vector<256x32xf32>
    %79 = arith.maximumf %78, %75 : vector<256x32xf32>
    %80 = vector.broadcast %cst_56 : f32 to vector<256x32xf32>
    %81 = arith.minimumf %80, %79 : vector<256x32xf32>
    %82 = vector.shape_cast %81 : vector<256x32xf32> to vector<16x16x32xf32>
    %c1_57 = arith.constant 1 : index
    %c1_58 = arith.constant 1 : index
    %c0_59 = arith.constant 0 : index
    %83 = vector.load %arg13[%c1_57, %c1_58, %c0_59] : memref<18x18x32xf32, #tpu.memory_space<vmem>>, vector<16x16x32xf32>
    tpu.vector_store %arg13[%c1_57, %c1_58, %c0_59], %82 {strides = array<i32>} : memref<18x18x32xf32, #tpu.memory_space<vmem>>, vector<16x16x32xf32>,
    %c0_60 = arith.constant 0 : index
    %c0_61 = arith.constant 0 : index
    %c0_62 = arith.constant 0 : index
    %84 = vector.load %arg5[%c0_60, %c0_61, %c0_62] : memref<9x32x32xbf16, #tpu.memory_space<vmem>>, vector<9x32x32xbf16>
    %cst_63 = arith.constant 0.000000e+00 : f32
    %85 = vector.broadcast %cst_63 : f32 to vector<256x32xf32>
    %c0_64 = arith.constant 0 : index
    %c0_65 = arith.constant 0 : index
    %c0_66 = arith.constant 0 : index
    %86 = vector.load %arg13[%c0_64, %c0_65, %c0_66] : memref<18x18x32xf32, #tpu.memory_space<vmem>>, vector<16x16x32xf32>
    %87 = vector.shape_cast %86 : vector<16x16x32xf32> to vector<256x32xf32>
    %88 = arith.truncf %87 : vector<256x32xf32> to vector<256x32xbf16>
    %89 = vector.extract_strided_slice %84 {offsets = [0, 0, 0], sizes = [1, 32, 32], strides = [1, 1, 1]} : vector<9x32x32xbf16> to vector<1x32x32xbf16>
    %90 = vector.shape_cast %89 : vector<1x32x32xbf16> to vector<32x32xbf16>
    %cst_67 = arith.constant dense<0.000000e+00> : vector<256x32xf32>
    %91 = tpu.matmul %88, %90, %cst_67 {dimension_numbers = #tpu.dot_dimension_numbers<[1], [0], [0], [1], [0, 0, 1, 1], [], []>} : vector<256x32xbf16>, vector<32x32xbf16>, vector<256x32xf32> -> vector<256x32xf32>
    %92 = arith.addf %85, %91 : vector<256x32xf32>
    %c0_68 = arith.constant 0 : index
    %c1_69 = arith.constant 1 : index
    %c0_70 = arith.constant 0 : index
    %93 = vector.load %arg13[%c0_68, %c1_69, %c0_70] : memref<18x18x32xf32, #tpu.memory_space<vmem>>, vector<16x16x32xf32>
    %94 = vector.shape_cast %93 : vector<16x16x32xf32> to vector<256x32xf32>
    %95 = arith.truncf %94 : vector<256x32xf32> to vector<256x32xbf16>
    %96 = vector.extract_strided_slice %84 {offsets = [1, 0, 0], sizes = [1, 32, 32], strides = [1, 1, 1]} : vector<9x32x32xbf16> to vector<1x32x32xbf16>
    %97 = vector.shape_cast %96 : vector<1x32x32xbf16> to vector<32x32xbf16>
    %cst_71 = arith.constant dense<0.000000e+00> : vector<256x32xf32>
    %98 = tpu.matmul %95, %97, %cst_71 {dimension_numbers = #tpu.dot_dimension_numbers<[1], [0], [0], [1], [0, 0, 1, 1], [], []>} : vector<256x32xbf16>, vector<32x32xbf16>, vector<256x32xf32> -> vector<256x32xf32>
    %99 = arith.addf %92, %98 : vector<256x32xf32>
    %c0_72 = arith.constant 0 : index
    %c2_73 = arith.constant 2 : index
    %c0_74 = arith.constant 0 : index
    %100 = vector.load %arg13[%c0_72, %c2_73, %c0_74] : memref<18x18x32xf32, #tpu.memory_space<vmem>>, vector<16x16x32xf32>
    %101 = vector.shape_cast %100 : vector<16x16x32xf32> to vector<256x32xf32>
    %102 = arith.truncf %101 : vector<256x32xf32> to vector<256x32xbf16>
    %103 = vector.extract_strided_slice %84 {offsets = [2, 0, 0], sizes = [1, 32, 32], strides = [1, 1, 1]} : vector<9x32x32xbf16> to vector<1x32x32xbf16>
    %104 = vector.shape_cast %103 : vector<1x32x32xbf16> to vector<32x32xbf16>
    %cst_75 = arith.constant dense<0.000000e+00> : vector<256x32xf32>
    %105 = tpu.matmul %102, %104, %cst_75 {dimension_numbers = #tpu.dot_dimension_numbers<[1], [0], [0], [1], [0, 0, 1, 1], [], []>} : vector<256x32xbf16>, vector<32x32xbf16>, vector<256x32xf32> -> vector<256x32xf32>
    %106 = arith.addf %99, %105 : vector<256x32xf32>
    %c1_76 = arith.constant 1 : index
    %c0_77 = arith.constant 0 : index
    %c0_78 = arith.constant 0 : index
    %107 = vector.load %arg13[%c1_76, %c0_77, %c0_78] : memref<18x18x32xf32, #tpu.memory_space<vmem>>, vector<16x16x32xf32>
    %108 = vector.shape_cast %107 : vector<16x16x32xf32> to vector<256x32xf32>
    %109 = arith.truncf %108 : vector<256x32xf32> to vector<256x32xbf16>
    %110 = vector.extract_strided_slice %84 {offsets = [3, 0, 0], sizes = [1, 32, 32], strides = [1, 1, 1]} : vector<9x32x32xbf16> to vector<1x32x32xbf16>
    %111 = vector.shape_cast %110 : vector<1x32x32xbf16> to vector<32x32xbf16>
    %cst_79 = arith.constant dense<0.000000e+00> : vector<256x32xf32>
    %112 = tpu.matmul %109, %111, %cst_79 {dimension_numbers = #tpu.dot_dimension_numbers<[1], [0], [0], [1], [0, 0, 1, 1], [], []>} : vector<256x32xbf16>, vector<32x32xbf16>, vector<256x32xf32> -> vector<256x32xf32>
    %113 = arith.addf %106, %112 : vector<256x32xf32>
    %c1_80 = arith.constant 1 : index
    %c1_81 = arith.constant 1 : index
    %c0_82 = arith.constant 0 : index
    %114 = vector.load %arg13[%c1_80, %c1_81, %c0_82] : memref<18x18x32xf32, #tpu.memory_space<vmem>>, vector<16x16x32xf32>
    %115 = vector.shape_cast %114 : vector<16x16x32xf32> to vector<256x32xf32>
    %116 = arith.truncf %115 : vector<256x32xf32> to vector<256x32xbf16>
    %117 = vector.extract_strided_slice %84 {offsets = [4, 0, 0], sizes = [1, 32, 32], strides = [1, 1, 1]} : vector<9x32x32xbf16> to vector<1x32x32xbf16>
    %118 = vector.shape_cast %117 : vector<1x32x32xbf16> to vector<32x32xbf16>
    %cst_83 = arith.constant dense<0.000000e+00> : vector<256x32xf32>
    %119 = tpu.matmul %116, %118, %cst_83 {dimension_numbers = #tpu.dot_dimension_numbers<[1], [0], [0], [1], [0, 0, 1, 1], [], []>} : vector<256x32xbf16>, vector<32x32xbf16>, vector<256x32xf32> -> vector<256x32xf32>
    %120 = arith.addf %113, %119 : vector<256x32xf32>
    %c1_84 = arith.constant 1 : index
    %c2_85 = arith.constant 2 : index
    %c0_86 = arith.constant 0 : index
    %121 = vector.load %arg13[%c1_84, %c2_85, %c0_86] : memref<18x18x32xf32, #tpu.memory_space<vmem>>, vector<16x16x32xf32>
    %122 = vector.shape_cast %121 : vector<16x16x32xf32> to vector<256x32xf32>
    %123 = arith.truncf %122 : vector<256x32xf32> to vector<256x32xbf16>
    %124 = vector.extract_strided_slice %84 {offsets = [5, 0, 0], sizes = [1, 32, 32], strides = [1, 1, 1]} : vector<9x32x32xbf16> to vector<1x32x32xbf16>
    %125 = vector.shape_cast %124 : vector<1x32x32xbf16> to vector<32x32xbf16>
    %cst_87 = arith.constant dense<0.000000e+00> : vector<256x32xf32>
    %126 = tpu.matmul %123, %125, %cst_87 {dimension_numbers = #tpu.dot_dimension_numbers<[1], [0], [0], [1], [0, 0, 1, 1], [], []>} : vector<256x32xbf16>, vector<32x32xbf16>, vector<256x32xf32> -> vector<256x32xf32>
    %127 = arith.addf %120, %126 : vector<256x32xf32>
    %c2_88 = arith.constant 2 : index
    %c0_89 = arith.constant 0 : index
    %c0_90 = arith.constant 0 : index
    %128 = vector.load %arg13[%c2_88, %c0_89, %c0_90] : memref<18x18x32xf32, #tpu.memory_space<vmem>>, vector<16x16x32xf32>
    %129 = vector.shape_cast %128 : vector<16x16x32xf32> to vector<256x32xf32>
    %130 = arith.truncf %129 : vector<256x32xf32> to vector<256x32xbf16>
    %131 = vector.extract_strided_slice %84 {offsets = [6, 0, 0], sizes = [1, 32, 32], strides = [1, 1, 1]} : vector<9x32x32xbf16> to vector<1x32x32xbf16>
    %132 = vector.shape_cast %131 : vector<1x32x32xbf16> to vector<32x32xbf16>
    %cst_91 = arith.constant dense<0.000000e+00> : vector<256x32xf32>
    %133 = tpu.matmul %130, %132, %cst_91 {dimension_numbers = #tpu.dot_dimension_numbers<[1], [0], [0], [1], [0, 0, 1, 1], [], []>} : vector<256x32xbf16>, vector<32x32xbf16>, vector<256x32xf32> -> vector<256x32xf32>
    %134 = arith.addf %127, %133 : vector<256x32xf32>
    %c2_92 = arith.constant 2 : index
    %c1_93 = arith.constant 1 : index
    %c0_94 = arith.constant 0 : index
    %135 = vector.load %arg13[%c2_92, %c1_93, %c0_94] : memref<18x18x32xf32, #tpu.memory_space<vmem>>, vector<16x16x32xf32>
    %136 = vector.shape_cast %135 : vector<16x16x32xf32> to vector<256x32xf32>
    %137 = arith.truncf %136 : vector<256x32xf32> to vector<256x32xbf16>
    %138 = vector.extract_strided_slice %84 {offsets = [7, 0, 0], sizes = [1, 32, 32], strides = [1, 1, 1]} : vector<9x32x32xbf16> to vector<1x32x32xbf16>
    %139 = vector.shape_cast %138 : vector<1x32x32xbf16> to vector<32x32xbf16>
    %cst_95 = arith.constant dense<0.000000e+00> : vector<256x32xf32>
    %140 = tpu.matmul %137, %139, %cst_95 {dimension_numbers = #tpu.dot_dimension_numbers<[1], [0], [0], [1], [0, 0, 1, 1], [], []>} : vector<256x32xbf16>, vector<32x32xbf16>, vector<256x32xf32> -> vector<256x32xf32>
    %141 = arith.addf %134, %140 : vector<256x32xf32>
    %c2_96 = arith.constant 2 : index
    %c2_97 = arith.constant 2 : index
    %c0_98 = arith.constant 0 : index
    %142 = vector.load %arg13[%c2_96, %c2_97, %c0_98] : memref<18x18x32xf32, #tpu.memory_space<vmem>>, vector<16x16x32xf32>
    %143 = vector.shape_cast %142 : vector<16x16x32xf32> to vector<256x32xf32>
    %144 = arith.truncf %143 : vector<256x32xf32> to vector<256x32xbf16>
    %145 = vector.extract_strided_slice %84 {offsets = [8, 0, 0], sizes = [1, 32, 32], strides = [1, 1, 1]} : vector<9x32x32xbf16> to vector<1x32x32xbf16>
    %146 = vector.shape_cast %145 : vector<1x32x32xbf16> to vector<32x32xbf16>
    %cst_99 = arith.constant dense<0.000000e+00> : vector<256x32xf32>
    %147 = tpu.matmul %144, %146, %cst_99 {dimension_numbers = #tpu.dot_dimension_numbers<[1], [0], [0], [1], [0, 0, 1, 1], [], []>} : vector<256x32xbf16>, vector<32x32xbf16>, vector<256x32xf32> -> vector<256x32xf32>
    %148 = arith.addf %141, %147 : vector<256x32xf32>
    %c0_100 = arith.constant 0 : index
    %c0_101 = arith.constant 0 : index
    %149 = vector.load %arg6[%c0_100, %c0_101] : memref<1x32xf32, #tpu.memory_space<vmem>>, vector<1x32xf32>
    %150 = vector.broadcast %149 : vector<1x32xf32> to vector<256x32xf32>
    %151 = arith.mulf %148, %150 : vector<256x32xf32>
    %c0_102 = arith.constant 0 : index
    %c0_103 = arith.constant 0 : index
    %152 = vector.load %arg7[%c0_102, %c0_103] : memref<1x32xf32, #tpu.memory_space<vmem>>, vector<1x32xf32>
    %153 = vector.broadcast %152 : vector<1x32xf32> to vector<256x32xf32>
    %154 = arith.addf %151, %153 : vector<256x32xf32>
    %cst_104 = arith.constant 0.000000e+00 : f32
    %155 = vector.broadcast %cst_104 : f32 to vector<18x18x32xf32>
    %c0_105 = arith.constant 0 : index
    %c0_106 = arith.constant 0 : index
    %c0_107 = arith.constant 0 : index
    %156 = vector.load %arg14[%c0_105, %c0_106, %c0_107] : memref<18x18x32xf32, #tpu.memory_space<vmem>>, vector<18x18x32xf32>
    tpu.vector_store %arg14[%c0_105, %c0_106, %c0_107], %155 {strides = array<i32>} : memref<18x18x32xf32, #tpu.memory_space<vmem>>, vector<18x18x32xf32>,
    %cst_108 = arith.constant 0.000000e+00 : f32
    %cst_109 = arith.constant 6.000000e+00 : f32
    %157 = vector.broadcast %cst_108 : f32 to vector<256x32xf32>
    %158 = arith.maximumf %157, %154 : vector<256x32xf32>
    %159 = vector.broadcast %cst_109 : f32 to vector<256x32xf32>
    %160 = arith.minimumf %159, %158 : vector<256x32xf32>
    %161 = vector.shape_cast %160 : vector<256x32xf32> to vector<16x16x32xf32>
    %c1_110 = arith.constant 1 : index
    %c1_111 = arith.constant 1 : index
    %c0_112 = arith.constant 0 : index
    %162 = vector.load %arg14[%c1_110, %c1_111, %c0_112] : memref<18x18x32xf32, #tpu.memory_space<vmem>>, vector<16x16x32xf32>
    tpu.vector_store %arg14[%c1_110, %c1_111, %c0_112], %161 {strides = array<i32>} : memref<18x18x32xf32, #tpu.memory_space<vmem>>, vector<16x16x32xf32>,
    %c0_113 = arith.constant 0 : index
    %c0_114 = arith.constant 0 : index
    %c0_115 = arith.constant 0 : index
    %163 = vector.load %arg8[%c0_113, %c0_114, %c0_115] : memref<9x32x4xbf16, #tpu.memory_space<vmem>>, vector<9x32x4xbf16>
    %cst_116 = arith.constant 0.000000e+00 : f32
    %164 = vector.broadcast %cst_116 : f32 to vector<256x4xf32>
    %c0_117 = arith.constant 0 : index
    %c0_118 = arith.constant 0 : index
    %c0_119 = arith.constant 0 : index
    %165 = vector.load %arg14[%c0_117, %c0_118, %c0_119] : memref<18x18x32xf32, #tpu.memory_space<vmem>>, vector<16x16x32xf32>
    %166 = vector.shape_cast %165 : vector<16x16x32xf32> to vector<256x32xf32>
    %167 = arith.truncf %166 : vector<256x32xf32> to vector<256x32xbf16>
    %168 = vector.extract_strided_slice %163 {offsets = [0, 0, 0], sizes = [1, 32, 4], strides = [1, 1, 1]} : vector<9x32x4xbf16> to vector<1x32x4xbf16>
    %169 = vector.shape_cast %168 : vector<1x32x4xbf16> to vector<32x4xbf16>
    %cst_120 = arith.constant dense<0.000000e+00> : vector<256x4xf32>
    %170 = tpu.matmul %167, %169, %cst_120 {dimension_numbers = #tpu.dot_dimension_numbers<[1], [0], [0], [1], [0, 0, 1, 1], [], []>} : vector<256x32xbf16>, vector<32x4xbf16>, vector<256x4xf32> -> vector<256x4xf32>
    %171 = arith.addf %164, %170 : vector<256x4xf32>
    %c0_121 = arith.constant 0 : index
    %c1_122 = arith.constant 1 : index
    %c0_123 = arith.constant 0 : index
    %172 = vector.load %arg14[%c0_121, %c1_122, %c0_123] : memref<18x18x32xf32, #tpu.memory_space<vmem>>, vector<16x16x32xf32>
    %173 = vector.shape_cast %172 : vector<16x16x32xf32> to vector<256x32xf32>
    %174 = arith.truncf %173 : vector<256x32xf32> to vector<256x32xbf16>
    %175 = vector.extract_strided_slice %163 {offsets = [1, 0, 0], sizes = [1, 32, 4], strides = [1, 1, 1]} : vector<9x32x4xbf16> to vector<1x32x4xbf16>
    %176 = vector.shape_cast %175 : vector<1x32x4xbf16> to vector<32x4xbf16>
    %cst_124 = arith.constant dense<0.000000e+00> : vector<256x4xf32>
    %177 = tpu.matmul %174, %176, %cst_124 {dimension_numbers = #tpu.dot_dimension_numbers<[1], [0], [0], [1], [0, 0, 1, 1], [], []>} : vector<256x32xbf16>, vector<32x4xbf16>, vector<256x4xf32> -> vector<256x4xf32>
    %178 = arith.addf %171, %177 : vector<256x4xf32>
    %c0_125 = arith.constant 0 : index
    %c2_126 = arith.constant 2 : index
    %c0_127 = arith.constant 0 : index
    %179 = vector.load %arg14[%c0_125, %c2_126, %c0_127] : memref<18x18x32xf32, #tpu.memory_space<vmem>>, vector<16x16x32xf32>
    %180 = vector.shape_cast %179 : vector<16x16x32xf32> to vector<256x32xf32>
    %181 = arith.truncf %180 : vector<256x32xf32> to vector<256x32xbf16>
    %182 = vector.extract_strided_slice %163 {offsets = [2, 0, 0], sizes = [1, 32, 4], strides = [1, 1, 1]} : vector<9x32x4xbf16> to vector<1x32x4xbf16>
    %183 = vector.shape_cast %182 : vector<1x32x4xbf16> to vector<32x4xbf16>
    %cst_128 = arith.constant dense<0.000000e+00> : vector<256x4xf32>
    %184 = tpu.matmul %181, %183, %cst_128 {dimension_numbers = #tpu.dot_dimension_numbers<[1], [0], [0], [1], [0, 0, 1, 1], [], []>} : vector<256x32xbf16>, vector<32x4xbf16>, vector<256x4xf32> -> vector<256x4xf32>
    %185 = arith.addf %178, %184 : vector<256x4xf32>
    %c1_129 = arith.constant 1 : index
    %c0_130 = arith.constant 0 : index
    %c0_131 = arith.constant 0 : index
    %186 = vector.load %arg14[%c1_129, %c0_130, %c0_131] : memref<18x18x32xf32, #tpu.memory_space<vmem>>, vector<16x16x32xf32>
    %187 = vector.shape_cast %186 : vector<16x16x32xf32> to vector<256x32xf32>
    %188 = arith.truncf %187 : vector<256x32xf32> to vector<256x32xbf16>
    %189 = vector.extract_strided_slice %163 {offsets = [3, 0, 0], sizes = [1, 32, 4], strides = [1, 1, 1]} : vector<9x32x4xbf16> to vector<1x32x4xbf16>
    %190 = vector.shape_cast %189 : vector<1x32x4xbf16> to vector<32x4xbf16>
    %cst_132 = arith.constant dense<0.000000e+00> : vector<256x4xf32>
    %191 = tpu.matmul %188, %190, %cst_132 {dimension_numbers = #tpu.dot_dimension_numbers<[1], [0], [0], [1], [0, 0, 1, 1], [], []>} : vector<256x32xbf16>, vector<32x4xbf16>, vector<256x4xf32> -> vector<256x4xf32>
    %192 = arith.addf %185, %191 : vector<256x4xf32>
    %c1_133 = arith.constant 1 : index
    %c1_134 = arith.constant 1 : index
    %c0_135 = arith.constant 0 : index
    %193 = vector.load %arg14[%c1_133, %c1_134, %c0_135] : memref<18x18x32xf32, #tpu.memory_space<vmem>>, vector<16x16x32xf32>
    %194 = vector.shape_cast %193 : vector<16x16x32xf32> to vector<256x32xf32>
    %195 = arith.truncf %194 : vector<256x32xf32> to vector<256x32xbf16>
    %196 = vector.extract_strided_slice %163 {offsets = [4, 0, 0], sizes = [1, 32, 4], strides = [1, 1, 1]} : vector<9x32x4xbf16> to vector<1x32x4xbf16>
    %197 = vector.shape_cast %196 : vector<1x32x4xbf16> to vector<32x4xbf16>
    %cst_136 = arith.constant dense<0.000000e+00> : vector<256x4xf32>
    %198 = tpu.matmul %195, %197, %cst_136 {dimension_numbers = #tpu.dot_dimension_numbers<[1], [0], [0], [1], [0, 0, 1, 1], [], []>} : vector<256x32xbf16>, vector<32x4xbf16>, vector<256x4xf32> -> vector<256x4xf32>
    %199 = arith.addf %192, %198 : vector<256x4xf32>
    %c1_137 = arith.constant 1 : index
    %c2_138 = arith.constant 2 : index
    %c0_139 = arith.constant 0 : index
    %200 = vector.load %arg14[%c1_137, %c2_138, %c0_139] : memref<18x18x32xf32, #tpu.memory_space<vmem>>, vector<16x16x32xf32>
    %201 = vector.shape_cast %200 : vector<16x16x32xf32> to vector<256x32xf32>
    %202 = arith.truncf %201 : vector<256x32xf32> to vector<256x32xbf16>
    %203 = vector.extract_strided_slice %163 {offsets = [5, 0, 0], sizes = [1, 32, 4], strides = [1, 1, 1]} : vector<9x32x4xbf16> to vector<1x32x4xbf16>
    %204 = vector.shape_cast %203 : vector<1x32x4xbf16> to vector<32x4xbf16>
    %cst_140 = arith.constant dense<0.000000e+00> : vector<256x4xf32>
    %205 = tpu.matmul %202, %204, %cst_140 {dimension_numbers = #tpu.dot_dimension_numbers<[1], [0], [0], [1], [0, 0, 1, 1], [], []>} : vector<256x32xbf16>, vector<32x4xbf16>, vector<256x4xf32> -> vector<256x4xf32>
    %206 = arith.addf %199, %205 : vector<256x4xf32>
    %c2_141 = arith.constant 2 : index
    %c0_142 = arith.constant 0 : index
    %c0_143 = arith.constant 0 : index
    %207 = vector.load %arg14[%c2_141, %c0_142, %c0_143] : memref<18x18x32xf32, #tpu.memory_space<vmem>>, vector<16x16x32xf32>
    %208 = vector.shape_cast %207 : vector<16x16x32xf32> to vector<256x32xf32>
    %209 = arith.truncf %208 : vector<256x32xf32> to vector<256x32xbf16>
    %210 = vector.extract_strided_slice %163 {offsets = [6, 0, 0], sizes = [1, 32, 4], strides = [1, 1, 1]} : vector<9x32x4xbf16> to vector<1x32x4xbf16>
    %211 = vector.shape_cast %210 : vector<1x32x4xbf16> to vector<32x4xbf16>
    %cst_144 = arith.constant dense<0.000000e+00> : vector<256x4xf32>
    %212 = tpu.matmul %209, %211, %cst_144 {dimension_numbers = #tpu.dot_dimension_numbers<[1], [0], [0], [1], [0, 0, 1, 1], [], []>} : vector<256x32xbf16>, vector<32x4xbf16>, vector<256x4xf32> -> vector<256x4xf32>
    %213 = arith.addf %206, %212 : vector<256x4xf32>
    %c2_145 = arith.constant 2 : index
    %c1_146 = arith.constant 1 : index
    %c0_147 = arith.constant 0 : index
    %214 = vector.load %arg14[%c2_145, %c1_146, %c0_147] : memref<18x18x32xf32, #tpu.memory_space<vmem>>, vector<16x16x32xf32>
    %215 = vector.shape_cast %214 : vector<16x16x32xf32> to vector<256x32xf32>
    %216 = arith.truncf %215 : vector<256x32xf32> to vector<256x32xbf16>
    %217 = vector.extract_strided_slice %163 {offsets = [7, 0, 0], sizes = [1, 32, 4], strides = [1, 1, 1]} : vector<9x32x4xbf16> to vector<1x32x4xbf16>
    %218 = vector.shape_cast %217 : vector<1x32x4xbf16> to vector<32x4xbf16>
    %cst_148 = arith.constant dense<0.000000e+00> : vector<256x4xf32>
    %219 = tpu.matmul %216, %218, %cst_148 {dimension_numbers = #tpu.dot_dimension_numbers<[1], [0], [0], [1], [0, 0, 1, 1], [], []>} : vector<256x32xbf16>, vector<32x4xbf16>, vector<256x4xf32> -> vector<256x4xf32>
    %220 = arith.addf %213, %219 : vector<256x4xf32>
    %c2_149 = arith.constant 2 : index
    %c2_150 = arith.constant 2 : index
    %c0_151 = arith.constant 0 : index
    %221 = vector.load %arg14[%c2_149, %c2_150, %c0_151] : memref<18x18x32xf32, #tpu.memory_space<vmem>>, vector<16x16x32xf32>
    %222 = vector.shape_cast %221 : vector<16x16x32xf32> to vector<256x32xf32>
    %223 = arith.truncf %222 : vector<256x32xf32> to vector<256x32xbf16>
    %224 = vector.extract_strided_slice %163 {offsets = [8, 0, 0], sizes = [1, 32, 4], strides = [1, 1, 1]} : vector<9x32x4xbf16> to vector<1x32x4xbf16>
    %225 = vector.shape_cast %224 : vector<1x32x4xbf16> to vector<32x4xbf16>
    %cst_152 = arith.constant dense<0.000000e+00> : vector<256x4xf32>
    %226 = tpu.matmul %223, %225, %cst_152 {dimension_numbers = #tpu.dot_dimension_numbers<[1], [0], [0], [1], [0, 0, 1, 1], [], []>} : vector<256x32xbf16>, vector<32x4xbf16>, vector<256x4xf32> -> vector<256x4xf32>
    %227 = arith.addf %220, %226 : vector<256x4xf32>
    %c0_153 = arith.constant 0 : index
    %c0_154 = arith.constant 0 : index
    %228 = vector.load %arg9[%c0_153, %c0_154] : memref<1x4xf32, #tpu.memory_space<vmem>>, vector<1x4xf32>
    %229 = vector.broadcast %228 : vector<1x4xf32> to vector<256x4xf32>
    %230 = arith.mulf %227, %229 : vector<256x4xf32>
    %c0_155 = arith.constant 0 : index
    %c0_156 = arith.constant 0 : index
    %231 = vector.load %arg10[%c0_155, %c0_156] : memref<1x4xf32, #tpu.memory_space<vmem>>, vector<1x4xf32>
    %232 = vector.broadcast %231 : vector<1x4xf32> to vector<256x4xf32>
    %233 = arith.addf %230, %232 : vector<256x4xf32>
    %cst_157 = arith.constant dense<0xFF800000> : vector<256xf32>
    %234 = vector.multi_reduction <maximumf>, %233, %cst_157 [1] : vector<256x4xf32> to vector<256xf32>
    %235 = vector.shape_cast %234 : vector<256xf32> to vector<256x1xf32>
    %236 = vector.broadcast %235 : vector<256x1xf32> to vector<256x4xf32>
    %237 = arith.subf %233, %236 : vector<256x4xf32>
    %238 = math.exp %237 : vector<256x4xf32>
    %cst_158 = arith.constant dense<0.000000e+00> : vector<256xf32>
    %239 = vector.multi_reduction <add>, %238, %cst_158 [1] : vector<256x4xf32> to vector<256xf32>
    %240 = vector.shape_cast %239 : vector<256xf32> to vector<256x1xf32>
    %241 = vector.broadcast %240 : vector<256x1xf32> to vector<256x4xf32>
    %242 = arith.divf %238, %241 : vector<256x4xf32>
    %243 = vector.shape_cast %242 : vector<256x4xf32> to vector<1x16x16x4xf32>
    %c0_159 = arith.constant 0 : index
    %c0_160 = arith.constant 0 : index
    %c0_161 = arith.constant 0 : index
    %c0_162 = arith.constant 0 : index
    %244 = vector.load %arg11[%c0_159, %c0_160, %c0_161, %c0_162] : memref<1x16x16x4xf32, #tpu.memory_space<vmem>>, vector<1x16x16x4xf32>
    tpu.vector_store %arg11[%c0_159, %c0_160, %c0_161, %c0_162], %243 {strides = array<i32>} : memref<1x16x16x4xf32, #tpu.memory_space<vmem>>, vector<1x16x16x4xf32>,
    return
  }
  func.func @transform_0(%arg0: i32) -> (i32, i32, i32, i32) {
    %c0_i32 = arith.constant 0 : i32
    %c0_i32_0 = arith.constant 0 : i32
    %c0_i32_1 = arith.constant 0 : i32
    %c0_i32_2 = arith.constant 0 : i32
    return %arg0, %c0_i32, %c0_i32_0, %c0_i32_1 : i32, i32, i32, i32
  }
  func.func @transform_1(%arg0: i32) -> (i32, i32, i32) {
    %c0_i32 = arith.constant 0 : i32
    %c0_i32_0 = arith.constant 0 : i32
    %c0_i32_1 = arith.constant 0 : i32
    %c0_i32_2 = arith.constant 0 : i32
    return %c0_i32, %c0_i32_0, %c0_i32_1 : i32, i32, i32
  }
  func.func @transform_2(%arg0: i32) -> (i32, i32) {
    %c0_i32 = arith.constant 0 : i32
    %c0_i32_0 = arith.constant 0 : i32
    %c0_i32_1 = arith.constant 0 : i32
    return %c0_i32, %c0_i32_0 : i32, i32
  }
  func.func @transform_3(%arg0: i32) -> (i32, i32) {
    %c0_i32 = arith.constant 0 : i32
    %c0_i32_0 = arith.constant 0 : i32
    %c0_i32_1 = arith.constant 0 : i32
    return %c0_i32, %c0_i32_0 : i32, i32
  }
  func.func @transform_4(%arg0: i32) -> (i32, i32, i32) {
    %c0_i32 = arith.constant 0 : i32
    %c0_i32_0 = arith.constant 0 : i32
    %c0_i32_1 = arith.constant 0 : i32
    %c0_i32_2 = arith.constant 0 : i32
    return %c0_i32, %c0_i32_0, %c0_i32_1 : i32, i32, i32
  }
  func.func @transform_5(%arg0: i32) -> (i32, i32) {
    %c0_i32 = arith.constant 0 : i32
    %c0_i32_0 = arith.constant 0 : i32
    %c0_i32_1 = arith.constant 0 : i32
    return %c0_i32, %c0_i32_0 : i32, i32
  }
  func.func @transform_6(%arg0: i32) -> (i32, i32) {
    %c0_i32 = arith.constant 0 : i32
    %c0_i32_0 = arith.constant 0 : i32
    %c0_i32_1 = arith.constant 0 : i32
    return %c0_i32, %c0_i32_0 : i32, i32
  }
  func.func @transform_7(%arg0: i32) -> (i32, i32, i32) {
    %c0_i32 = arith.constant 0 : i32
    %c0_i32_0 = arith.constant 0 : i32
    %c0_i32_1 = arith.constant 0 : i32
    %c0_i32_2 = arith.constant 0 : i32
    return %c0_i32, %c0_i32_0, %c0_i32_1 : i32, i32, i32
  }
  func.func @transform_8(%arg0: i32) -> (i32, i32) {
    %c0_i32 = arith.constant 0 : i32
    %c0_i32_0 = arith.constant 0 : i32
    %c0_i32_1 = arith.constant 0 : i32
    return %c0_i32, %c0_i32_0 : i32, i32
  }
  func.func @transform_9(%arg0: i32) -> (i32, i32) {
    %c0_i32 = arith.constant 0 : i32
    %c0_i32_0 = arith.constant 0 : i32
    %c0_i32_1 = arith.constant 0 : i32
    return %c0_i32, %c0_i32_0 : i32, i32
  }
  func.func @transform_10(%arg0: i32) -> (i32, i32, i32, i32) {
    %c0_i32 = arith.constant 0 : i32
    %c0_i32_0 = arith.constant 0 : i32
    %c0_i32_1 = arith.constant 0 : i32
    %c0_i32_2 = arith.constant 0 : i32
    return %arg0, %c0_i32, %c0_i32_0, %c0_i32_1 : i32, i32, i32, i32
  }
}

</mosaic_0001>

<llo_original>
// kernel: foveation_forward.1
$region0: #{foveation_forward.1}
  #allocation0 [shape = 'u32[]', space=smem, size = 0x4, offset = 0x4, fixed_abs, tag = 'smem constant byte address 0x4 - core index']
  #allocation1 [shape = 'u32[72,128]{1,0:T(1,128)}', space=vmem, size = 0x9000, scoped, tag = 'internal scratch']
  #allocation2 [shape = 'f32[18,18,4]{2,1,0:T(8,128)}', space=vmem, size = 0x36000, scoped, tag = 'scratch operand']
  #allocation3 [shape = 'f32[18,18,32]{2,1,0:T(8,128)}', space=vmem, size = 0x36000, scoped, tag = 'scratch operand']
  #allocation4 [shape = 'f32[18,18,32]{2,1,0:T(8,128)}', space=vmem, size = 0x36000, scoped, tag = 'scratch operand']
  %s0 = inlined_call_operand.vmem [shape: f32[2,16,16,4], index: 0, kind: input, shape index: {}]
  %s1 = inlined_call_operand.vmem [shape: bf16[9,4,32], index: 1, kind: input, shape index: {}]
  %s2 = inlined_call_operand.vmem [shape: f32[1,32], index: 2, kind: input, shape index: {}]
  %s3 = inlined_call_operand.vmem [shape: f32[1,32], index: 3, kind: input, shape index: {}]
  %s4 = inlined_call_operand.vmem [shape: bf16[9,32,32], index: 4, kind: input, shape index: {}]
  %s5 = inlined_call_operand.vmem [shape: f32[1,32], index: 5, kind: input, shape index: {}]
  %s6 = inlined_call_operand.vmem [shape: f32[1,32], index: 6, kind: input, shape index: {}]
  %s7 = inlined_call_operand.vmem [shape: bf16[9,32,4], index: 7, kind: input, shape index: {}]
  %s8 = inlined_call_operand.vmem [shape: f32[1,4], index: 8, kind: input, shape index: {}]
  %s9 = inlined_call_operand.vmem [shape: f32[1,4], index: 9, kind: input, shape index: {}]
  %s10 = inlined_call_operand.vmem [shape: f32[2,16,16,4], index: 10, kind: output, shape index: {}]
  %s11 = sld [smem:[#allocation0]]
  $region73: #{foveation_forward.1} parent=0
    _
  %s13 = ssub.s32 1, %s11
  %s14 = scalar_select 0, %s13, %s11
  loop: start=0, step=1, limit=4
  $region2: #{foveation_forward.1} parent=0 // loop_pre_header
    _
  $region3: #{foveation_forward.1} parent=0 // loop_header
    %s16 = sphi 0, %s20
    %p17 = scmp.ge.s32.totalorder %s16, 4
    %s26 = sphi 0, %s28
    %s29 = sphi 0, %s26
    %s30 = sphi 0, %s29
    %s46 = sphi 0, %s30
    %s50 = sphi 0, %s50
    %s52 = sphi 0, %s50
    %s53 = sphi 0, %s52
    %s67 = sphi 0, %s53
    %s71 = sphi 0, %s71
    %s73 = sphi 0, %s71
    %s74 = sphi 0, %s73
    %s88 = sphi 0, %s74
    %s92 = sphi 0, %s92
    %s94 = sphi 0, %s92
    %s95 = sphi 0, %s94
    %s109 = sphi 0, %s95
    %s113 = sphi 0, %s113
    %s115 = sphi 0, %s113
    %s116 = sphi 0, %s115
    %s130 = sphi 0, %s116
    %s134 = sphi 0, %s134
    %s136 = sphi 0, %s134
    %s137 = sphi 0, %s136
    %s151 = sphi 0, %s137
    %s155 = sphi 0, %s155
    %s157 = sphi 0, %s155
    %s158 = sphi 0, %s157
    %s172 = sphi 0, %s158
    %s176 = sphi 0, %s176
    %s178 = sphi 0, %s176
    %s179 = sphi 0, %s178
    %s193 = sphi 0, %s179
    %s197 = sphi 0, %s197
    %s199 = sphi 0, %s197
    %s200 = sphi 0, %s199
    %s214 = sphi 0, %s200
    %s218 = sphi 0, %s218
    %s220 = sphi 0, %s218
    %s221 = sphi 0, %s220
    %s235 = sphi 0, %s221
    %s241 = sphi 0, %s243
    %s244 = sphi 0, %s241
    %s245 = sphi 0, %s244
    %s261 = sphi 0, %s245
  $region4: #{foveation_forward.1} parent=0 // loop_header_branch
    %19 = sbr.rel (%p17) target = $region8
  $region5: #{foveation_forward.1} parent=0 // loop_body
    %s21 = ssub.s32 %s16, 1
    %s22 = ssub.s32 %s16, 2
    %s23 = sadd.s32 %s16, 1
    %s24 = ssub.s32 %s16, %s23
    %p25 = scmp.eq.s32.totalorder %s24, 0
    %s27 = sadd.s32 %s26, 1
    %s28 = scalar_select %p25, %s26, %s27
    %p31 = pneg %p25
    %p32 = scmp.eq.s32.totalorder %s16, 1
    %p33 = por %p31, %p32
    %p34 = scmp.ne.s32.totalorder %s26, %s29
    %p35 = scmp.eq.s32.totalorder %s16, 0
    %p36 = por %p34, %p35
    %p37 = scmp.ne.s32.totalorder %s26, %s29
    %p38 = scmp.eq.s32.totalorder %s21, 1
    %p39 = por %p37, %p38
    %p40 = scmp.ne.s32.totalorder %s29, %s30
    %p41 = scmp.eq.s32.totalorder %s21, 0
    %p42 = por %p40, %p41
    %p43 = scmp.ne.s32.totalorder %s29, %s30
    %p44 = scmp.eq.s32.totalorder %s22, 1
    %p45 = por %p43, %p44
    %p47 = scmp.ne.s32.totalorder %s30, %s46
    %p48 = scmp.eq.s32.totalorder %s22, 0
    %p49 = por %p47, %p48
    %s51 = sadd.s32 %s50, 1
    %p54 = scmp.eq.s32.totalorder %s16, 1
    %p55 = scmp.ne.s32.totalorder %s50, %s52
    %p56 = scmp.eq.s32.totalorder %s16, 0
    %p57 = por %p55, %p56
    %p58 = scmp.ne.s32.totalorder %s50, %s52
    %p59 = scmp.eq.s32.totalorder %s21, 1
    %p60 = por %p58, %p59
    %p61 = scmp.ne.s32.totalorder %s52, %s53
    %p62 = scmp.eq.s32.totalorder %s21, 0
    %p63 = por %p61, %p62
    %p64 = scmp.ne.s32.totalorder %s52, %s53
    %p65 = scmp.eq.s32.totalorder %s22, 1
    %p66 = por %p64, %p65
    %p68 = scmp.ne.s32.totalorder %s53, %s67
    %p69 = scmp.eq.s32.totalorder %s22, 0
    %p70 = por %p68, %p69
    %s72 = sadd.s32 %s71, 1
    %p75 = scmp.eq.s32.totalorder %s16, 1
    %p76 = scmp.ne.s32.totalorder %s71, %s73
    %p77 = scmp.eq.s32.totalorder %s16, 0
    %p78 = por %p76, %p77
    %p79 = scmp.ne.s32.totalorder %s71, %s73
    %p80 = scmp.eq.s32.totalorder %s21, 1
    %p81 = por %p79, %p80
    %p82 = scmp.ne.s32.totalorder %s73, %s74
    %p83 = scmp.eq.s32.totalorder %s21, 0
    %p84 = por %p82, %p83
    %p85 = scmp.ne.s32.totalorder %s73, %s74
    %p86 = scmp.eq.s32.totalorder %s22, 1
    %p87 = por %p85, %p86
    %p89 = scmp.ne.s32.totalorder %s74, %s88
    %p90 = scmp.eq.s32.totalorder %s22, 0
    %p91 = por %p89, %p90
    %s93 = sadd.s32 %s92, 1
    %p96 = scmp.eq.s32.totalorder %s16, 1
    %p97 = scmp.ne.s32.totalorder %s92, %s94
    %p98 = scmp.eq.s32.totalorder %s16, 0
    %p99 = por %p97, %p98
    %p100 = scmp.ne.s32.totalorder %s92, %s94
    %p101 = scmp.eq.s32.totalorder %s21, 1
    %p102 = por %p100, %p101
    %p103 = scmp.ne.s32.totalorder %s94, %s95
    %p104 = scmp.eq.s32.totalorder %s21, 0
    %p105 = por %p103, %p104
    %p106 = scmp.ne.s32.totalorder %s94, %s95
    %p107 = scmp.eq.s32.totalorder %s22, 1
    %p108 = por %p106, %p107
    %p110 = scmp.ne.s32.totalorder %s95, %s109
    %p111 = scmp.eq.s32.totalorder %s22, 0
    %p112 = por %p110, %p111
    %s114 = sadd.s32 %s113, 1
    %p117 = scmp.eq.s32.totalorder %s16, 1
    %p118 = scmp.ne.s32.totalorder %s113, %s115
    %p119 = scmp.eq.s32.totalorder %s16, 0
    %p120 = por %p118, %p119
    %p121 = scmp.ne.s32.totalorder %s113, %s115
    %p122 = scmp.eq.s32.totalorder %s21, 1
    %p123 = por %p121, %p122
    %p124 = scmp.ne.s32.totalorder %s115, %s116
    %p125 = scmp.eq.s32.totalorder %s21, 0
    %p126 = por %p124, %p125
    %p127 = scmp.ne.s32.totalorder %s115, %s116
    %p128 = scmp.eq.s32.totalorder %s22, 1
    %p129 = por %p127, %p128
    %p131 = scmp.ne.s32.totalorder %s116, %s130
    %p132 = scmp.eq.s32.totalorder %s22, 0
    %p133 = por %p131, %p132
    %s135 = sadd.s32 %s134, 1
    %p138 = scmp.eq.s32.totalorder %s16, 1
    %p139 = scmp.ne.s32.totalorder %s134, %s136
    %p140 = scmp.eq.s32.totalorder %s16, 0
    %p141 = por %p139, %p140
    %p142 = scmp.ne.s32.totalorder %s134, %s136
    %p143 = scmp.eq.s32.totalorder %s21, 1
    %p144 = por %p142, %p143
    %p145 = scmp.ne.s32.totalorder %s136, %s137
    %p146 = scmp.eq.s32.totalorder %s21, 0
    %p147 = por %p145, %p146
    %p148 = scmp.ne.s32.totalorder %s136, %s137
    %p149 = scmp.eq.s32.totalorder %s22, 1
    %p150 = por %p148, %p149
    %p152 = scmp.ne.s32.totalorder %s137, %s151
    %p153 = scmp.eq.s32.totalorder %s22, 0
    %p154 = por %p152, %p153
    %s156 = sadd.s32 %s155, 1
    %p159 = scmp.eq.s32.totalorder %s16, 1
    %p160 = scmp.ne.s32.totalorder %s155, %s157
    %p161 = scmp.eq.s32.totalorder %s16, 0
    %p162 = por %p160, %p161
    %p163 = scmp.ne.s32.totalorder %s155, %s157
    %p164 = scmp.eq.s32.totalorder %s21, 1
    %p165 = por %p163, %p164
    %p166 = scmp.ne.s32.totalorder %s157, %s158
    %p167 = scmp.eq.s32.totalorder %s21, 0
    %p168 = por %p166, %p167
    %p169 = scmp.ne.s32.totalorder %s157, %s158
    %p170 = scmp.eq.s32.totalorder %s22, 1
    %p171 = por %p169, %p170
    %p173 = scmp.ne.s32.totalorder %s158, %s172
    %p174 = scmp.eq.s32.totalorder %s22, 0
    %p175 = por %p173, %p174
    %s177 = sadd.s32 %s176, 1
    %p180 = scmp.eq.s32.totalorder %s16, 1
    %p181 = scmp.ne.s32.totalorder %s176, %s178
    %p182 = scmp.eq.s32.totalorder %s16, 0
    %p183 = por %p181, %p182
    %p184 = scmp.ne.s32.totalorder %s176, %s178
    %p185 = scmp.eq.s32.totalorder %s21, 1
    %p186 = por %p184, %p185
    %p187 = scmp.ne.s32.totalorder %s178, %s179
    %p188 = scmp.eq.s32.totalorder %s21, 0
    %p189 = por %p187, %p188
    %p190 = scmp.ne.s32.totalorder %s178, %s179
    %p191 = scmp.eq.s32.totalorder %s22, 1
    %p192 = por %p190, %p191
    %p194 = scmp.ne.s32.totalorder %s179, %s193
    %p195 = scmp.eq.s32.totalorder %s22, 0
    %p196 = por %p194, %p195
    %s198 = sadd.s32 %s197, 1
    %p201 = scmp.eq.s32.totalorder %s16, 1
    %p202 = scmp.ne.s32.totalorder %s197, %s199
    %p203 = scmp.eq.s32.totalorder %s16, 0
    %p204 = por %p202, %p203
    %p205 = scmp.ne.s32.totalorder %s197, %s199
    %p206 = scmp.eq.s32.totalorder %s21, 1
    %p207 = por %p205, %p206
    %p208 = scmp.ne.s32.totalorder %s199, %s200
    %p209 = scmp.eq.s32.totalorder %s21, 0
    %p210 = por %p208, %p209
    %p211 = scmp.ne.s32.totalorder %s199, %s200
    %p212 = scmp.eq.s32.totalorder %s22, 1
    %p213 = por %p211, %p212
    %p215 = scmp.ne.s32.totalorder %s200, %s214
    %p216 = scmp.eq.s32.totalorder %s22, 0
    %p217 = por %p215, %p216
    %s219 = sadd.s32 %s218, 1
    %p222 = scmp.eq.s32.totalorder %s16, 1
    %p223 = scmp.ne.s32.totalorder %s218, %s220
    %p224 = scmp.eq.s32.totalorder %s16, 0
    %p225 = por %p223, %p224
    %p226 = scmp.ne.s32.totalorder %s218, %s220
    %p227 = scmp.eq.s32.totalorder %s21, 1
    %p228 = por %p226, %p227
    %p229 = scmp.ne.s32.totalorder %s220, %s221
    %p230 = scmp.eq.s32.totalorder %s21, 0
    %p231 = por %p229, %p230
    %p232 = scmp.ne.s32.totalorder %s220, %s221
    %p233 = scmp.eq.s32.totalorder %s22, 1
    %p234 = por %p232, %p233
    %p236 = scmp.ne.s32.totalorder %s221, %s235
    %p237 = scmp.eq.s32.totalorder %s22, 0
    %p238 = por %p236, %p237
    %s239 = ssub.s32 %s16, %s23
    %p240 = scmp.eq.s32.totalorder %s239, 0
    %s242 = sadd.s32 %s241, 1
    %s243 = scalar_select %p240, %s241, %s242
    %p246 = pneg %p240
    %p247 = scmp.eq.s32.totalorder %s16, 1
    %p248 = por %p246, %p247
    %p249 = scmp.ne.s32.totalorder %s241, %s244
    %p250 = scmp.eq.s32.totalorder %s16, 0
    %p251 = por %p249, %p250
    %p252 = scmp.ne.s32.totalorder %s241, %s244
    %p253 = scmp.eq.s32.totalorder %s21, 1
    %p254 = por %p252, %p253
    %p255 = scmp.ne.s32.totalorder %s244, %s245
    %p256 = scmp.eq.s32.totalorder %s21, 0
    %p257 = por %p255, %p256
    %p258 = scmp.ne.s32.totalorder %s244, %s245
    %p259 = scmp.eq.s32.totalorder %s22, 1
    %p260 = por %p258, %p259
    %p262 = scmp.ne.s32.totalorder %s245, %s261
    %p263 = scmp.eq.s32.totalorder %s22, 0
    %p264 = por %p262, %p263
    %p265 = scmp.le.s32.totalorder 1, %s16
    %p266 = scmp.lt.s32.totalorder %s16, 3
    %p267 = pnand %p265, %p266
    %p268 = pneg %p267
    // Predicated region
    $region9: #{foveation_forward.1} parent=5 // pred_check
      _
    $region10: #{foveation_forward.1} parent=5 // pred_check_branch
      %270 = sbr.rel (%p267) target = $region12
    $region11: #{foveation_forward.1} parent=5 // pred_region
      %s271 = ssub.s32 %s16, 1
      // Predicated region
      $region13: #{foveation_forward.1} parent=11 // pred_check
        %p272 = pneg %p63
      $region14: #{foveation_forward.1} parent=11 // pred_check_branch
        %274 = sbr.rel (%p272) target = $region16
      $region15: #{foveation_forward.1} parent=11 // pred_region
        _
      $region16: #{foveation_forward.1} parent=11 // pred_fallthru
        _
      // Predicated region
      $region17: #{foveation_forward.1} parent=11 // pred_check
        %p275 = pneg %p84
      $region18: #{foveation_forward.1} parent=11 // pred_check_branch
        %277 = sbr.rel (%p275) target = $region20
      $region19: #{foveation_forward.1} parent=11 // pred_region
        _
      $region20: #{foveation_forward.1} parent=11 // pred_fallthru
        _
      // Predicated region
      $region21: #{foveation_forward.1} parent=11 // pred_check
        %p278 = pneg %p105
      $region22: #{foveation_forward.1} parent=11 // pred_check_branch
        %280 = sbr.rel (%p278) target = $region24
      $region23: #{foveation_forward.1} parent=11 // pred_region
        _
      $region24: #{foveation_forward.1} parent=11 // pred_fallthru
        _
      // Predicated region
      $region25: #{foveation_forward.1} parent=11 // pred_check
        %p281 = pneg %p126
      $region26: #{foveation_forward.1} parent=11 // pred_check_branch
        %283 = sbr.rel (%p281) target = $region28
      $region27: #{foveation_forward.1} parent=11 // pred_region
        _
      $region28: #{foveation_forward.1} parent=11 // pred_fallthru
        _
      // Predicated region
      $region29: #{foveation_forward.1} parent=11 // pred_check
        %p284 = pneg %p147
      $region30: #{foveation_forward.1} parent=11 // pred_check_branch
        %286 = sbr.rel (%p284) target = $region32
      $region31: #{foveation_forward.1} parent=11 // pred_region
        _
      $region32: #{foveation_forward.1} parent=11 // pred_fallthru
        _
      // Predicated region
      $region33: #{foveation_forward.1} parent=11 // pred_check
        %p287 = pneg %p168
      $region34: #{foveation_forward.1} parent=11 // pred_check_branch
        %289 = sbr.rel (%p287) target = $region36
      $region35: #{foveation_forward.1} parent=11 // pred_region
        _
      $region36: #{foveation_forward.1} parent=11 // pred_fallthru
        _
      // Predicated region
      $region37: #{foveation_forward.1} parent=11 // pred_check
        %p290 = pneg %p189
      $region38: #{foveation_forward.1} parent=11 // pred_check_branch
        %292 = sbr.rel (%p290) target = $region40
      $region39: #{foveation_forward.1} parent=11 // pred_region
        _
      $region40: #{foveation_forward.1} parent=11 // pred_fallthru
        _
      // Predicated region
      $region41: #{foveation_forward.1} parent=11 // pred_check
        %p293 = pneg %p210
      $region42: #{foveation_forward.1} parent=11 // pred_check_branch
        %295 = sbr.rel (%p293) target = $region44
      $region43: #{foveation_forward.1} parent=11 // pred_region
        _
      $region44: #{foveation_forward.1} parent=11 // pred_fallthru
        _
      // Predicated region
      $region45: #{foveation_forward.1} parent=11 // pred_check
        %p296 = pneg %p231
      $region46: #{foveation_forward.1} parent=11 // pred_check_branch
        %298 = sbr.rel (%p296) target = $region48
      $region47: #{foveation_forward.1} parent=11 // pred_region
        _
      $region48: #{foveation_forward.1} parent=11 // pred_fallthru
        _
    $region12: #{foveation_forward.1} parent=5 // pred_fallthru
      _
    %p299 = scmp.lt.s32.totalorder %s16, 2
    // Predicated region
    $region49: #{foveation_forward.1} parent=5 // pred_check
      %p300 = pneg %p299
    $region50: #{foveation_forward.1} parent=5 // pred_check_branch
      %302 = sbr.rel (%p300) target = $region52
    $region51: #{foveation_forward.1} parent=5 // pred_region
      // Predicated region
      $region53: #{foveation_forward.1} parent=51 // pred_check
        %p303 = pneg %p36
      $region54: #{foveation_forward.1} parent=51 // pred_check_branch
        %305 = sbr.rel (%p303) target = $region56
      $region55: #{foveation_forward.1} parent=51 // pred_region
        %p306 = scmp.lt.s32.totalorder %s16, 1
        %s307 = scalar_select %p306, %s16, 1
        %s308 = smul.addr %s307, 32
        %s309 = smul.addr %s308, 8
        %s310 = scalar_lea.vmem %s0, %s309
      $region56: #{foveation_forward.1} parent=51 // pred_fallthru
        _
    $region52: #{foveation_forward.1} parent=5 // pred_fallthru
      _
    %p311 = scmp.le.s32.totalorder 1, %s16
    %p312 = scmp.lt.s32.totalorder %s16, 3
    %p313 = pnand %p311, %p312
    %p314 = pneg %p313
    // Predicated region
    $region57: #{foveation_forward.1} parent=5 // pred_check
      _
    $region58: #{foveation_forward.1} parent=5 // pred_check_branch
      %316 = sbr.rel (%p313) target = $region60
    $region59: #{foveation_forward.1} parent=5 // pred_region
      %s317 = ssub.s32 %s16, 1
      %p318 = scmp.lt.s32.totalorder %s21, 1
      %s319 = scalar_select %p318, %s21, 1
      %s320 = smul.addr %s319, 32
      %s321 = smul.addr %s320, 8
      %s322 = scalar_lea.vmem %s0, %s321
      %p323 = pneg %p42
      %p324 = pneg %p39
      %p325 = pneg %p63
      %p326 = pneg %p60
      %p327 = pneg %p84
      %p328 = pneg %p81
      %p329 = pneg %p105
      %p330 = pneg %p102
      %p331 = pneg %p126
      %p332 = pneg %p123
      %p333 = pneg %p147
      %p334 = pneg %p144
      %p335 = pneg %p168
      %p336 = pneg %p165
      %p337 = pneg %p189
      %p338 = pneg %p186
      %p339 = pneg %p210
      %p340 = pneg %p207
      %p341 = pneg %p231
      %p342 = pneg %p228
      %p343 = pneg %p257
      %p344 = pneg %p254
      %p345 = scmp.lt.s32.totalorder %s21, 1
      %s346 = scalar_select %p345, %s21, 1
      %s347 = smul.addr %s346, 32
      %s348 = smul.addr %s347, 8
      %s349 = scalar_lea.vmem %s10, %s348
      %p350 = scmp.lt.s32.totalorder %s21, 1
      %s351 = scalar_select %p350, %s21, 1
      %s352 = smul.addr %s351, 32
      %s353 = smul.addr %s352, 8
      %s354 = scalar_lea.vmem %s0, %s353
      %p355 = scmp.lt.s32.totalorder %s21, 1
      %s356 = scalar_select %p355, %s21, 1
      %s357 = smul.addr %s356, 32
      %s358 = smul.addr %s357, 8
      %s359 = scalar_lea.vmem %s10, %s358
      %vm361 = vcmask 31744
      %362 = vst.msk [vmem:[#allocation2] sm:$0xff] %vm361, 0.0
      %363 = vst.msk [vmem:[#allocation2 + $0x8] sm:$0xff] %vm361, 0.0
      %vm364 = vcmask 25600
      %365 = vst.msk [vmem:[#allocation2 + $0x10] sm:$0x3] %vm364, 0.0
      %366 = vst.msk [vmem:[#allocation2 + $0x18] sm:$0xff] %vm361, 0.0
      %367 = vst.msk [vmem:[#allocation2 + $0x20] sm:$0xff] %vm361, 0.0
      %368 = vst.msk [vmem:[#allocation2 + $0x28] sm:$0x3] %vm364, 0.0
      %369 = vst.msk [vmem:[#allocation2 + $0x30] sm:$0xff] %vm361, 0.0
      %370 = vst.msk [vmem:[#allocation2 + $0x38] sm:$0xff] %vm361, 0.0
      %371 = vst.msk [vmem:[#allocation2 + $0x40] sm:$0x3] %vm364, 0.0
      %372 = vst.msk [vmem:[#allocation2 + $0x48] sm:$0xff] %vm361, 0.0
      %373 = vst.msk [vmem:[#allocation2 + $0x50] sm:$0xff] %vm361, 0.0
      %374 = vst.msk [vmem:[#allocation2 + $0x58] sm:$0x3] %vm364, 0.0
      %375 = vst.msk [vmem:[#allocation2 + $0x60] sm:$0xff] %vm361, 0.0
      %376 = vst.msk [vmem:[#allocation2 + $0x68] sm:$0xff] %vm361, 0.0
      %377 = vst.msk [vmem:[#allocation2 + $0x70] sm:$0x3] %vm364, 0.0
      %378 = vst.msk [vmem:[#allocation2 + $0x78] sm:$0xff] %vm361, 0.0
      %379 = vst.msk [vmem:[#allocation2 + $0x80] sm:$0xff] %vm361, 0.0
      %380 = vst.msk [vmem:[#allocation2 + $0x88] sm:$0x3] %vm364, 0.0
      %381 = vst.msk [vmem:[#allocation2 + $0x90] sm:$0xff] %vm361, 0.0
      %382 = vst.msk [vmem:[#allocation2 + $0x98] sm:$0xff] %vm361, 0.0
      %383 = vst.msk [vmem:[#allocation2 + $0xa0] sm:$0x3] %vm364, 0.0
      %384 = vst.msk [vmem:[#allocation2 + $0xa8] sm:$0xff] %vm361, 0.0
      %385 = vst.msk [vmem:[#allocation2 + $0xb0] sm:$0xff] %vm361, 0.0
      %386 = vst.msk [vmem:[#allocation2 + $0xb8] sm:$0x3] %vm364, 0.0
      %387 = vst.msk [vmem:[#allocation2 + $0xc0] sm:$0xff] %vm361, 0.0
      %388 = vst.msk [vmem:[#allocation2 + $0xc8] sm:$0xff] %vm361, 0.0
      %389 = vst.msk [vmem:[#allocation2 + $0xd0] sm:$0x3] %vm364, 0.0
      %390 = vst.msk [vmem:[#allocation2 + $0xd8] sm:$0xff] %vm361, 0.0
      %391 = vst.msk [vmem:[#allocation2 + $0xe0] sm:$0xff] %vm361, 0.0
      %392 = vst.msk [vmem:[#allocation2 + $0xe8] sm:$0x3] %vm364, 0.0
      %393 = vst.msk [vmem:[#allocation2 + $0xf0] sm:$0xff] %vm361, 0.0
      %394 = vst.msk [vmem:[#allocation2 + $0xf8] sm:$0xff] %vm361, 0.0
      %395 = vst.msk [vmem:[#allocation2 + $0x100] sm:$0x3] %vm364, 0.0
      %396 = vst.msk [vmem:[#allocation2 + $0x108] sm:$0xff] %vm361, 0.0
      %397 = vst.msk [vmem:[#allocation2 + $0x110] sm:$0xff] %vm361, 0.0
      %398 = vst.msk [vmem:[#allocation2 + $0x118] sm:$0x3] %vm364, 0.0
      %399 = vst.msk [vmem:[#allocation2 + $0x120] sm:$0xff] %vm361, 0.0
      %400 = vst.msk [vmem:[#allocation2 + $0x128] sm:$0xff] %vm361, 0.0
      %401 = vst.msk [vmem:[#allocation2 + $0x130] sm:$0x3] %vm364, 0.0
      %402 = vst.msk [vmem:[#allocation2 + $0x138] sm:$0xff] %vm361, 0.0
      %403 = vst.msk [vmem:[#allocation2 + $0x140] sm:$0xff] %vm361, 0.0
      %404 = vst.msk [vmem:[#allocation2 + $0x148] sm:$0x3] %vm364, 0.0
      %405 = vst.msk [vmem:[#allocation2 + $0x150] sm:$0xff] %vm361, 0.0
      %406 = vst.msk [vmem:[#allocation2 + $0x158] sm:$0xff] %vm361, 0.0
      %407 = vst.msk [vmem:[#allocation2 + $0x160] sm:$0x3] %vm364, 0.0
      %408 = vst.msk [vmem:[#allocation2 + $0x168] sm:$0xff] %vm361, 0.0
      %409 = vst.msk [vmem:[#allocation2 + $0x170] sm:$0xff] %vm361, 0.0
      %410 = vst.msk [vmem:[#allocation2 + $0x178] sm:$0x3] %vm364, 0.0
      %411 = vst.msk [vmem:[#allocation2 + $0x180] sm:$0xff] %vm361, 0.0
      %412 = vst.msk [vmem:[#allocation2 + $0x188] sm:$0xff] %vm361, 0.0
      %413 = vst.msk [vmem:[#allocation2 + $0x190] sm:$0x3] %vm364, 0.0
      %414 = vst.msk [vmem:[#allocation2 + $0x198] sm:$0xff] %vm361, 0.0
      %415 = vst.msk [vmem:[#allocation2 + $0x1a0] sm:$0xff] %vm361, 0.0
      %416 = vst.msk [vmem:[#allocation2 + $0x1a8] sm:$0x3] %vm364, 0.0
      %v417 = vld [vmem:[%s354] sm:$0xff]
      %v418 = vld [vmem:[%s354 + $0x8] sm:$0xff]
      %v419 = vld [vmem:[%s354 + $0x10] sm:$0xff]
      %v420 = vld [vmem:[%s354 + $0x18] sm:$0xff]
      %v421 = vld [vmem:[%s354 + $0x20] sm:$0xff]
      %v422 = vld [vmem:[%s354 + $0x28] sm:$0xff]
      %v423 = vld [vmem:[%s354 + $0x30] sm:$0xff]
      %v424 = vld [vmem:[%s354 + $0x38] sm:$0xff]
      %v425 = vld [vmem:[%s354 + $0x40] sm:$0xff]
      %v426 = vld [vmem:[%s354 + $0x48] sm:$0xff]
      %v427 = vld [vmem:[%s354 + $0x50] sm:$0xff]
      %v428 = vld [vmem:[%s354 + $0x58] sm:$0xff]
      %v429 = vld [vmem:[%s354 + $0x60] sm:$0xff]
      %v430 = vld [vmem:[%s354 + $0x68] sm:$0xff]
      %v431 = vld [vmem:[%s354 + $0x70] sm:$0xff]
      %v432 = vld [vmem:[%s354 + $0x78] sm:$0xff]
      %v433 = vld [vmem:[%s354 + $0x80] sm:$0xff]
      %v434 = vld [vmem:[%s354 + $0x88] sm:$0xff]
      %v435 = vld [vmem:[%s354 + $0x90] sm:$0xff]
      %v436 = vld [vmem:[%s354 + $0x98] sm:$0xff]
      %v437 = vld [vmem:[%s354 + $0xa0] sm:$0xff]
      %v438 = vld [vmem:[%s354 + $0xa8] sm:$0xff]
      %v439 = vld [vmem:[%s354 + $0xb0] sm:$0xff]
      %v440 = vld [vmem:[%s354 + $0xb8] sm:$0xff]
      %v441 = vld [vmem:[%s354 + $0xc0] sm:$0xff]
      %v442 = vld [vmem:[%s354 + $0xc8] sm:$0xff]
      %v443 = vld [vmem:[%s354 + $0xd0] sm:$0xff]
      %v444 = vld [vmem:[%s354 + $0xd8] sm:$0xff]
      %v445 = vld [vmem:[%s354 + $0xe0] sm:$0xff]
      %v446 = vld [vmem:[%s354 + $0xe8] sm:$0xff]
      %v447 = vld [vmem:[%s354 + $0xf0] sm:$0xff]
      %v448 = vld [vmem:[%s354 + $0xf8] sm:$0xff]
      %s449 = scalar_lea.vmem [#allocation2], 24
      %450 = vst.msk [vmem:[%s449 + $0x1] sm:$0xff] %vm361, %v417
      %451 = vst.msk [vmem:[%s449 + $0x9] sm:$0xff] %vm361, %v418
      %452 = vst.msk [vmem:[%s449 + $0x19] sm:$0xff] %vm361, %v419
      %453 = vst.msk [vmem:[%s449 + $0x21] sm:$0xff] %vm361, %v420
      %454 = vst.msk [vmem:[%s449 + $0x31] sm:$0xff] %vm361, %v421
      %455 = vst.msk [vmem:[%s449 + $0x39] sm:$0xff] %vm361, %v422
      %456 = vst.msk [vmem:[%s449 + $0x49] sm:$0xff] %vm361, %v423
      %457 = vst.msk [vmem:[%s449 + $0x51] sm:$0xff] %vm361, %v424
      %458 = vst.msk [vmem:[%s449 + $0x61] sm:$0xff] %vm361, %v425
      %459 = vst.msk [vmem:[%s449 + $0x69] sm:$0xff] %vm361, %v426
      %460 = vst.msk [vmem:[%s449 + $0x79] sm:$0xff] %vm361, %v427
      %461 = vst.msk [vmem:[%s449 + $0x81] sm:$0xff] %vm361, %v428
      %462 = vst.msk [vmem:[%s449 + $0x91] sm:$0xff] %vm361, %v429
      %463 = vst.msk [vmem:[%s449 + $0x99] sm:$0xff] %vm361, %v430
      %464 = vst.msk [vmem:[%s449 + $0xa9] sm:$0xff] %vm361, %v431
      %465 = vst.msk [vmem:[%s449 + $0xb1] sm:$0xff] %vm361, %v432
      %466 = vst.msk [vmem:[%s449 + $0xc1] sm:$0xff] %vm361, %v433
      %467 = vst.msk [vmem:[%s449 + $0xc9] sm:$0xff] %vm361, %v434
      %468 = vst.msk [vmem:[%s449 + $0xd9] sm:$0xff] %vm361, %v435
      %469 = vst.msk [vmem:[%s449 + $0xe1] sm:$0xff] %vm361, %v436
      %470 = vst.msk [vmem:[%s449 + $0xf1] sm:$0xff] %vm361, %v437
      %471 = vst.msk [vmem:[%s449 + $0xf9] sm:$0xff] %vm361, %v438
      %472 = vst.msk [vmem:[%s449 + $0x109] sm:$0xff] %vm361, %v439
      %473 = vst.msk [vmem:[%s449 + $0x111] sm:$0xff] %vm361, %v440
      %474 = vst.msk [vmem:[%s449 + $0x121] sm:$0xff] %vm361, %v441
      %475 = vst.msk [vmem:[%s449 + $0x129] sm:$0xff] %vm361, %v442
      %476 = vst.msk [vmem:[%s449 + $0x139] sm:$0xff] %vm361, %v443
      %477 = vst.msk [vmem:[%s449 + $0x141] sm:$0xff] %vm361, %v444
      %478 = vst.msk [vmem:[%s449 + $0x151] sm:$0xff] %vm361, %v445
      %479 = vst.msk [vmem:[%s449 + $0x159] sm:$0xff] %vm361, %v446
      %480 = vst.msk [vmem:[%s449 + $0x169] sm:$0xff] %vm361, %v447
      %481 = vst.msk [vmem:[%s449 + $0x171] sm:$0xff] %vm361, %v448
      %v482 = vld [vmem:[%s1] sm:$0x3]
      %v483 = vld [vmem:[%s1 + $0x2] sm:$0x3]
      %v484 = vld [vmem:[%s1 + $0x4] sm:$0x3]
      %v485 = vld [vmem:[%s1 + $0x6] sm:$0x3]
      %v486 = vld [vmem:[%s1 + $0x8] sm:$0x3]
      %v487 = vld [vmem:[%s1 + $0xa] sm:$0x3]
      %v488 = vld [vmem:[%s1 + $0xc] sm:$0x3]
      %v489 = vld [vmem:[%s1 + $0xe] sm:$0x3]
      %v490 = vld [vmem:[%s1 + $0x10] sm:$0x3]
      %v491 = vld [vmem:[#allocation2] sm:$0xff]
      %v492 = vld [vmem:[#allocation2 + $0x8] sm:$0xff]
      %v493 = vld [vmem:[#allocation2 + $0x18] sm:$0xff]
      %v494 = vld [vmem:[#allocation2 + $0x20] sm:$0xff]
      %v495 = vld [vmem:[#allocation2 + $0x30] sm:$0xff]
      %v496 = vld [vmem:[#allocation2 + $0x38] sm:$0xff]
      %v497 = vld [vmem:[#allocation2 + $0x48] sm:$0xff]
      %v498 = vld [vmem:[#allocation2 + $0x50] sm:$0xff]
      %v499 = vld [vmem:[#allocation2 + $0x60] sm:$0xff]
      %v500 = vld [vmem:[#allocation2 + $0x68] sm:$0xff]
      %v501 = vld [vmem:[#allocation2 + $0x78] sm:$0xff]
      %v502 = vld [vmem:[#allocation2 + $0x80] sm:$0xff]
      %v503 = vld [vmem:[#allocation2 + $0x90] sm:$0xff]
      %v504 = vld [vmem:[#allocation2 + $0x98] sm:$0xff]
      %v505 = vld [vmem:[#allocation2 + $0xa8] sm:$0xff]
      %v506 = vld [vmem:[#allocation2 + $0xb0] sm:$0xff]
      %v507 = vld [vmem:[#allocation2 + $0xc0] sm:$0xff]
      %v508 = vld [vmem:[#allocation2 + $0xc8] sm:$0xff]
      %v509 = vld [vmem:[#allocation2 + $0xd8] sm:$0xff]
      %v510 = vld [vmem:[#allocation2 + $0xe0] sm:$0xff]
      %v511 = vld [vmem:[#allocation2 + $0xf0] sm:$0xff]
      %v512 = vld [vmem:[#allocation2 + $0xf8] sm:$0xff]
      %v513 = vld [vmem:[#allocation2 + $0x108] sm:$0xff]
      %v514 = vld [vmem:[#allocation2 + $0x110] sm:$0xff]
      %v515 = vld [vmem:[#allocation2 + $0x120] sm:$0xff]
      %v516 = vld [vmem:[#allocation2 + $0x128] sm:$0xff]
      %v517 = vld [vmem:[#allocation2 + $0x138] sm:$0xff]
      %v518 = vld [vmem:[#allocation2 + $0x140] sm:$0xff]
      %v519 = vld [vmem:[#allocation2 + $0x150] sm:$0xff]
      %v520 = vld [vmem:[#allocation2 + $0x158] sm:$0xff]
      %v521 = vld [vmem:[#allocation2 + $0x168] sm:$0xff]
      %v522 = vld [vmem:[#allocation2 + $0x170] sm:$0xff]
      %v523 = vpack.c.bf16 %v492, %v491
      %v524 = vpack.c.bf16 %v494, %v493
      %v525 = vpack.c.bf16 %v496, %v495
      %v526 = vpack.c.bf16 %v498, %v497
      %v527 = vpack.c.bf16 %v500, %v499
      %v528 = vpack.c.bf16 %v502, %v501
      %v529 = vpack.c.bf16 %v504, %v503
      %v530 = vpack.c.bf16 %v506, %v505
      %v531 = vpack.c.bf16 %v508, %v507
      %v532 = vpack.c.bf16 %v510, %v509
      %v533 = vpack.c.bf16 %v512, %v511
      %v534 = vpack.c.bf16 %v514, %v513
      %v535 = vpack.c.bf16 %v516, %v515
      %v536 = vpack.c.bf16 %v518, %v517
      %v537 = vpack.c.bf16 %v520, %v519
      %v538 = vpack.c.bf16 %v522, %v521
      %v539 = vld [vmem:[#allocation2 + $0x1] sm:$0xff]
      %v540 = vld [vmem:[#allocation2 + $0x9] sm:$0xff]
      %v541 = vld [vmem:[#allocation2 + $0x19] sm:$0xff]
      %v542 = vld [vmem:[#allocation2 + $0x21] sm:$0xff]
      %v543 = vld [vmem:[#allocation2 + $0x31] sm:$0xff]
      %v544 = vld [vmem:[#allocation2 + $0x39] sm:$0xff]
      %v545 = vld [vmem:[#allocation2 + $0x49] sm:$0xff]
      %v546 = vld [vmem:[#allocation2 + $0x51] sm:$0xff]
      %v547 = vld [vmem:[#allocation2 + $0x61] sm:$0xff]
      %v548 = vld [vmem:[#allocation2 + $0x69] sm:$0xff]
      %v549 = vld [vmem:[#allocation2 + $0x79] sm:$0xff]
      %v550 = vld [vmem:[#allocation2 + $0x81] sm:$0xff]
      %v551 = vld [vmem:[#allocation2 + $0x91] sm:$0xff]
      %v552 = vld [vmem:[#allocation2 + $0x99] sm:$0xff]
      %v553 = vld [vmem:[#allocation2 + $0xa9] sm:$0xff]
      %v554 = vld [vmem:[#allocation2 + $0xb1] sm:$0xff]
      %v555 = vld [vmem:[#allocation2 + $0xc1] sm:$0xff]
      %v556 = vld [vmem:[#allocation2 + $0xc9] sm:$0xff]
      %v557 = vld [vmem:[#allocation2 + $0xd9] sm:$0xff]
      %v558 = vld [vmem:[#allocation2 + $0xe1] sm:$0xff]
      %v559 = vld [vmem:[#allocation2 + $0xf1] sm:$0xff]
      %v560 = vld [vmem:[#allocation2 + $0xf9] sm:$0xff]
      %v561 = vld [vmem:[#allocation2 + $0x109] sm:$0xff]
      %v562 = vld [vmem:[#allocation2 + $0x111] sm:$0xff]
      %v563 = vld [vmem:[#allocation2 + $0x121] sm:$0xff]
      %v564 = vld [vmem:[#allocation2 + $0x129] sm:$0xff]
      %v565 = vld [vmem:[#allocation2 + $0x139] sm:$0xff]
      %v566 = vld [vmem:[#allocation2 + $0x141] sm:$0xff]
      %v567 = vld [vmem:[#allocation2 + $0x151] sm:$0xff]
      %v568 = vld [vmem:[#allocation2 + $0x159] sm:$0xff]
      %v569 = vld [vmem:[#allocation2 + $0x169] sm:$0xff]
      %v570 = vld [vmem:[#allocation2 + $0x171] sm:$0xff]
      %v571 = vpack.c.bf16 %v540, %v539
      %v572 = vpack.c.bf16 %v542, %v541
      %v573 = vpack.c.bf16 %v544, %v543
      %v574 = vpack.c.bf16 %v546, %v545
      %v575 = vpack.c.bf16 %v548, %v547
      %v576 = vpack.c.bf16 %v550, %v549
      %v577 = vpack.c.bf16 %v552, %v551
      %v578 = vpack.c.bf16 %v554, %v553
      %v579 = vpack.c.bf16 %v556, %v555
      %v580 = vpack.c.bf16 %v558, %v557
      %v581 = vpack.c.bf16 %v560, %v559
      %v582 = vpack.c.bf16 %v562, %v561
      %v583 = vpack.c.bf16 %v564, %v563
      %v584 = vpack.c.bf16 %v566, %v565
      %v585 = vpack.c.bf16 %v568, %v567
      %v586 = vpack.c.bf16 %v570, %v569
      %v588 = vsel %vm361, %v571, 0
      %v591 = vsel %vm361, %v572, 0
      %v594 = vsel %vm361, %v573, 0
      %v597 = vsel %vm361, %v574, 0
      %v600 = vsel %vm361, %v575, 0
      %v603 = vsel %vm361, %v576, 0
      %v606 = vsel %vm361, %v577, 0
      %v609 = vsel %vm361, %v578, 0
      %v612 = vsel %vm361, %v579, 0
      %v615 = vsel %vm361, %v580, 0
      %v618 = vsel %vm361, %v581, 0
      %v621 = vsel %vm361, %v582, 0
      %v624 = vsel %vm361, %v583, 0
      %v627 = vsel %vm361, %v584, 0
      %v630 = vsel %vm361, %v585, 0
      %v633 = vsel %vm361, %v586, 0
      %vm635 = vcmask 1041408
      %v637 = vsel %vm635, %v483, 0
      %639 = vmatpush.bf16.msra.mxu0 0
      %640 = vmatpush.bf16.msra.mxu0 0
      %641 = vmatpush.bf16.msra.mxu0 0
      %642 = vmatpush.bf16.msra.mxu0 0
      %643 = vmatpush.bf16.msra.mxu0 0
      %644 = vmatpush.bf16.msra.mxu0 0
      %645 = vmatpush.bf16.msra.mxu0 0
      %646 = vmatpush.bf16.msra.mxu0 %v637
      %647 = vmatmul.bf16.gmra.mxu0 %v588
      %v648 = vpop.f32.mrf.mxu0
      %v649 = vadd.f32 0.0, %v648
      %v650 = vpop.f32.mrf.mxu0
      %v651 = vadd.f32 0.0, %v650
      %652 = vmatmul.bf16.gmra.mxu0 %v591
      %v653 = vpop.f32.mrf.mxu0
      %v654 = vadd.f32 0.0, %v653
      %v655 = vpop.f32.mrf.mxu0
      %v656 = vadd.f32 0.0, %v655
      %657 = vmatmul.bf16.gmra.mxu0 %v594
      %v658 = vpop.f32.mrf.mxu0
      %v659 = vadd.f32 0.0, %v658
      %v660 = vpop.f32.mrf.mxu0
      %v661 = vadd.f32 0.0, %v660
      %662 = vmatmul.bf16.gmra.mxu0 %v597
      %v663 = vpop.f32.mrf.mxu0
      %v664 = vadd.f32 0.0, %v663
      %v665 = vpop.f32.mrf.mxu0
      %v666 = vadd.f32 0.0, %v665
      %667 = vmatmul.bf16.gmra.mxu0 %v600
      %v668 = vpop.f32.mrf.mxu0
      %v669 = vadd.f32 0.0, %v668
      %v670 = vpop.f32.mrf.mxu0
      %v671 = vadd.f32 0.0, %v670
      %672 = vmatmul.bf16.gmra.mxu0 %v603
      %v673 = vpop.f32.mrf.mxu0
      %v674 = vadd.f32 0.0, %v673
      %v675 = vpop.f32.mrf.mxu0
      %v676 = vadd.f32 0.0, %v675
      %677 = vmatmul.bf16.gmra.mxu0 %v606
      %v678 = vpop.f32.mrf.mxu0
      %v679 = vadd.f32 0.0, %v678
      %v680 = vpop.f32.mrf.mxu0
      %v681 = vadd.f32 0.0, %v680
      %682 = vmatmul.bf16.gmra.mxu0 %v609
      %v683 = vpop.f32.mrf.mxu0
      %v684 = vadd.f32 0.0, %v683
      %v685 = vpop.f32.mrf.mxu0
      %v686 = vadd.f32 0.0, %v685
      %687 = vmatmul.bf16.gmra.mxu0 %v612
      %v688 = vpop.f32.mrf.mxu0
      %v689 = vadd.f32 0.0, %v688
      %v690 = vpop.f32.mrf.mxu0
      %v691 = vadd.f32 0.0, %v690
      %692 = vmatmul.bf16.gmra.mxu0 %v615
      %v693 = vpop.f32.mrf.mxu0
      %v694 = vadd.f32 0.0, %v693
      %v695 = vpop.f32.mrf.mxu0
      %v696 = vadd.f32 0.0, %v695
      %697 = vmatmul.bf16.gmra.mxu0 %v618
      %v698 = vpop.f32.mrf.mxu0
      %v699 = vadd.f32 0.0, %v698
      %v700 = vpop.f32.mrf.mxu0
      %v701 = vadd.f32 0.0, %v700
      %702 = vmatmul.bf16.gmra.mxu0 %v621
      %v703 = vpop.f32.mrf.mxu0
      %v704 = vadd.f32 0.0, %v703
      %v705 = vpop.f32.mrf.mxu0
      %v706 = vadd.f32 0.0, %v705
      %707 = vmatmul.bf16.gmra.mxu0 %v624
      %v708 = vpop.f32.mrf.mxu0
      %v709 = vadd.f32 0.0, %v708
      %v710 = vpop.f32.mrf.mxu0
      %v711 = vadd.f32 0.0, %v710
      %712 = vmatmul.bf16.gmra.mxu0 %v627
      %v713 = vpop.f32.mrf.mxu0
      %v714 = vadd.f32 0.0, %v713
      %v715 = vpop.f32.mrf.mxu0
      %v716 = vadd.f32 0.0, %v715
      %717 = vmatmul.bf16.gmra.mxu0 %v630
      %v718 = vpop.f32.mrf.mxu0
      %v719 = vadd.f32 0.0, %v718
      %v720 = vpop.f32.mrf.mxu0
      %v721 = vadd.f32 0.0, %v720
      %722 = vmatmul.bf16.gmra.mxu0 %v633
      %v723 = vpop.f32.mrf.mxu0
      %v724 = vadd.f32 0.0, %v723
      %v725 = vpop.f32.mrf.mxu0
      %v726 = vadd.f32 0.0, %v725
      %727 = vdwg.mxu0
      %v729 = vsel %vm361, %v523, 0
      %v732 = vsel %vm361, %v524, 0
      %v735 = vsel %vm361, %v525, 0
      %v738 = vsel %vm361, %v526, 0
      %v741 = vsel %vm361, %v527, 0
      %v744 = vsel %vm361, %v528, 0
      %v747 = vsel %vm361, %v529, 0
      %v750 = vsel %vm361, %v530, 0
      %v753 = vsel %vm361, %v531, 0
      %v756 = vsel %vm361, %v532, 0
      %v759 = vsel %vm361, %v533, 0
      %v762 = vsel %vm361, %v534, 0
      %v765 = vsel %vm361, %v535, 0
      %v768 = vsel %vm361, %v536, 0
      %v771 = vsel %vm361, %v537, 0
      %v774 = vsel %vm361, %v538, 0
      %v777 = vsel %vm635, %v482, 0
      %779 = vmatpush.bf16.msra.mxu0 0
      %780 = vmatpush.bf16.msra.mxu0 0
      %781 = vmatpush.bf16.msra.mxu0 0
      %782 = vmatpush.bf16.msra.mxu0 0
      %783 = vmatpush.bf16.msra.mxu0 0
      %784 = vmatpush.bf16.msra.mxu0 0
      %785 = vmatpush.bf16.msra.mxu0 0
      %786 = vmatpush.bf16.msra.mxu0 %v777
      %787 = vmatmul.bf16.gmra.mxu0 %v729
      %v788 = vpop.f32.mrf.mxu0
      %v789 = vadd.f32 %v649, %v788
      %v790 = vpop.f32.mrf.mxu0
      %v791 = vadd.f32 %v651, %v790
      %792 = vmatmul.bf16.gmra.mxu0 %v732
      %v793 = vpop.f32.mrf.mxu0
      %v794 = vadd.f32 %v654, %v793
      %v795 = vpop.f32.mrf.mxu0
      %v796 = vadd.f32 %v656, %v795
      %797 = vmatmul.bf16.gmra.mxu0 %v735
      %v798 = vpop.f32.mrf.mxu0
      %v799 = vadd.f32 %v659, %v798
      %v800 = vpop.f32.mrf.mxu0
      %v801 = vadd.f32 %v661, %v800
      %802 = vmatmul.bf16.gmra.mxu0 %v738
      %v803 = vpop.f32.mrf.mxu0
      %v804 = vadd.f32 %v664, %v803
      %v805 = vpop.f32.mrf.mxu0
      %v806 = vadd.f32 %v666, %v805
      %807 = vmatmul.bf16.gmra.mxu0 %v741
      %v808 = vpop.f32.mrf.mxu0
      %v809 = vadd.f32 %v669, %v808
      %v810 = vpop.f32.mrf.mxu0
      %v811 = vadd.f32 %v671, %v810
      %812 = vmatmul.bf16.gmra.mxu0 %v744
      %v813 = vpop.f32.mrf.mxu0
      %v814 = vadd.f32 %v674, %v813
      %v815 = vpop.f32.mrf.mxu0
      %v816 = vadd.f32 %v676, %v815
      %817 = vmatmul.bf16.gmra.mxu0 %v747
      %v818 = vpop.f32.mrf.mxu0
      %v819 = vadd.f32 %v679, %v818
      %v820 = vpop.f32.mrf.mxu0
      %v821 = vadd.f32 %v681, %v820
      %822 = vmatmul.bf16.gmra.mxu0 %v750
      %v823 = vpop.f32.mrf.mxu0
      %v824 = vadd.f32 %v684, %v823
      %v825 = vpop.f32.mrf.mxu0
      %v826 = vadd.f32 %v686, %v825
      %827 = vmatmul.bf16.gmra.mxu0 %v753
      %v828 = vpop.f32.mrf.mxu0
      %v829 = vadd.f32 %v689, %v828
      %v830 = vpop.f32.mrf.mxu0
      %v831 = vadd.f32 %v691, %v830
      %832 = vmatmul.bf16.gmra.mxu0 %v756
      %v833 = vpop.f32.mrf.mxu0
      %v834 = vadd.f32 %v694, %v833
      %v835 = vpop.f32.mrf.mxu0
      %v836 = vadd.f32 %v696, %v835
      %837 = vmatmul.bf16.gmra.mxu0 %v759
      %v838 = vpop.f32.mrf.mxu0
      %v839 = vadd.f32 %v699, %v838
      %v840 = vpop.f32.mrf.mxu0
      %v841 = vadd.f32 %v701, %v840
      %842 = vmatmul.bf16.gmra.mxu0 %v762
      %v843 = vpop.f32.mrf.mxu0
      %v844 = vadd.f32 %v704, %v843
      %v845 = vpop.f32.mrf.mxu0
      %v846 = vadd.f32 %v706, %v845
      %847 = vmatmul.bf16.gmra.mxu0 %v765
      %v848 = vpop.f32.mrf.mxu0
      %v849 = vadd.f32 %v709, %v848
      %v850 = vpop.f32.mrf.mxu0
      %v851 = vadd.f32 %v711, %v850
      %852 = vmatmul.bf16.gmra.mxu0 %v768
      %v853 = vpop.f32.mrf.mxu0
      %v854 = vadd.f32 %v714, %v853
      %v855 = vpop.f32.mrf.mxu0
      %v856 = vadd.f32 %v716, %v855
      %857 = vmatmul.bf16.gmra.mxu0 %v771
      %v858 = vpop.f32.mrf.mxu0
      %v859 = vadd.f32 %v719, %v858
      %v860 = vpop.f32.mrf.mxu0
      %v861 = vadd.f32 %v721, %v860
      %862 = vmatmul.bf16.gmra.mxu0 %v774
      %v863 = vpop.f32.mrf.mxu0
      %v864 = vadd.f32 %v724, %v863
      %v865 = vpop.f32.mrf.mxu0
      %v866 = vadd.f32 %v726, %v865
      %867 = vdwg.mxu0
      %v868 = vld [vmem:[#allocation2 + $0x2] sm:$0xff]
      %v869 = vld [vmem:[#allocation2 + $0xa] sm:$0xff]
      %v870 = vld [vmem:[#allocation2 + $0x1a] sm:$0xff]
      %v871 = vld [vmem:[#allocation2 + $0x22] sm:$0xff]
      %v872 = vld [vmem:[#allocation2 + $0x32] sm:$0xff]
      %v873 = vld [vmem:[#allocation2 + $0x3a] sm:$0xff]
      %v874 = vld [vmem:[#allocation2 + $0x4a] sm:$0xff]
      %v875 = vld [vmem:[#allocation2 + $0x52] sm:$0xff]
      %v876 = vld [vmem:[#allocation2 + $0x62] sm:$0xff]
      %v877 = vld [vmem:[#allocation2 + $0x6a] sm:$0xff]
      %v878 = vld [vmem:[#allocation2 + $0x7a] sm:$0xff]
      %v879 = vld [vmem:[#allocation2 + $0x82] sm:$0xff]
      %v880 = vld [vmem:[#allocation2 + $0x92] sm:$0xff]
      %v881 = vld [vmem:[#allocation2 + $0x9a] sm:$0xff]
      %v882 = vld [vmem:[#allocation2 + $0xaa] sm:$0xff]
      %v883 = vld [vmem:[#allocation2 + $0xb2] sm:$0xff]
      %v884 = vld [vmem:[#allocation2 + $0xc2] sm:$0xff]
      %v885 = vld [vmem:[#allocation2 + $0xca] sm:$0xff]
      %v886 = vld [vmem:[#allocation2 + $0xda] sm:$0xff]
      %v887 = vld [vmem:[#allocation2 + $0xe2] sm:$0xff]
      %v888 = vld [vmem:[#allocation2 + $0xf2] sm:$0xff]
      %v889 = vld [vmem:[#allocation2 + $0xfa] sm:$0xff]
      %v890 = vld [vmem:[#allocation2 + $0x10a] sm:$0xff]
      %v891 = vld [vmem:[#allocation2 + $0x112] sm:$0xff]
      %v892 = vld [vmem:[#allocation2 + $0x122] sm:$0xff]
      %v893 = vld [vmem:[#allocation2 + $0x12a] sm:$0xff]
      %v894 = vld [vmem:[#allocation2 + $0x13a] sm:$0xff]
      %v895 = vld [vmem:[#allocation2 + $0x142] sm:$0xff]
      %v896 = vld [vmem:[#allocation2 + $0x152] sm:$0xff]
      %v897 = vld [vmem:[#allocation2 + $0x15a] sm:$0xff]
      %v898 = vld [vmem:[#allocation2 + $0x16a] sm:$0xff]
      %v899 = vld [vmem:[#allocation2 + $0x172] sm:$0xff]
      %v900 = vpack.c.bf16 %v869, %v868
      %v901 = vpack.c.bf16 %v871, %v870
      %v902 = vpack.c.bf16 %v873, %v872
      %v903 = vpack.c.bf16 %v875, %v874
      %v904 = vpack.c.bf16 %v877, %v876
      %v905 = vpack.c.bf16 %v879, %v878
      %v906 = vpack.c.bf16 %v881, %v880
      %v907 = vpack.c.bf16 %v883, %v882
      %v908 = vpack.c.bf16 %v885, %v884
      %v909 = vpack.c.bf16 %v887, %v886
      %v910 = vpack.c.bf16 %v889, %v888
      %v911 = vpack.c.bf16 %v891, %v890
      %v912 = vpack.c.bf16 %v893, %v892
      %v913 = vpack.c.bf16 %v895, %v894
      %v914 = vpack.c.bf16 %v897, %v896
      %v915 = vpack.c.bf16 %v899, %v898
      %v917 = vsel %vm361, %v900, 0
      %v920 = vsel %vm361, %v901, 0
      %v923 = vsel %vm361, %v902, 0
      %v926 = vsel %vm361, %v903, 0
      %v929 = vsel %vm361, %v904, 0
      %v932 = vsel %vm361, %v905, 0
      %v935 = vsel %vm361, %v906, 0
      %v938 = vsel %vm361, %v907, 0
      %v941 = vsel %vm361, %v908, 0
      %v944 = vsel %vm361, %v909, 0
      %v947 = vsel %vm361, %v910, 0
      %v950 = vsel %vm361, %v911, 0
      %v953 = vsel %vm361, %v912, 0
      %v956 = vsel %vm361, %v913, 0
      %v959 = vsel %vm361, %v914, 0
      %v962 = vsel %vm361, %v915, 0
      %v965 = vsel %vm635, %v484, 0
      %967 = vmatpush.bf16.msra.mxu0 0
      %968 = vmatpush.bf16.msra.mxu0 0
      %969 = vmatpush.bf16.msra.mxu0 0
      %970 = vmatpush.bf16.msra.mxu0 0
      %971 = vmatpush.bf16.msra.mxu0 0
      %972 = vmatpush.bf16.msra.mxu0 0
      %973 = vmatpush.bf16.msra.mxu0 0
      %974 = vmatpush.bf16.msra.mxu0 %v965
      %975 = vmatmul.bf16.gmra.mxu0 %v917
      %v976 = vpop.f32.mrf.mxu0
      %v977 = vadd.f32 0.0, %v976
      %v978 = vpop.f32.mrf.mxu0
      %v979 = vadd.f32 0.0, %v978
      %980 = vmatmul.bf16.gmra.mxu0 %v920
      %v981 = vpop.f32.mrf.mxu0
      %v982 = vadd.f32 0.0, %v981
      %v983 = vpop.f32.mrf.mxu0
      %v984 = vadd.f32 0.0, %v983
      %985 = vmatmul.bf16.gmra.mxu0 %v923
      %v986 = vpop.f32.mrf.mxu0
      %v987 = vadd.f32 0.0, %v986
      %v988 = vpop.f32.mrf.mxu0
      %v989 = vadd.f32 0.0, %v988
      %990 = vmatmul.bf16.gmra.mxu0 %v926
      %v991 = vpop.f32.mrf.mxu0
      %v992 = vadd.f32 0.0, %v991
      %v993 = vpop.f32.mrf.mxu0
      %v994 = vadd.f32 0.0, %v993
      %995 = vmatmul.bf16.gmra.mxu0 %v929
      %v996 = vpop.f32.mrf.mxu0
      %v997 = vadd.f32 0.0, %v996
      %v998 = vpop.f32.mrf.mxu0
      %v999 = vadd.f32 0.0, %v998
      %1000 = vmatmul.bf16.gmra.mxu0 %v932
      %v1001 = vpop.f32.mrf.mxu0
      %v1002 = vadd.f32 0.0, %v1001
      %v1003 = vpop.f32.mrf.mxu0
      %v1004 = vadd.f32 0.0, %v1003
      %1005 = vmatmul.bf16.gmra.mxu0 %v935
      %v1006 = vpop.f32.mrf.mxu0
      %v1007 = vadd.f32 0.0, %v1006
      %v1008 = vpop.f32.mrf.mxu0
      %v1009 = vadd.f32 0.0, %v1008
      %1010 = vmatmul.bf16.gmra.mxu0 %v938
      %v1011 = vpop.f32.mrf.mxu0
      %v1012 = vadd.f32 0.0, %v1011
      %v1013 = vpop.f32.mrf.mxu0
      %v1014 = vadd.f32 0.0, %v1013
      %1015 = vmatmul.bf16.gmra.mxu0 %v941
      %v1016 = vpop.f32.mrf.mxu0
      %v1017 = vadd.f32 0.0, %v1016
      %v1018 = vpop.f32.mrf.mxu0
      %v1019 = vadd.f32 0.0, %v1018
      %1020 = vmatmul.bf16.gmra.mxu0 %v944
      %v1021 = vpop.f32.mrf.mxu0
      %v1022 = vadd.f32 0.0, %v1021
      %v1023 = vpop.f32.mrf.mxu0
      %v1024 = vadd.f32 0.0, %v1023
      %1025 = vmatmul.bf16.gmra.mxu0 %v947
      %v1026 = vpop.f32.mrf.mxu0
      %v1027 = vadd.f32 0.0, %v1026
      %v1028 = vpop.f32.mrf.mxu0
      %v1029 = vadd.f32 0.0, %v1028
      %1030 = vmatmul.bf16.gmra.mxu0 %v950
      %v1031 = vpop.f32.mrf.mxu0
      %v1032 = vadd.f32 0.0, %v1031
      %v1033 = vpop.f32.mrf.mxu0
      %v1034 = vadd.f32 0.0, %v1033
      %1035 = vmatmul.bf16.gmra.mxu0 %v953
      %v1036 = vpop.f32.mrf.mxu0
      %v1037 = vadd.f32 0.0, %v1036
      %v1038 = vpop.f32.mrf.mxu0
      %v1039 = vadd.f32 0.0, %v1038
      %1040 = vmatmul.bf16.gmra.mxu0 %v956
      %v1041 = vpop.f32.mrf.mxu0
      %v1042 = vadd.f32 0.0, %v1041
      %v1043 = vpop.f32.mrf.mxu0
      %v1044 = vadd.f32 0.0, %v1043
      %1045 = vmatmul.bf16.gmra.mxu0 %v959
      %v1046 = vpop.f32.mrf.mxu0
      %v1047 = vadd.f32 0.0, %v1046
      %v1048 = vpop.f32.mrf.mxu0
      %v1049 = vadd.f32 0.0, %v1048
      %1050 = vmatmul.bf16.gmra.mxu0 %v962
      %v1051 = vpop.f32.mrf.mxu0
      %v1052 = vadd.f32 0.0, %v1051
      %v1053 = vpop.f32.mrf.mxu0
      %v1054 = vadd.f32 0.0, %v1053
      %1055 = vdwg.mxu0
      %v1056 = vadd.f32 %v789, %v977
      %v1057 = vadd.f32 %v791, %v979
      %v1058 = vadd.f32 %v794, %v982
      %v1059 = vadd.f32 %v796, %v984
      %v1060 = vadd.f32 %v799, %v987
      %v1061 = vadd.f32 %v801, %v989
      %v1062 = vadd.f32 %v804, %v992
      %v1063 = vadd.f32 %v806, %v994
      %v1064 = vadd.f32 %v809, %v997
      %v1065 = vadd.f32 %v811, %v999
      %v1066 = vadd.f32 %v814, %v1002
      %v1067 = vadd.f32 %v816, %v1004
      %v1068 = vadd.f32 %v819, %v1007
      %v1069 = vadd.f32 %v821, %v1009
      %v1070 = vadd.f32 %v824, %v1012
      %v1071 = vadd.f32 %v826, %v1014
      %v1072 = vadd.f32 %v829, %v1017
      %v1073 = vadd.f32 %v831, %v1019
      %v1074 = vadd.f32 %v834, %v1022
      %v1075 = vadd.f32 %v836, %v1024
      %v1076 = vadd.f32 %v839, %v1027
      %v1077 = vadd.f32 %v841, %v1029
      %v1078 = vadd.f32 %v844, %v1032
      %v1079 = vadd.f32 %v846, %v1034
      %v1080 = vadd.f32 %v849, %v1037
      %v1081 = vadd.f32 %v851, %v1039
      %v1082 = vadd.f32 %v854, %v1042
      %v1083 = vadd.f32 %v856, %v1044
      %v1084 = vadd.f32 %v859, %v1047
      %v1085 = vadd.f32 %v861, %v1049
      %v1086 = vadd.f32 %v864, %v1052
      %v1087 = vadd.f32 %v866, %v1054
      %v1088 = vld [vmem:[%s449] sm:$0xff]
      %v1089 = vld [vmem:[%s449 + $0x8] sm:$0xff]
      %v1090 = vld [vmem:[%s449 + $0x18] sm:$0xff]
      %v1091 = vld [vmem:[%s449 + $0x20] sm:$0xff]
      %v1092 = vld [vmem:[%s449 + $0x30] sm:$0xff]
      %v1093 = vld [vmem:[%s449 + $0x38] sm:$0xff]
      %v1094 = vld [vmem:[%s449 + $0x48] sm:$0xff]
      %v1095 = vld [vmem:[%s449 + $0x50] sm:$0xff]
      %v1096 = vld [vmem:[%s449 + $0x60] sm:$0xff]
      %v1097 = vld [vmem:[%s449 + $0x68] sm:$0xff]
      %v1098 = vld [vmem:[%s449 + $0x78] sm:$0xff]
      %v1099 = vld [vmem:[%s449 + $0x80] sm:$0xff]
      %v1100 = vld [vmem:[%s449 + $0x90] sm:$0xff]
      %v1101 = vld [vmem:[%s449 + $0x98] sm:$0xff]
      %v1102 = vld [vmem:[%s449 + $0xa8] sm:$0xff]
      %v1103 = vld [vmem:[%s449 + $0xb0] sm:$0xff]
      %v1104 = vld [vmem:[%s449 + $0xc0] sm:$0xff]
      %v1105 = vld [vmem:[%s449 + $0xc8] sm:$0xff]
      %v1106 = vld [vmem:[%s449 + $0xd8] sm:$0xff]
      %v1107 = vld [vmem:[%s449 + $0xe0] sm:$0xff]
      %v1108 = vld [vmem:[%s449 + $0xf0] sm:$0xff]
      %v1109 = vld [vmem:[%s449 + $0xf8] sm:$0xff]
      %v1110 = vld [vmem:[%s449 + $0x108] sm:$0xff]
      %v1111 = vld [vmem:[%s449 + $0x110] sm:$0xff]
      %v1112 = vld [vmem:[%s449 + $0x120] sm:$0xff]
      %v1113 = vld [vmem:[%s449 + $0x128] sm:$0xff]
      %v1114 = vld [vmem:[%s449 + $0x138] sm:$0xff]
      %v1115 = vld [vmem:[%s449 + $0x140] sm:$0xff]
      %v1116 = vld [vmem:[%s449 + $0x150] sm:$0xff]
      %v1117 = vld [vmem:[%s449 + $0x158] sm:$0xff]
      %v1118 = vld [vmem:[%s449 + $0x168] sm:$0xff]
      %v1119 = vld [vmem:[%s449 + $0x170] sm:$0xff]
      %v1120 = vpack.c.bf16 %v1089, %v1088
      %v1121 = vpack.c.bf16 %v1091, %v1090
      %v1122 = vpack.c.bf16 %v1093, %v1092
      %v1123 = vpack.c.bf16 %v1095, %v1094
      %v1124 = vpack.c.bf16 %v1097, %v1096
      %v1125 = vpack.c.bf16 %v1099, %v1098
      %v1126 = vpack.c.bf16 %v1101, %v1100
      %v1127 = vpack.c.bf16 %v1103, %v1102
      %v1128 = vpack.c.bf16 %v1105, %v1104
      %v1129 = vpack.c.bf16 %v1107, %v1106
      %v1130 = vpack.c.bf16 %v1109, %v1108
      %v1131 = vpack.c.bf16 %v1111, %v1110
      %v1132 = vpack.c.bf16 %v1113, %v1112
      %v1133 = vpack.c.bf16 %v1115, %v1114
      %v1134 = vpack.c.bf16 %v1117, %v1116
      %v1135 = vpack.c.bf16 %v1119, %v1118
      %v1137 = vsel %vm361, %v1120, 0
      %v1140 = vsel %vm361, %v1121, 0
      %v1143 = vsel %vm361, %v1122, 0
      %v1146 = vsel %vm361, %v1123, 0
      %v1149 = vsel %vm361, %v1124, 0
      %v1152 = vsel %vm361, %v1125, 0
      %v1155 = vsel %vm361, %v1126, 0
      %v1158 = vsel %vm361, %v1127, 0
      %v1161 = vsel %vm361, %v1128, 0
      %v1164 = vsel %vm361, %v1129, 0
      %v1167 = vsel %vm361, %v1130, 0
      %v1170 = vsel %vm361, %v1131, 0
      %v1173 = vsel %vm361, %v1132, 0
      %v1176 = vsel %vm361, %v1133, 0
      %v1179 = vsel %vm361, %v1134, 0
      %v1182 = vsel %vm361, %v1135, 0
      %v1185 = vsel %vm635, %v485, 0
      %1187 = vmatpush.bf16.msra.mxu0 0
      %1188 = vmatpush.bf16.msra.mxu0 0
      %1189 = vmatpush.bf16.msra.mxu0 0
      %1190 = vmatpush.bf16.msra.mxu0 0
      %1191 = vmatpush.bf16.msra.mxu0 0
      %1192 = vmatpush.bf16.msra.mxu0 0
      %1193 = vmatpush.bf16.msra.mxu0 0
      %1194 = vmatpush.bf16.msra.mxu0 %v1185
      %1195 = vmatmul.bf16.gmra.mxu0 %v1137
      %v1196 = vpop.f32.mrf.mxu0
      %v1197 = vadd.f32 0.0, %v1196
      %v1198 = vpop.f32.mrf.mxu0
      %v1199 = vadd.f32 0.0, %v1198
      %1200 = vmatmul.bf16.gmra.mxu0 %v1140
      %v1201 = vpop.f32.mrf.mxu0
      %v1202 = vadd.f32 0.0, %v1201
      %v1203 = vpop.f32.mrf.mxu0
      %v1204 = vadd.f32 0.0, %v1203
      %1205 = vmatmul.bf16.gmra.mxu0 %v1143
      %v1206 = vpop.f32.mrf.mxu0
      %v1207 = vadd.f32 0.0, %v1206
      %v1208 = vpop.f32.mrf.mxu0
      %v1209 = vadd.f32 0.0, %v1208
      %1210 = vmatmul.bf16.gmra.mxu0 %v1146
      %v1211 = vpop.f32.mrf.mxu0
      %v1212 = vadd.f32 0.0, %v1211
      %v1213 = vpop.f32.mrf.mxu0
      %v1214 = vadd.f32 0.0, %v1213
      %1215 = vmatmul.bf16.gmra.mxu0 %v1149
      %v1216 = vpop.f32.mrf.mxu0
      %v1217 = vadd.f32 0.0, %v1216
      %v1218 = vpop.f32.mrf.mxu0
      %v1219 = vadd.f32 0.0, %v1218
      %1220 = vmatmul.bf16.gmra.mxu0 %v1152
      %v1221 = vpop.f32.mrf.mxu0
      %v1222 = vadd.f32 0.0, %v1221
      %v1223 = vpop.f32.mrf.mxu0
      %v1224 = vadd.f32 0.0, %v1223
      %1225 = vmatmul.bf16.gmra.mxu0 %v1155
      %v1226 = vpop.f32.mrf.mxu0
      %v1227 = vadd.f32 0.0, %v1226
      %v1228 = vpop.f32.mrf.mxu0
      %v1229 = vadd.f32 0.0, %v1228
      %1230 = vmatmul.bf16.gmra.mxu0 %v1158
      %v1231 = vpop.f32.mrf.mxu0
      %v1232 = vadd.f32 0.0, %v1231
      %v1233 = vpop.f32.mrf.mxu0
      %v1234 = vadd.f32 0.0, %v1233
      %1235 = vmatmul.bf16.gmra.mxu0 %v1161
      %v1236 = vpop.f32.mrf.mxu0
      %v1237 = vadd.f32 0.0, %v1236
      %v1238 = vpop.f32.mrf.mxu0
      %v1239 = vadd.f32 0.0, %v1238
      %1240 = vmatmul.bf16.gmra.mxu0 %v1164
      %v1241 = vpop.f32.mrf.mxu0
      %v1242 = vadd.f32 0.0, %v1241
      %v1243 = vpop.f32.mrf.mxu0
      %v1244 = vadd.f32 0.0, %v1243
      %1245 = vmatmul.bf16.gmra.mxu0 %v1167
      %v1246 = vpop.f32.mrf.mxu0
      %v1247 = vadd.f32 0.0, %v1246
      %v1248 = vpop.f32.mrf.mxu0
      %v1249 = vadd.f32 0.0, %v1248
      %1250 = vmatmul.bf16.gmra.mxu0 %v1170
      %v1251 = vpop.f32.mrf.mxu0
      %v1252 = vadd.f32 0.0, %v1251
      %v1253 = vpop.f32.mrf.mxu0
      %v1254 = vadd.f32 0.0, %v1253
      %1255 = vmatmul.bf16.gmra.mxu0 %v1173
      %v1256 = vpop.f32.mrf.mxu0
      %v1257 = vadd.f32 0.0, %v1256
      %v1258 = vpop.f32.mrf.mxu0
      %v1259 = vadd.f32 0.0, %v1258
      %1260 = vmatmul.bf16.gmra.mxu0 %v1176
      %v1261 = vpop.f32.mrf.mxu0
      %v1262 = vadd.f32 0.0, %v1261
      %v1263 = vpop.f32.mrf.mxu0
      %v1264 = vadd.f32 0.0, %v1263
      %1265 = vmatmul.bf16.gmra.mxu0 %v1179
      %v1266 = vpop.f32.mrf.mxu0
      %v1267 = vadd.f32 0.0, %v1266
      %v1268 = vpop.f32.mrf.mxu0
      %v1269 = vadd.f32 0.0, %v1268
      %1270 = vmatmul.bf16.gmra.mxu0 %v1182
      %v1271 = vpop.f32.mrf.mxu0
      %v1272 = vadd.f32 0.0, %v1271
      %v1273 = vpop.f32.mrf.mxu0
      %v1274 = vadd.f32 0.0, %v1273
      %1275 = vdwg.mxu0
      %v1276 = vadd.f32 %v1056, %v1197
      %v1277 = vadd.f32 %v1057, %v1199
      %v1278 = vadd.f32 %v1058, %v1202
      %v1279 = vadd.f32 %v1059, %v1204
      %v1280 = vadd.f32 %v1060, %v1207
      %v1281 = vadd.f32 %v1061, %v1209
      %v1282 = vadd.f32 %v1062, %v1212
      %v1283 = vadd.f32 %v1063, %v1214
      %v1284 = vadd.f32 %v1064, %v1217
      %v1285 = vadd.f32 %v1065, %v1219
      %v1286 = vadd.f32 %v1066, %v1222
      %v1287 = vadd.f32 %v1067, %v1224
      %v1288 = vadd.f32 %v1068, %v1227
      %v1289 = vadd.f32 %v1069, %v1229
      %v1290 = vadd.f32 %v1070, %v1232
      %v1291 = vadd.f32 %v1071, %v1234
      %v1292 = vadd.f32 %v1072, %v1237
      %v1293 = vadd.f32 %v1073, %v1239
      %v1294 = vadd.f32 %v1074, %v1242
      %v1295 = vadd.f32 %v1075, %v1244
      %v1296 = vadd.f32 %v1076, %v1247
      %v1297 = vadd.f32 %v1077, %v1249
      %v1298 = vadd.f32 %v1078, %v1252
      %v1299 = vadd.f32 %v1079, %v1254
      %v1300 = vadd.f32 %v1080, %v1257
      %v1301 = vadd.f32 %v1081, %v1259
      %v1302 = vadd.f32 %v1082, %v1262
      %v1303 = vadd.f32 %v1083, %v1264
      %v1304 = vadd.f32 %v1084, %v1267
      %v1305 = vadd.f32 %v1085, %v1269
      %v1306 = vadd.f32 %v1086, %v1272
      %v1307 = vadd.f32 %v1087, %v1274
      %v1308 = vld [vmem:[%s449 + $0x1] sm:$0xff]
      %v1309 = vld [vmem:[%s449 + $0x9] sm:$0xff]
      %v1310 = vld [vmem:[%s449 + $0x19] sm:$0xff]
      %v1311 = vld [vmem:[%s449 + $0x21] sm:$0xff]
      %v1312 = vld [vmem:[%s449 + $0x31] sm:$0xff]
      %v1313 = vld [vmem:[%s449 + $0x39] sm:$0xff]
      %v1314 = vld [vmem:[%s449 + $0x49] sm:$0xff]
      %v1315 = vld [vmem:[%s449 + $0x51] sm:$0xff]
      %v1316 = vld [vmem:[%s449 + $0x61] sm:$0xff]
      %v1317 = vld [vmem:[%s449 + $0x69] sm:$0xff]
      %v1318 = vld [vmem:[%s449 + $0x79] sm:$0xff]
      %v1319 = vld [vmem:[%s449 + $0x81] sm:$0xff]
      %v1320 = vld [vmem:[%s449 + $0x91] sm:$0xff]
      %v1321 = vld [vmem:[%s449 + $0x99] sm:$0xff]
      %v1322 = vld [vmem:[%s449 + $0xa9] sm:$0xff]
      %v1323 = vld [vmem:[%s449 + $0xb1] sm:$0xff]
      %v1324 = vld [vmem:[%s449 + $0xc1] sm:$0xff]
      %v1325 = vld [vmem:[%s449 + $0xc9] sm:$0xff]
      %v1326 = vld [vmem:[%s449 + $0xd9] sm:$0xff]
      %v1327 = vld [vmem:[%s449 + $0xe1] sm:$0xff]
      %v1328 = vld [vmem:[%s449 + $0xf1] sm:$0xff]
      %v1329 = vld [vmem:[%s449 + $0xf9] sm:$0xff]
      %v1330 = vld [vmem:[%s449 + $0x109] sm:$0xff]
      %v1331 = vld [vmem:[%s449 + $0x111] sm:$0xff]
      %v1332 = vld [vmem:[%s449 + $0x121] sm:$0xff]
      %v1333 = vld [vmem:[%s449 + $0x129] sm:$0xff]
      %v1334 = vld [vmem:[%s449 + $0x139] sm:$0xff]
      %v1335 = vld [vmem:[%s449 + $0x141] sm:$0xff]
      %v1336 = vld [vmem:[%s449 + $0x151] sm:$0xff]
      %v1337 = vld [vmem:[%s449 + $0x159] sm:$0xff]
      %v1338 = vld [vmem:[%s449 + $0x169] sm:$0xff]
      %v1339 = vld [vmem:[%s449 + $0x171] sm:$0xff]
      %v1340 = vpack.c.bf16 %v1309, %v1308
      %v1341 = vpack.c.bf16 %v1311, %v1310
      %v1342 = vpack.c.bf16 %v1313, %v1312
      %v1343 = vpack.c.bf16 %v1315, %v1314
      %v1344 = vpack.c.bf16 %v1317, %v1316
      %v1345 = vpack.c.bf16 %v1319, %v1318
      %v1346 = vpack.c.bf16 %v1321, %v1320
      %v1347 = vpack.c.bf16 %v1323, %v1322
      %v1348 = vpack.c.bf16 %v1325, %v1324
      %v1349 = vpack.c.bf16 %v1327, %v1326
      %v1350 = vpack.c.bf16 %v1329, %v1328
      %v1351 = vpack.c.bf16 %v1331, %v1330
      %v1352 = vpack.c.bf16 %v1333, %v1332
      %v1353 = vpack.c.bf16 %v1335, %v1334
      %v1354 = vpack.c.bf16 %v1337, %v1336
      %v1355 = vpack.c.bf16 %v1339, %v1338
      %v1357 = vsel %vm361, %v1340, 0
      %v1360 = vsel %vm361, %v1341, 0
      %v1363 = vsel %vm361, %v1342, 0
      %v1366 = vsel %vm361, %v1343, 0
      %v1369 = vsel %vm361, %v1344, 0
      %v1372 = vsel %vm361, %v1345, 0
      %v1375 = vsel %vm361, %v1346, 0
      %v1378 = vsel %vm361, %v1347, 0
      %v1381 = vsel %vm361, %v1348, 0
      %v1384 = vsel %vm361, %v1349, 0
      %v1387 = vsel %vm361, %v1350, 0
      %v1390 = vsel %vm361, %v1351, 0
      %v1393 = vsel %vm361, %v1352, 0
      %v1396 = vsel %vm361, %v1353, 0
      %v1399 = vsel %vm361, %v1354, 0
      %v1402 = vsel %vm361, %v1355, 0
      %v1405 = vsel %vm635, %v486, 0
      %1407 = vmatpush.bf16.msra.mxu0 0
      %1408 = vmatpush.bf16.msra.mxu0 0
      %1409 = vmatpush.bf16.msra.mxu0 0
      %1410 = vmatpush.bf16.msra.mxu0 0
      %1411 = vmatpush.bf16.msra.mxu0 0
      %1412 = vmatpush.bf16.msra.mxu0 0
      %1413 = vmatpush.bf16.msra.mxu0 0
      %1414 = vmatpush.bf16.msra.mxu0 %v1405
      %1415 = vmatmul.bf16.gmra.mxu0 %v1357
      %v1416 = vpop.f32.mrf.mxu0
      %v1417 = vadd.f32 0.0, %v1416
      %v1418 = vpop.f32.mrf.mxu0
      %v1419 = vadd.f32 0.0, %v1418
      %1420 = vmatmul.bf16.gmra.mxu0 %v1360
      %v1421 = vpop.f32.mrf.mxu0
      %v1422 = vadd.f32 0.0, %v1421
      %v1423 = vpop.f32.mrf.mxu0
      %v1424 = vadd.f32 0.0, %v1423
      %1425 = vmatmul.bf16.gmra.mxu0 %v1363
      %v1426 = vpop.f32.mrf.mxu0
      %v1427 = vadd.f32 0.0, %v1426
      %v1428 = vpop.f32.mrf.mxu0
      %v1429 = vadd.f32 0.0, %v1428
      %1430 = vmatmul.bf16.gmra.mxu0 %v1366
      %v1431 = vpop.f32.mrf.mxu0
      %v1432 = vadd.f32 0.0, %v1431
      %v1433 = vpop.f32.mrf.mxu0
      %v1434 = vadd.f32 0.0, %v1433
      %1435 = vmatmul.bf16.gmra.mxu0 %v1369
      %v1436 = vpop.f32.mrf.mxu0
      %v1437 = vadd.f32 0.0, %v1436
      %v1438 = vpop.f32.mrf.mxu0
      %v1439 = vadd.f32 0.0, %v1438
      %1440 = vmatmul.bf16.gmra.mxu0 %v1372
      %v1441 = vpop.f32.mrf.mxu0
      %v1442 = vadd.f32 0.0, %v1441
      %v1443 = vpop.f32.mrf.mxu0
      %v1444 = vadd.f32 0.0, %v1443
      %1445 = vmatmul.bf16.gmra.mxu0 %v1375
      %v1446 = vpop.f32.mrf.mxu0
      %v1447 = vadd.f32 0.0, %v1446
      %v1448 = vpop.f32.mrf.mxu0
      %v1449 = vadd.f32 0.0, %v1448
      %1450 = vmatmul.bf16.gmra.mxu0 %v1378
      %v1451 = vpop.f32.mrf.mxu0
      %v1452 = vadd.f32 0.0, %v1451
      %v1453 = vpop.f32.mrf.mxu0
      %v1454 = vadd.f32 0.0, %v1453
      %1455 = vmatmul.bf16.gmra.mxu0 %v1381
      %v1456 = vpop.f32.mrf.mxu0
      %v1457 = vadd.f32 0.0, %v1456
      %v1458 = vpop.f32.mrf.mxu0
      %v1459 = vadd.f32 0.0, %v1458
      %1460 = vmatmul.bf16.gmra.mxu0 %v1384
      %v1461 = vpop.f32.mrf.mxu0
      %v1462 = vadd.f32 0.0, %v1461
      %v1463 = vpop.f32.mrf.mxu0
      %v1464 = vadd.f32 0.0, %v1463
      %1465 = vmatmul.bf16.gmra.mxu0 %v1387
      %v1466 = vpop.f32.mrf.mxu0
      %v1467 = vadd.f32 0.0, %v1466
      %v1468 = vpop.f32.mrf.mxu0
      %v1469 = vadd.f32 0.0, %v1468
      %1470 = vmatmul.bf16.gmra.mxu0 %v1390
      %v1471 = vpop.f32.mrf.mxu0
      %v1472 = vadd.f32 0.0, %v1471
      %v1473 = vpop.f32.mrf.mxu0
      %v1474 = vadd.f32 0.0, %v1473
      %1475 = vmatmul.bf16.gmra.mxu0 %v1393
      %v1476 = vpop.f32.mrf.mxu0
      %v1477 = vadd.f32 0.0, %v1476
      %v1478 = vpop.f32.mrf.mxu0
      %v1479 = vadd.f32 0.0, %v1478
      %1480 = vmatmul.bf16.gmra.mxu0 %v1396
      %v1481 = vpop.f32.mrf.mxu0
      %v1482 = vadd.f32 0.0, %v1481
      %v1483 = vpop.f32.mrf.mxu0
      %v1484 = vadd.f32 0.0, %v1483
      %1485 = vmatmul.bf16.gmra.mxu0 %v1399
      %v1486 = vpop.f32.mrf.mxu0
      %v1487 = vadd.f32 0.0, %v1486
      %v1488 = vpop.f32.mrf.mxu0
      %v1489 = vadd.f32 0.0, %v1488
      %1490 = vmatmul.bf16.gmra.mxu0 %v1402
      %v1491 = vpop.f32.mrf.mxu0
      %v1492 = vadd.f32 0.0, %v1491
      %v1493 = vpop.f32.mrf.mxu0
      %v1494 = vadd.f32 0.0, %v1493
      %1495 = vdwg.mxu0
      %v1496 = vadd.f32 %v1276, %v1417
      %v1497 = vadd.f32 %v1277, %v1419
      %v1498 = vadd.f32 %v1278, %v1422
      %v1499 = vadd.f32 %v1279, %v1424
      %v1500 = vadd.f32 %v1280, %v1427
      %v1501 = vadd.f32 %v1281, %v1429
      %v1502 = vadd.f32 %v1282, %v1432
      %v1503 = vadd.f32 %v1283, %v1434
      %v1504 = vadd.f32 %v1284, %v1437
      %v1505 = vadd.f32 %v1285, %v1439
      %v1506 = vadd.f32 %v1286, %v1442
      %v1507 = vadd.f32 %v1287, %v1444
      %v1508 = vadd.f32 %v1288, %v1447
      %v1509 = vadd.f32 %v1289, %v1449
      %v1510 = vadd.f32 %v1290, %v1452
      %v1511 = vadd.f32 %v1291, %v1454
      %v1512 = vadd.f32 %v1292, %v1457
      %v1513 = vadd.f32 %v1293, %v1459
      %v1514 = vadd.f32 %v1294, %v1462
      %v1515 = vadd.f32 %v1295, %v1464
      %v1516 = vadd.f32 %v1296, %v1467
      %v1517 = vadd.f32 %v1297, %v1469
      %v1518 = vadd.f32 %v1298, %v1472
      %v1519 = vadd.f32 %v1299, %v1474
      %v1520 = vadd.f32 %v1300, %v1477
      %v1521 = vadd.f32 %v1301, %v1479
      %v1522 = vadd.f32 %v1302, %v1482
      %v1523 = vadd.f32 %v1303, %v1484
      %v1524 = vadd.f32 %v1304, %v1487
      %v1525 = vadd.f32 %v1305, %v1489
      %v1526 = vadd.f32 %v1306, %v1492
      %v1527 = vadd.f32 %v1307, %v1494
      %v1528 = vld [vmem:[%s449 + $0x2] sm:$0xff]
      %v1529 = vld [vmem:[%s449 + $0xa] sm:$0xff]
      %v1530 = vld [vmem:[%s449 + $0x1a] sm:$0xff]
      %v1531 = vld [vmem:[%s449 + $0x22] sm:$0xff]
      %v1532 = vld [vmem:[%s449 + $0x32] sm:$0xff]
      %v1533 = vld [vmem:[%s449 + $0x3a] sm:$0xff]
      %v1534 = vld [vmem:[%s449 + $0x4a] sm:$0xff]
      %v1535 = vld [vmem:[%s449 + $0x52] sm:$0xff]
      %v1536 = vld [vmem:[%s449 + $0x62] sm:$0xff]
      %v1537 = vld [vmem:[%s449 + $0x6a] sm:$0xff]
      %v1538 = vld [vmem:[%s449 + $0x7a] sm:$0xff]
      %v1539 = vld [vmem:[%s449 + $0x82] sm:$0xff]
      %v1540 = vld [vmem:[%s449 + $0x92] sm:$0xff]
      %v1541 = vld [vmem:[%s449 + $0x9a] sm:$0xff]
      %v1542 = vld [vmem:[%s449 + $0xaa] sm:$0xff]
      %v1543 = vld [vmem:[%s449 + $0xb2] sm:$0xff]
      %v1544 = vld [vmem:[%s449 + $0xc2] sm:$0xff]
      %v1545 = vld [vmem:[%s449 + $0xca] sm:$0xff]
      %v1546 = vld [vmem:[%s449 + $0xda] sm:$0xff]
      %v1547 = vld [vmem:[%s449 + $0xe2] sm:$0xff]
      %v1548 = vld [vmem:[%s449 + $0xf2] sm:$0xff]
      %v1549 = vld [vmem:[%s449 + $0xfa] sm:$0xff]
      %v1550 = vld [vmem:[%s449 + $0x10a] sm:$0xff]
      %v1551 = vld [vmem:[%s449 + $0x112] sm:$0xff]
      %v1552 = vld [vmem:[%s449 + $0x122] sm:$0xff]
      %v1553 = vld [vmem:[%s449 + $0x12a] sm:$0xff]
      %v1554 = vld [vmem:[%s449 + $0x13a] sm:$0xff]
      %v1555 = vld [vmem:[%s449 + $0x142] sm:$0xff]
      %v1556 = vld [vmem:[%s449 + $0x152] sm:$0xff]
      %v1557 = vld [vmem:[%s449 + $0x15a] sm:$0xff]
      %v1558 = vld [vmem:[%s449 + $0x16a] sm:$0xff]
      %v1559 = vld [vmem:[%s449 + $0x172] sm:$0xff]
      %v1560 = vpack.c.bf16 %v1529, %v1528
      %v1561 = vpack.c.bf16 %v1531, %v1530
      %v1562 = vpack.c.bf16 %v1533, %v1532
      %v1563 = vpack.c.bf16 %v1535, %v1534
      %v1564 = vpack.c.bf16 %v1537, %v1536
      %v1565 = vpack.c.bf16 %v1539, %v1538
      %v1566 = vpack.c.bf16 %v1541, %v1540
      %v1567 = vpack.c.bf16 %v1543, %v1542
      %v1568 = vpack.c.bf16 %v1545, %v1544
      %v1569 = vpack.c.bf16 %v1547, %v1546
      %v1570 = vpack.c.bf16 %v1549, %v1548
      %v1571 = vpack.c.bf16 %v1551, %v1550
      %v1572 = vpack.c.bf16 %v1553, %v1552
      %v1573 = vpack.c.bf16 %v1555, %v1554
      %v1574 = vpack.c.bf16 %v1557, %v1556
      %v1575 = vpack.c.bf16 %v1559, %v1558
      %v1577 = vsel %vm361, %v1560, 0
      %v1580 = vsel %vm361, %v1561, 0
      %v1583 = vsel %vm361, %v1562, 0
      %v1586 = vsel %vm361, %v1563, 0
      %v1589 = vsel %vm361, %v1564, 0
      %v1592 = vsel %vm361, %v1565, 0
      %v1595 = vsel %vm361, %v1566, 0
      %v1598 = vsel %vm361, %v1567, 0
      %v1601 = vsel %vm361, %v1568, 0
      %v1604 = vsel %vm361, %v1569, 0
      %v1607 = vsel %vm361, %v1570, 0
      %v1610 = vsel %vm361, %v1571, 0
      %v1613 = vsel %vm361, %v1572, 0
      %v1616 = vsel %vm361, %v1573, 0
      %v1619 = vsel %vm361, %v1574, 0
      %v1622 = vsel %vm361, %v1575, 0
      %v1625 = vsel %vm635, %v487, 0
      %1627 = vmatpush.bf16.msra.mxu0 0
      %1628 = vmatpush.bf16.msra.mxu0 0
      %1629 = vmatpush.bf16.msra.mxu0 0
      %1630 = vmatpush.bf16.msra.mxu0 0
      %1631 = vmatpush.bf16.msra.mxu0 0
      %1632 = vmatpush.bf16.msra.mxu0 0
      %1633 = vmatpush.bf16.msra.mxu0 0
      %1634 = vmatpush.bf16.msra.mxu0 %v1625
      %1635 = vmatmul.bf16.gmra.mxu0 %v1577
      %v1636 = vpop.f32.mrf.mxu0
      %v1637 = vadd.f32 0.0, %v1636
      %v1638 = vpop.f32.mrf.mxu0
      %v1639 = vadd.f32 0.0, %v1638
      %1640 = vmatmul.bf16.gmra.mxu0 %v1580
      %v1641 = vpop.f32.mrf.mxu0
      %v1642 = vadd.f32 0.0, %v1641
      %v1643 = vpop.f32.mrf.mxu0
      %v1644 = vadd.f32 0.0, %v1643
      %1645 = vmatmul.bf16.gmra.mxu0 %v1583
      %v1646 = vpop.f32.mrf.mxu0
      %v1647 = vadd.f32 0.0, %v1646
      %v1648 = vpop.f32.mrf.mxu0
      %v1649 = vadd.f32 0.0, %v1648
      %1650 = vmatmul.bf16.gmra.mxu0 %v1586
      %v1651 = vpop.f32.mrf.mxu0
      %v1652 = vadd.f32 0.0, %v1651
      %v1653 = vpop.f32.mrf.mxu0
      %v1654 = vadd.f32 0.0, %v1653
      %1655 = vmatmul.bf16.gmra.mxu0 %v1589
      %v1656 = vpop.f32.mrf.mxu0
      %v1657 = vadd.f32 0.0, %v1656
      %v1658 = vpop.f32.mrf.mxu0
      %v1659 = vadd.f32 0.0, %v1658
      %1660 = vmatmul.bf16.gmra.mxu0 %v1592
      %v1661 = vpop.f32.mrf.mxu0
      %v1662 = vadd.f32 0.0, %v1661
      %v1663 = vpop.f32.mrf.mxu0
      %v1664 = vadd.f32 0.0, %v1663
      %1665 = vmatmul.bf16.gmra.mxu0 %v1595
      %v1666 = vpop.f32.mrf.mxu0
      %v1667 = vadd.f32 0.0, %v1666
      %v1668 = vpop.f32.mrf.mxu0
      %v1669 = vadd.f32 0.0, %v1668
      %1670 = vmatmul.bf16.gmra.mxu0 %v1598
      %v1671 = vpop.f32.mrf.mxu0
      %v1672 = vadd.f32 0.0, %v1671
      %v1673 = vpop.f32.mrf.mxu0
      %v1674 = vadd.f32 0.0, %v1673
      %1675 = vmatmul.bf16.gmra.mxu0 %v1601
      %v1676 = vpop.f32.mrf.mxu0
      %v1677 = vadd.f32 0.0, %v1676
      %v1678 = vpop.f32.mrf.mxu0
      %v1679 = vadd.f32 0.0, %v1678
      %1680 = vmatmul.bf16.gmra.mxu0 %v1604
      %v1681 = vpop.f32.mrf.mxu0
      %v1682 = vadd.f32 0.0, %v1681
      %v1683 = vpop.f32.mrf.mxu0
      %v1684 = vadd.f32 0.0, %v1683
      %1685 = vmatmul.bf16.gmra.mxu0 %v1607
      %v1686 = vpop.f32.mrf.mxu0
      %v1687 = vadd.f32 0.0, %v1686
      %v1688 = vpop.f32.mrf.mxu0
      %v1689 = vadd.f32 0.0, %v1688
      %1690 = vmatmul.bf16.gmra.mxu0 %v1610
      %v1691 = vpop.f32.mrf.mxu0
      %v1692 = vadd.f32 0.0, %v1691
      %v1693 = vpop.f32.mrf.mxu0
      %v1694 = vadd.f32 0.0, %v1693
      %1695 = vmatmul.bf16.gmra.mxu0 %v1613
      %v1696 = vpop.f32.mrf.mxu0
      %v1697 = vadd.f32 0.0, %v1696
      %v1698 = vpop.f32.mrf.mxu0
      %v1699 = vadd.f32 0.0, %v1698
      %1700 = vmatmul.bf16.gmra.mxu0 %v1616
      %v1701 = vpop.f32.mrf.mxu0
      %v1702 = vadd.f32 0.0, %v1701
      %v1703 = vpop.f32.mrf.mxu0
      %v1704 = vadd.f32 0.0, %v1703
      %1705 = vmatmul.bf16.gmra.mxu0 %v1619
      %v1706 = vpop.f32.mrf.mxu0
      %v1707 = vadd.f32 0.0, %v1706
      %v1708 = vpop.f32.mrf.mxu0
      %v1709 = vadd.f32 0.0, %v1708
      %1710 = vmatmul.bf16.gmra.mxu0 %v1622
      %v1711 = vpop.f32.mrf.mxu0
      %v1712 = vadd.f32 0.0, %v1711
      %v1713 = vpop.f32.mrf.mxu0
      %v1714 = vadd.f32 0.0, %v1713
      %1715 = vdwg.mxu0
      %v1716 = vadd.f32 %v1496, %v1637
      %v1717 = vadd.f32 %v1497, %v1639
      %v1718 = vadd.f32 %v1498, %v1642
      %v1719 = vadd.f32 %v1499, %v1644
      %v1720 = vadd.f32 %v1500, %v1647
      %v1721 = vadd.f32 %v1501, %v1649
      %v1722 = vadd.f32 %v1502, %v1652
      %v1723 = vadd.f32 %v1503, %v1654
      %v1724 = vadd.f32 %v1504, %v1657
      %v1725 = vadd.f32 %v1505, %v1659
      %v1726 = vadd.f32 %v1506, %v1662
      %v1727 = vadd.f32 %v1507, %v1664
      %v1728 = vadd.f32 %v1508, %v1667
      %v1729 = vadd.f32 %v1509, %v1669
      %v1730 = vadd.f32 %v1510, %v1672
      %v1731 = vadd.f32 %v1511, %v1674
      %v1732 = vadd.f32 %v1512, %v1677
      %v1733 = vadd.f32 %v1513, %v1679
      %v1734 = vadd.f32 %v1514, %v1682
      %v1735 = vadd.f32 %v1515, %v1684
      %v1736 = vadd.f32 %v1516, %v1687
      %v1737 = vadd.f32 %v1517, %v1689
      %v1738 = vadd.f32 %v1518, %v1692
      %v1739 = vadd.f32 %v1519, %v1694
      %v1740 = vadd.f32 %v1520, %v1697
      %v1741 = vadd.f32 %v1521, %v1699
      %v1742 = vadd.f32 %v1522, %v1702
      %v1743 = vadd.f32 %v1523, %v1704
      %v1744 = vadd.f32 %v1524, %v1707
      %v1745 = vadd.f32 %v1525, %v1709
      %v1746 = vadd.f32 %v1526, %v1712
      %v1747 = vadd.f32 %v1527, %v1714
      %s1748 = scalar_lea.vmem [#allocation2], 48
      %v1749 = vld [vmem:[%s1748] sm:$0xff]
      %v1750 = vld [vmem:[%s1748 + $0x8] sm:$0xff]
      %v1751 = vld [vmem:[%s1748 + $0x18] sm:$0xff]
      %v1752 = vld [vmem:[%s1748 + $0x20] sm:$0xff]
      %v1753 = vld [vmem:[%s1748 + $0x30] sm:$0xff]
      %v1754 = vld [vmem:[%s1748 + $0x38] sm:$0xff]
      %v1755 = vld [vmem:[%s1748 + $0x48] sm:$0xff]
      %v1756 = vld [vmem:[%s1748 + $0x50] sm:$0xff]
      %v1757 = vld [vmem:[%s1748 + $0x60] sm:$0xff]
      %v1758 = vld [vmem:[%s1748 + $0x68] sm:$0xff]
      %v1759 = vld [vmem:[%s1748 + $0x78] sm:$0xff]
      %v1760 = vld [vmem:[%s1748 + $0x80] sm:$0xff]
      %v1761 = vld [vmem:[%s1748 + $0x90] sm:$0xff]
      %v1762 = vld [vmem:[%s1748 + $0x98] sm:$0xff]
      %v1763 = vld [vmem:[%s1748 + $0xa8] sm:$0xff]
      %v1764 = vld [vmem:[%s1748 + $0xb0] sm:$0xff]
      %v1765 = vld [vmem:[%s1748 + $0xc0] sm:$0xff]
      %v1766 = vld [vmem:[%s1748 + $0xc8] sm:$0xff]
      %v1767 = vld [vmem:[%s1748 + $0xd8] sm:$0xff]
      %v1768 = vld [vmem:[%s1748 + $0xe0] sm:$0xff]
      %v1769 = vld [vmem:[%s1748 + $0xf0] sm:$0xff]
      %v1770 = vld [vmem:[%s1748 + $0xf8] sm:$0xff]
      %v1771 = vld [vmem:[%s1748 + $0x108] sm:$0xff]
      %v1772 = vld [vmem:[%s1748 + $0x110] sm:$0xff]
      %v1773 = vld [vmem:[%s1748 + $0x120] sm:$0xff]
      %v1774 = vld [vmem:[%s1748 + $0x128] sm:$0xff]
      %v1775 = vld [vmem:[%s1748 + $0x138] sm:$0xff]
      %v1776 = vld [vmem:[%s1748 + $0x140] sm:$0xff]
      %v1777 = vld [vmem:[%s1748 + $0x150] sm:$0xff]
      %v1778 = vld [vmem:[%s1748 + $0x158] sm:$0xff]
      %v1779 = vld [vmem:[%s1748 + $0x168] sm:$0xff]
      %v1780 = vld [vmem:[%s1748 + $0x170] sm:$0xff]
      %v1781 = vpack.c.bf16 %v1750, %v1749
      %v1782 = vpack.c.bf16 %v1752, %v1751
      %v1783 = vpack.c.bf16 %v1754, %v1753
      %v1784 = vpack.c.bf16 %v1756, %v1755
      %v1785 = vpack.c.bf16 %v1758, %v1757
      %v1786 = vpack.c.bf16 %v1760, %v1759
      %v1787 = vpack.c.bf16 %v1762, %v1761
      %v1788 = vpack.c.bf16 %v1764, %v1763
      %v1789 = vpack.c.bf16 %v1766, %v1765
      %v1790 = vpack.c.bf16 %v1768, %v1767
      %v1791 = vpack.c.bf16 %v1770, %v1769
      %v1792 = vpack.c.bf16 %v1772, %v1771
      %v1793 = vpack.c.bf16 %v1774, %v1773
      %v1794 = vpack.c.bf16 %v1776, %v1775
      %v1795 = vpack.c.bf16 %v1778, %v1777
      %v1796 = vpack.c.bf16 %v1780, %v1779
      %v1798 = vsel %vm361, %v1781, 0
      %v1801 = vsel %vm361, %v1782, 0
      %v1804 = vsel %vm361, %v1783, 0
      %v1807 = vsel %vm361, %v1784, 0
      %v1810 = vsel %vm361, %v1785, 0
      %v1813 = vsel %vm361, %v1786, 0
      %v1816 = vsel %vm361, %v1787, 0
      %v1819 = vsel %vm361, %v1788, 0
      %v1822 = vsel %vm361, %v1789, 0
      %v1825 = vsel %vm361, %v1790, 0
      %v1828 = vsel %vm361, %v1791, 0
      %v1831 = vsel %vm361, %v1792, 0
      %v1834 = vsel %vm361, %v1793, 0
      %v1837 = vsel %vm361, %v1794, 0
      %v1840 = vsel %vm361, %v1795, 0
      %v1843 = vsel %vm361, %v1796, 0
      %v1846 = vsel %vm635, %v488, 0
      %1848 = vmatpush.bf16.msra.mxu0 0
      %1849 = vmatpush.bf16.msra.mxu0 0
      %1850 = vmatpush.bf16.msra.mxu0 0
      %1851 = vmatpush.bf16.msra.mxu0 0
      %1852 = vmatpush.bf16.msra.mxu0 0
      %1853 = vmatpush.bf16.msra.mxu0 0
      %1854 = vmatpush.bf16.msra.mxu0 0
      %1855 = vmatpush.bf16.msra.mxu0 %v1846
      %1856 = vmatmul.bf16.gmra.mxu0 %v1798
      %v1857 = vpop.f32.mrf.mxu0
      %v1858 = vadd.f32 0.0, %v1857
      %v1859 = vpop.f32.mrf.mxu0
      %v1860 = vadd.f32 0.0, %v1859
      %1861 = vmatmul.bf16.gmra.mxu0 %v1801
      %v1862 = vpop.f32.mrf.mxu0
      %v1863 = vadd.f32 0.0, %v1862
      %v1864 = vpop.f32.mrf.mxu0
      %v1865 = vadd.f32 0.0, %v1864
      %1866 = vmatmul.bf16.gmra.mxu0 %v1804
      %v1867 = vpop.f32.mrf.mxu0
      %v1868 = vadd.f32 0.0, %v1867
      %v1869 = vpop.f32.mrf.mxu0
      %v1870 = vadd.f32 0.0, %v1869
      %1871 = vmatmul.bf16.gmra.mxu0 %v1807
      %v1872 = vpop.f32.mrf.mxu0
      %v1873 = vadd.f32 0.0, %v1872
      %v1874 = vpop.f32.mrf.mxu0
      %v1875 = vadd.f32 0.0, %v1874
      %1876 = vmatmul.bf16.gmra.mxu0 %v1810
      %v1877 = vpop.f32.mrf.mxu0
      %v1878 = vadd.f32 0.0, %v1877
      %v1879 = vpop.f32.mrf.mxu0
      %v1880 = vadd.f32 0.0, %v1879
      %1881 = vmatmul.bf16.gmra.mxu0 %v1813
      %v1882 = vpop.f32.mrf.mxu0
      %v1883 = vadd.f32 0.0, %v1882
      %v1884 = vpop.f32.mrf.mxu0
      %v1885 = vadd.f32 0.0, %v1884
      %1886 = vmatmul.bf16.gmra.mxu0 %v1816
      %v1887 = vpop.f32.mrf.mxu0
      %v1888 = vadd.f32 0.0, %v1887
      %v1889 = vpop.f32.mrf.mxu0
      %v1890 = vadd.f32 0.0, %v1889
      %1891 = vmatmul.bf16.gmra.mxu0 %v1819
      %v1892 = vpop.f32.mrf.mxu0
      %v1893 = vadd.f32 0.0, %v1892
      %v1894 = vpop.f32.mrf.mxu0
      %v1895 = vadd.f32 0.0, %v1894
      %1896 = vmatmul.bf16.gmra.mxu0 %v1822
      %v1897 = vpop.f32.mrf.mxu0
      %v1898 = vadd.f32 0.0, %v1897
      %v1899 = vpop.f32.mrf.mxu0
      %v1900 = vadd.f32 0.0, %v1899
      %1901 = vmatmul.bf16.gmra.mxu0 %v1825
      %v1902 = vpop.f32.mrf.mxu0
      %v1903 = vadd.f32 0.0, %v1902
      %v1904 = vpop.f32.mrf.mxu0
      %v1905 = vadd.f32 0.0, %v1904
      %1906 = vmatmul.bf16.gmra.mxu0 %v1828
      %v1907 = vpop.f32.mrf.mxu0
      %v1908 = vadd.f32 0.0, %v1907
      %v1909 = vpop.f32.mrf.mxu0
      %v1910 = vadd.f32 0.0, %v1909
      %1911 = vmatmul.bf16.gmra.mxu0 %v1831
      %v1912 = vpop.f32.mrf.mxu0
      %v1913 = vadd.f32 0.0, %v1912
      %v1914 = vpop.f32.mrf.mxu0
      %v1915 = vadd.f32 0.0, %v1914
      %1916 = vmatmul.bf16.gmra.mxu0 %v1834
      %v1917 = vpop.f32.mrf.mxu0
      %v1918 = vadd.f32 0.0, %v1917
      %v1919 = vpop.f32.mrf.mxu0
      %v1920 = vadd.f32 0.0, %v1919
      %1921 = vmatmul.bf16.gmra.mxu0 %v1837
      %v1922 = vpop.f32.mrf.mxu0
      %v1923 = vadd.f32 0.0, %v1922
      %v1924 = vpop.f32.mrf.mxu0
      %v1925 = vadd.f32 0.0, %v1924
      %1926 = vmatmul.bf16.gmra.mxu0 %v1840
      %v1927 = vpop.f32.mrf.mxu0
      %v1928 = vadd.f32 0.0, %v1927
      %v1929 = vpop.f32.mrf.mxu0
      %v1930 = vadd.f32 0.0, %v1929
      %1931 = vmatmul.bf16.gmra.mxu0 %v1843
      %v1932 = vpop.f32.mrf.mxu0
      %v1933 = vadd.f32 0.0, %v1932
      %v1934 = vpop.f32.mrf.mxu0
      %v1935 = vadd.f32 0.0, %v1934
      %1936 = vdwg.mxu0
      %v1937 = vadd.f32 %v1716, %v1858
      %v1938 = vadd.f32 %v1717, %v1860
      %v1939 = vadd.f32 %v1718, %v1863
      %v1940 = vadd.f32 %v1719, %v1865
      %v1941 = vadd.f32 %v1720, %v1868
      %v1942 = vadd.f32 %v1721, %v1870
      %v1943 = vadd.f32 %v1722, %v1873
      %v1944 = vadd.f32 %v1723, %v1875
      %v1945 = vadd.f32 %v1724, %v1878
      %v1946 = vadd.f32 %v1725, %v1880
      %v1947 = vadd.f32 %v1726, %v1883
      %v1948 = vadd.f32 %v1727, %v1885
      %v1949 = vadd.f32 %v1728, %v1888
      %v1950 = vadd.f32 %v1729, %v1890
      %v1951 = vadd.f32 %v1730, %v1893
      %v1952 = vadd.f32 %v1731, %v1895
      %v1953 = vadd.f32 %v1732, %v1898
      %v1954 = vadd.f32 %v1733, %v1900
      %v1955 = vadd.f32 %v1734, %v1903
      %v1956 = vadd.f32 %v1735, %v1905
      %v1957 = vadd.f32 %v1736, %v1908
      %v1958 = vadd.f32 %v1737, %v1910
      %v1959 = vadd.f32 %v1738, %v1913
      %v1960 = vadd.f32 %v1739, %v1915
      %v1961 = vadd.f32 %v1740, %v1918
      %v1962 = vadd.f32 %v1741, %v1920
      %v1963 = vadd.f32 %v1742, %v1923
      %v1964 = vadd.f32 %v1743, %v1925
      %v1965 = vadd.f32 %v1744, %v1928
      %v1966 = vadd.f32 %v1745, %v1930
      %v1967 = vadd.f32 %v1746, %v1933
      %v1968 = vadd.f32 %v1747, %v1935
      %v1969 = vld [vmem:[%s1748 + $0x1] sm:$0xff]
      %v1970 = vld [vmem:[%s1748 + $0x9] sm:$0xff]
      %v1971 = vld [vmem:[%s1748 + $0x19] sm:$0xff]
      %v1972 = vld [vmem:[%s1748 + $0x21] sm:$0xff]
      %v1973 = vld [vmem:[%s1748 + $0x31] sm:$0xff]
      %v1974 = vld [vmem:[%s1748 + $0x39] sm:$0xff]
      %v1975 = vld [vmem:[%s1748 + $0x49] sm:$0xff]
      %v1976 = vld [vmem:[%s1748 + $0x51] sm:$0xff]
      %v1977 = vld [vmem:[%s1748 + $0x61] sm:$0xff]
      %v1978 = vld [vmem:[%s1748 + $0x69] sm:$0xff]
      %v1979 = vld [vmem:[%s1748 + $0x79] sm:$0xff]
      %v1980 = vld [vmem:[%s1748 + $0x81] sm:$0xff]
      %v1981 = vld [vmem:[%s1748 + $0x91] sm:$0xff]
      %v1982 = vld [vmem:[%s1748 + $0x99] sm:$0xff]
      %v1983 = vld [vmem:[%s1748 + $0xa9] sm:$0xff]
      %v1984 = vld [vmem:[%s1748 + $0xb1] sm:$0xff]
      %v1985 = vld [vmem:[%s1748 + $0xc1] sm:$0xff]
      %v1986 = vld [vmem:[%s1748 + $0xc9] sm:$0xff]
      %v1987 = vld [vmem:[%s1748 + $0xd9] sm:$0xff]
      %v1988 = vld [vmem:[%s1748 + $0xe1] sm:$0xff]
      %v1989 = vld [vmem:[%s1748 + $0xf1] sm:$0xff]
      %v1990 = vld [vmem:[%s1748 + $0xf9] sm:$0xff]
      %v1991 = vld [vmem:[%s1748 + $0x109] sm:$0xff]
      %v1992 = vld [vmem:[%s1748 + $0x111] sm:$0xff]
      %v1993 = vld [vmem:[%s1748 + $0x121] sm:$0xff]
      %v1994 = vld [vmem:[%s1748 + $0x129] sm:$0xff]
      %v1995 = vld [vmem:[%s1748 + $0x139] sm:$0xff]
      %v1996 = vld [vmem:[%s1748 + $0x141] sm:$0xff]
      %v1997 = vld [vmem:[%s1748 + $0x151] sm:$0xff]
      %v1998 = vld [vmem:[%s1748 + $0x159] sm:$0xff]
      %v1999 = vld [vmem:[%s1748 + $0x169] sm:$0xff]
      %v2000 = vld [vmem:[%s1748 + $0x171] sm:$0xff]
      %v2001 = vpack.c.bf16 %v1970, %v1969
      %v2002 = vpack.c.bf16 %v1972, %v1971
      %v2003 = vpack.c.bf16 %v1974, %v1973
      %v2004 = vpack.c.bf16 %v1976, %v1975
      %v2005 = vpack.c.bf16 %v1978, %v1977
      %v2006 = vpack.c.bf16 %v1980, %v1979
      %v2007 = vpack.c.bf16 %v1982, %v1981
      %v2008 = vpack.c.bf16 %v1984, %v1983
      %v2009 = vpack.c.bf16 %v1986, %v1985
      %v2010 = vpack.c.bf16 %v1988, %v1987
      %v2011 = vpack.c.bf16 %v1990, %v1989
      %v2012 = vpack.c.bf16 %v1992, %v1991
      %v2013 = vpack.c.bf16 %v1994, %v1993
      %v2014 = vpack.c.bf16 %v1996, %v1995
      %v2015 = vpack.c.bf16 %v1998, %v1997
      %v2016 = vpack.c.bf16 %v2000, %v1999
      %v2018 = vsel %vm361, %v2001, 0
      %v2021 = vsel %vm361, %v2002, 0
      %v2024 = vsel %vm361, %v2003, 0
      %v2027 = vsel %vm361, %v2004, 0
      %v2030 = vsel %vm361, %v2005, 0
      %v2033 = vsel %vm361, %v2006, 0
      %v2036 = vsel %vm361, %v2007, 0
      %v2039 = vsel %vm361, %v2008, 0
      %v2042 = vsel %vm361, %v2009, 0
      %v2045 = vsel %vm361, %v2010, 0
      %v2048 = vsel %vm361, %v2011, 0
      %v2051 = vsel %vm361, %v2012, 0
      %v2054 = vsel %vm361, %v2013, 0
      %v2057 = vsel %vm361, %v2014, 0
      %v2060 = vsel %vm361, %v2015, 0
      %v2063 = vsel %vm361, %v2016, 0
      %v2066 = vsel %vm635, %v489, 0
      %2068 = vmatpush.bf16.msra.mxu0 0
      %2069 = vmatpush.bf16.msra.mxu0 0
      %2070 = vmatpush.bf16.msra.mxu0 0
      %2071 = vmatpush.bf16.msra.mxu0 0
      %2072 = vmatpush.bf16.msra.mxu0 0
      %2073 = vmatpush.bf16.msra.mxu0 0
      %2074 = vmatpush.bf16.msra.mxu0 0
      %2075 = vmatpush.bf16.msra.mxu0 %v2066
      %2076 = vmatmul.bf16.gmra.mxu0 %v2018
      %v2077 = vpop.f32.mrf.mxu0
      %v2078 = vadd.f32 0.0, %v2077
      %v2079 = vpop.f32.mrf.mxu0
      %v2080 = vadd.f32 0.0, %v2079
      %2081 = vmatmul.bf16.gmra.mxu0 %v2021
      %v2082 = vpop.f32.mrf.mxu0
      %v2083 = vadd.f32 0.0, %v2082
      %v2084 = vpop.f32.mrf.mxu0
      %v2085 = vadd.f32 0.0, %v2084
      %2086 = vmatmul.bf16.gmra.mxu0 %v2024
      %v2087 = vpop.f32.mrf.mxu0
      %v2088 = vadd.f32 0.0, %v2087
      %v2089 = vpop.f32.mrf.mxu0
      %v2090 = vadd.f32 0.0, %v2089
      %2091 = vmatmul.bf16.gmra.mxu0 %v2027
      %v2092 = vpop.f32.mrf.mxu0
      %v2093 = vadd.f32 0.0, %v2092
      %v2094 = vpop.f32.mrf.mxu0
      %v2095 = vadd.f32 0.0, %v2094
      %2096 = vmatmul.bf16.gmra.mxu0 %v2030
      %v2097 = vpop.f32.mrf.mxu0
      %v2098 = vadd.f32 0.0, %v2097
      %v2099 = vpop.f32.mrf.mxu0
      %v2100 = vadd.f32 0.0, %v2099
      %2101 = vmatmul.bf16.gmra.mxu0 %v2033
      %v2102 = vpop.f32.mrf.mxu0
      %v2103 = vadd.f32 0.0, %v2102
      %v2104 = vpop.f32.mrf.mxu0
      %v2105 = vadd.f32 0.0, %v2104
      %2106 = vmatmul.bf16.gmra.mxu0 %v2036
      %v2107 = vpop.f32.mrf.mxu0
      %v2108 = vadd.f32 0.0, %v2107
      %v2109 = vpop.f32.mrf.mxu0
      %v2110 = vadd.f32 0.0, %v2109
      %2111 = vmatmul.bf16.gmra.mxu0 %v2039
      %v2112 = vpop.f32.mrf.mxu0
      %v2113 = vadd.f32 0.0, %v2112
      %v2114 = vpop.f32.mrf.mxu0
      %v2115 = vadd.f32 0.0, %v2114
      %2116 = vmatmul.bf16.gmra.mxu0 %v2042
      %v2117 = vpop.f32.mrf.mxu0
      %v2118 = vadd.f32 0.0, %v2117
      %v2119 = vpop.f32.mrf.mxu0
      %v2120 = vadd.f32 0.0, %v2119
      %2121 = vmatmul.bf16.gmra.mxu0 %v2045
      %v2122 = vpop.f32.mrf.mxu0
      %v2123 = vadd.f32 0.0, %v2122
      %v2124 = vpop.f32.mrf.mxu0
      %v2125 = vadd.f32 0.0, %v2124
      %2126 = vmatmul.bf16.gmra.mxu0 %v2048
      %v2127 = vpop.f32.mrf.mxu0
      %v2128 = vadd.f32 0.0, %v2127
      %v2129 = vpop.f32.mrf.mxu0
      %v2130 = vadd.f32 0.0, %v2129
      %2131 = vmatmul.bf16.gmra.mxu0 %v2051
      %v2132 = vpop.f32.mrf.mxu0
      %v2133 = vadd.f32 0.0, %v2132
      %v2134 = vpop.f32.mrf.mxu0
      %v2135 = vadd.f32 0.0, %v2134
      %2136 = vmatmul.bf16.gmra.mxu0 %v2054
      %v2137 = vpop.f32.mrf.mxu0
      %v2138 = vadd.f32 0.0, %v2137
      %v2139 = vpop.f32.mrf.mxu0
      %v2140 = vadd.f32 0.0, %v2139
      %2141 = vmatmul.bf16.gmra.mxu0 %v2057
      %v2142 = vpop.f32.mrf.mxu0
      %v2143 = vadd.f32 0.0, %v2142
      %v2144 = vpop.f32.mrf.mxu0
      %v2145 = vadd.f32 0.0, %v2144
      %2146 = vmatmul.bf16.gmra.mxu0 %v2060
      %v2147 = vpop.f32.mrf.mxu0
      %v2148 = vadd.f32 0.0, %v2147
      %v2149 = vpop.f32.mrf.mxu0
      %v2150 = vadd.f32 0.0, %v2149
      %2151 = vmatmul.bf16.gmra.mxu0 %v2063
      %v2152 = vpop.f32.mrf.mxu0
      %v2153 = vadd.f32 0.0, %v2152
      %v2154 = vpop.f32.mrf.mxu0
      %v2155 = vadd.f32 0.0, %v2154
      %2156 = vdwg.mxu0
      %v2157 = vadd.f32 %v1937, %v2078
      %v2158 = vadd.f32 %v1938, %v2080
      %v2159 = vadd.f32 %v1939, %v2083
      %v2160 = vadd.f32 %v1940, %v2085
      %v2161 = vadd.f32 %v1941, %v2088
      %v2162 = vadd.f32 %v1942, %v2090
      %v2163 = vadd.f32 %v1943, %v2093
      %v2164 = vadd.f32 %v1944, %v2095
      %v2165 = vadd.f32 %v1945, %v2098
      %v2166 = vadd.f32 %v1946, %v2100
      %v2167 = vadd.f32 %v1947, %v2103
      %v2168 = vadd.f32 %v1948, %v2105
      %v2169 = vadd.f32 %v1949, %v2108
      %v2170 = vadd.f32 %v1950, %v2110
      %v2171 = vadd.f32 %v1951, %v2113
      %v2172 = vadd.f32 %v1952, %v2115
      %v2173 = vadd.f32 %v1953, %v2118
      %v2174 = vadd.f32 %v1954, %v2120
      %v2175 = vadd.f32 %v1955, %v2123
      %v2176 = vadd.f32 %v1956, %v2125
      %v2177 = vadd.f32 %v1957, %v2128
      %v2178 = vadd.f32 %v1958, %v2130
      %v2179 = vadd.f32 %v1959, %v2133
      %v2180 = vadd.f32 %v1960, %v2135
      %v2181 = vadd.f32 %v1961, %v2138
      %v2182 = vadd.f32 %v1962, %v2140
      %v2183 = vadd.f32 %v1963, %v2143
      %v2184 = vadd.f32 %v1964, %v2145
      %v2185 = vadd.f32 %v1965, %v2148
      %v2186 = vadd.f32 %v1966, %v2150
      %v2187 = vadd.f32 %v1967, %v2153
      %v2188 = vadd.f32 %v1968, %v2155
      %v2189 = vld [vmem:[%s1748 + $0x2] sm:$0xff]
      %v2190 = vld [vmem:[%s1748 + $0xa] sm:$0xff]
      %v2191 = vld [vmem:[%s1748 + $0x1a] sm:$0xff]
      %v2192 = vld [vmem:[%s1748 + $0x22] sm:$0xff]
      %v2193 = vld [vmem:[%s1748 + $0x32] sm:$0xff]
      %v2194 = vld [vmem:[%s1748 + $0x3a] sm:$0xff]
      %v2195 = vld [vmem:[%s1748 + $0x4a] sm:$0xff]
      %v2196 = vld [vmem:[%s1748 + $0x52] sm:$0xff]
      %v2197 = vld [vmem:[%s1748 + $0x62] sm:$0xff]
      %v2198 = vld [vmem:[%s1748 + $0x6a] sm:$0xff]
      %v2199 = vld [vmem:[%s1748 + $0x7a] sm:$0xff]
      %v2200 = vld [vmem:[%s1748 + $0x82] sm:$0xff]
      %v2201 = vld [vmem:[%s1748 + $0x92] sm:$0xff]
      %v2202 = vld [vmem:[%s1748 + $0x9a] sm:$0xff]
      %v2203 = vld [vmem:[%s1748 + $0xaa] sm:$0xff]
      %v2204 = vld [vmem:[%s1748 + $0xb2] sm:$0xff]
      %v2205 = vld [vmem:[%s1748 + $0xc2] sm:$0xff]
      %v2206 = vld [vmem:[%s1748 + $0xca] sm:$0xff]
      %v2207 = vld [vmem:[%s1748 + $0xda] sm:$0xff]
      %v2208 = vld [vmem:[%s1748 + $0xe2] sm:$0xff]
      %v2209 = vld [vmem:[%s1748 + $0xf2] sm:$0xff]
      %v2210 = vld [vmem:[%s1748 + $0xfa] sm:$0xff]
      %v2211 = vld [vmem:[%s1748 + $0x10a] sm:$0xff]
      %v2212 = vld [vmem:[%s1748 + $0x112] sm:$0xff]
      %v2213 = vld [vmem:[%s1748 + $0x122] sm:$0xff]
      %v2214 = vld [vmem:[%s1748 + $0x12a] sm:$0xff]
      %v2215 = vld [vmem:[%s1748 + $0x13a] sm:$0xff]
      %v2216 = vld [vmem:[%s1748 + $0x142] sm:$0xff]
      %v2217 = vld [vmem:[%s1748 + $0x152] sm:$0xff]
      %v2218 = vld [vmem:[%s1748 + $0x15a] sm:$0xff]
      %v2219 = vld [vmem:[%s1748 + $0x16a] sm:$0xff]
      %v2220 = vld [vmem:[%s1748 + $0x172] sm:$0xff]
      %v2221 = vpack.c.bf16 %v2190, %v2189
      %v2222 = vpack.c.bf16 %v2192, %v2191
      %v2223 = vpack.c.bf16 %v2194, %v2193
      %v2224 = vpack.c.bf16 %v2196, %v2195
      %v2225 = vpack.c.bf16 %v2198, %v2197
      %v2226 = vpack.c.bf16 %v2200, %v2199
      %v2227 = vpack.c.bf16 %v2202, %v2201
      %v2228 = vpack.c.bf16 %v2204, %v2203
      %v2229 = vpack.c.bf16 %v2206, %v2205
      %v2230 = vpack.c.bf16 %v2208, %v2207
      %v2231 = vpack.c.bf16 %v2210, %v2209
      %v2232 = vpack.c.bf16 %v2212, %v2211
      %v2233 = vpack.c.bf16 %v2214, %v2213
      %v2234 = vpack.c.bf16 %v2216, %v2215
      %v2235 = vpack.c.bf16 %v2218, %v2217
      %v2236 = vpack.c.bf16 %v2220, %v2219
      %v2238 = vsel %vm361, %v2221, 0
      %v2241 = vsel %vm361, %v2222, 0
      %v2244 = vsel %vm361, %v2223, 0
      %v2247 = vsel %vm361, %v2224, 0
      %v2250 = vsel %vm361, %v2225, 0
      %v2253 = vsel %vm361, %v2226, 0
      %v2256 = vsel %vm361, %v2227, 0
      %v2259 = vsel %vm361, %v2228, 0
      %v2262 = vsel %vm361, %v2229, 0
      %v2265 = vsel %vm361, %v2230, 0
      %v2268 = vsel %vm361, %v2231, 0
      %v2271 = vsel %vm361, %v2232, 0
      %v2274 = vsel %vm361, %v2233, 0
      %v2277 = vsel %vm361, %v2234, 0
      %v2280 = vsel %vm361, %v2235, 0
      %v2283 = vsel %vm361, %v2236, 0
      %v2286 = vsel %vm635, %v490, 0
      %2288 = vmatpush.bf16.msra.mxu0 0
      %2289 = vmatpush.bf16.msra.mxu0 0
      %2290 = vmatpush.bf16.msra.mxu0 0
      %2291 = vmatpush.bf16.msra.mxu0 0
      %2292 = vmatpush.bf16.msra.mxu0 0
      %2293 = vmatpush.bf16.msra.mxu0 0
      %2294 = vmatpush.bf16.msra.mxu0 0
      %2295 = vmatpush.bf16.msra.mxu0 %v2286
      %2296 = vmatmul.bf16.gmra.mxu0 %v2238
      %v2297 = vpop.f32.mrf.mxu0
      %v2298 = vadd.f32 0.0, %v2297
      %v2299 = vpop.f32.mrf.mxu0
      %v2300 = vadd.f32 0.0, %v2299
      %2301 = vmatmul.bf16.gmra.mxu0 %v2241
      %v2302 = vpop.f32.mrf.mxu0
      %v2303 = vadd.f32 0.0, %v2302
      %v2304 = vpop.f32.mrf.mxu0
      %v2305 = vadd.f32 0.0, %v2304
      %2306 = vmatmul.bf16.gmra.mxu0 %v2244
      %v2307 = vpop.f32.mrf.mxu0
      %v2308 = vadd.f32 0.0, %v2307
      %v2309 = vpop.f32.mrf.mxu0
      %v2310 = vadd.f32 0.0, %v2309
      %2311 = vmatmul.bf16.gmra.mxu0 %v2247
      %v2312 = vpop.f32.mrf.mxu0
      %v2313 = vadd.f32 0.0, %v2312
      %v2314 = vpop.f32.mrf.mxu0
      %v2315 = vadd.f32 0.0, %v2314
      %2316 = vmatmul.bf16.gmra.mxu0 %v2250
      %v2317 = vpop.f32.mrf.mxu0
      %v2318 = vadd.f32 0.0, %v2317
      %v2319 = vpop.f32.mrf.mxu0
      %v2320 = vadd.f32 0.0, %v2319
      %2321 = vmatmul.bf16.gmra.mxu0 %v2253
      %v2322 = vpop.f32.mrf.mxu0
      %v2323 = vadd.f32 0.0, %v2322
      %v2324 = vpop.f32.mrf.mxu0
      %v2325 = vadd.f32 0.0, %v2324
      %2326 = vmatmul.bf16.gmra.mxu0 %v2256
      %v2327 = vpop.f32.mrf.mxu0
      %v2328 = vadd.f32 0.0, %v2327
      %v2329 = vpop.f32.mrf.mxu0
      %v2330 = vadd.f32 0.0, %v2329
      %2331 = vmatmul.bf16.gmra.mxu0 %v2259
      %v2332 = vpop.f32.mrf.mxu0
      %v2333 = vadd.f32 0.0, %v2332
      %v2334 = vpop.f32.mrf.mxu0
      %v2335 = vadd.f32 0.0, %v2334
      %2336 = vmatmul.bf16.gmra.mxu0 %v2262
      %v2337 = vpop.f32.mrf.mxu0
      %v2338 = vadd.f32 0.0, %v2337
      %v2339 = vpop.f32.mrf.mxu0
      %v2340 = vadd.f32 0.0, %v2339
      %2341 = vmatmul.bf16.gmra.mxu0 %v2265
      %v2342 = vpop.f32.mrf.mxu0
      %v2343 = vadd.f32 0.0, %v2342
      %v2344 = vpop.f32.mrf.mxu0
      %v2345 = vadd.f32 0.0, %v2344
      %2346 = vmatmul.bf16.gmra.mxu0 %v2268
      %v2347 = vpop.f32.mrf.mxu0
      %v2348 = vadd.f32 0.0, %v2347
      %v2349 = vpop.f32.mrf.mxu0
      %v2350 = vadd.f32 0.0, %v2349
      %2351 = vmatmul.bf16.gmra.mxu0 %v2271
      %v2352 = vpop.f32.mrf.mxu0
      %v2353 = vadd.f32 0.0, %v2352
      %v2354 = vpop.f32.mrf.mxu0
      %v2355 = vadd.f32 0.0, %v2354
      %2356 = vmatmul.bf16.gmra.mxu0 %v2274
      %v2357 = vpop.f32.mrf.mxu0
      %v2358 = vadd.f32 0.0, %v2357
      %v2359 = vpop.f32.mrf.mxu0
      %v2360 = vadd.f32 0.0, %v2359
      %2361 = vmatmul.bf16.gmra.mxu0 %v2277
      %v2362 = vpop.f32.mrf.mxu0
      %v2363 = vadd.f32 0.0, %v2362
      %v2364 = vpop.f32.mrf.mxu0
      %v2365 = vadd.f32 0.0, %v2364
      %2366 = vmatmul.bf16.gmra.mxu0 %v2280
      %v2367 = vpop.f32.mrf.mxu0
      %v2368 = vadd.f32 0.0, %v2367
      %v2369 = vpop.f32.mrf.mxu0
      %v2370 = vadd.f32 0.0, %v2369
      %2371 = vmatmul.bf16.gmra.mxu0 %v2283
      %v2372 = vpop.f32.mrf.mxu0
      %v2373 = vadd.f32 0.0, %v2372
      %v2374 = vpop.f32.mrf.mxu0
      %v2375 = vadd.f32 0.0, %v2374
      %2376 = vdwg.mxu0
      %v2377 = vadd.f32 %v2157, %v2298
      %v2378 = vadd.f32 %v2158, %v2300
      %v2379 = vadd.f32 %v2159, %v2303
      %v2380 = vadd.f32 %v2160, %v2305
      %v2381 = vadd.f32 %v2161, %v2308
      %v2382 = vadd.f32 %v2162, %v2310
      %v2383 = vadd.f32 %v2163, %v2313
      %v2384 = vadd.f32 %v2164, %v2315
      %v2385 = vadd.f32 %v2165, %v2318
      %v2386 = vadd.f32 %v2166, %v2320
      %v2387 = vadd.f32 %v2167, %v2323
      %v2388 = vadd.f32 %v2168, %v2325
      %v2389 = vadd.f32 %v2169, %v2328
      %v2390 = vadd.f32 %v2170, %v2330
      %v2391 = vadd.f32 %v2171, %v2333
      %v2392 = vadd.f32 %v2172, %v2335
      %v2393 = vadd.f32 %v2173, %v2338
      %v2394 = vadd.f32 %v2174, %v2340
      %v2395 = vadd.f32 %v2175, %v2343
      %v2396 = vadd.f32 %v2176, %v2345
      %v2397 = vadd.f32 %v2177, %v2348
      %v2398 = vadd.f32 %v2178, %v2350
      %v2399 = vadd.f32 %v2179, %v2353
      %v2400 = vadd.f32 %v2180, %v2355
      %v2401 = vadd.f32 %v2181, %v2358
      %v2402 = vadd.f32 %v2182, %v2360
      %v2403 = vadd.f32 %v2183, %v2363
      %v2404 = vadd.f32 %v2184, %v2365
      %v2405 = vadd.f32 %v2185, %v2368
      %v2406 = vadd.f32 %v2186, %v2370
      %v2407 = vadd.f32 %v2187, %v2373
      %v2408 = vadd.f32 %v2188, %v2375
      %v2409 = vld [vmem:[%s2] sm:$0x1]
      %v2411 = vperm.slane %v2409, 0
      %v2413 = vmul.f32 %v2377, %v2411
      %v2414 = vmul.f32 %v2378, %v2411
      %v2415 = vmul.f32 %v2379, %v2411
      %v2416 = vmul.f32 %v2380, %v2411
      %v2417 = vmul.f32 %v2381, %v2411
      %v2418 = vmul.f32 %v2382, %v2411
      %v2419 = vmul.f32 %v2383, %v2411
      %v2420 = vmul.f32 %v2384, %v2411
      %v2421 = vmul.f32 %v2385, %v2411
      %v2422 = vmul.f32 %v2386, %v2411
      %v2423 = vmul.f32 %v2387, %v2411
      %v2424 = vmul.f32 %v2388, %v2411
      %v2425 = vmul.f32 %v2389, %v2411
      %v2426 = vmul.f32 %v2390, %v2411
      %v2427 = vmul.f32 %v2391, %v2411
      %v2428 = vmul.f32 %v2392, %v2411
      %v2429 = vmul.f32 %v2393, %v2411
      %v2430 = vmul.f32 %v2394, %v2411
      %v2431 = vmul.f32 %v2395, %v2411
      %v2432 = vmul.f32 %v2396, %v2411
      %v2433 = vmul.f32 %v2397, %v2411
      %v2434 = vmul.f32 %v2398, %v2411
      %v2435 = vmul.f32 %v2399, %v2411
      %v2436 = vmul.f32 %v2400, %v2411
      %v2437 = vmul.f32 %v2401, %v2411
      %v2438 = vmul.f32 %v2402, %v2411
      %v2439 = vmul.f32 %v2403, %v2411
      %v2440 = vmul.f32 %v2404, %v2411
      %v2441 = vmul.f32 %v2405, %v2411
      %v2442 = vmul.f32 %v2406, %v2411
      %v2443 = vmul.f32 %v2407, %v2411
      %v2444 = vmul.f32 %v2408, %v2411
      %v2445 = vld [vmem:[%s3] sm:$0x1]
      %v2447 = vperm.slane %v2445, 0
      %v2449 = vadd.f32 %v2413, %v2447
      %v2450 = vadd.f32 %v2414, %v2447
      %v2451 = vadd.f32 %v2415, %v2447
      %v2452 = vadd.f32 %v2416, %v2447
      %v2453 = vadd.f32 %v2417, %v2447
      %v2454 = vadd.f32 %v2418, %v2447
      %v2455 = vadd.f32 %v2419, %v2447
      %v2456 = vadd.f32 %v2420, %v2447
      %v2457 = vadd.f32 %v2421, %v2447
      %v2458 = vadd.f32 %v2422, %v2447
      %v2459 = vadd.f32 %v2423, %v2447
      %v2460 = vadd.f32 %v2424, %v2447
      %v2461 = vadd.f32 %v2425, %v2447
      %v2462 = vadd.f32 %v2426, %v2447
      %v2463 = vadd.f32 %v2427, %v2447
      %v2464 = vadd.f32 %v2428, %v2447
      %v2465 = vadd.f32 %v2429, %v2447
      %v2466 = vadd.f32 %v2430, %v2447
      %v2467 = vadd.f32 %v2431, %v2447
      %v2468 = vadd.f32 %v2432, %v2447
      %v2469 = vadd.f32 %v2433, %v2447
      %v2470 = vadd.f32 %v2434, %v2447
      %v2471 = vadd.f32 %v2435, %v2447
      %v2472 = vadd.f32 %v2436, %v2447
      %v2473 = vadd.f32 %v2437, %v2447
      %v2474 = vadd.f32 %v2438, %v2447
      %v2475 = vadd.f32 %v2439, %v2447
      %v2476 = vadd.f32 %v2440, %v2447
      %v2477 = vadd.f32 %v2441, %v2447
      %v2478 = vadd.f32 %v2442, %v2447
      %v2479 = vadd.f32 %v2443, %v2447
      %v2480 = vadd.f32 %v2444, %v2447
      %vm2481 = vcmask 261120
      %2482 = vst.msk [vmem:[#allocation3] sm:$0xff] %vm2481, 0.0
      %2483 = vst.msk [vmem:[#allocation3 + $0x8] sm:$0xff] %vm2481, 0.0
      %vm2484 = vcmask 254976
      %2485 = vst.msk [vmem:[#allocation3 + $0x10] sm:$0x3] %vm2484, 0.0
      %2486 = vst.msk [vmem:[#allocation3 + $0x18] sm:$0xff] %vm2481, 0.0
      %2487 = vst.msk [vmem:[#allocation3 + $0x20] sm:$0xff] %vm2481, 0.0
      %2488 = vst.msk [vmem:[#allocation3 + $0x28] sm:$0x3] %vm2484, 0.0
      %2489 = vst.msk [vmem:[#allocation3 + $0x30] sm:$0xff] %vm2481, 0.0
      %2490 = vst.msk [vmem:[#allocation3 + $0x38] sm:$0xff] %vm2481, 0.0
      %2491 = vst.msk [vmem:[#allocation3 + $0x40] sm:$0x3] %vm2484, 0.0
      %2492 = vst.msk [vmem:[#allocation3 + $0x48] sm:$0xff] %vm2481, 0.0
      %2493 = vst.msk [vmem:[#allocation3 + $0x50] sm:$0xff] %vm2481, 0.0
      %2494 = vst.msk [vmem:[#allocation3 + $0x58] sm:$0x3] %vm2484, 0.0
      %2495 = vst.msk [vmem:[#allocation3 + $0x60] sm:$0xff] %vm2481, 0.0
      %2496 = vst.msk [vmem:[#allocation3 + $0x68] sm:$0xff] %vm2481, 0.0
      %2497 = vst.msk [vmem:[#allocation3 + $0x70] sm:$0x3] %vm2484, 0.0
      %2498 = vst.msk [vmem:[#allocation3 + $0x78] sm:$0xff] %vm2481, 0.0
      %2499 = vst.msk [vmem:[#allocation3 + $0x80] sm:$0xff] %vm2481, 0.0
      %2500 = vst.msk [vmem:[#allocation3 + $0x88] sm:$0x3] %vm2484, 0.0
      %2501 = vst.msk [vmem:[#allocation3 + $0x90] sm:$0xff] %vm2481, 0.0
      %2502 = vst.msk [vmem:[#allocation3 + $0x98] sm:$0xff] %vm2481, 0.0
      %2503 = vst.msk [vmem:[#allocation3 + $0xa0] sm:$0x3] %vm2484, 0.0
      %2504 = vst.msk [vmem:[#allocation3 + $0xa8] sm:$0xff] %vm2481, 0.0
      %2505 = vst.msk [vmem:[#allocation3 + $0xb0] sm:$0xff] %vm2481, 0.0
      %2506 = vst.msk [vmem:[#allocation3 + $0xb8] sm:$0x3] %vm2484, 0.0
      %2507 = vst.msk [vmem:[#allocation3 + $0xc0] sm:$0xff] %vm2481, 0.0
      %2508 = vst.msk [vmem:[#allocation3 + $0xc8] sm:$0xff] %vm2481, 0.0
      %2509 = vst.msk [vmem:[#allocation3 + $0xd0] sm:$0x3] %vm2484, 0.0
      %2510 = vst.msk [vmem:[#allocation3 + $0xd8] sm:$0xff] %vm2481, 0.0
      %2511 = vst.msk [vmem:[#allocation3 + $0xe0] sm:$0xff] %vm2481, 0.0
      %2512 = vst.msk [vmem:[#allocation3 + $0xe8] sm:$0x3] %vm2484, 0.0
      %2513 = vst.msk [vmem:[#allocation3 + $0xf0] sm:$0xff] %vm2481, 0.0
      %2514 = vst.msk [vmem:[#allocation3 + $0xf8] sm:$0xff] %vm2481, 0.0
      %2515 = vst.msk [vmem:[#allocation3 + $0x100] sm:$0x3] %vm2484, 0.0
      %2516 = vst.msk [vmem:[#allocation3 + $0x108] sm:$0xff] %vm2481, 0.0
      %2517 = vst.msk [vmem:[#allocation3 + $0x110] sm:$0xff] %vm2481, 0.0
      %2518 = vst.msk [vmem:[#allocation3 + $0x118] sm:$0x3] %vm2484, 0.0
      %2519 = vst.msk [vmem:[#allocation3 + $0x120] sm:$0xff] %vm2481, 0.0
      %2520 = vst.msk [vmem:[#allocation3 + $0x128] sm:$0xff] %vm2481, 0.0
      %2521 = vst.msk [vmem:[#allocation3 + $0x130] sm:$0x3] %vm2484, 0.0
      %2522 = vst.msk [vmem:[#allocation3 + $0x138] sm:$0xff] %vm2481, 0.0
      %2523 = vst.msk [vmem:[#allocation3 + $0x140] sm:$0xff] %vm2481, 0.0
      %2524 = vst.msk [vmem:[#allocation3 + $0x148] sm:$0x3] %vm2484, 0.0
      %2525 = vst.msk [vmem:[#allocation3 + $0x150] sm:$0xff] %vm2481, 0.0
      %2526 = vst.msk [vmem:[#allocation3 + $0x158] sm:$0xff] %vm2481, 0.0
      %2527 = vst.msk [vmem:[#allocation3 + $0x160] sm:$0x3] %vm2484, 0.0
      %2528 = vst.msk [vmem:[#allocation3 + $0x168] sm:$0xff] %vm2481, 0.0
      %2529 = vst.msk [vmem:[#allocation3 + $0x170] sm:$0xff] %vm2481, 0.0
      %2530 = vst.msk [vmem:[#allocation3 + $0x178] sm:$0x3] %vm2484, 0.0
      %2531 = vst.msk [vmem:[#allocation3 + $0x180] sm:$0xff] %vm2481, 0.0
      %2532 = vst.msk [vmem:[#allocation3 + $0x188] sm:$0xff] %vm2481, 0.0
      %2533 = vst.msk [vmem:[#allocation3 + $0x190] sm:$0x3] %vm2484, 0.0
      %2534 = vst.msk [vmem:[#allocation3 + $0x198] sm:$0xff] %vm2481, 0.0
      %2535 = vst.msk [vmem:[#allocation3 + $0x1a0] sm:$0xff] %vm2481, 0.0
      %2536 = vst.msk [vmem:[#allocation3 + $0x1a8] sm:$0x3] %vm2484, 0.0
      %v2537 = vmax.f32 %v2449, 0.0
      %v2538 = vmax.f32 %v2450, 0.0
      %v2539 = vmax.f32 %v2451, 0.0
      %v2540 = vmax.f32 %v2452, 0.0
      %v2541 = vmax.f32 %v2453, 0.0
      %v2542 = vmax.f32 %v2454, 0.0
      %v2543 = vmax.f32 %v2455, 0.0
      %v2544 = vmax.f32 %v2456, 0.0
      %v2545 = vmax.f32 %v2457, 0.0
      %v2546 = vmax.f32 %v2458, 0.0
      %v2547 = vmax.f32 %v2459, 0.0
      %v2548 = vmax.f32 %v2460, 0.0
      %v2549 = vmax.f32 %v2461, 0.0
      %v2550 = vmax.f32 %v2462, 0.0
      %v2551 = vmax.f32 %v2463, 0.0
      %v2552 = vmax.f32 %v2464, 0.0
      %v2553 = vmax.f32 %v2465, 0.0
      %v2554 = vmax.f32 %v2466, 0.0
      %v2555 = vmax.f32 %v2467, 0.0
      %v2556 = vmax.f32 %v2468, 0.0
      %v2557 = vmax.f32 %v2469, 0.0
      %v2558 = vmax.f32 %v2470, 0.0
      %v2559 = vmax.f32 %v2471, 0.0
      %v2560 = vmax.f32 %v2472, 0.0
      %v2561 = vmax.f32 %v2473, 0.0
      %v2562 = vmax.f32 %v2474, 0.0
      %v2563 = vmax.f32 %v2475, 0.0
      %v2564 = vmax.f32 %v2476, 0.0
      %v2565 = vmax.f32 %v2477, 0.0
      %v2566 = vmax.f32 %v2478, 0.0
      %v2567 = vmax.f32 %v2479, 0.0
      %v2568 = vmax.f32 %v2480, 0.0
      %v2569 = vmin.f32 %v2537, 6.0
      %v2570 = vmin.f32 %v2538, 6.0
      %v2571 = vmin.f32 %v2539, 6.0
      %v2572 = vmin.f32 %v2540, 6.0
      %v2573 = vmin.f32 %v2541, 6.0
      %v2574 = vmin.f32 %v2542, 6.0
      %v2575 = vmin.f32 %v2543, 6.0
      %v2576 = vmin.f32 %v2544, 6.0
      %v2577 = vmin.f32 %v2545, 6.0
      %v2578 = vmin.f32 %v2546, 6.0
      %v2579 = vmin.f32 %v2547, 6.0
      %v2580 = vmin.f32 %v2548, 6.0
      %v2581 = vmin.f32 %v2549, 6.0
      %v2582 = vmin.f32 %v2550, 6.0
      %v2583 = vmin.f32 %v2551, 6.0
      %v2584 = vmin.f32 %v2552, 6.0
      %v2585 = vmin.f32 %v2553, 6.0
      %v2586 = vmin.f32 %v2554, 6.0
      %v2587 = vmin.f32 %v2555, 6.0
      %v2588 = vmin.f32 %v2556, 6.0
      %v2589 = vmin.f32 %v2557, 6.0
      %v2590 = vmin.f32 %v2558, 6.0
      %v2591 = vmin.f32 %v2559, 6.0
      %v2592 = vmin.f32 %v2560, 6.0
      %v2593 = vmin.f32 %v2561, 6.0
      %v2594 = vmin.f32 %v2562, 6.0
      %v2595 = vmin.f32 %v2563, 6.0
      %v2596 = vmin.f32 %v2564, 6.0
      %v2597 = vmin.f32 %v2565, 6.0
      %v2598 = vmin.f32 %v2566, 6.0
      %v2599 = vmin.f32 %v2567, 6.0
      %v2600 = vmin.f32 %v2568, 6.0
      %s2601 = scalar_lea.vmem [#allocation3], 24
      %2602 = vst.msk [vmem:[%s2601 + $0x1] sm:$0xff] %vm2481, %v2569
      %2603 = vst.msk [vmem:[%s2601 + $0x9] sm:$0xff] %vm2481, %v2570
      %2604 = vst.msk [vmem:[%s2601 + $0x19] sm:$0xff] %vm2481, %v2571
      %2605 = vst.msk [vmem:[%s2601 + $0x21] sm:$0xff] %vm2481, %v2572
      %2606 = vst.msk [vmem:[%s2601 + $0x31] sm:$0xff] %vm2481, %v2573
      %2607 = vst.msk [vmem:[%s2601 + $0x39] sm:$0xff] %vm2481, %v2574
      %2608 = vst.msk [vmem:[%s2601 + $0x49] sm:$0xff] %vm2481, %v2575
      %2609 = vst.msk [vmem:[%s2601 + $0x51] sm:$0xff] %vm2481, %v2576
      %2610 = vst.msk [vmem:[%s2601 + $0x61] sm:$0xff] %vm2481, %v2577
      %2611 = vst.msk [vmem:[%s2601 + $0x69] sm:$0xff] %vm2481, %v2578
      %2612 = vst.msk [vmem:[%s2601 + $0x79] sm:$0xff] %vm2481, %v2579
      %2613 = vst.msk [vmem:[%s2601 + $0x81] sm:$0xff] %vm2481, %v2580
      %2614 = vst.msk [vmem:[%s2601 + $0x91] sm:$0xff] %vm2481, %v2581
      %2615 = vst.msk [vmem:[%s2601 + $0x99] sm:$0xff] %vm2481, %v2582
      %2616 = vst.msk [vmem:[%s2601 + $0xa9] sm:$0xff] %vm2481, %v2583
      %2617 = vst.msk [vmem:[%s2601 + $0xb1] sm:$0xff] %vm2481, %v2584
      %2618 = vst.msk [vmem:[%s2601 + $0xc1] sm:$0xff] %vm2481, %v2585
      %2619 = vst.msk [vmem:[%s2601 + $0xc9] sm:$0xff] %vm2481, %v2586
      %2620 = vst.msk [vmem:[%s2601 + $0xd9] sm:$0xff] %vm2481, %v2587
      %2621 = vst.msk [vmem:[%s2601 + $0xe1] sm:$0xff] %vm2481, %v2588
      %2622 = vst.msk [vmem:[%s2601 + $0xf1] sm:$0xff] %vm2481, %v2589
      %2623 = vst.msk [vmem:[%s2601 + $0xf9] sm:$0xff] %vm2481, %v2590
      %2624 = vst.msk [vmem:[%s2601 + $0x109] sm:$0xff] %vm2481, %v2591
      %2625 = vst.msk [vmem:[%s2601 + $0x111] sm:$0xff] %vm2481, %v2592
      %2626 = vst.msk [vmem:[%s2601 + $0x121] sm:$0xff] %vm2481, %v2593
      %2627 = vst.msk [vmem:[%s2601 + $0x129] sm:$0xff] %vm2481, %v2594
      %2628 = vst.msk [vmem:[%s2601 + $0x139] sm:$0xff] %vm2481, %v2595
      %2629 = vst.msk [vmem:[%s2601 + $0x141] sm:$0xff] %vm2481, %v2596
      %2630 = vst.msk [vmem:[%s2601 + $0x151] sm:$0xff] %vm2481, %v2597
      %2631 = vst.msk [vmem:[%s2601 + $0x159] sm:$0xff] %vm2481, %v2598
      %2632 = vst.msk [vmem:[%s2601 + $0x169] sm:$0xff] %vm2481, %v2599
      %2633 = vst.msk [vmem:[%s2601 + $0x171] sm:$0xff] %vm2481, %v2600
      %v2634 = vld [vmem:[%s4] sm:$0xf]
      %v2635 = vld [vmem:[%s4 + $0x4] sm:$0xf]
      %v2636 = vld [vmem:[%s4 + $0x8] sm:$0xf]
      %v2637 = vld [vmem:[%s4 + $0xc] sm:$0xf]
      %v2638 = vld [vmem:[%s4 + $0x10] sm:$0xf]
      %v2639 = vld [vmem:[%s4 + $0x14] sm:$0xf]
      %v2640 = vld [vmem:[%s4 + $0x18] sm:$0xf]
      %v2641 = vld [vmem:[%s4 + $0x1c] sm:$0xf]
      %v2642 = vld [vmem:[%s4 + $0x20] sm:$0xf]
      %v2643 = vld [vmem:[%s4 + $0x24] sm:$0xf]
      %v2644 = vld [vmem:[%s4 + $0x28] sm:$0xf]
      %v2645 = vld [vmem:[%s4 + $0x2c] sm:$0xf]
      %v2646 = vld [vmem:[%s4 + $0x30] sm:$0xf]
      %v2647 = vld [vmem:[%s4 + $0x34] sm:$0xf]
      %v2648 = vld [vmem:[%s4 + $0x38] sm:$0xf]
      %v2649 = vld [vmem:[%s4 + $0x3c] sm:$0xf]
      %v2650 = vld [vmem:[%s4 + $0x40] sm:$0xf]
      %v2651 = vld [vmem:[%s4 + $0x44] sm:$0xf]
      %v2652 = vld [vmem:[%s4 + $0x48] sm:$0xf]
      %v2653 = vld [vmem:[%s4 + $0x4c] sm:$0xf]
      %v2654 = vld [vmem:[%s4 + $0x50] sm:$0xf]
      %v2655 = vld [vmem:[%s4 + $0x54] sm:$0xf]
      %v2656 = vld [vmem:[%s4 + $0x58] sm:$0xf]
      %v2657 = vld [vmem:[%s4 + $0x5c] sm:$0xf]
      %v2658 = vld [vmem:[%s4 + $0x60] sm:$0xf]
      %v2659 = vld [vmem:[%s4 + $0x64] sm:$0xf]
      %v2660 = vld [vmem:[%s4 + $0x68] sm:$0xf]
      %v2661 = vld [vmem:[%s4 + $0x6c] sm:$0xf]
      %v2662 = vld [vmem:[%s4 + $0x70] sm:$0xf]
      %v2663 = vld [vmem:[%s4 + $0x74] sm:$0xf]
      %v2664 = vld [vmem:[%s4 + $0x78] sm:$0xf]
      %v2665 = vld [vmem:[%s4 + $0x7c] sm:$0xf]
      %v2666 = vld [vmem:[%s4 + $0x80] sm:$0xf]
      %v2667 = vld [vmem:[%s4 + $0x84] sm:$0xf]
      %v2668 = vld [vmem:[%s4 + $0x88] sm:$0xf]
      %v2669 = vld [vmem:[%s4 + $0x8c] sm:$0xf]
      %v2670 = vld [vmem:[#allocation3] sm:$0xff]
      %v2671 = vld [vmem:[#allocation3 + $0x8] sm:$0xff]
      %v2672 = vld [vmem:[#allocation3 + $0x18] sm:$0xff]
      %v2673 = vld [vmem:[#allocation3 + $0x20] sm:$0xff]
      %v2674 = vld [vmem:[#allocation3 + $0x30] sm:$0xff]
      %v2675 = vld [vmem:[#allocation3 + $0x38] sm:$0xff]
      %v2676 = vld [vmem:[#allocation3 + $0x48] sm:$0xff]
      %v2677 = vld [vmem:[#allocation3 + $0x50] sm:$0xff]
      %v2678 = vld [vmem:[#allocation3 + $0x60] sm:$0xff]
      %v2679 = vld [vmem:[#allocation3 + $0x68] sm:$0xff]
      %v2680 = vld [vmem:[#allocation3 + $0x78] sm:$0xff]
      %v2681 = vld [vmem:[#allocation3 + $0x80] sm:$0xff]
      %v2682 = vld [vmem:[#allocation3 + $0x90] sm:$0xff]
      %v2683 = vld [vmem:[#allocation3 + $0x98] sm:$0xff]
      %v2684 = vld [vmem:[#allocation3 + $0xa8] sm:$0xff]
      %v2685 = vld [vmem:[#allocation3 + $0xb0] sm:$0xff]
      %v2686 = vld [vmem:[#allocation3 + $0xc0] sm:$0xff]
      %v2687 = vld [vmem:[#allocation3 + $0xc8] sm:$0xff]
      %v2688 = vld [vmem:[#allocation3 + $0xd8] sm:$0xff]
      %v2689 = vld [vmem:[#allocation3 + $0xe0] sm:$0xff]
      %v2690 = vld [vmem:[#allocation3 + $0xf0] sm:$0xff]
      %v2691 = vld [vmem:[#allocation3 + $0xf8] sm:$0xff]
      %v2692 = vld [vmem:[#allocation3 + $0x108] sm:$0xff]
      %v2693 = vld [vmem:[#allocation3 + $0x110] sm:$0xff]
      %v2694 = vld [vmem:[#allocation3 + $0x120] sm:$0xff]
      %v2695 = vld [vmem:[#allocation3 + $0x128] sm:$0xff]
      %v2696 = vld [vmem:[#allocation3 + $0x138] sm:$0xff]
      %v2697 = vld [vmem:[#allocation3 + $0x140] sm:$0xff]
      %v2698 = vld [vmem:[#allocation3 + $0x150] sm:$0xff]
      %v2699 = vld [vmem:[#allocation3 + $0x158] sm:$0xff]
      %v2700 = vld [vmem:[#allocation3 + $0x168] sm:$0xff]
      %v2701 = vld [vmem:[#allocation3 + $0x170] sm:$0xff]
      %v2702 = vpack.c.bf16 %v2671, %v2670
      %v2703 = vpack.c.bf16 %v2673, %v2672
      %v2704 = vpack.c.bf16 %v2675, %v2674
      %v2705 = vpack.c.bf16 %v2677, %v2676
      %v2706 = vpack.c.bf16 %v2679, %v2678
      %v2707 = vpack.c.bf16 %v2681, %v2680
      %v2708 = vpack.c.bf16 %v2683, %v2682
      %v2709 = vpack.c.bf16 %v2685, %v2684
      %v2710 = vpack.c.bf16 %v2687, %v2686
      %v2711 = vpack.c.bf16 %v2689, %v2688
      %v2712 = vpack.c.bf16 %v2691, %v2690
      %v2713 = vpack.c.bf16 %v2693, %v2692
      %v2714 = vpack.c.bf16 %v2695, %v2694
      %v2715 = vpack.c.bf16 %v2697, %v2696
      %v2716 = vpack.c.bf16 %v2699, %v2698
      %v2717 = vpack.c.bf16 %v2701, %v2700
      %v2718 = vld [vmem:[#allocation3 + $0x1] sm:$0xff]
      %v2719 = vld [vmem:[#allocation3 + $0x9] sm:$0xff]
      %v2720 = vld [vmem:[#allocation3 + $0x19] sm:$0xff]
      %v2721 = vld [vmem:[#allocation3 + $0x21] sm:$0xff]
      %v2722 = vld [vmem:[#allocation3 + $0x31] sm:$0xff]
      %v2723 = vld [vmem:[#allocation3 + $0x39] sm:$0xff]
      %v2724 = vld [vmem:[#allocation3 + $0x49] sm:$0xff]
      %v2725 = vld [vmem:[#allocation3 + $0x51] sm:$0xff]
      %v2726 = vld [vmem:[#allocation3 + $0x61] sm:$0xff]
      %v2727 = vld [vmem:[#allocation3 + $0x69] sm:$0xff]
      %v2728 = vld [vmem:[#allocation3 + $0x79] sm:$0xff]
      %v2729 = vld [vmem:[#allocation3 + $0x81] sm:$0xff]
      %v2730 = vld [vmem:[#allocation3 + $0x91] sm:$0xff]
      %v2731 = vld [vmem:[#allocation3 + $0x99] sm:$0xff]
      %v2732 = vld [vmem:[#allocation3 + $0xa9] sm:$0xff]
      %v2733 = vld [vmem:[#allocation3 + $0xb1] sm:$0xff]
      %v2734 = vld [vmem:[#allocation3 + $0xc1] sm:$0xff]
      %v2735 = vld [vmem:[#allocation3 + $0xc9] sm:$0xff]
      %v2736 = vld [vmem:[#allocation3 + $0xd9] sm:$0xff]
      %v2737 = vld [vmem:[#allocation3 + $0xe1] sm:$0xff]
      %v2738 = vld [vmem:[#allocation3 + $0xf1] sm:$0xff]
      %v2739 = vld [vmem:[#allocation3 + $0xf9] sm:$0xff]
      %v2740 = vld [vmem:[#allocation3 + $0x109] sm:$0xff]
      %v2741 = vld [vmem:[#allocation3 + $0x111] sm:$0xff]
      %v2742 = vld [vmem:[#allocation3 + $0x121] sm:$0xff]
      %v2743 = vld [vmem:[#allocation3 + $0x129] sm:$0xff]
      %v2744 = vld [vmem:[#allocation3 + $0x139] sm:$0xff]
      %v2745 = vld [vmem:[#allocation3 + $0x141] sm:$0xff]
      %v2746 = vld [vmem:[#allocation3 + $0x151] sm:$0xff]
      %v2747 = vld [vmem:[#allocation3 + $0x159] sm:$0xff]
      %v2748 = vld [vmem:[#allocation3 + $0x169] sm:$0xff]
      %v2749 = vld [vmem:[#allocation3 + $0x171] sm:$0xff]
      %v2750 = vpack.c.bf16 %v2719, %v2718
      %v2751 = vpack.c.bf16 %v2721, %v2720
      %v2752 = vpack.c.bf16 %v2723, %v2722
      %v2753 = vpack.c.bf16 %v2725, %v2724
      %v2754 = vpack.c.bf16 %v2727, %v2726
      %v2755 = vpack.c.bf16 %v2729, %v2728
      %v2756 = vpack.c.bf16 %v2731, %v2730
      %v2757 = vpack.c.bf16 %v2733, %v2732
      %v2758 = vpack.c.bf16 %v2735, %v2734
      %v2759 = vpack.c.bf16 %v2737, %v2736
      %v2760 = vpack.c.bf16 %v2739, %v2738
      %v2761 = vpack.c.bf16 %v2741, %v2740
      %v2762 = vpack.c.bf16 %v2743, %v2742
      %v2763 = vpack.c.bf16 %v2745, %v2744
      %v2764 = vpack.c.bf16 %v2747, %v2746
      %v2765 = vpack.c.bf16 %v2749, %v2748
      %v2770 = vunpack.c.l.b16 %v2638
      %v2771 = vunpack.c.l.b16 %v2639
      %v2772 = vunpack.c.l.b16 %v2640
      %v2773 = vunpack.c.l.b16 %v2641
      %v2774 = vpack.c.b16 %v2771, %v2770
      %v2775 = vpack.c.b16 %v2773, %v2772
      %v2779 = vsel %vm2481, %v2750, 0
      %v2782 = vsel %vm2481, %v2751, 0
      %v2785 = vsel %vm2481, %v2752, 0
      %v2788 = vsel %vm2481, %v2753, 0
      %v2791 = vsel %vm2481, %v2754, 0
      %v2794 = vsel %vm2481, %v2755, 0
      %v2797 = vsel %vm2481, %v2756, 0
      %v2800 = vsel %vm2481, %v2757, 0
      %v2803 = vsel %vm2481, %v2758, 0
      %v2806 = vsel %vm2481, %v2759, 0
      %v2809 = vsel %vm2481, %v2760, 0
      %v2812 = vsel %vm2481, %v2761, 0
      %v2815 = vsel %vm2481, %v2762, 0
      %v2818 = vsel %vm2481, %v2763, 0
      %v2821 = vsel %vm2481, %v2764, 0
      %v2824 = vsel %vm2481, %v2765, 0
      %2826 = vmatpush.bf16.msra.mxu0 0
      %2827 = vmatpush.bf16.msra.mxu0 0
      %2828 = vmatpush.bf16.msra.mxu0 0
      %2829 = vmatpush.bf16.msra.mxu0 0
      %2830 = vmatpush.bf16.msra.mxu0 0
      %2831 = vmatpush.bf16.msra.mxu0 0
      %2832 = vmatpush.bf16.msra.mxu0 %v2775
      %2833 = vmatpush.bf16.msra.mxu0 %v2774
      %2834 = vmatmul.bf16.gmra.mxu0 %v2779
      %v2835 = vpop.f32.mrf.mxu0
      %v2836 = vadd.f32 0.0, %v2835
      %v2837 = vpop.f32.mrf.mxu0
      %v2838 = vadd.f32 0.0, %v2837
      %2839 = vmatmul.bf16.gmra.mxu0 %v2782
      %v2840 = vpop.f32.mrf.mxu0
      %v2841 = vadd.f32 0.0, %v2840
      %v2842 = vpop.f32.mrf.mxu0
      %v2843 = vadd.f32 0.0, %v2842
      %2844 = vmatmul.bf16.gmra.mxu0 %v2785
      %v2845 = vpop.f32.mrf.mxu0
      %v2846 = vadd.f32 0.0, %v2845
      %v2847 = vpop.f32.mrf.mxu0
      %v2848 = vadd.f32 0.0, %v2847
      %2849 = vmatmul.bf16.gmra.mxu0 %v2788
      %v2850 = vpop.f32.mrf.mxu0
      %v2851 = vadd.f32 0.0, %v2850
      %v2852 = vpop.f32.mrf.mxu0
      %v2853 = vadd.f32 0.0, %v2852
      %2854 = vmatmul.bf16.gmra.mxu0 %v2791
      %v2855 = vpop.f32.mrf.mxu0
      %v2856 = vadd.f32 0.0, %v2855
      %v2857 = vpop.f32.mrf.mxu0
      %v2858 = vadd.f32 0.0, %v2857
      %2859 = vmatmul.bf16.gmra.mxu0 %v2794
      %v2860 = vpop.f32.mrf.mxu0
      %v2861 = vadd.f32 0.0, %v2860
      %v2862 = vpop.f32.mrf.mxu0
      %v2863 = vadd.f32 0.0, %v2862
      %2864 = vmatmul.bf16.gmra.mxu0 %v2797
      %v2865 = vpop.f32.mrf.mxu0
      %v2866 = vadd.f32 0.0, %v2865
      %v2867 = vpop.f32.mrf.mxu0
      %v2868 = vadd.f32 0.0, %v2867
      %2869 = vmatmul.bf16.gmra.mxu0 %v2800
      %v2870 = vpop.f32.mrf.mxu0
      %v2871 = vadd.f32 0.0, %v2870
      %v2872 = vpop.f32.mrf.mxu0
      %v2873 = vadd.f32 0.0, %v2872
      %2874 = vmatmul.bf16.gmra.mxu0 %v2803
      %v2875 = vpop.f32.mrf.mxu0
      %v2876 = vadd.f32 0.0, %v2875
      %v2877 = vpop.f32.mrf.mxu0
      %v2878 = vadd.f32 0.0, %v2877
      %2879 = vmatmul.bf16.gmra.mxu0 %v2806
      %v2880 = vpop.f32.mrf.mxu0
      %v2881 = vadd.f32 0.0, %v2880
      %v2882 = vpop.f32.mrf.mxu0
      %v2883 = vadd.f32 0.0, %v2882
      %2884 = vmatmul.bf16.gmra.mxu0 %v2809
      %v2885 = vpop.f32.mrf.mxu0
      %v2886 = vadd.f32 0.0, %v2885
      %v2887 = vpop.f32.mrf.mxu0
      %v2888 = vadd.f32 0.0, %v2887
      %2889 = vmatmul.bf16.gmra.mxu0 %v2812
      %v2890 = vpop.f32.mrf.mxu0
      %v2891 = vadd.f32 0.0, %v2890
      %v2892 = vpop.f32.mrf.mxu0
      %v2893 = vadd.f32 0.0, %v2892
      %2894 = vmatmul.bf16.gmra.mxu0 %v2815
      %v2895 = vpop.f32.mrf.mxu0
      %v2896 = vadd.f32 0.0, %v2895
      %v2897 = vpop.f32.mrf.mxu0
      %v2898 = vadd.f32 0.0, %v2897
      %2899 = vmatmul.bf16.gmra.mxu0 %v2818
      %v2900 = vpop.f32.mrf.mxu0
      %v2901 = vadd.f32 0.0, %v2900
      %v2902 = vpop.f32.mrf.mxu0
      %v2903 = vadd.f32 0.0, %v2902
      %2904 = vmatmul.bf16.gmra.mxu0 %v2821
      %v2905 = vpop.f32.mrf.mxu0
      %v2906 = vadd.f32 0.0, %v2905
      %v2907 = vpop.f32.mrf.mxu0
      %v2908 = vadd.f32 0.0, %v2907
      %2909 = vmatmul.bf16.gmra.mxu0 %v2824
      %v2910 = vpop.f32.mrf.mxu0
      %v2911 = vadd.f32 0.0, %v2910
      %v2912 = vpop.f32.mrf.mxu0
      %v2913 = vadd.f32 0.0, %v2912
      %2914 = vdwg.mxu0
      %v2919 = vunpack.c.l.b16 %v2634
      %v2920 = vunpack.c.l.b16 %v2635
      %v2921 = vunpack.c.l.b16 %v2636
      %v2922 = vunpack.c.l.b16 %v2637
      %v2923 = vpack.c.b16 %v2920, %v2919
      %v2924 = vpack.c.b16 %v2922, %v2921
      %v2928 = vsel %vm2481, %v2702, 0
      %v2931 = vsel %vm2481, %v2703, 0
      %v2934 = vsel %vm2481, %v2704, 0
      %v2937 = vsel %vm2481, %v2705, 0
      %v2940 = vsel %vm2481, %v2706, 0
      %v2943 = vsel %vm2481, %v2707, 0
      %v2946 = vsel %vm2481, %v2708, 0
      %v2949 = vsel %vm2481, %v2709, 0
      %v2952 = vsel %vm2481, %v2710, 0
      %v2955 = vsel %vm2481, %v2711, 0
      %v2958 = vsel %vm2481, %v2712, 0
      %v2961 = vsel %vm2481, %v2713, 0
      %v2964 = vsel %vm2481, %v2714, 0
      %v2967 = vsel %vm2481, %v2715, 0
      %v2970 = vsel %vm2481, %v2716, 0
      %v2973 = vsel %vm2481, %v2717, 0
      %2975 = vmatpush.bf16.msra.mxu0 0
      %2976 = vmatpush.bf16.msra.mxu0 0
      %2977 = vmatpush.bf16.msra.mxu0 0
      %2978 = vmatpush.bf16.msra.mxu0 0
      %2979 = vmatpush.bf16.msra.mxu0 0
      %2980 = vmatpush.bf16.msra.mxu0 0
      %2981 = vmatpush.bf16.msra.mxu0 %v2924
      %2982 = vmatpush.bf16.msra.mxu0 %v2923
      %2983 = vmatmul.bf16.gmra.mxu0 %v2928
      %v2984 = vpop.f32.mrf.mxu0
      %v2985 = vadd.f32 %v2836, %v2984
      %v2986 = vpop.f32.mrf.mxu0
      %v2987 = vadd.f32 %v2838, %v2986
      %2988 = vmatmul.bf16.gmra.mxu0 %v2931
      %v2989 = vpop.f32.mrf.mxu0
      %v2990 = vadd.f32 %v2841, %v2989
      %v2991 = vpop.f32.mrf.mxu0
      %v2992 = vadd.f32 %v2843, %v2991
      %2993 = vmatmul.bf16.gmra.mxu0 %v2934
      %v2994 = vpop.f32.mrf.mxu0
      %v2995 = vadd.f32 %v2846, %v2994
      %v2996 = vpop.f32.mrf.mxu0
      %v2997 = vadd.f32 %v2848, %v2996
      %2998 = vmatmul.bf16.gmra.mxu0 %v2937
      %v2999 = vpop.f32.mrf.mxu0
      %v3000 = vadd.f32 %v2851, %v2999
      %v3001 = vpop.f32.mrf.mxu0
      %v3002 = vadd.f32 %v2853, %v3001
      %3003 = vmatmul.bf16.gmra.mxu0 %v2940
      %v3004 = vpop.f32.mrf.mxu0
      %v3005 = vadd.f32 %v2856, %v3004
      %v3006 = vpop.f32.mrf.mxu0
      %v3007 = vadd.f32 %v2858, %v3006
      %3008 = vmatmul.bf16.gmra.mxu0 %v2943
      %v3009 = vpop.f32.mrf.mxu0
      %v3010 = vadd.f32 %v2861, %v3009
      %v3011 = vpop.f32.mrf.mxu0
      %v3012 = vadd.f32 %v2863, %v3011
      %3013 = vmatmul.bf16.gmra.mxu0 %v2946
      %v3014 = vpop.f32.mrf.mxu0
      %v3015 = vadd.f32 %v2866, %v3014
      %v3016 = vpop.f32.mrf.mxu0
      %v3017 = vadd.f32 %v2868, %v3016
      %3018 = vmatmul.bf16.gmra.mxu0 %v2949
      %v3019 = vpop.f32.mrf.mxu0
      %v3020 = vadd.f32 %v2871, %v3019
      %v3021 = vpop.f32.mrf.mxu0
      %v3022 = vadd.f32 %v2873, %v3021
      %3023 = vmatmul.bf16.gmra.mxu0 %v2952
      %v3024 = vpop.f32.mrf.mxu0
      %v3025 = vadd.f32 %v2876, %v3024
      %v3026 = vpop.f32.mrf.mxu0
      %v3027 = vadd.f32 %v2878, %v3026
      %3028 = vmatmul.bf16.gmra.mxu0 %v2955
      %v3029 = vpop.f32.mrf.mxu0
      %v3030 = vadd.f32 %v2881, %v3029
      %v3031 = vpop.f32.mrf.mxu0
      %v3032 = vadd.f32 %v2883, %v3031
      %3033 = vmatmul.bf16.gmra.mxu0 %v2958
      %v3034 = vpop.f32.mrf.mxu0
      %v3035 = vadd.f32 %v2886, %v3034
      %v3036 = vpop.f32.mrf.mxu0
      %v3037 = vadd.f32 %v2888, %v3036
      %3038 = vmatmul.bf16.gmra.mxu0 %v2961
      %v3039 = vpop.f32.mrf.mxu0
      %v3040 = vadd.f32 %v2891, %v3039
      %v3041 = vpop.f32.mrf.mxu0
      %v3042 = vadd.f32 %v2893, %v3041
      %3043 = vmatmul.bf16.gmra.mxu0 %v2964
      %v3044 = vpop.f32.mrf.mxu0
      %v3045 = vadd.f32 %v2896, %v3044
      %v3046 = vpop.f32.mrf.mxu0
      %v3047 = vadd.f32 %v2898, %v3046
      %3048 = vmatmul.bf16.gmra.mxu0 %v2967
      %v3049 = vpop.f32.mrf.mxu0
      %v3050 = vadd.f32 %v2901, %v3049
      %v3051 = vpop.f32.mrf.mxu0
      %v3052 = vadd.f32 %v2903, %v3051
      %3053 = vmatmul.bf16.gmra.mxu0 %v2970
      %v3054 = vpop.f32.mrf.mxu0
      %v3055 = vadd.f32 %v2906, %v3054
      %v3056 = vpop.f32.mrf.mxu0
      %v3057 = vadd.f32 %v2908, %v3056
      %3058 = vmatmul.bf16.gmra.mxu0 %v2973
      %v3059 = vpop.f32.mrf.mxu0
      %v3060 = vadd.f32 %v2911, %v3059
      %v3061 = vpop.f32.mrf.mxu0
      %v3062 = vadd.f32 %v2913, %v3061
      %3063 = vdwg.mxu0
      %v3064 = vld [vmem:[#allocation3 + $0x2] sm:$0xff]
      %v3065 = vld [vmem:[#allocation3 + $0xa] sm:$0xff]
      %v3066 = vld [vmem:[#allocation3 + $0x1a] sm:$0xff]
      %v3067 = vld [vmem:[#allocation3 + $0x22] sm:$0xff]
      %v3068 = vld [vmem:[#allocation3 + $0x32] sm:$0xff]
      %v3069 = vld [vmem:[#allocation3 + $0x3a] sm:$0xff]
      %v3070 = vld [vmem:[#allocation3 + $0x4a] sm:$0xff]
      %v3071 = vld [vmem:[#allocation3 + $0x52] sm:$0xff]
      %v3072 = vld [vmem:[#allocation3 + $0x62] sm:$0xff]
      %v3073 = vld [vmem:[#allocation3 + $0x6a] sm:$0xff]
      %v3074 = vld [vmem:[#allocation3 + $0x7a] sm:$0xff]
      %v3075 = vld [vmem:[#allocation3 + $0x82] sm:$0xff]
      %v3076 = vld [vmem:[#allocation3 + $0x92] sm:$0xff]
      %v3077 = vld [vmem:[#allocation3 + $0x9a] sm:$0xff]
      %v3078 = vld [vmem:[#allocation3 + $0xaa] sm:$0xff]
      %v3079 = vld [vmem:[#allocation3 + $0xb2] sm:$0xff]
      %v3080 = vld [vmem:[#allocation3 + $0xc2] sm:$0xff]
      %v3081 = vld [vmem:[#allocation3 + $0xca] sm:$0xff]
      %v3082 = vld [vmem:[#allocation3 + $0xda] sm:$0xff]
      %v3083 = vld [vmem:[#allocation3 + $0xe2] sm:$0xff]
      %v3084 = vld [vmem:[#allocation3 + $0xf2] sm:$0xff]
      %v3085 = vld [vmem:[#allocation3 + $0xfa] sm:$0xff]
      %v3086 = vld [vmem:[#allocation3 + $0x10a] sm:$0xff]
      %v3087 = vld [vmem:[#allocation3 + $0x112] sm:$0xff]
      %v3088 = vld [vmem:[#allocation3 + $0x122] sm:$0xff]
      %v3089 = vld [vmem:[#allocation3 + $0x12a] sm:$0xff]
      %v3090 = vld [vmem:[#allocation3 + $0x13a] sm:$0xff]
      %v3091 = vld [vmem:[#allocation3 + $0x142] sm:$0xff]
      %v3092 = vld [vmem:[#allocation3 + $0x152] sm:$0xff]
      %v3093 = vld [vmem:[#allocation3 + $0x15a] sm:$0xff]
      %v3094 = vld [vmem:[#allocation3 + $0x16a] sm:$0xff]
      %v3095 = vld [vmem:[#allocation3 + $0x172] sm:$0xff]
      %v3096 = vpack.c.bf16 %v3065, %v3064
      %v3097 = vpack.c.bf16 %v3067, %v3066
      %v3098 = vpack.c.bf16 %v3069, %v3068
      %v3099 = vpack.c.bf16 %v3071, %v3070
      %v3100 = vpack.c.bf16 %v3073, %v3072
      %v3101 = vpack.c.bf16 %v3075, %v3074
      %v3102 = vpack.c.bf16 %v3077, %v3076
      %v3103 = vpack.c.bf16 %v3079, %v3078
      %v3104 = vpack.c.bf16 %v3081, %v3080
      %v3105 = vpack.c.bf16 %v3083, %v3082
      %v3106 = vpack.c.bf16 %v3085, %v3084
      %v3107 = vpack.c.bf16 %v3087, %v3086
      %v3108 = vpack.c.bf16 %v3089, %v3088
      %v3109 = vpack.c.bf16 %v3091, %v3090
      %v3110 = vpack.c.bf16 %v3093, %v3092
      %v3111 = vpack.c.bf16 %v3095, %v3094
      %v3116 = vunpack.c.l.b16 %v2642
      %v3117 = vunpack.c.l.b16 %v2643
      %v3118 = vunpack.c.l.b16 %v2644
      %v3119 = vunpack.c.l.b16 %v2645
      %v3120 = vpack.c.b16 %v3117, %v3116
      %v3121 = vpack.c.b16 %v3119, %v3118
      %v3125 = vsel %vm2481, %v3096, 0
      %v3128 = vsel %vm2481, %v3097, 0
      %v3131 = vsel %vm2481, %v3098, 0
      %v3134 = vsel %vm2481, %v3099, 0
      %v3137 = vsel %vm2481, %v3100, 0
      %v3140 = vsel %vm2481, %v3101, 0
      %v3143 = vsel %vm2481, %v3102, 0
      %v3146 = vsel %vm2481, %v3103, 0
      %v3149 = vsel %vm2481, %v3104, 0
      %v3152 = vsel %vm2481, %v3105, 0
      %v3155 = vsel %vm2481, %v3106, 0
      %v3158 = vsel %vm2481, %v3107, 0
      %v3161 = vsel %vm2481, %v3108, 0
      %v3164 = vsel %vm2481, %v3109, 0
      %v3167 = vsel %vm2481, %v3110, 0
      %v3170 = vsel %vm2481, %v3111, 0
      %3172 = vmatpush.bf16.msra.mxu0 0
      %3173 = vmatpush.bf16.msra.mxu0 0
      %3174 = vmatpush.bf16.msra.mxu0 0
      %3175 = vmatpush.bf16.msra.mxu0 0
      %3176 = vmatpush.bf16.msra.mxu0 0
      %3177 = vmatpush.bf16.msra.mxu0 0
      %3178 = vmatpush.bf16.msra.mxu0 %v3121
      %3179 = vmatpush.bf16.msra.mxu0 %v3120
      %3180 = vmatmul.bf16.gmra.mxu0 %v3125
      %v3181 = vpop.f32.mrf.mxu0
      %v3182 = vadd.f32 0.0, %v3181
      %v3183 = vpop.f32.mrf.mxu0
      %v3184 = vadd.f32 0.0, %v3183
      %3185 = vmatmul.bf16.gmra.mxu0 %v3128
      %v3186 = vpop.f32.mrf.mxu0
      %v3187 = vadd.f32 0.0, %v3186
      %v3188 = vpop.f32.mrf.mxu0
      %v3189 = vadd.f32 0.0, %v3188
      %3190 = vmatmul.bf16.gmra.mxu0 %v3131
      %v3191 = vpop.f32.mrf.mxu0
      %v3192 = vadd.f32 0.0, %v3191
      %v3193 = vpop.f32.mrf.mxu0
      %v3194 = vadd.f32 0.0, %v3193
      %3195 = vmatmul.bf16.gmra.mxu0 %v3134
      %v3196 = vpop.f32.mrf.mxu0
      %v3197 = vadd.f32 0.0, %v3196
      %v3198 = vpop.f32.mrf.mxu0
      %v3199 = vadd.f32 0.0, %v3198
      %3200 = vmatmul.bf16.gmra.mxu0 %v3137
      %v3201 = vpop.f32.mrf.mxu0
      %v3202 = vadd.f32 0.0, %v3201
      %v3203 = vpop.f32.mrf.mxu0
      %v3204 = vadd.f32 0.0, %v3203
      %3205 = vmatmul.bf16.gmra.mxu0 %v3140
      %v3206 = vpop.f32.mrf.mxu0
      %v3207 = vadd.f32 0.0, %v3206
      %v3208 = vpop.f32.mrf.mxu0
      %v3209 = vadd.f32 0.0, %v3208
      %3210 = vmatmul.bf16.gmra.mxu0 %v3143
      %v3211 = vpop.f32.mrf.mxu0
      %v3212 = vadd.f32 0.0, %v3211
      %v3213 = vpop.f32.mrf.mxu0
      %v3214 = vadd.f32 0.0, %v3213
      %3215 = vmatmul.bf16.gmra.mxu0 %v3146
      %v3216 = vpop.f32.mrf.mxu0
      %v3217 = vadd.f32 0.0, %v3216
      %v3218 = vpop.f32.mrf.mxu0
      %v3219 = vadd.f32 0.0, %v3218
      %3220 = vmatmul.bf16.gmra.mxu0 %v3149
      %v3221 = vpop.f32.mrf.mxu0
      %v3222 = vadd.f32 0.0, %v3221
      %v3223 = vpop.f32.mrf.mxu0
      %v3224 = vadd.f32 0.0, %v3223
      %3225 = vmatmul.bf16.gmra.mxu0 %v3152
      %v3226 = vpop.f32.mrf.mxu0
      %v3227 = vadd.f32 0.0, %v3226
      %v3228 = vpop.f32.mrf.mxu0
      %v3229 = vadd.f32 0.0, %v3228
      %3230 = vmatmul.bf16.gmra.mxu0 %v3155
      %v3231 = vpop.f32.mrf.mxu0
      %v3232 = vadd.f32 0.0, %v3231
      %v3233 = vpop.f32.mrf.mxu0
      %v3234 = vadd.f32 0.0, %v3233
      %3235 = vmatmul.bf16.gmra.mxu0 %v3158
      %v3236 = vpop.f32.mrf.mxu0
      %v3237 = vadd.f32 0.0, %v3236
      %v3238 = vpop.f32.mrf.mxu0
      %v3239 = vadd.f32 0.0, %v3238
      %3240 = vmatmul.bf16.gmra.mxu0 %v3161
      %v3241 = vpop.f32.mrf.mxu0
      %v3242 = vadd.f32 0.0, %v3241
      %v3243 = vpop.f32.mrf.mxu0
      %v3244 = vadd.f32 0.0, %v3243
      %3245 = vmatmul.bf16.gmra.mxu0 %v3164
      %v3246 = vpop.f32.mrf.mxu0
      %v3247 = vadd.f32 0.0, %v3246
      %v3248 = vpop.f32.mrf.mxu0
      %v3249 = vadd.f32 0.0, %v3248
      %3250 = vmatmul.bf16.gmra.mxu0 %v3167
      %v3251 = vpop.f32.mrf.mxu0
      %v3252 = vadd.f32 0.0, %v3251
      %v3253 = vpop.f32.mrf.mxu0
      %v3254 = vadd.f32 0.0, %v3253
      %3255 = vmatmul.bf16.gmra.mxu0 %v3170
      %v3256 = vpop.f32.mrf.mxu0
      %v3257 = vadd.f32 0.0, %v3256
      %v3258 = vpop.f32.mrf.mxu0
      %v3259 = vadd.f32 0.0, %v3258
      %3260 = vdwg.mxu0
      %v3261 = vadd.f32 %v2985, %v3182
      %v3262 = vadd.f32 %v2987, %v3184
      %v3263 = vadd.f32 %v2990, %v3187
      %v3264 = vadd.f32 %v2992, %v3189
      %v3265 = vadd.f32 %v2995, %v3192
      %v3266 = vadd.f32 %v2997, %v3194
      %v3267 = vadd.f32 %v3000, %v3197
      %v3268 = vadd.f32 %v3002, %v3199
      %v3269 = vadd.f32 %v3005, %v3202
      %v3270 = vadd.f32 %v3007, %v3204
      %v3271 = vadd.f32 %v3010, %v3207
      %v3272 = vadd.f32 %v3012, %v3209
      %v3273 = vadd.f32 %v3015, %v3212
      %v3274 = vadd.f32 %v3017, %v3214
      %v3275 = vadd.f32 %v3020, %v3217
      %v3276 = vadd.f32 %v3022, %v3219
      %v3277 = vadd.f32 %v3025, %v3222
      %v3278 = vadd.f32 %v3027, %v3224
      %v3279 = vadd.f32 %v3030, %v3227
      %v3280 = vadd.f32 %v3032, %v3229
      %v3281 = vadd.f32 %v3035, %v3232
      %v3282 = vadd.f32 %v3037, %v3234
      %v3283 = vadd.f32 %v3040, %v3237
      %v3284 = vadd.f32 %v3042, %v3239
      %v3285 = vadd.f32 %v3045, %v3242
      %v3286 = vadd.f32 %v3047, %v3244
      %v3287 = vadd.f32 %v3050, %v3247
      %v3288 = vadd.f32 %v3052, %v3249
      %v3289 = vadd.f32 %v3055, %v3252
      %v3290 = vadd.f32 %v3057, %v3254
      %v3291 = vadd.f32 %v3060, %v3257
      %v3292 = vadd.f32 %v3062, %v3259
      %v3293 = vld [vmem:[%s2601] sm:$0xff]
      %v3294 = vld [vmem:[%s2601 + $0x8] sm:$0xff]
      %v3295 = vld [vmem:[%s2601 + $0x18] sm:$0xff]
      %v3296 = vld [vmem:[%s2601 + $0x20] sm:$0xff]
      %v3297 = vld [vmem:[%s2601 + $0x30] sm:$0xff]
      %v3298 = vld [vmem:[%s2601 + $0x38] sm:$0xff]
      %v3299 = vld [vmem:[%s2601 + $0x48] sm:$0xff]
      %v3300 = vld [vmem:[%s2601 + $0x50] sm:$0xff]
      %v3301 = vld [vmem:[%s2601 + $0x60] sm:$0xff]
      %v3302 = vld [vmem:[%s2601 + $0x68] sm:$0xff]
      %v3303 = vld [vmem:[%s2601 + $0x78] sm:$0xff]
      %v3304 = vld [vmem:[%s2601 + $0x80] sm:$0xff]
      %v3305 = vld [vmem:[%s2601 + $0x90] sm:$0xff]
      %v3306 = vld [vmem:[%s2601 + $0x98] sm:$0xff]
      %v3307 = vld [vmem:[%s2601 + $0xa8] sm:$0xff]
      %v3308 = vld [vmem:[%s2601 + $0xb0] sm:$0xff]
      %v3309 = vld [vmem:[%s2601 + $0xc0] sm:$0xff]
      %v3310 = vld [vmem:[%s2601 + $0xc8] sm:$0xff]
      %v3311 = vld [vmem:[%s2601 + $0xd8] sm:$0xff]
      %v3312 = vld [vmem:[%s2601 + $0xe0] sm:$0xff]
      %v3313 = vld [vmem:[%s2601 + $0xf0] sm:$0xff]
      %v3314 = vld [vmem:[%s2601 + $0xf8] sm:$0xff]
      %v3315 = vld [vmem:[%s2601 + $0x108] sm:$0xff]
      %v3316 = vld [vmem:[%s2601 + $0x110] sm:$0xff]
      %v3317 = vld [vmem:[%s2601 + $0x120] sm:$0xff]
      %v3318 = vld [vmem:[%s2601 + $0x128] sm:$0xff]
      %v3319 = vld [vmem:[%s2601 + $0x138] sm:$0xff]
      %v3320 = vld [vmem:[%s2601 + $0x140] sm:$0xff]
      %v3321 = vld [vmem:[%s2601 + $0x150] sm:$0xff]
      %v3322 = vld [vmem:[%s2601 + $0x158] sm:$0xff]
      %v3323 = vld [vmem:[%s2601 + $0x168] sm:$0xff]
      %v3324 = vld [vmem:[%s2601 + $0x170] sm:$0xff]
      %v3325 = vpack.c.bf16 %v3294, %v3293
      %v3326 = vpack.c.bf16 %v3296, %v3295
      %v3327 = vpack.c.bf16 %v3298, %v3297
      %v3328 = vpack.c.bf16 %v3300, %v3299
      %v3329 = vpack.c.bf16 %v3302, %v3301
      %v3330 = vpack.c.bf16 %v3304, %v3303
      %v3331 = vpack.c.bf16 %v3306, %v3305
      %v3332 = vpack.c.bf16 %v3308, %v3307
      %v3333 = vpack.c.bf16 %v3310, %v3309
      %v3334 = vpack.c.bf16 %v3312, %v3311
      %v3335 = vpack.c.bf16 %v3314, %v3313
      %v3336 = vpack.c.bf16 %v3316, %v3315
      %v3337 = vpack.c.bf16 %v3318, %v3317
      %v3338 = vpack.c.bf16 %v3320, %v3319
      %v3339 = vpack.c.bf16 %v3322, %v3321
      %v3340 = vpack.c.bf16 %v3324, %v3323
      %v3345 = vunpack.c.l.b16 %v2646
      %v3346 = vunpack.c.l.b16 %v2647
      %v3347 = vunpack.c.l.b16 %v2648
      %v3348 = vunpack.c.l.b16 %v2649
      %v3349 = vpack.c.b16 %v3346, %v3345
      %v3350 = vpack.c.b16 %v3348, %v3347
      %v3354 = vsel %vm2481, %v3325, 0
      %v3357 = vsel %vm2481, %v3326, 0
      %v3360 = vsel %vm2481, %v3327, 0
      %v3363 = vsel %vm2481, %v3328, 0
      %v3366 = vsel %vm2481, %v3329, 0
      %v3369 = vsel %vm2481, %v3330, 0
      %v3372 = vsel %vm2481, %v3331, 0
      %v3375 = vsel %vm2481, %v3332, 0
      %v3378 = vsel %vm2481, %v3333, 0
      %v3381 = vsel %vm2481, %v3334, 0
      %v3384 = vsel %vm2481, %v3335, 0
      %v3387 = vsel %vm2481, %v3336, 0
      %v3390 = vsel %vm2481, %v3337, 0
      %v3393 = vsel %vm2481, %v3338, 0
      %v3396 = vsel %vm2481, %v3339, 0
      %v3399 = vsel %vm2481, %v3340, 0
      %3401 = vmatpush.bf16.msra.mxu0 0
      %3402 = vmatpush.bf16.msra.mxu0 0
      %3403 = vmatpush.bf16.msra.mxu0 0
      %3404 = vmatpush.bf16.msra.mxu0 0
      %3405 = vmatpush.bf16.msra.mxu0 0
      %3406 = vmatpush.bf16.msra.mxu0 0
      %3407 = vmatpush.bf16.msra.mxu0 %v3350
      %3408 = vmatpush.bf16.msra.mxu0 %v3349
      %3409 = vmatmul.bf16.gmra.mxu0 %v3354
      %v3410 = vpop.f32.mrf.mxu0
      %v3411 = vadd.f32 0.0, %v3410
      %v3412 = vpop.f32.mrf.mxu0
      %v3413 = vadd.f32 0.0, %v3412
      %3414 = vmatmul.bf16.gmra.mxu0 %v3357
      %v3415 = vpop.f32.mrf.mxu0
      %v3416 = vadd.f32 0.0, %v3415
      %v3417 = vpop.f32.mrf.mxu0
      %v3418 = vadd.f32 0.0, %v3417
      %3419 = vmatmul.bf16.gmra.mxu0 %v3360
      %v3420 = vpop.f32.mrf.mxu0
      %v3421 = vadd.f32 0.0, %v3420
      %v3422 = vpop.f32.mrf.mxu0
      %v3423 = vadd.f32 0.0, %v3422
      %3424 = vmatmul.bf16.gmra.mxu0 %v3363
      %v3425 = vpop.f32.mrf.mxu0
      %v3426 = vadd.f32 0.0, %v3425
      %v3427 = vpop.f32.mrf.mxu0
      %v3428 = vadd.f32 0.0, %v3427
      %3429 = vmatmul.bf16.gmra.mxu0 %v3366
      %v3430 = vpop.f32.mrf.mxu0
      %v3431 = vadd.f32 0.0, %v3430
      %v3432 = vpop.f32.mrf.mxu0
      %v3433 = vadd.f32 0.0, %v3432
      %3434 = vmatmul.bf16.gmra.mxu0 %v3369
      %v3435 = vpop.f32.mrf.mxu0
      %v3436 = vadd.f32 0.0, %v3435
      %v3437 = vpop.f32.mrf.mxu0
      %v3438 = vadd.f32 0.0, %v3437
      %3439 = vmatmul.bf16.gmra.mxu0 %v3372
      %v3440 = vpop.f32.mrf.mxu0
      %v3441 = vadd.f32 0.0, %v3440
      %v3442 = vpop.f32.mrf.mxu0
      %v3443 = vadd.f32 0.0, %v3442
      %3444 = vmatmul.bf16.gmra.mxu0 %v3375
      %v3445 = vpop.f32.mrf.mxu0
      %v3446 = vadd.f32 0.0, %v3445
      %v3447 = vpop.f32.mrf.mxu0
      %v3448 = vadd.f32 0.0, %v3447
      %3449 = vmatmul.bf16.gmra.mxu0 %v3378
      %v3450 = vpop.f32.mrf.mxu0
      %v3451 = vadd.f32 0.0, %v3450
      %v3452 = vpop.f32.mrf.mxu0
      %v3453 = vadd.f32 0.0, %v3452
      %3454 = vmatmul.bf16.gmra.mxu0 %v3381
      %v3455 = vpop.f32.mrf.mxu0
      %v3456 = vadd.f32 0.0, %v3455
      %v3457 = vpop.f32.mrf.mxu0
      %v3458 = vadd.f32 0.0, %v3457
      %3459 = vmatmul.bf16.gmra.mxu0 %v3384
      %v3460 = vpop.f32.mrf.mxu0
      %v3461 = vadd.f32 0.0, %v3460
      %v3462 = vpop.f32.mrf.mxu0
      %v3463 = vadd.f32 0.0, %v3462
      %3464 = vmatmul.bf16.gmra.mxu0 %v3387
      %v3465 = vpop.f32.mrf.mxu0
      %v3466 = vadd.f32 0.0, %v3465
      %v3467 = vpop.f32.mrf.mxu0
      %v3468 = vadd.f32 0.0, %v3467
      %3469 = vmatmul.bf16.gmra.mxu0 %v3390
      %v3470 = vpop.f32.mrf.mxu0
      %v3471 = vadd.f32 0.0, %v3470
      %v3472 = vpop.f32.mrf.mxu0
      %v3473 = vadd.f32 0.0, %v3472
      %3474 = vmatmul.bf16.gmra.mxu0 %v3393
      %v3475 = vpop.f32.mrf.mxu0
      %v3476 = vadd.f32 0.0, %v3475
      %v3477 = vpop.f32.mrf.mxu0
      %v3478 = vadd.f32 0.0, %v3477
      %3479 = vmatmul.bf16.gmra.mxu0 %v3396
      %v3480 = vpop.f32.mrf.mxu0
      %v3481 = vadd.f32 0.0, %v3480
      %v3482 = vpop.f32.mrf.mxu0
      %v3483 = vadd.f32 0.0, %v3482
      %3484 = vmatmul.bf16.gmra.mxu0 %v3399
      %v3485 = vpop.f32.mrf.mxu0
      %v3486 = vadd.f32 0.0, %v3485
      %v3487 = vpop.f32.mrf.mxu0
      %v3488 = vadd.f32 0.0, %v3487
      %3489 = vdwg.mxu0
      %v3490 = vadd.f32 %v3261, %v3411
      %v3491 = vadd.f32 %v3262, %v3413
      %v3492 = vadd.f32 %v3263, %v3416
      %v3493 = vadd.f32 %v3264, %v3418
      %v3494 = vadd.f32 %v3265, %v3421
      %v3495 = vadd.f32 %v3266, %v3423
      %v3496 = vadd.f32 %v3267, %v3426
      %v3497 = vadd.f32 %v3268, %v3428
      %v3498 = vadd.f32 %v3269, %v3431
      %v3499 = vadd.f32 %v3270, %v3433
      %v3500 = vadd.f32 %v3271, %v3436
      %v3501 = vadd.f32 %v3272, %v3438
      %v3502 = vadd.f32 %v3273, %v3441
      %v3503 = vadd.f32 %v3274, %v3443
      %v3504 = vadd.f32 %v3275, %v3446
      %v3505 = vadd.f32 %v3276, %v3448
      %v3506 = vadd.f32 %v3277, %v3451
      %v3507 = vadd.f32 %v3278, %v3453
      %v3508 = vadd.f32 %v3279, %v3456
      %v3509 = vadd.f32 %v3280, %v3458
      %v3510 = vadd.f32 %v3281, %v3461
      %v3511 = vadd.f32 %v3282, %v3463
      %v3512 = vadd.f32 %v3283, %v3466
      %v3513 = vadd.f32 %v3284, %v3468
      %v3514 = vadd.f32 %v3285, %v3471
      %v3515 = vadd.f32 %v3286, %v3473
      %v3516 = vadd.f32 %v3287, %v3476
      %v3517 = vadd.f32 %v3288, %v3478
      %v3518 = vadd.f32 %v3289, %v3481
      %v3519 = vadd.f32 %v3290, %v3483
      %v3520 = vadd.f32 %v3291, %v3486
      %v3521 = vadd.f32 %v3292, %v3488
      %v3522 = vld [vmem:[%s2601 + $0x1] sm:$0xff]
      %v3523 = vld [vmem:[%s2601 + $0x9] sm:$0xff]
      %v3524 = vld [vmem:[%s2601 + $0x19] sm:$0xff]
      %v3525 = vld [vmem:[%s2601 + $0x21] sm:$0xff]
      %v3526 = vld [vmem:[%s2601 + $0x31] sm:$0xff]
      %v3527 = vld [vmem:[%s2601 + $0x39] sm:$0xff]
      %v3528 = vld [vmem:[%s2601 + $0x49] sm:$0xff]
      %v3529 = vld [vmem:[%s2601 + $0x51] sm:$0xff]
      %v3530 = vld [vmem:[%s2601 + $0x61] sm:$0xff]
      %v3531 = vld [vmem:[%s2601 + $0x69] sm:$0xff]
      %v3532 = vld [vmem:[%s2601 + $0x79] sm:$0xff]
      %v3533 = vld [vmem:[%s2601 + $0x81] sm:$0xff]
      %v3534 = vld [vmem:[%s2601 + $0x91] sm:$0xff]
      %v3535 = vld [vmem:[%s2601 + $0x99] sm:$0xff]
      %v3536 = vld [vmem:[%s2601 + $0xa9] sm:$0xff]
      %v3537 = vld [vmem:[%s2601 + $0xb1] sm:$0xff]
      %v3538 = vld [vmem:[%s2601 + $0xc1] sm:$0xff]
      %v3539 = vld [vmem:[%s2601 + $0xc9] sm:$0xff]
      %v3540 = vld [vmem:[%s2601 + $0xd9] sm:$0xff]
      %v3541 = vld [vmem:[%s2601 + $0xe1] sm:$0xff]
      %v3542 = vld [vmem:[%s2601 + $0xf1] sm:$0xff]
      %v3543 = vld [vmem:[%s2601 + $0xf9] sm:$0xff]
      %v3544 = vld [vmem:[%s2601 + $0x109] sm:$0xff]
      %v3545 = vld [vmem:[%s2601 + $0x111] sm:$0xff]
      %v3546 = vld [vmem:[%s2601 + $0x121] sm:$0xff]
      %v3547 = vld [vmem:[%s2601 + $0x129] sm:$0xff]
      %v3548 = vld [vmem:[%s2601 + $0x139] sm:$0xff]
      %v3549 = vld [vmem:[%s2601 + $0x141] sm:$0xff]
      %v3550 = vld [vmem:[%s2601 + $0x151] sm:$0xff]
      %v3551 = vld [vmem:[%s2601 + $0x159] sm:$0xff]
      %v3552 = vld [vmem:[%s2601 + $0x169] sm:$0xff]
      %v3553 = vld [vmem:[%s2601 + $0x171] sm:$0xff]
      %v3554 = vpack.c.bf16 %v3523, %v3522
      %v3555 = vpack.c.bf16 %v3525, %v3524
      %v3556 = vpack.c.bf16 %v3527, %v3526
      %v3557 = vpack.c.bf16 %v3529, %v3528
      %v3558 = vpack.c.bf16 %v3531, %v3530
      %v3559 = vpack.c.bf16 %v3533, %v3532
      %v3560 = vpack.c.bf16 %v3535, %v3534
      %v3561 = vpack.c.bf16 %v3537, %v3536
      %v3562 = vpack.c.bf16 %v3539, %v3538
      %v3563 = vpack.c.bf16 %v3541, %v3540
      %v3564 = vpack.c.bf16 %v3543, %v3542
      %v3565 = vpack.c.bf16 %v3545, %v3544
      %v3566 = vpack.c.bf16 %v3547, %v3546
      %v3567 = vpack.c.bf16 %v3549, %v3548
      %v3568 = vpack.c.bf16 %v3551, %v3550
      %v3569 = vpack.c.bf16 %v3553, %v3552
      %v3574 = vunpack.c.l.b16 %v2650
      %v3575 = vunpack.c.l.b16 %v2651
      %v3576 = vunpack.c.l.b16 %v2652
      %v3577 = vunpack.c.l.b16 %v2653
      %v3578 = vpack.c.b16 %v3575, %v3574
      %v3579 = vpack.c.b16 %v3577, %v3576
      %v3583 = vsel %vm2481, %v3554, 0
      %v3586 = vsel %vm2481, %v3555, 0
      %v3589 = vsel %vm2481, %v3556, 0
      %v3592 = vsel %vm2481, %v3557, 0
      %v3595 = vsel %vm2481, %v3558, 0
      %v3598 = vsel %vm2481, %v3559, 0
      %v3601 = vsel %vm2481, %v3560, 0
      %v3604 = vsel %vm2481, %v3561, 0
      %v3607 = vsel %vm2481, %v3562, 0
      %v3610 = vsel %vm2481, %v3563, 0
      %v3613 = vsel %vm2481, %v3564, 0
      %v3616 = vsel %vm2481, %v3565, 0
      %v3619 = vsel %vm2481, %v3566, 0
      %v3622 = vsel %vm2481, %v3567, 0
      %v3625 = vsel %vm2481, %v3568, 0
      %v3628 = vsel %vm2481, %v3569, 0
      %3630 = vmatpush.bf16.msra.mxu0 0
      %3631 = vmatpush.bf16.msra.mxu0 0
      %3632 = vmatpush.bf16.msra.mxu0 0
      %3633 = vmatpush.bf16.msra.mxu0 0
      %3634 = vmatpush.bf16.msra.mxu0 0
      %3635 = vmatpush.bf16.msra.mxu0 0
      %3636 = vmatpush.bf16.msra.mxu0 %v3579
      %3637 = vmatpush.bf16.msra.mxu0 %v3578
      %3638 = vmatmul.bf16.gmra.mxu0 %v3583
      %v3639 = vpop.f32.mrf.mxu0
      %v3640 = vadd.f32 0.0, %v3639
      %v3641 = vpop.f32.mrf.mxu0
      %v3642 = vadd.f32 0.0, %v3641
      %3643 = vmatmul.bf16.gmra.mxu0 %v3586
      %v3644 = vpop.f32.mrf.mxu0
      %v3645 = vadd.f32 0.0, %v3644
      %v3646 = vpop.f32.mrf.mxu0
      %v3647 = vadd.f32 0.0, %v3646
      %3648 = vmatmul.bf16.gmra.mxu0 %v3589
      %v3649 = vpop.f32.mrf.mxu0
      %v3650 = vadd.f32 0.0, %v3649
      %v3651 = vpop.f32.mrf.mxu0
      %v3652 = vadd.f32 0.0, %v3651
      %3653 = vmatmul.bf16.gmra.mxu0 %v3592
      %v3654 = vpop.f32.mrf.mxu0
      %v3655 = vadd.f32 0.0, %v3654
      %v3656 = vpop.f32.mrf.mxu0
      %v3657 = vadd.f32 0.0, %v3656
      %3658 = vmatmul.bf16.gmra.mxu0 %v3595
      %v3659 = vpop.f32.mrf.mxu0
      %v3660 = vadd.f32 0.0, %v3659
      %v3661 = vpop.f32.mrf.mxu0
      %v3662 = vadd.f32 0.0, %v3661
      %3663 = vmatmul.bf16.gmra.mxu0 %v3598
      %v3664 = vpop.f32.mrf.mxu0
      %v3665 = vadd.f32 0.0, %v3664
      %v3666 = vpop.f32.mrf.mxu0
      %v3667 = vadd.f32 0.0, %v3666
      %3668 = vmatmul.bf16.gmra.mxu0 %v3601
      %v3669 = vpop.f32.mrf.mxu0
      %v3670 = vadd.f32 0.0, %v3669
      %v3671 = vpop.f32.mrf.mxu0
      %v3672 = vadd.f32 0.0, %v3671
      %3673 = vmatmul.bf16.gmra.mxu0 %v3604
      %v3674 = vpop.f32.mrf.mxu0
      %v3675 = vadd.f32 0.0, %v3674
      %v3676 = vpop.f32.mrf.mxu0
      %v3677 = vadd.f32 0.0, %v3676
      %3678 = vmatmul.bf16.gmra.mxu0 %v3607
      %v3679 = vpop.f32.mrf.mxu0
      %v3680 = vadd.f32 0.0, %v3679
      %v3681 = vpop.f32.mrf.mxu0
      %v3682 = vadd.f32 0.0, %v3681
      %3683 = vmatmul.bf16.gmra.mxu0 %v3610
      %v3684 = vpop.f32.mrf.mxu0
      %v3685 = vadd.f32 0.0, %v3684
      %v3686 = vpop.f32.mrf.mxu0
      %v3687 = vadd.f32 0.0, %v3686
      %3688 = vmatmul.bf16.gmra.mxu0 %v3613
      %v3689 = vpop.f32.mrf.mxu0
      %v3690 = vadd.f32 0.0, %v3689
      %v3691 = vpop.f32.mrf.mxu0
      %v3692 = vadd.f32 0.0, %v3691
      %3693 = vmatmul.bf16.gmra.mxu0 %v3616
      %v3694 = vpop.f32.mrf.mxu0
      %v3695 = vadd.f32 0.0, %v3694
      %v3696 = vpop.f32.mrf.mxu0
      %v3697 = vadd.f32 0.0, %v3696
      %3698 = vmatmul.bf16.gmra.mxu0 %v3619
      %v3699 = vpop.f32.mrf.mxu0
      %v3700 = vadd.f32 0.0, %v3699
      %v3701 = vpop.f32.mrf.mxu0
      %v3702 = vadd.f32 0.0, %v3701
      %3703 = vmatmul.bf16.gmra.mxu0 %v3622
      %v3704 = vpop.f32.mrf.mxu0
      %v3705 = vadd.f32 0.0, %v3704
      %v3706 = vpop.f32.mrf.mxu0
      %v3707 = vadd.f32 0.0, %v3706
      %3708 = vmatmul.bf16.gmra.mxu0 %v3625
      %v3709 = vpop.f32.mrf.mxu0
      %v3710 = vadd.f32 0.0, %v3709
      %v3711 = vpop.f32.mrf.mxu0
      %v3712 = vadd.f32 0.0, %v3711
      %3713 = vmatmul.bf16.gmra.mxu0 %v3628
      %v3714 = vpop.f32.mrf.mxu0
      %v3715 = vadd.f32 0.0, %v3714
      %v3716 = vpop.f32.mrf.mxu0
      %v3717 = vadd.f32 0.0, %v3716
      %3718 = vdwg.mxu0
      %v3719 = vadd.f32 %v3490, %v3640
      %v3720 = vadd.f32 %v3491, %v3642
      %v3721 = vadd.f32 %v3492, %v3645
      %v3722 = vadd.f32 %v3493, %v3647
      %v3723 = vadd.f32 %v3494, %v3650
      %v3724 = vadd.f32 %v3495, %v3652
      %v3725 = vadd.f32 %v3496, %v3655
      %v3726 = vadd.f32 %v3497, %v3657
      %v3727 = vadd.f32 %v3498, %v3660
      %v3728 = vadd.f32 %v3499, %v3662
      %v3729 = vadd.f32 %v3500, %v3665
      %v3730 = vadd.f32 %v3501, %v3667
      %v3731 = vadd.f32 %v3502, %v3670
      %v3732 = vadd.f32 %v3503, %v3672
      %v3733 = vadd.f32 %v3504, %v3675
      %v3734 = vadd.f32 %v3505, %v3677
      %v3735 = vadd.f32 %v3506, %v3680
      %v3736 = vadd.f32 %v3507, %v3682
      %v3737 = vadd.f32 %v3508, %v3685
      %v3738 = vadd.f32 %v3509, %v3687
      %v3739 = vadd.f32 %v3510, %v3690
      %v3740 = vadd.f32 %v3511, %v3692
      %v3741 = vadd.f32 %v3512, %v3695
      %v3742 = vadd.f32 %v3513, %v3697
      %v3743 = vadd.f32 %v3514, %v3700
      %v3744 = vadd.f32 %v3515, %v3702
      %v3745 = vadd.f32 %v3516, %v3705
      %v3746 = vadd.f32 %v3517, %v3707
      %v3747 = vadd.f32 %v3518, %v3710
      %v3748 = vadd.f32 %v3519, %v3712
      %v3749 = vadd.f32 %v3520, %v3715
      %v3750 = vadd.f32 %v3521, %v3717
      %v3751 = vld [vmem:[%s2601 + $0x2] sm:$0xff]
      %v3752 = vld [vmem:[%s2601 + $0xa] sm:$0xff]
      %v3753 = vld [vmem:[%s2601 + $0x1a] sm:$0xff]
      %v3754 = vld [vmem:[%s2601 + $0x22] sm:$0xff]
      %v3755 = vld [vmem:[%s2601 + $0x32] sm:$0xff]
      %v3756 = vld [vmem:[%s2601 + $0x3a] sm:$0xff]
      %v3757 = vld [vmem:[%s2601 + $0x4a] sm:$0xff]
      %v3758 = vld [vmem:[%s2601 + $0x52] sm:$0xff]
      %v3759 = vld [vmem:[%s2601 + $0x62] sm:$0xff]
      %v3760 = vld [vmem:[%s2601 + $0x6a] sm:$0xff]
      %v3761 = vld [vmem:[%s2601 + $0x7a] sm:$0xff]
      %v3762 = vld [vmem:[%s2601 + $0x82] sm:$0xff]
      %v3763 = vld [vmem:[%s2601 + $0x92] sm:$0xff]
      %v3764 = vld [vmem:[%s2601 + $0x9a] sm:$0xff]
      %v3765 = vld [vmem:[%s2601 + $0xaa] sm:$0xff]
      %v3766 = vld [vmem:[%s2601 + $0xb2] sm:$0xff]
      %v3767 = vld [vmem:[%s2601 + $0xc2] sm:$0xff]
      %v3768 = vld [vmem:[%s2601 + $0xca] sm:$0xff]
      %v3769 = vld [vmem:[%s2601 + $0xda] sm:$0xff]
      %v3770 = vld [vmem:[%s2601 + $0xe2] sm:$0xff]
      %v3771 = vld [vmem:[%s2601 + $0xf2] sm:$0xff]
      %v3772 = vld [vmem:[%s2601 + $0xfa] sm:$0xff]
      %v3773 = vld [vmem:[%s2601 + $0x10a] sm:$0xff]
      %v3774 = vld [vmem:[%s2601 + $0x112] sm:$0xff]
      %v3775 = vld [vmem:[%s2601 + $0x122] sm:$0xff]
      %v3776 = vld [vmem:[%s2601 + $0x12a] sm:$0xff]
      %v3777 = vld [vmem:[%s2601 + $0x13a] sm:$0xff]
      %v3778 = vld [vmem:[%s2601 + $0x142] sm:$0xff]
      %v3779 = vld [vmem:[%s2601 + $0x152] sm:$0xff]
      %v3780 = vld [vmem:[%s2601 + $0x15a] sm:$0xff]
      %v3781 = vld [vmem:[%s2601 + $0x16a] sm:$0xff]
      %v3782 = vld [vmem:[%s2601 + $0x172] sm:$0xff]
      %v3783 = vpack.c.bf16 %v3752, %v3751
      %v3784 = vpack.c.bf16 %v3754, %v3753
      %v3785 = vpack.c.bf16 %v3756, %v3755
      %v3786 = vpack.c.bf16 %v3758, %v3757
      %v3787 = vpack.c.bf16 %v3760, %v3759
      %v3788 = vpack.c.bf16 %v3762, %v3761
      %v3789 = vpack.c.bf16 %v3764, %v3763
      %v3790 = vpack.c.bf16 %v3766, %v3765
      %v3791 = vpack.c.bf16 %v3768, %v3767
      %v3792 = vpack.c.bf16 %v3770, %v3769
      %v3793 = vpack.c.bf16 %v3772, %v3771
      %v3794 = vpack.c.bf16 %v3774, %v3773
      %v3795 = vpack.c.bf16 %v3776, %v3775
      %v3796 = vpack.c.bf16 %v3778, %v3777
      %v3797 = vpack.c.bf16 %v3780, %v3779
      %v3798 = vpack.c.bf16 %v3782, %v3781
      %v3803 = vunpack.c.l.b16 %v2654
      %v3804 = vunpack.c.l.b16 %v2655
      %v3805 = vunpack.c.l.b16 %v2656
      %v3806 = vunpack.c.l.b16 %v2657
      %v3807 = vpack.c.b16 %v3804, %v3803
      %v3808 = vpack.c.b16 %v3806, %v3805
      %v3812 = vsel %vm2481, %v3783, 0
      %v3815 = vsel %vm2481, %v3784, 0
      %v3818 = vsel %vm2481, %v3785, 0
      %v3821 = vsel %vm2481, %v3786, 0
      %v3824 = vsel %vm2481, %v3787, 0
      %v3827 = vsel %vm2481, %v3788, 0
      %v3830 = vsel %vm2481, %v3789, 0
      %v3833 = vsel %vm2481, %v3790, 0
      %v3836 = vsel %vm2481, %v3791, 0
      %v3839 = vsel %vm2481, %v3792, 0
      %v3842 = vsel %vm2481, %v3793, 0
      %v3845 = vsel %vm2481, %v3794, 0
      %v3848 = vsel %vm2481, %v3795, 0
      %v3851 = vsel %vm2481, %v3796, 0
      %v3854 = vsel %vm2481, %v3797, 0
      %v3857 = vsel %vm2481, %v3798, 0
      %3859 = vmatpush.bf16.msra.mxu0 0
      %3860 = vmatpush.bf16.msra.mxu0 0
      %3861 = vmatpush.bf16.msra.mxu0 0
      %3862 = vmatpush.bf16.msra.mxu0 0
      %3863 = vmatpush.bf16.msra.mxu0 0
      %3864 = vmatpush.bf16.msra.mxu0 0
      %3865 = vmatpush.bf16.msra.mxu0 %v3808
      %3866 = vmatpush.bf16.msra.mxu0 %v3807
      %3867 = vmatmul.bf16.gmra.mxu0 %v3812
      %v3868 = vpop.f32.mrf.mxu0
      %v3869 = vadd.f32 0.0, %v3868
      %v3870 = vpop.f32.mrf.mxu0
      %v3871 = vadd.f32 0.0, %v3870
      %3872 = vmatmul.bf16.gmra.mxu0 %v3815
      %v3873 = vpop.f32.mrf.mxu0
      %v3874 = vadd.f32 0.0, %v3873
      %v3875 = vpop.f32.mrf.mxu0
      %v3876 = vadd.f32 0.0, %v3875
      %3877 = vmatmul.bf16.gmra.mxu0 %v3818
      %v3878 = vpop.f32.mrf.mxu0
      %v3879 = vadd.f32 0.0, %v3878
      %v3880 = vpop.f32.mrf.mxu0
      %v3881 = vadd.f32 0.0, %v3880
      %3882 = vmatmul.bf16.gmra.mxu0 %v3821
      %v3883 = vpop.f32.mrf.mxu0
      %v3884 = vadd.f32 0.0, %v3883
      %v3885 = vpop.f32.mrf.mxu0
      %v3886 = vadd.f32 0.0, %v3885
      %3887 = vmatmul.bf16.gmra.mxu0 %v3824
      %v3888 = vpop.f32.mrf.mxu0
      %v3889 = vadd.f32 0.0, %v3888
      %v3890 = vpop.f32.mrf.mxu0
      %v3891 = vadd.f32 0.0, %v3890
      %3892 = vmatmul.bf16.gmra.mxu0 %v3827
      %v3893 = vpop.f32.mrf.mxu0
      %v3894 = vadd.f32 0.0, %v3893
      %v3895 = vpop.f32.mrf.mxu0
      %v3896 = vadd.f32 0.0, %v3895
      %3897 = vmatmul.bf16.gmra.mxu0 %v3830
      %v3898 = vpop.f32.mrf.mxu0
      %v3899 = vadd.f32 0.0, %v3898
      %v3900 = vpop.f32.mrf.mxu0
      %v3901 = vadd.f32 0.0, %v3900
      %3902 = vmatmul.bf16.gmra.mxu0 %v3833
      %v3903 = vpop.f32.mrf.mxu0
      %v3904 = vadd.f32 0.0, %v3903
      %v3905 = vpop.f32.mrf.mxu0
      %v3906 = vadd.f32 0.0, %v3905
      %3907 = vmatmul.bf16.gmra.mxu0 %v3836
      %v3908 = vpop.f32.mrf.mxu0
      %v3909 = vadd.f32 0.0, %v3908
      %v3910 = vpop.f32.mrf.mxu0
      %v3911 = vadd.f32 0.0, %v3910
      %3912 = vmatmul.bf16.gmra.mxu0 %v3839
      %v3913 = vpop.f32.mrf.mxu0
      %v3914 = vadd.f32 0.0, %v3913
      %v3915 = vpop.f32.mrf.mxu0
      %v3916 = vadd.f32 0.0, %v3915
      %3917 = vmatmul.bf16.gmra.mxu0 %v3842
      %v3918 = vpop.f32.mrf.mxu0
      %v3919 = vadd.f32 0.0, %v3918
      %v3920 = vpop.f32.mrf.mxu0
      %v3921 = vadd.f32 0.0, %v3920
      %3922 = vmatmul.bf16.gmra.mxu0 %v3845
      %v3923 = vpop.f32.mrf.mxu0
      %v3924 = vadd.f32 0.0, %v3923
      %v3925 = vpop.f32.mrf.mxu0
      %v3926 = vadd.f32 0.0, %v3925
      %3927 = vmatmul.bf16.gmra.mxu0 %v3848
      %v3928 = vpop.f32.mrf.mxu0
      %v3929 = vadd.f32 0.0, %v3928
      %v3930 = vpop.f32.mrf.mxu0
      %v3931 = vadd.f32 0.0, %v3930
      %3932 = vmatmul.bf16.gmra.mxu0 %v3851
      %v3933 = vpop.f32.mrf.mxu0
      %v3934 = vadd.f32 0.0, %v3933
      %v3935 = vpop.f32.mrf.mxu0
      %v3936 = vadd.f32 0.0, %v3935
      %3937 = vmatmul.bf16.gmra.mxu0 %v3854
      %v3938 = vpop.f32.mrf.mxu0
      %v3939 = vadd.f32 0.0, %v3938
      %v3940 = vpop.f32.mrf.mxu0
      %v3941 = vadd.f32 0.0, %v3940
      %3942 = vmatmul.bf16.gmra.mxu0 %v3857
      %v3943 = vpop.f32.mrf.mxu0
      %v3944 = vadd.f32 0.0, %v3943
      %v3945 = vpop.f32.mrf.mxu0
      %v3946 = vadd.f32 0.0, %v3945
      %3947 = vdwg.mxu0
      %v3948 = vadd.f32 %v3719, %v3869
      %v3949 = vadd.f32 %v3720, %v3871
      %v3950 = vadd.f32 %v3721, %v3874
      %v3951 = vadd.f32 %v3722, %v3876
      %v3952 = vadd.f32 %v3723, %v3879
      %v3953 = vadd.f32 %v3724, %v3881
      %v3954 = vadd.f32 %v3725, %v3884
      %v3955 = vadd.f32 %v3726, %v3886
      %v3956 = vadd.f32 %v3727, %v3889
      %v3957 = vadd.f32 %v3728, %v3891
      %v3958 = vadd.f32 %v3729, %v3894
      %v3959 = vadd.f32 %v3730, %v3896
      %v3960 = vadd.f32 %v3731, %v3899
      %v3961 = vadd.f32 %v3732, %v3901
      %v3962 = vadd.f32 %v3733, %v3904
      %v3963 = vadd.f32 %v3734, %v3906
      %v3964 = vadd.f32 %v3735, %v3909
      %v3965 = vadd.f32 %v3736, %v3911
      %v3966 = vadd.f32 %v3737, %v3914
      %v3967 = vadd.f32 %v3738, %v3916
      %v3968 = vadd.f32 %v3739, %v3919
      %v3969 = vadd.f32 %v3740, %v3921
      %v3970 = vadd.f32 %v3741, %v3924
      %v3971 = vadd.f32 %v3742, %v3926
      %v3972 = vadd.f32 %v3743, %v3929
      %v3973 = vadd.f32 %v3744, %v3931
      %v3974 = vadd.f32 %v3745, %v3934
      %v3975 = vadd.f32 %v3746, %v3936
      %v3976 = vadd.f32 %v3747, %v3939
      %v3977 = vadd.f32 %v3748, %v3941
      %v3978 = vadd.f32 %v3749, %v3944
      %v3979 = vadd.f32 %v3750, %v3946
      %s3980 = scalar_lea.vmem [#allocation3], 48
      %v3981 = vld [vmem:[%s3980] sm:$0xff]
      %v3982 = vld [vmem:[%s3980 + $0x8] sm:$0xff]
      %v3983 = vld [vmem:[%s3980 + $0x18] sm:$0xff]
      %v3984 = vld [vmem:[%s3980 + $0x20] sm:$0xff]
      %v3985 = vld [vmem:[%s3980 + $0x30] sm:$0xff]
      %v3986 = vld [vmem:[%s3980 + $0x38] sm:$0xff]
      %v3987 = vld [vmem:[%s3980 + $0x48] sm:$0xff]
      %v3988 = vld [vmem:[%s3980 + $0x50] sm:$0xff]
      %v3989 = vld [vmem:[%s3980 + $0x60] sm:$0xff]
      %v3990 = vld [vmem:[%s3980 + $0x68] sm:$0xff]
      %v3991 = vld [vmem:[%s3980 + $0x78] sm:$0xff]
      %v3992 = vld [vmem:[%s3980 + $0x80] sm:$0xff]
      %v3993 = vld [vmem:[%s3980 + $0x90] sm:$0xff]
      %v3994 = vld [vmem:[%s3980 + $0x98] sm:$0xff]
      %v3995 = vld [vmem:[%s3980 + $0xa8] sm:$0xff]
      %v3996 = vld [vmem:[%s3980 + $0xb0] sm:$0xff]
      %v3997 = vld [vmem:[%s3980 + $0xc0] sm:$0xff]
      %v3998 = vld [vmem:[%s3980 + $0xc8] sm:$0xff]
      %v3999 = vld [vmem:[%s3980 + $0xd8] sm:$0xff]
      %v4000 = vld [vmem:[%s3980 + $0xe0] sm:$0xff]
      %v4001 = vld [vmem:[%s3980 + $0xf0] sm:$0xff]
      %v4002 = vld [vmem:[%s3980 + $0xf8] sm:$0xff]
      %v4003 = vld [vmem:[%s3980 + $0x108] sm:$0xff]
      %v4004 = vld [vmem:[%s3980 + $0x110] sm:$0xff]
      %v4005 = vld [vmem:[%s3980 + $0x120] sm:$0xff]
      %v4006 = vld [vmem:[%s3980 + $0x128] sm:$0xff]
      %v4007 = vld [vmem:[%s3980 + $0x138] sm:$0xff]
      %v4008 = vld [vmem:[%s3980 + $0x140] sm:$0xff]
      %v4009 = vld [vmem:[%s3980 + $0x150] sm:$0xff]
      %v4010 = vld [vmem:[%s3980 + $0x158] sm:$0xff]
      %v4011 = vld [vmem:[%s3980 + $0x168] sm:$0xff]
      %v4012 = vld [vmem:[%s3980 + $0x170] sm:$0xff]
      %v4013 = vpack.c.bf16 %v3982, %v3981
      %v4014 = vpack.c.bf16 %v3984, %v3983
      %v4015 = vpack.c.bf16 %v3986, %v3985
      %v4016 = vpack.c.bf16 %v3988, %v3987
      %v4017 = vpack.c.bf16 %v3990, %v3989
      %v4018 = vpack.c.bf16 %v3992, %v3991
      %v4019 = vpack.c.bf16 %v3994, %v3993
      %v4020 = vpack.c.bf16 %v3996, %v3995
      %v4021 = vpack.c.bf16 %v3998, %v3997
      %v4022 = vpack.c.bf16 %v4000, %v3999
      %v4023 = vpack.c.bf16 %v4002, %v4001
      %v4024 = vpack.c.bf16 %v4004, %v4003
      %v4025 = vpack.c.bf16 %v4006, %v4005
      %v4026 = vpack.c.bf16 %v4008, %v4007
      %v4027 = vpack.c.bf16 %v4010, %v4009
      %v4028 = vpack.c.bf16 %v4012, %v4011
      %v4033 = vunpack.c.l.b16 %v2658
      %v4034 = vunpack.c.l.b16 %v2659
      %v4035 = vunpack.c.l.b16 %v2660
      %v4036 = vunpack.c.l.b16 %v2661
      %v4037 = vpack.c.b16 %v4034, %v4033
      %v4038 = vpack.c.b16 %v4036, %v4035
      %v4042 = vsel %vm2481, %v4013, 0
      %v4045 = vsel %vm2481, %v4014, 0
      %v4048 = vsel %vm2481, %v4015, 0
      %v4051 = vsel %vm2481, %v4016, 0
      %v4054 = vsel %vm2481, %v4017, 0
      %v4057 = vsel %vm2481, %v4018, 0
      %v4060 = vsel %vm2481, %v4019, 0
      %v4063 = vsel %vm2481, %v4020, 0
      %v4066 = vsel %vm2481, %v4021, 0
      %v4069 = vsel %vm2481, %v4022, 0
      %v4072 = vsel %vm2481, %v4023, 0
      %v4075 = vsel %vm2481, %v4024, 0
      %v4078 = vsel %vm2481, %v4025, 0
      %v4081 = vsel %vm2481, %v4026, 0
      %v4084 = vsel %vm2481, %v4027, 0
      %v4087 = vsel %vm2481, %v4028, 0
      %4089 = vmatpush.bf16.msra.mxu0 0
      %4090 = vmatpush.bf16.msra.mxu0 0
      %4091 = vmatpush.bf16.msra.mxu0 0
      %4092 = vmatpush.bf16.msra.mxu0 0
      %4093 = vmatpush.bf16.msra.mxu0 0
      %4094 = vmatpush.bf16.msra.mxu0 0
      %4095 = vmatpush.bf16.msra.mxu0 %v4038
      %4096 = vmatpush.bf16.msra.mxu0 %v4037
      %4097 = vmatmul.bf16.gmra.mxu0 %v4042
      %v4098 = vpop.f32.mrf.mxu0
      %v4099 = vadd.f32 0.0, %v4098
      %v4100 = vpop.f32.mrf.mxu0
      %v4101 = vadd.f32 0.0, %v4100
      %4102 = vmatmul.bf16.gmra.mxu0 %v4045
      %v4103 = vpop.f32.mrf.mxu0
      %v4104 = vadd.f32 0.0, %v4103
      %v4105 = vpop.f32.mrf.mxu0
      %v4106 = vadd.f32 0.0, %v4105
      %4107 = vmatmul.bf16.gmra.mxu0 %v4048
      %v4108 = vpop.f32.mrf.mxu0
      %v4109 = vadd.f32 0.0, %v4108
      %v4110 = vpop.f32.mrf.mxu0
      %v4111 = vadd.f32 0.0, %v4110
      %4112 = vmatmul.bf16.gmra.mxu0 %v4051
      %v4113 = vpop.f32.mrf.mxu0
      %v4114 = vadd.f32 0.0, %v4113
      %v4115 = vpop.f32.mrf.mxu0
      %v4116 = vadd.f32 0.0, %v4115
      %4117 = vmatmul.bf16.gmra.mxu0 %v4054
      %v4118 = vpop.f32.mrf.mxu0
      %v4119 = vadd.f32 0.0, %v4118
      %v4120 = vpop.f32.mrf.mxu0
      %v4121 = vadd.f32 0.0, %v4120
      %4122 = vmatmul.bf16.gmra.mxu0 %v4057
      %v4123 = vpop.f32.mrf.mxu0
      %v4124 = vadd.f32 0.0, %v4123
      %v4125 = vpop.f32.mrf.mxu0
      %v4126 = vadd.f32 0.0, %v4125
      %4127 = vmatmul.bf16.gmra.mxu0 %v4060
      %v4128 = vpop.f32.mrf.mxu0
      %v4129 = vadd.f32 0.0, %v4128
      %v4130 = vpop.f32.mrf.mxu0
      %v4131 = vadd.f32 0.0, %v4130
      %4132 = vmatmul.bf16.gmra.mxu0 %v4063
      %v4133 = vpop.f32.mrf.mxu0
      %v4134 = vadd.f32 0.0, %v4133
      %v4135 = vpop.f32.mrf.mxu0
      %v4136 = vadd.f32 0.0, %v4135
      %4137 = vmatmul.bf16.gmra.mxu0 %v4066
      %v4138 = vpop.f32.mrf.mxu0
      %v4139 = vadd.f32 0.0, %v4138
      %v4140 = vpop.f32.mrf.mxu0
      %v4141 = vadd.f32 0.0, %v4140
      %4142 = vmatmul.bf16.gmra.mxu0 %v4069
      %v4143 = vpop.f32.mrf.mxu0
      %v4144 = vadd.f32 0.0, %v4143
      %v4145 = vpop.f32.mrf.mxu0
      %v4146 = vadd.f32 0.0, %v4145
      %4147 = vmatmul.bf16.gmra.mxu0 %v4072
      %v4148 = vpop.f32.mrf.mxu0
      %v4149 = vadd.f32 0.0, %v4148
      %v4150 = vpop.f32.mrf.mxu0
      %v4151 = vadd.f32 0.0, %v4150
      %4152 = vmatmul.bf16.gmra.mxu0 %v4075
      %v4153 = vpop.f32.mrf.mxu0
      %v4154 = vadd.f32 0.0, %v4153
      %v4155 = vpop.f32.mrf.mxu0
      %v4156 = vadd.f32 0.0, %v4155
      %4157 = vmatmul.bf16.gmra.mxu0 %v4078
      %v4158 = vpop.f32.mrf.mxu0
      %v4159 = vadd.f32 0.0, %v4158
      %v4160 = vpop.f32.mrf.mxu0
      %v4161 = vadd.f32 0.0, %v4160
      %4162 = vmatmul.bf16.gmra.mxu0 %v4081
      %v4163 = vpop.f32.mrf.mxu0
      %v4164 = vadd.f32 0.0, %v4163
      %v4165 = vpop.f32.mrf.mxu0
      %v4166 = vadd.f32 0.0, %v4165
      %4167 = vmatmul.bf16.gmra.mxu0 %v4084
      %v4168 = vpop.f32.mrf.mxu0
      %v4169 = vadd.f32 0.0, %v4168
      %v4170 = vpop.f32.mrf.mxu0
      %v4171 = vadd.f32 0.0, %v4170
      %4172 = vmatmul.bf16.gmra.mxu0 %v4087
      %v4173 = vpop.f32.mrf.mxu0
      %v4174 = vadd.f32 0.0, %v4173
      %v4175 = vpop.f32.mrf.mxu0
      %v4176 = vadd.f32 0.0, %v4175
      %4177 = vdwg.mxu0
      %v4178 = vadd.f32 %v3948, %v4099
      %v4179 = vadd.f32 %v3949, %v4101
      %v4180 = vadd.f32 %v3950, %v4104
      %v4181 = vadd.f32 %v3951, %v4106
      %v4182 = vadd.f32 %v3952, %v4109
      %v4183 = vadd.f32 %v3953, %v4111
      %v4184 = vadd.f32 %v3954, %v4114
      %v4185 = vadd.f32 %v3955, %v4116
      %v4186 = vadd.f32 %v3956, %v4119
      %v4187 = vadd.f32 %v3957, %v4121
      %v4188 = vadd.f32 %v3958, %v4124
      %v4189 = vadd.f32 %v3959, %v4126
      %v4190 = vadd.f32 %v3960, %v4129
      %v4191 = vadd.f32 %v3961, %v4131
      %v4192 = vadd.f32 %v3962, %v4134
      %v4193 = vadd.f32 %v3963, %v4136
      %v4194 = vadd.f32 %v3964, %v4139
      %v4195 = vadd.f32 %v3965, %v4141
      %v4196 = vadd.f32 %v3966, %v4144
      %v4197 = vadd.f32 %v3967, %v4146
      %v4198 = vadd.f32 %v3968, %v4149
      %v4199 = vadd.f32 %v3969, %v4151
      %v4200 = vadd.f32 %v3970, %v4154
      %v4201 = vadd.f32 %v3971, %v4156
      %v4202 = vadd.f32 %v3972, %v4159
      %v4203 = vadd.f32 %v3973, %v4161
      %v4204 = vadd.f32 %v3974, %v4164
      %v4205 = vadd.f32 %v3975, %v4166
      %v4206 = vadd.f32 %v3976, %v4169
      %v4207 = vadd.f32 %v3977, %v4171
      %v4208 = vadd.f32 %v3978, %v4174
      %v4209 = vadd.f32 %v3979, %v4176
      %v4210 = vld [vmem:[%s3980 + $0x1] sm:$0xff]
      %v4211 = vld [vmem:[%s3980 + $0x9] sm:$0xff]
      %v4212 = vld [vmem:[%s3980 + $0x19] sm:$0xff]
      %v4213 = vld [vmem:[%s3980 + $0x21] sm:$0xff]
      %v4214 = vld [vmem:[%s3980 + $0x31] sm:$0xff]
      %v4215 = vld [vmem:[%s3980 + $0x39] sm:$0xff]
      %v4216 = vld [vmem:[%s3980 + $0x49] sm:$0xff]
      %v4217 = vld [vmem:[%s3980 + $0x51] sm:$0xff]
      %v4218 = vld [vmem:[%s3980 + $0x61] sm:$0xff]
      %v4219 = vld [vmem:[%s3980 + $0x69] sm:$0xff]
      %v4220 = vld [vmem:[%s3980 + $0x79] sm:$0xff]
      %v4221 = vld [vmem:[%s3980 + $0x81] sm:$0xff]
      %v4222 = vld [vmem:[%s3980 + $0x91] sm:$0xff]
      %v4223 = vld [vmem:[%s3980 + $0x99] sm:$0xff]
      %v4224 = vld [vmem:[%s3980 + $0xa9] sm:$0xff]
      %v4225 = vld [vmem:[%s3980 + $0xb1] sm:$0xff]
      %v4226 = vld [vmem:[%s3980 + $0xc1] sm:$0xff]
      %v4227 = vld [vmem:[%s3980 + $0xc9] sm:$0xff]
      %v4228 = vld [vmem:[%s3980 + $0xd9] sm:$0xff]
      %v4229 = vld [vmem:[%s3980 + $0xe1] sm:$0xff]
      %v4230 = vld [vmem:[%s3980 + $0xf1] sm:$0xff]
      %v4231 = vld [vmem:[%s3980 + $0xf9] sm:$0xff]
      %v4232 = vld [vmem:[%s3980 + $0x109] sm:$0xff]
      %v4233 = vld [vmem:[%s3980 + $0x111] sm:$0xff]
      %v4234 = vld [vmem:[%s3980 + $0x121] sm:$0xff]
      %v4235 = vld [vmem:[%s3980 + $0x129] sm:$0xff]
      %v4236 = vld [vmem:[%s3980 + $0x139] sm:$0xff]
      %v4237 = vld [vmem:[%s3980 + $0x141] sm:$0xff]
      %v4238 = vld [vmem:[%s3980 + $0x151] sm:$0xff]
      %v4239 = vld [vmem:[%s3980 + $0x159] sm:$0xff]
      %v4240 = vld [vmem:[%s3980 + $0x169] sm:$0xff]
      %v4241 = vld [vmem:[%s3980 + $0x171] sm:$0xff]
      %v4242 = vpack.c.bf16 %v4211, %v4210
      %v4243 = vpack.c.bf16 %v4213, %v4212
      %v4244 = vpack.c.bf16 %v4215, %v4214
      %v4245 = vpack.c.bf16 %v4217, %v4216
      %v4246 = vpack.c.bf16 %v4219, %v4218
      %v4247 = vpack.c.bf16 %v4221, %v4220
      %v4248 = vpack.c.bf16 %v4223, %v4222
      %v4249 = vpack.c.bf16 %v4225, %v4224
      %v4250 = vpack.c.bf16 %v4227, %v4226
      %v4251 = vpack.c.bf16 %v4229, %v4228
      %v4252 = vpack.c.bf16 %v4231, %v4230
      %v4253 = vpack.c.bf16 %v4233, %v4232
      %v4254 = vpack.c.bf16 %v4235, %v4234
      %v4255 = vpack.c.bf16 %v4237, %v4236
      %v4256 = vpack.c.bf16 %v4239, %v4238
      %v4257 = vpack.c.bf16 %v4241, %v4240
      %v4262 = vunpack.c.l.b16 %v2662
      %v4263 = vunpack.c.l.b16 %v2663
      %v4264 = vunpack.c.l.b16 %v2664
      %v4265 = vunpack.c.l.b16 %v2665
      %v4266 = vpack.c.b16 %v4263, %v4262
      %v4267 = vpack.c.b16 %v4265, %v4264
      %v4271 = vsel %vm2481, %v4242, 0
      %v4274 = vsel %vm2481, %v4243, 0
      %v4277 = vsel %vm2481, %v4244, 0
      %v4280 = vsel %vm2481, %v4245, 0
      %v4283 = vsel %vm2481, %v4246, 0
      %v4286 = vsel %vm2481, %v4247, 0
      %v4289 = vsel %vm2481, %v4248, 0
      %v4292 = vsel %vm2481, %v4249, 0
      %v4295 = vsel %vm2481, %v4250, 0
      %v4298 = vsel %vm2481, %v4251, 0
      %v4301 = vsel %vm2481, %v4252, 0
      %v4304 = vsel %vm2481, %v4253, 0
      %v4307 = vsel %vm2481, %v4254, 0
      %v4310 = vsel %vm2481, %v4255, 0
      %v4313 = vsel %vm2481, %v4256, 0
      %v4316 = vsel %vm2481, %v4257, 0
      %4318 = vmatpush.bf16.msra.mxu0 0
      %4319 = vmatpush.bf16.msra.mxu0 0
      %4320 = vmatpush.bf16.msra.mxu0 0
      %4321 = vmatpush.bf16.msra.mxu0 0
      %4322 = vmatpush.bf16.msra.mxu0 0
      %4323 = vmatpush.bf16.msra.mxu0 0
      %4324 = vmatpush.bf16.msra.mxu0 %v4267
      %4325 = vmatpush.bf16.msra.mxu0 %v4266
      %4326 = vmatmul.bf16.gmra.mxu0 %v4271
      %v4327 = vpop.f32.mrf.mxu0
      %v4328 = vadd.f32 0.0, %v4327
      %v4329 = vpop.f32.mrf.mxu0
      %v4330 = vadd.f32 0.0, %v4329
      %4331 = vmatmul.bf16.gmra.mxu0 %v4274
      %v4332 = vpop.f32.mrf.mxu0
      %v4333 = vadd.f32 0.0, %v4332
      %v4334 = vpop.f32.mrf.mxu0
      %v4335 = vadd.f32 0.0, %v4334
      %4336 = vmatmul.bf16.gmra.mxu0 %v4277
      %v4337 = vpop.f32.mrf.mxu0
      %v4338 = vadd.f32 0.0, %v4337
      %v4339 = vpop.f32.mrf.mxu0
      %v4340 = vadd.f32 0.0, %v4339
      %4341 = vmatmul.bf16.gmra.mxu0 %v4280
      %v4342 = vpop.f32.mrf.mxu0
      %v4343 = vadd.f32 0.0, %v4342
      %v4344 = vpop.f32.mrf.mxu0
      %v4345 = vadd.f32 0.0, %v4344
      %4346 = vmatmul.bf16.gmra.mxu0 %v4283
      %v4347 = vpop.f32.mrf.mxu0
      %v4348 = vadd.f32 0.0, %v4347
      %v4349 = vpop.f32.mrf.mxu0
      %v4350 = vadd.f32 0.0, %v4349
      %4351 = vmatmul.bf16.gmra.mxu0 %v4286
      %v4352 = vpop.f32.mrf.mxu0
      %v4353 = vadd.f32 0.0, %v4352
      %v4354 = vpop.f32.mrf.mxu0
      %v4355 = vadd.f32 0.0, %v4354
      %4356 = vmatmul.bf16.gmra.mxu0 %v4289
      %v4357 = vpop.f32.mrf.mxu0
      %v4358 = vadd.f32 0.0, %v4357
      %v4359 = vpop.f32.mrf.mxu0
      %v4360 = vadd.f32 0.0, %v4359
      %4361 = vmatmul.bf16.gmra.mxu0 %v4292
      %v4362 = vpop.f32.mrf.mxu0
      %v4363 = vadd.f32 0.0, %v4362
      %v4364 = vpop.f32.mrf.mxu0
      %v4365 = vadd.f32 0.0, %v4364
      %4366 = vmatmul.bf16.gmra.mxu0 %v4295
      %v4367 = vpop.f32.mrf.mxu0
      %v4368 = vadd.f32 0.0, %v4367
      %v4369 = vpop.f32.mrf.mxu0
      %v4370 = vadd.f32 0.0, %v4369
      %4371 = vmatmul.bf16.gmra.mxu0 %v4298
      %v4372 = vpop.f32.mrf.mxu0
      %v4373 = vadd.f32 0.0, %v4372
      %v4374 = vpop.f32.mrf.mxu0
      %v4375 = vadd.f32 0.0, %v4374
      %4376 = vmatmul.bf16.gmra.mxu0 %v4301
      %v4377 = vpop.f32.mrf.mxu0
      %v4378 = vadd.f32 0.0, %v4377
      %v4379 = vpop.f32.mrf.mxu0
      %v4380 = vadd.f32 0.0, %v4379
      %4381 = vmatmul.bf16.gmra.mxu0 %v4304
      %v4382 = vpop.f32.mrf.mxu0
      %v4383 = vadd.f32 0.0, %v4382
      %v4384 = vpop.f32.mrf.mxu0
      %v4385 = vadd.f32 0.0, %v4384
      %4386 = vmatmul.bf16.gmra.mxu0 %v4307
      %v4387 = vpop.f32.mrf.mxu0
      %v4388 = vadd.f32 0.0, %v4387
      %v4389 = vpop.f32.mrf.mxu0
      %v4390 = vadd.f32 0.0, %v4389
      %4391 = vmatmul.bf16.gmra.mxu0 %v4310
      %v4392 = vpop.f32.mrf.mxu0
      %v4393 = vadd.f32 0.0, %v4392
      %v4394 = vpop.f32.mrf.mxu0
      %v4395 = vadd.f32 0.0, %v4394
      %4396 = vmatmul.bf16.gmra.mxu0 %v4313
      %v4397 = vpop.f32.mrf.mxu0
      %v4398 = vadd.f32 0.0, %v4397
      %v4399 = vpop.f32.mrf.mxu0
      %v4400 = vadd.f32 0.0, %v4399
      %4401 = vmatmul.bf16.gmra.mxu0 %v4316
      %v4402 = vpop.f32.mrf.mxu0
      %v4403 = vadd.f32 0.0, %v4402
      %v4404 = vpop.f32.mrf.mxu0
      %v4405 = vadd.f32 0.0, %v4404
      %4406 = vdwg.mxu0
      %v4407 = vadd.f32 %v4178, %v4328
      %v4408 = vadd.f32 %v4179, %v4330
      %v4409 = vadd.f32 %v4180, %v4333
      %v4410 = vadd.f32 %v4181, %v4335
      %v4411 = vadd.f32 %v4182, %v4338
      %v4412 = vadd.f32 %v4183, %v4340
      %v4413 = vadd.f32 %v4184, %v4343
      %v4414 = vadd.f32 %v4185, %v4345
      %v4415 = vadd.f32 %v4186, %v4348
      %v4416 = vadd.f32 %v4187, %v4350
      %v4417 = vadd.f32 %v4188, %v4353
      %v4418 = vadd.f32 %v4189, %v4355
      %v4419 = vadd.f32 %v4190, %v4358
      %v4420 = vadd.f32 %v4191, %v4360
      %v4421 = vadd.f32 %v4192, %v4363
      %v4422 = vadd.f32 %v4193, %v4365
      %v4423 = vadd.f32 %v4194, %v4368
      %v4424 = vadd.f32 %v4195, %v4370
      %v4425 = vadd.f32 %v4196, %v4373
      %v4426 = vadd.f32 %v4197, %v4375
      %v4427 = vadd.f32 %v4198, %v4378
      %v4428 = vadd.f32 %v4199, %v4380
      %v4429 = vadd.f32 %v4200, %v4383
      %v4430 = vadd.f32 %v4201, %v4385
      %v4431 = vadd.f32 %v4202, %v4388
      %v4432 = vadd.f32 %v4203, %v4390
      %v4433 = vadd.f32 %v4204, %v4393
      %v4434 = vadd.f32 %v4205, %v4395
      %v4435 = vadd.f32 %v4206, %v4398
      %v4436 = vadd.f32 %v4207, %v4400
      %v4437 = vadd.f32 %v4208, %v4403
      %v4438 = vadd.f32 %v4209, %v4405
      %v4439 = vld [vmem:[%s3980 + $0x2] sm:$0xff]
      %v4440 = vld [vmem:[%s3980 + $0xa] sm:$0xff]
      %v4441 = vld [vmem:[%s3980 + $0x1a] sm:$0xff]
      %v4442 = vld [vmem:[%s3980 + $0x22] sm:$0xff]
      %v4443 = vld [vmem:[%s3980 + $0x32] sm:$0xff]
      %v4444 = vld [vmem:[%s3980 + $0x3a] sm:$0xff]
      %v4445 = vld [vmem:[%s3980 + $0x4a] sm:$0xff]
      %v4446 = vld [vmem:[%s3980 + $0x52] sm:$0xff]
      %v4447 = vld [vmem:[%s3980 + $0x62] sm:$0xff]
      %v4448 = vld [vmem:[%s3980 + $0x6a] sm:$0xff]
      %v4449 = vld [vmem:[%s3980 + $0x7a] sm:$0xff]
      %v4450 = vld [vmem:[%s3980 + $0x82] sm:$0xff]
      %v4451 = vld [vmem:[%s3980 + $0x92] sm:$0xff]
      %v4452 = vld [vmem:[%s3980 + $0x9a] sm:$0xff]
      %v4453 = vld [vmem:[%s3980 + $0xaa] sm:$0xff]
      %v4454 = vld [vmem:[%s3980 + $0xb2] sm:$0xff]
      %v4455 = vld [vmem:[%s3980 + $0xc2] sm:$0xff]
      %v4456 = vld [vmem:[%s3980 + $0xca] sm:$0xff]
      %v4457 = vld [vmem:[%s3980 + $0xda] sm:$0xff]
      %v4458 = vld [vmem:[%s3980 + $0xe2] sm:$0xff]
      %v4459 = vld [vmem:[%s3980 + $0xf2] sm:$0xff]
      %v4460 = vld [vmem:[%s3980 + $0xfa] sm:$0xff]
      %v4461 = vld [vmem:[%s3980 + $0x10a] sm:$0xff]
      %v4462 = vld [vmem:[%s3980 + $0x112] sm:$0xff]
      %v4463 = vld [vmem:[%s3980 + $0x122] sm:$0xff]
      %v4464 = vld [vmem:[%s3980 + $0x12a] sm:$0xff]
      %v4465 = vld [vmem:[%s3980 + $0x13a] sm:$0xff]
      %v4466 = vld [vmem:[%s3980 + $0x142] sm:$0xff]
      %v4467 = vld [vmem:[%s3980 + $0x152] sm:$0xff]
      %v4468 = vld [vmem:[%s3980 + $0x15a] sm:$0xff]
      %v4469 = vld [vmem:[%s3980 + $0x16a] sm:$0xff]
      %v4470 = vld [vmem:[%s3980 + $0x172] sm:$0xff]
      %v4471 = vpack.c.bf16 %v4440, %v4439
      %v4472 = vpack.c.bf16 %v4442, %v4441
      %v4473 = vpack.c.bf16 %v4444, %v4443
      %v4474 = vpack.c.bf16 %v4446, %v4445
      %v4475 = vpack.c.bf16 %v4448, %v4447
      %v4476 = vpack.c.bf16 %v4450, %v4449
      %v4477 = vpack.c.bf16 %v4452, %v4451
      %v4478 = vpack.c.bf16 %v4454, %v4453
      %v4479 = vpack.c.bf16 %v4456, %v4455
      %v4480 = vpack.c.bf16 %v4458, %v4457
      %v4481 = vpack.c.bf16 %v4460, %v4459
      %v4482 = vpack.c.bf16 %v4462, %v4461
      %v4483 = vpack.c.bf16 %v4464, %v4463
      %v4484 = vpack.c.bf16 %v4466, %v4465
      %v4485 = vpack.c.bf16 %v4468, %v4467
      %v4486 = vpack.c.bf16 %v4470, %v4469
      %v4491 = vunpack.c.l.b16 %v2666
      %v4492 = vunpack.c.l.b16 %v2667
      %v4493 = vunpack.c.l.b16 %v2668
      %v4494 = vunpack.c.l.b16 %v2669
      %v4495 = vpack.c.b16 %v4492, %v4491
      %v4496 = vpack.c.b16 %v4494, %v4493
      %v4500 = vsel %vm2481, %v4471, 0
      %v4503 = vsel %vm2481, %v4472, 0
      %v4506 = vsel %vm2481, %v4473, 0
      %v4509 = vsel %vm2481, %v4474, 0
      %v4512 = vsel %vm2481, %v4475, 0
      %v4515 = vsel %vm2481, %v4476, 0
      %v4518 = vsel %vm2481, %v4477, 0
      %v4521 = vsel %vm2481, %v4478, 0
      %v4524 = vsel %vm2481, %v4479, 0
      %v4527 = vsel %vm2481, %v4480, 0
      %v4530 = vsel %vm2481, %v4481, 0
      %v4533 = vsel %vm2481, %v4482, 0
      %v4536 = vsel %vm2481, %v4483, 0
      %v4539 = vsel %vm2481, %v4484, 0
      %v4542 = vsel %vm2481, %v4485, 0
      %v4545 = vsel %vm2481, %v4486, 0
      %4547 = vmatpush.bf16.msra.mxu0 0
      %4548 = vmatpush.bf16.msra.mxu0 0
      %4549 = vmatpush.bf16.msra.mxu0 0
      %4550 = vmatpush.bf16.msra.mxu0 0
      %4551 = vmatpush.bf16.msra.mxu0 0
      %4552 = vmatpush.bf16.msra.mxu0 0
      %4553 = vmatpush.bf16.msra.mxu0 %v4496
      %4554 = vmatpush.bf16.msra.mxu0 %v4495
      %4555 = vmatmul.bf16.gmra.mxu0 %v4500
      %v4556 = vpop.f32.mrf.mxu0
      %v4557 = vadd.f32 0.0, %v4556
      %v4558 = vpop.f32.mrf.mxu0
      %v4559 = vadd.f32 0.0, %v4558
      %4560 = vmatmul.bf16.gmra.mxu0 %v4503
      %v4561 = vpop.f32.mrf.mxu0
      %v4562 = vadd.f32 0.0, %v4561
      %v4563 = vpop.f32.mrf.mxu0
      %v4564 = vadd.f32 0.0, %v4563
      %4565 = vmatmul.bf16.gmra.mxu0 %v4506
      %v4566 = vpop.f32.mrf.mxu0
      %v4567 = vadd.f32 0.0, %v4566
      %v4568 = vpop.f32.mrf.mxu0
      %v4569 = vadd.f32 0.0, %v4568
      %4570 = vmatmul.bf16.gmra.mxu0 %v4509
      %v4571 = vpop.f32.mrf.mxu0
      %v4572 = vadd.f32 0.0, %v4571
      %v4573 = vpop.f32.mrf.mxu0
      %v4574 = vadd.f32 0.0, %v4573
      %4575 = vmatmul.bf16.gmra.mxu0 %v4512
      %v4576 = vpop.f32.mrf.mxu0
      %v4577 = vadd.f32 0.0, %v4576
      %v4578 = vpop.f32.mrf.mxu0
      %v4579 = vadd.f32 0.0, %v4578
      %4580 = vmatmul.bf16.gmra.mxu0 %v4515
      %v4581 = vpop.f32.mrf.mxu0
      %v4582 = vadd.f32 0.0, %v4581
      %v4583 = vpop.f32.mrf.mxu0
      %v4584 = vadd.f32 0.0, %v4583
      %4585 = vmatmul.bf16.gmra.mxu0 %v4518
      %v4586 = vpop.f32.mrf.mxu0
      %v4587 = vadd.f32 0.0, %v4586
      %v4588 = vpop.f32.mrf.mxu0
      %v4589 = vadd.f32 0.0, %v4588
      %4590 = vmatmul.bf16.gmra.mxu0 %v4521
      %v4591 = vpop.f32.mrf.mxu0
      %v4592 = vadd.f32 0.0, %v4591
      %v4593 = vpop.f32.mrf.mxu0
      %v4594 = vadd.f32 0.0, %v4593
      %4595 = vmatmul.bf16.gmra.mxu0 %v4524
      %v4596 = vpop.f32.mrf.mxu0
      %v4597 = vadd.f32 0.0, %v4596
      %v4598 = vpop.f32.mrf.mxu0
      %v4599 = vadd.f32 0.0, %v4598
      %4600 = vmatmul.bf16.gmra.mxu0 %v4527
      %v4601 = vpop.f32.mrf.mxu0
      %v4602 = vadd.f32 0.0, %v4601
      %v4603 = vpop.f32.mrf.mxu0
      %v4604 = vadd.f32 0.0, %v4603
      %4605 = vmatmul.bf16.gmra.mxu0 %v4530
      %v4606 = vpop.f32.mrf.mxu0
      %v4607 = vadd.f32 0.0, %v4606
      %v4608 = vpop.f32.mrf.mxu0
      %v4609 = vadd.f32 0.0, %v4608
      %4610 = vmatmul.bf16.gmra.mxu0 %v4533
      %v4611 = vpop.f32.mrf.mxu0
      %v4612 = vadd.f32 0.0, %v4611
      %v4613 = vpop.f32.mrf.mxu0
      %v4614 = vadd.f32 0.0, %v4613
      %4615 = vmatmul.bf16.gmra.mxu0 %v4536
      %v4616 = vpop.f32.mrf.mxu0
      %v4617 = vadd.f32 0.0, %v4616
      %v4618 = vpop.f32.mrf.mxu0
      %v4619 = vadd.f32 0.0, %v4618
      %4620 = vmatmul.bf16.gmra.mxu0 %v4539
      %v4621 = vpop.f32.mrf.mxu0
      %v4622 = vadd.f32 0.0, %v4621
      %v4623 = vpop.f32.mrf.mxu0
      %v4624 = vadd.f32 0.0, %v4623
      %4625 = vmatmul.bf16.gmra.mxu0 %v4542
      %v4626 = vpop.f32.mrf.mxu0
      %v4627 = vadd.f32 0.0, %v4626
      %v4628 = vpop.f32.mrf.mxu0
      %v4629 = vadd.f32 0.0, %v4628
      %4630 = vmatmul.bf16.gmra.mxu0 %v4545
      %v4631 = vpop.f32.mrf.mxu0
      %v4632 = vadd.f32 0.0, %v4631
      %v4633 = vpop.f32.mrf.mxu0
      %v4634 = vadd.f32 0.0, %v4633
      %4635 = vdwg.mxu0
      %v4636 = vadd.f32 %v4407, %v4557
      %v4637 = vadd.f32 %v4408, %v4559
      %v4638 = vadd.f32 %v4409, %v4562
      %v4639 = vadd.f32 %v4410, %v4564
      %v4640 = vadd.f32 %v4411, %v4567
      %v4641 = vadd.f32 %v4412, %v4569
      %v4642 = vadd.f32 %v4413, %v4572
      %v4643 = vadd.f32 %v4414, %v4574
      %v4644 = vadd.f32 %v4415, %v4577
      %v4645 = vadd.f32 %v4416, %v4579
      %v4646 = vadd.f32 %v4417, %v4582
      %v4647 = vadd.f32 %v4418, %v4584
      %v4648 = vadd.f32 %v4419, %v4587
      %v4649 = vadd.f32 %v4420, %v4589
      %v4650 = vadd.f32 %v4421, %v4592
      %v4651 = vadd.f32 %v4422, %v4594
      %v4652 = vadd.f32 %v4423, %v4597
      %v4653 = vadd.f32 %v4424, %v4599
      %v4654 = vadd.f32 %v4425, %v4602
      %v4655 = vadd.f32 %v4426, %v4604
      %v4656 = vadd.f32 %v4427, %v4607
      %v4657 = vadd.f32 %v4428, %v4609
      %v4658 = vadd.f32 %v4429, %v4612
      %v4659 = vadd.f32 %v4430, %v4614
      %v4660 = vadd.f32 %v4431, %v4617
      %v4661 = vadd.f32 %v4432, %v4619
      %v4662 = vadd.f32 %v4433, %v4622
      %v4663 = vadd.f32 %v4434, %v4624
      %v4664 = vadd.f32 %v4435, %v4627
      %v4665 = vadd.f32 %v4436, %v4629
      %v4666 = vadd.f32 %v4437, %v4632
      %v4667 = vadd.f32 %v4438, %v4634
      %v4668 = vld [vmem:[%s5] sm:$0x1]
      %v4670 = vperm.slane %v4668, 0
      %v4672 = vmul.f32 %v4636, %v4670
      %v4673 = vmul.f32 %v4637, %v4670
      %v4674 = vmul.f32 %v4638, %v4670
      %v4675 = vmul.f32 %v4639, %v4670
      %v4676 = vmul.f32 %v4640, %v4670
      %v4677 = vmul.f32 %v4641, %v4670
      %v4678 = vmul.f32 %v4642, %v4670
      %v4679 = vmul.f32 %v4643, %v4670
      %v4680 = vmul.f32 %v4644, %v4670
      %v4681 = vmul.f32 %v4645, %v4670
      %v4682 = vmul.f32 %v4646, %v4670
      %v4683 = vmul.f32 %v4647, %v4670
      %v4684 = vmul.f32 %v4648, %v4670
      %v4685 = vmul.f32 %v4649, %v4670
      %v4686 = vmul.f32 %v4650, %v4670
      %v4687 = vmul.f32 %v4651, %v4670
      %v4688 = vmul.f32 %v4652, %v4670
      %v4689 = vmul.f32 %v4653, %v4670
      %v4690 = vmul.f32 %v4654, %v4670
      %v4691 = vmul.f32 %v4655, %v4670
      %v4692 = vmul.f32 %v4656, %v4670
      %v4693 = vmul.f32 %v4657, %v4670
      %v4694 = vmul.f32 %v4658, %v4670
      %v4695 = vmul.f32 %v4659, %v4670
      %v4696 = vmul.f32 %v4660, %v4670
      %v4697 = vmul.f32 %v4661, %v4670
      %v4698 = vmul.f32 %v4662, %v4670
      %v4699 = vmul.f32 %v4663, %v4670
      %v4700 = vmul.f32 %v4664, %v4670
      %v4701 = vmul.f32 %v4665, %v4670
      %v4702 = vmul.f32 %v4666, %v4670
      %v4703 = vmul.f32 %v4667, %v4670
      %v4704 = vld [vmem:[%s6] sm:$0x1]
      %v4706 = vperm.slane %v4704, 0
      %v4708 = vadd.f32 %v4672, %v4706
      %v4709 = vadd.f32 %v4673, %v4706
      %v4710 = vadd.f32 %v4674, %v4706
      %v4711 = vadd.f32 %v4675, %v4706
      %v4712 = vadd.f32 %v4676, %v4706
      %v4713 = vadd.f32 %v4677, %v4706
      %v4714 = vadd.f32 %v4678, %v4706
      %v4715 = vadd.f32 %v4679, %v4706
      %v4716 = vadd.f32 %v4680, %v4706
      %v4717 = vadd.f32 %v4681, %v4706
      %v4718 = vadd.f32 %v4682, %v4706
      %v4719 = vadd.f32 %v4683, %v4706
      %v4720 = vadd.f32 %v4684, %v4706
      %v4721 = vadd.f32 %v4685, %v4706
      %v4722 = vadd.f32 %v4686, %v4706
      %v4723 = vadd.f32 %v4687, %v4706
      %v4724 = vadd.f32 %v4688, %v4706
      %v4725 = vadd.f32 %v4689, %v4706
      %v4726 = vadd.f32 %v4690, %v4706
      %v4727 = vadd.f32 %v4691, %v4706
      %v4728 = vadd.f32 %v4692, %v4706
      %v4729 = vadd.f32 %v4693, %v4706
      %v4730 = vadd.f32 %v4694, %v4706
      %v4731 = vadd.f32 %v4695, %v4706
      %v4732 = vadd.f32 %v4696, %v4706
      %v4733 = vadd.f32 %v4697, %v4706
      %v4734 = vadd.f32 %v4698, %v4706
      %v4735 = vadd.f32 %v4699, %v4706
      %v4736 = vadd.f32 %v4700, %v4706
      %v4737 = vadd.f32 %v4701, %v4706
      %v4738 = vadd.f32 %v4702, %v4706
      %v4739 = vadd.f32 %v4703, %v4706
      %4740 = vst.msk [vmem:[#allocation4] sm:$0xff] %vm2481, 0.0
      %4741 = vst.msk [vmem:[#allocation4 + $0x8] sm:$0xff] %vm2481, 0.0
      %4742 = vst.msk [vmem:[#allocation4 + $0x10] sm:$0x3] %vm2484, 0.0
      %4743 = vst.msk [vmem:[#allocation4 + $0x18] sm:$0xff] %vm2481, 0.0
      %4744 = vst.msk [vmem:[#allocation4 + $0x20] sm:$0xff] %vm2481, 0.0
      %4745 = vst.msk [vmem:[#allocation4 + $0x28] sm:$0x3] %vm2484, 0.0
      %4746 = vst.msk [vmem:[#allocation4 + $0x30] sm:$0xff] %vm2481, 0.0
      %4747 = vst.msk [vmem:[#allocation4 + $0x38] sm:$0xff] %vm2481, 0.0
      %4748 = vst.msk [vmem:[#allocation4 + $0x40] sm:$0x3] %vm2484, 0.0
      %4749 = vst.msk [vmem:[#allocation4 + $0x48] sm:$0xff] %vm2481, 0.0
      %4750 = vst.msk [vmem:[#allocation4 + $0x50] sm:$0xff] %vm2481, 0.0
      %4751 = vst.msk [vmem:[#allocation4 + $0x58] sm:$0x3] %vm2484, 0.0
      %4752 = vst.msk [vmem:[#allocation4 + $0x60] sm:$0xff] %vm2481, 0.0
      %4753 = vst.msk [vmem:[#allocation4 + $0x68] sm:$0xff] %vm2481, 0.0
      %4754 = vst.msk [vmem:[#allocation4 + $0x70] sm:$0x3] %vm2484, 0.0
      %4755 = vst.msk [vmem:[#allocation4 + $0x78] sm:$0xff] %vm2481, 0.0
      %4756 = vst.msk [vmem:[#allocation4 + $0x80] sm:$0xff] %vm2481, 0.0
      %4757 = vst.msk [vmem:[#allocation4 + $0x88] sm:$0x3] %vm2484, 0.0
      %4758 = vst.msk [vmem:[#allocation4 + $0x90] sm:$0xff] %vm2481, 0.0
      %4759 = vst.msk [vmem:[#allocation4 + $0x98] sm:$0xff] %vm2481, 0.0
      %4760 = vst.msk [vmem:[#allocation4 + $0xa0] sm:$0x3] %vm2484, 0.0
      %4761 = vst.msk [vmem:[#allocation4 + $0xa8] sm:$0xff] %vm2481, 0.0
      %4762 = vst.msk [vmem:[#allocation4 + $0xb0] sm:$0xff] %vm2481, 0.0
      %4763 = vst.msk [vmem:[#allocation4 + $0xb8] sm:$0x3] %vm2484, 0.0
      %4764 = vst.msk [vmem:[#allocation4 + $0xc0] sm:$0xff] %vm2481, 0.0
      %4765 = vst.msk [vmem:[#allocation4 + $0xc8] sm:$0xff] %vm2481, 0.0
      %4766 = vst.msk [vmem:[#allocation4 + $0xd0] sm:$0x3] %vm2484, 0.0
      %4767 = vst.msk [vmem:[#allocation4 + $0xd8] sm:$0xff] %vm2481, 0.0
      %4768 = vst.msk [vmem:[#allocation4 + $0xe0] sm:$0xff] %vm2481, 0.0
      %4769 = vst.msk [vmem:[#allocation4 + $0xe8] sm:$0x3] %vm2484, 0.0
      %4770 = vst.msk [vmem:[#allocation4 + $0xf0] sm:$0xff] %vm2481, 0.0
      %4771 = vst.msk [vmem:[#allocation4 + $0xf8] sm:$0xff] %vm2481, 0.0
      %4772 = vst.msk [vmem:[#allocation4 + $0x100] sm:$0x3] %vm2484, 0.0
      %4773 = vst.msk [vmem:[#allocation4 + $0x108] sm:$0xff] %vm2481, 0.0
      %4774 = vst.msk [vmem:[#allocation4 + $0x110] sm:$0xff] %vm2481, 0.0
      %4775 = vst.msk [vmem:[#allocation4 + $0x118] sm:$0x3] %vm2484, 0.0
      %4776 = vst.msk [vmem:[#allocation4 + $0x120] sm:$0xff] %vm2481, 0.0
      %4777 = vst.msk [vmem:[#allocation4 + $0x128] sm:$0xff] %vm2481, 0.0
      %4778 = vst.msk [vmem:[#allocation4 + $0x130] sm:$0x3] %vm2484, 0.0
      %4779 = vst.msk [vmem:[#allocation4 + $0x138] sm:$0xff] %vm2481, 0.0
      %4780 = vst.msk [vmem:[#allocation4 + $0x140] sm:$0xff] %vm2481, 0.0
      %4781 = vst.msk [vmem:[#allocation4 + $0x148] sm:$0x3] %vm2484, 0.0
      %4782 = vst.msk [vmem:[#allocation4 + $0x150] sm:$0xff] %vm2481, 0.0
      %4783 = vst.msk [vmem:[#allocation4 + $0x158] sm:$0xff] %vm2481, 0.0
      %4784 = vst.msk [vmem:[#allocation4 + $0x160] sm:$0x3] %vm2484, 0.0
      %4785 = vst.msk [vmem:[#allocation4 + $0x168] sm:$0xff] %vm2481, 0.0
      %4786 = vst.msk [vmem:[#allocation4 + $0x170] sm:$0xff] %vm2481, 0.0
      %4787 = vst.msk [vmem:[#allocation4 + $0x178] sm:$0x3] %vm2484, 0.0
      %4788 = vst.msk [vmem:[#allocation4 + $0x180] sm:$0xff] %vm2481, 0.0
      %4789 = vst.msk [vmem:[#allocation4 + $0x188] sm:$0xff] %vm2481, 0.0
      %4790 = vst.msk [vmem:[#allocation4 + $0x190] sm:$0x3] %vm2484, 0.0
      %4791 = vst.msk [vmem:[#allocation4 + $0x198] sm:$0xff] %vm2481, 0.0
      %4792 = vst.msk [vmem:[#allocation4 + $0x1a0] sm:$0xff] %vm2481, 0.0
      %4793 = vst.msk [vmem:[#allocation4 + $0x1a8] sm:$0x3] %vm2484, 0.0
      %v4794 = vmax.f32 %v4708, 0.0
      %v4795 = vmax.f32 %v4709, 0.0
      %v4796 = vmax.f32 %v4710, 0.0
      %v4797 = vmax.f32 %v4711, 0.0
      %v4798 = vmax.f32 %v4712, 0.0
      %v4799 = vmax.f32 %v4713, 0.0
      %v4800 = vmax.f32 %v4714, 0.0
      %v4801 = vmax.f32 %v4715, 0.0
      %v4802 = vmax.f32 %v4716, 0.0
      %v4803 = vmax.f32 %v4717, 0.0
      %v4804 = vmax.f32 %v4718, 0.0
      %v4805 = vmax.f32 %v4719, 0.0
      %v4806 = vmax.f32 %v4720, 0.0
      %v4807 = vmax.f32 %v4721, 0.0
      %v4808 = vmax.f32 %v4722, 0.0
      %v4809 = vmax.f32 %v4723, 0.0
      %v4810 = vmax.f32 %v4724, 0.0
      %v4811 = vmax.f32 %v4725, 0.0
      %v4812 = vmax.f32 %v4726, 0.0
      %v4813 = vmax.f32 %v4727, 0.0
      %v4814 = vmax.f32 %v4728, 0.0
      %v4815 = vmax.f32 %v4729, 0.0
      %v4816 = vmax.f32 %v4730, 0.0
      %v4817 = vmax.f32 %v4731, 0.0
      %v4818 = vmax.f32 %v4732, 0.0
      %v4819 = vmax.f32 %v4733, 0.0
      %v4820 = vmax.f32 %v4734, 0.0
      %v4821 = vmax.f32 %v4735, 0.0
      %v4822 = vmax.f32 %v4736, 0.0
      %v4823 = vmax.f32 %v4737, 0.0
      %v4824 = vmax.f32 %v4738, 0.0
      %v4825 = vmax.f32 %v4739, 0.0
      %v4826 = vmin.f32 %v4794, 6.0
      %v4827 = vmin.f32 %v4795, 6.0
      %v4828 = vmin.f32 %v4796, 6.0
      %v4829 = vmin.f32 %v4797, 6.0
      %v4830 = vmin.f32 %v4798, 6.0
      %v4831 = vmin.f32 %v4799, 6.0
      %v4832 = vmin.f32 %v4800, 6.0
      %v4833 = vmin.f32 %v4801, 6.0
      %v4834 = vmin.f32 %v4802, 6.0
      %v4835 = vmin.f32 %v4803, 6.0
      %v4836 = vmin.f32 %v4804, 6.0
      %v4837 = vmin.f32 %v4805, 6.0
      %v4838 = vmin.f32 %v4806, 6.0
      %v4839 = vmin.f32 %v4807, 6.0
      %v4840 = vmin.f32 %v4808, 6.0
      %v4841 = vmin.f32 %v4809, 6.0
      %v4842 = vmin.f32 %v4810, 6.0
      %v4843 = vmin.f32 %v4811, 6.0
      %v4844 = vmin.f32 %v4812, 6.0
      %v4845 = vmin.f32 %v4813, 6.0
      %v4846 = vmin.f32 %v4814, 6.0
      %v4847 = vmin.f32 %v4815, 6.0
      %v4848 = vmin.f32 %v4816, 6.0
      %v4849 = vmin.f32 %v4817, 6.0
      %v4850 = vmin.f32 %v4818, 6.0
      %v4851 = vmin.f32 %v4819, 6.0
      %v4852 = vmin.f32 %v4820, 6.0
      %v4853 = vmin.f32 %v4821, 6.0
      %v4854 = vmin.f32 %v4822, 6.0
      %v4855 = vmin.f32 %v4823, 6.0
      %v4856 = vmin.f32 %v4824, 6.0
      %v4857 = vmin.f32 %v4825, 6.0
      %s4858 = scalar_lea.vmem [#allocation4], 24
      %4859 = vst.msk [vmem:[%s4858 + $0x1] sm:$0xff] %vm2481, %v4826
      %4860 = vst.msk [vmem:[%s4858 + $0x9] sm:$0xff] %vm2481, %v4827
      %4861 = vst.msk [vmem:[%s4858 + $0x19] sm:$0xff] %vm2481, %v4828
      %4862 = vst.msk [vmem:[%s4858 + $0x21] sm:$0xff] %vm2481, %v4829
      %4863 = vst.msk [vmem:[%s4858 + $0x31] sm:$0xff] %vm2481, %v4830
      %4864 = vst.msk [vmem:[%s4858 + $0x39] sm:$0xff] %vm2481, %v4831
      %4865 = vst.msk [vmem:[%s4858 + $0x49] sm:$0xff] %vm2481, %v4832
      %4866 = vst.msk [vmem:[%s4858 + $0x51] sm:$0xff] %vm2481, %v4833
      %4867 = vst.msk [vmem:[%s4858 + $0x61] sm:$0xff] %vm2481, %v4834
      %4868 = vst.msk [vmem:[%s4858 + $0x69] sm:$0xff] %vm2481, %v4835
      %4869 = vst.msk [vmem:[%s4858 + $0x79] sm:$0xff] %vm2481, %v4836
      %4870 = vst.msk [vmem:[%s4858 + $0x81] sm:$0xff] %vm2481, %v4837
      %4871 = vst.msk [vmem:[%s4858 + $0x91] sm:$0xff] %vm2481, %v4838
      %4872 = vst.msk [vmem:[%s4858 + $0x99] sm:$0xff] %vm2481, %v4839
      %4873 = vst.msk [vmem:[%s4858 + $0xa9] sm:$0xff] %vm2481, %v4840
      %4874 = vst.msk [vmem:[%s4858 + $0xb1] sm:$0xff] %vm2481, %v4841
      %4875 = vst.msk [vmem:[%s4858 + $0xc1] sm:$0xff] %vm2481, %v4842
      %4876 = vst.msk [vmem:[%s4858 + $0xc9] sm:$0xff] %vm2481, %v4843
      %4877 = vst.msk [vmem:[%s4858 + $0xd9] sm:$0xff] %vm2481, %v4844
      %4878 = vst.msk [vmem:[%s4858 + $0xe1] sm:$0xff] %vm2481, %v4845
      %4879 = vst.msk [vmem:[%s4858 + $0xf1] sm:$0xff] %vm2481, %v4846
      %4880 = vst.msk [vmem:[%s4858 + $0xf9] sm:$0xff] %vm2481, %v4847
      %4881 = vst.msk [vmem:[%s4858 + $0x109] sm:$0xff] %vm2481, %v4848
      %4882 = vst.msk [vmem:[%s4858 + $0x111] sm:$0xff] %vm2481, %v4849
      %4883 = vst.msk [vmem:[%s4858 + $0x121] sm:$0xff] %vm2481, %v4850
      %4884 = vst.msk [vmem:[%s4858 + $0x129] sm:$0xff] %vm2481, %v4851
      %4885 = vst.msk [vmem:[%s4858 + $0x139] sm:$0xff] %vm2481, %v4852
      %4886 = vst.msk [vmem:[%s4858 + $0x141] sm:$0xff] %vm2481, %v4853
      %4887 = vst.msk [vmem:[%s4858 + $0x151] sm:$0xff] %vm2481, %v4854
      %4888 = vst.msk [vmem:[%s4858 + $0x159] sm:$0xff] %vm2481, %v4855
      %4889 = vst.msk [vmem:[%s4858 + $0x169] sm:$0xff] %vm2481, %v4856
      %4890 = vst.msk [vmem:[%s4858 + $0x171] sm:$0xff] %vm2481, %v4857
      %v4891 = vld [vmem:[%s7] sm:$0xf]
      %v4892 = vld [vmem:[%s7 + $0x4] sm:$0xf]
      %v4893 = vld [vmem:[%s7 + $0x8] sm:$0xf]
      %v4894 = vld [vmem:[%s7 + $0xc] sm:$0xf]
      %v4895 = vld [vmem:[%s7 + $0x10] sm:$0xf]
      %v4896 = vld [vmem:[%s7 + $0x14] sm:$0xf]
      %v4897 = vld [vmem:[%s7 + $0x18] sm:$0xf]
      %v4898 = vld [vmem:[%s7 + $0x1c] sm:$0xf]
      %v4899 = vld [vmem:[%s7 + $0x20] sm:$0xf]
      %v4900 = vld [vmem:[%s7 + $0x24] sm:$0xf]
      %v4901 = vld [vmem:[%s7 + $0x28] sm:$0xf]
      %v4902 = vld [vmem:[%s7 + $0x2c] sm:$0xf]
      %v4903 = vld [vmem:[%s7 + $0x30] sm:$0xf]
      %v4904 = vld [vmem:[%s7 + $0x34] sm:$0xf]
      %v4905 = vld [vmem:[%s7 + $0x38] sm:$0xf]
      %v4906 = vld [vmem:[%s7 + $0x3c] sm:$0xf]
      %v4907 = vld [vmem:[%s7 + $0x40] sm:$0xf]
      %v4908 = vld [vmem:[%s7 + $0x44] sm:$0xf]
      %v4909 = vld [vmem:[%s7 + $0x48] sm:$0xf]
      %v4910 = vld [vmem:[%s7 + $0x4c] sm:$0xf]
      %v4911 = vld [vmem:[%s7 + $0x50] sm:$0xf]
      %v4912 = vld [vmem:[%s7 + $0x54] sm:$0xf]
      %v4913 = vld [vmem:[%s7 + $0x58] sm:$0xf]
      %v4914 = vld [vmem:[%s7 + $0x5c] sm:$0xf]
      %v4915 = vld [vmem:[%s7 + $0x60] sm:$0xf]
      %v4916 = vld [vmem:[%s7 + $0x64] sm:$0xf]
      %v4917 = vld [vmem:[%s7 + $0x68] sm:$0xf]
      %v4918 = vld [vmem:[%s7 + $0x6c] sm:$0xf]
      %v4919 = vld [vmem:[%s7 + $0x70] sm:$0xf]
      %v4920 = vld [vmem:[%s7 + $0x74] sm:$0xf]
      %v4921 = vld [vmem:[%s7 + $0x78] sm:$0xf]
      %v4922 = vld [vmem:[%s7 + $0x7c] sm:$0xf]
      %v4923 = vld [vmem:[%s7 + $0x80] sm:$0xf]
      %v4924 = vld [vmem:[%s7 + $0x84] sm:$0xf]
      %v4925 = vld [vmem:[%s7 + $0x88] sm:$0xf]
      %v4926 = vld [vmem:[%s7 + $0x8c] sm:$0xf]
      %v4927 = vld [vmem:[#allocation4] sm:$0xff]
      %v4928 = vld [vmem:[#allocation4 + $0x8] sm:$0xff]
      %v4929 = vld [vmem:[#allocation4 + $0x18] sm:$0xff]
      %v4930 = vld [vmem:[#allocation4 + $0x20] sm:$0xff]
      %v4931 = vld [vmem:[#allocation4 + $0x30] sm:$0xff]
      %v4932 = vld [vmem:[#allocation4 + $0x38] sm:$0xff]
      %v4933 = vld [vmem:[#allocation4 + $0x48] sm:$0xff]
      %v4934 = vld [vmem:[#allocation4 + $0x50] sm:$0xff]
      %v4935 = vld [vmem:[#allocation4 + $0x60] sm:$0xff]
      %v4936 = vld [vmem:[#allocation4 + $0x68] sm:$0xff]
      %v4937 = vld [vmem:[#allocation4 + $0x78] sm:$0xff]
      %v4938 = vld [vmem:[#allocation4 + $0x80] sm:$0xff]
      %v4939 = vld [vmem:[#allocation4 + $0x90] sm:$0xff]
      %v4940 = vld [vmem:[#allocation4 + $0x98] sm:$0xff]
      %v4941 = vld [vmem:[#allocation4 + $0xa8] sm:$0xff]
      %v4942 = vld [vmem:[#allocation4 + $0xb0] sm:$0xff]
      %v4943 = vld [vmem:[#allocation4 + $0xc0] sm:$0xff]
      %v4944 = vld [vmem:[#allocation4 + $0xc8] sm:$0xff]
      %v4945 = vld [vmem:[#allocation4 + $0xd8] sm:$0xff]
      %v4946 = vld [vmem:[#allocation4 + $0xe0] sm:$0xff]
      %v4947 = vld [vmem:[#allocation4 + $0xf0] sm:$0xff]
      %v4948 = vld [vmem:[#allocation4 + $0xf8] sm:$0xff]
      %v4949 = vld [vmem:[#allocation4 + $0x108] sm:$0xff]
      %v4950 = vld [vmem:[#allocation4 + $0x110] sm:$0xff]
      %v4951 = vld [vmem:[#allocation4 + $0x120] sm:$0xff]
      %v4952 = vld [vmem:[#allocation4 + $0x128] sm:$0xff]
      %v4953 = vld [vmem:[#allocation4 + $0x138] sm:$0xff]
      %v4954 = vld [vmem:[#allocation4 + $0x140] sm:$0xff]
      %v4955 = vld [vmem:[#allocation4 + $0x150] sm:$0xff]
      %v4956 = vld [vmem:[#allocation4 + $0x158] sm:$0xff]
      %v4957 = vld [vmem:[#allocation4 + $0x168] sm:$0xff]
      %v4958 = vld [vmem:[#allocation4 + $0x170] sm:$0xff]
      %v4959 = vpack.c.bf16 %v4928, %v4927
      %v4960 = vpack.c.bf16 %v4930, %v4929
      %v4961 = vpack.c.bf16 %v4932, %v4931
      %v4962 = vpack.c.bf16 %v4934, %v4933
      %v4963 = vpack.c.bf16 %v4936, %v4935
      %v4964 = vpack.c.bf16 %v4938, %v4937
      %v4965 = vpack.c.bf16 %v4940, %v4939
      %v4966 = vpack.c.bf16 %v4942, %v4941
      %v4967 = vpack.c.bf16 %v4944, %v4943
      %v4968 = vpack.c.bf16 %v4946, %v4945
      %v4969 = vpack.c.bf16 %v4948, %v4947
      %v4970 = vpack.c.bf16 %v4950, %v4949
      %v4971 = vpack.c.bf16 %v4952, %v4951
      %v4972 = vpack.c.bf16 %v4954, %v4953
      %v4973 = vpack.c.bf16 %v4956, %v4955
      %v4974 = vpack.c.bf16 %v4958, %v4957
      %v4975 = vld [vmem:[#allocation4 + $0x1] sm:$0xff]
      %v4976 = vld [vmem:[#allocation4 + $0x9] sm:$0xff]
      %v4977 = vld [vmem:[#allocation4 + $0x19] sm:$0xff]
      %v4978 = vld [vmem:[#allocation4 + $0x21] sm:$0xff]
      %v4979 = vld [vmem:[#allocation4 + $0x31] sm:$0xff]
      %v4980 = vld [vmem:[#allocation4 + $0x39] sm:$0xff]
      %v4981 = vld [vmem:[#allocation4 + $0x49] sm:$0xff]
      %v4982 = vld [vmem:[#allocation4 + $0x51] sm:$0xff]
      %v4983 = vld [vmem:[#allocation4 + $0x61] sm:$0xff]
      %v4984 = vld [vmem:[#allocation4 + $0x69] sm:$0xff]
      %v4985 = vld [vmem:[#allocation4 + $0x79] sm:$0xff]
      %v4986 = vld [vmem:[#allocation4 + $0x81] sm:$0xff]
      %v4987 = vld [vmem:[#allocation4 + $0x91] sm:$0xff]
      %v4988 = vld [vmem:[#allocation4 + $0x99] sm:$0xff]
      %v4989 = vld [vmem:[#allocation4 + $0xa9] sm:$0xff]
      %v4990 = vld [vmem:[#allocation4 + $0xb1] sm:$0xff]
      %v4991 = vld [vmem:[#allocation4 + $0xc1] sm:$0xff]
      %v4992 = vld [vmem:[#allocation4 + $0xc9] sm:$0xff]
      %v4993 = vld [vmem:[#allocation4 + $0xd9] sm:$0xff]
      %v4994 = vld [vmem:[#allocation4 + $0xe1] sm:$0xff]
      %v4995 = vld [vmem:[#allocation4 + $0xf1] sm:$0xff]
      %v4996 = vld [vmem:[#allocation4 + $0xf9] sm:$0xff]
      %v4997 = vld [vmem:[#allocation4 + $0x109] sm:$0xff]
      %v4998 = vld [vmem:[#allocation4 + $0x111] sm:$0xff]
      %v4999 = vld [vmem:[#allocation4 + $0x121] sm:$0xff]
      %v5000 = vld [vmem:[#allocation4 + $0x129] sm:$0xff]
      %v5001 = vld [vmem:[#allocation4 + $0x139] sm:$0xff]
      %v5002 = vld [vmem:[#allocation4 + $0x141] sm:$0xff]
      %v5003 = vld [vmem:[#allocation4 + $0x151] sm:$0xff]
      %v5004 = vld [vmem:[#allocation4 + $0x159] sm:$0xff]
      %v5005 = vld [vmem:[#allocation4 + $0x169] sm:$0xff]
      %v5006 = vld [vmem:[#allocation4 + $0x171] sm:$0xff]
      %v5007 = vpack.c.bf16 %v4976, %v4975
      %v5008 = vpack.c.bf16 %v4978, %v4977
      %v5009 = vpack.c.bf16 %v4980, %v4979
      %v5010 = vpack.c.bf16 %v4982, %v4981
      %v5011 = vpack.c.bf16 %v4984, %v4983
      %v5012 = vpack.c.bf16 %v4986, %v4985
      %v5013 = vpack.c.bf16 %v4988, %v4987
      %v5014 = vpack.c.bf16 %v4990, %v4989
      %v5015 = vpack.c.bf16 %v4992, %v4991
      %v5016 = vpack.c.bf16 %v4994, %v4993
      %v5017 = vpack.c.bf16 %v4996, %v4995
      %v5018 = vpack.c.bf16 %v4998, %v4997
      %v5019 = vpack.c.bf16 %v5000, %v4999
      %v5020 = vpack.c.bf16 %v5002, %v5001
      %v5021 = vpack.c.bf16 %v5004, %v5003
      %v5022 = vpack.c.bf16 %v5006, %v5005
      %v5027 = vunpack.c.l.b16 %v4895
      %v5028 = vunpack.c.l.b16 %v4896
      %v5029 = vunpack.c.l.b16 %v4897
      %v5030 = vunpack.c.l.b16 %v4898
      %v5031 = vpack.c.b16 %v5028, %v5027
      %v5032 = vpack.c.b16 %v5030, %v5029
      %v5036 = vsel %vm2481, %v5007, 0
      %v5039 = vsel %vm2481, %v5008, 0
      %v5042 = vsel %vm2481, %v5009, 0
      %v5045 = vsel %vm2481, %v5010, 0
      %v5048 = vsel %vm2481, %v5011, 0
      %v5051 = vsel %vm2481, %v5012, 0
      %v5054 = vsel %vm2481, %v5013, 0
      %v5057 = vsel %vm2481, %v5014, 0
      %v5060 = vsel %vm2481, %v5015, 0
      %v5063 = vsel %vm2481, %v5016, 0
      %v5066 = vsel %vm2481, %v5017, 0
      %v5069 = vsel %vm2481, %v5018, 0
      %v5072 = vsel %vm2481, %v5019, 0
      %v5075 = vsel %vm2481, %v5020, 0
      %v5078 = vsel %vm2481, %v5021, 0
      %v5081 = vsel %vm2481, %v5022, 0
      %5083 = vmatpush.bf16.msra.mxu0 0
      %5084 = vmatpush.bf16.msra.mxu0 0
      %5085 = vmatpush.bf16.msra.mxu0 0
      %5086 = vmatpush.bf16.msra.mxu0 0
      %5087 = vmatpush.bf16.msra.mxu0 0
      %5088 = vmatpush.bf16.msra.mxu0 0
      %5089 = vmatpush.bf16.msra.mxu0 %v5032
      %5090 = vmatpush.bf16.msra.mxu0 %v5031
      %5091 = vmatmul.bf16.gmra.mxu0 %v5036
      %v5092 = vpop.f32.mrf.mxu0
      %v5093 = vadd.f32 0.0, %v5092
      %v5094 = vpop.f32.mrf.mxu0
      %v5095 = vadd.f32 0.0, %v5094
      %5096 = vmatmul.bf16.gmra.mxu0 %v5039
      %v5097 = vpop.f32.mrf.mxu0
      %v5098 = vadd.f32 0.0, %v5097
      %v5099 = vpop.f32.mrf.mxu0
      %v5100 = vadd.f32 0.0, %v5099
      %5101 = vmatmul.bf16.gmra.mxu0 %v5042
      %v5102 = vpop.f32.mrf.mxu0
      %v5103 = vadd.f32 0.0, %v5102
      %v5104 = vpop.f32.mrf.mxu0
      %v5105 = vadd.f32 0.0, %v5104
      %5106 = vmatmul.bf16.gmra.mxu0 %v5045
      %v5107 = vpop.f32.mrf.mxu0
      %v5108 = vadd.f32 0.0, %v5107
      %v5109 = vpop.f32.mrf.mxu0
      %v5110 = vadd.f32 0.0, %v5109
      %5111 = vmatmul.bf16.gmra.mxu0 %v5048
      %v5112 = vpop.f32.mrf.mxu0
      %v5113 = vadd.f32 0.0, %v5112
      %v5114 = vpop.f32.mrf.mxu0
      %v5115 = vadd.f32 0.0, %v5114
      %5116 = vmatmul.bf16.gmra.mxu0 %v5051
      %v5117 = vpop.f32.mrf.mxu0
      %v5118 = vadd.f32 0.0, %v5117
      %v5119 = vpop.f32.mrf.mxu0
      %v5120 = vadd.f32 0.0, %v5119
      %5121 = vmatmul.bf16.gmra.mxu0 %v5054
      %v5122 = vpop.f32.mrf.mxu0
      %v5123 = vadd.f32 0.0, %v5122
      %v5124 = vpop.f32.mrf.mxu0
      %v5125 = vadd.f32 0.0, %v5124
      %5126 = vmatmul.bf16.gmra.mxu0 %v5057
      %v5127 = vpop.f32.mrf.mxu0
      %v5128 = vadd.f32 0.0, %v5127
      %v5129 = vpop.f32.mrf.mxu0
      %v5130 = vadd.f32 0.0, %v5129
      %5131 = vmatmul.bf16.gmra.mxu0 %v5060
      %v5132 = vpop.f32.mrf.mxu0
      %v5133 = vadd.f32 0.0, %v5132
      %v5134 = vpop.f32.mrf.mxu0
      %v5135 = vadd.f32 0.0, %v5134
      %5136 = vmatmul.bf16.gmra.mxu0 %v5063
      %v5137 = vpop.f32.mrf.mxu0
      %v5138 = vadd.f32 0.0, %v5137
      %v5139 = vpop.f32.mrf.mxu0
      %v5140 = vadd.f32 0.0, %v5139
      %5141 = vmatmul.bf16.gmra.mxu0 %v5066
      %v5142 = vpop.f32.mrf.mxu0
      %v5143 = vadd.f32 0.0, %v5142
      %v5144 = vpop.f32.mrf.mxu0
      %v5145 = vadd.f32 0.0, %v5144
      %5146 = vmatmul.bf16.gmra.mxu0 %v5069
      %v5147 = vpop.f32.mrf.mxu0
      %v5148 = vadd.f32 0.0, %v5147
      %v5149 = vpop.f32.mrf.mxu0
      %v5150 = vadd.f32 0.0, %v5149
      %5151 = vmatmul.bf16.gmra.mxu0 %v5072
      %v5152 = vpop.f32.mrf.mxu0
      %v5153 = vadd.f32 0.0, %v5152
      %v5154 = vpop.f32.mrf.mxu0
      %v5155 = vadd.f32 0.0, %v5154
      %5156 = vmatmul.bf16.gmra.mxu0 %v5075
      %v5157 = vpop.f32.mrf.mxu0
      %v5158 = vadd.f32 0.0, %v5157
      %v5159 = vpop.f32.mrf.mxu0
      %v5160 = vadd.f32 0.0, %v5159
      %5161 = vmatmul.bf16.gmra.mxu0 %v5078
      %v5162 = vpop.f32.mrf.mxu0
      %v5163 = vadd.f32 0.0, %v5162
      %v5164 = vpop.f32.mrf.mxu0
      %v5165 = vadd.f32 0.0, %v5164
      %5166 = vmatmul.bf16.gmra.mxu0 %v5081
      %v5167 = vpop.f32.mrf.mxu0
      %v5168 = vadd.f32 0.0, %v5167
      %v5169 = vpop.f32.mrf.mxu0
      %v5170 = vadd.f32 0.0, %v5169
      %5171 = vdwg.mxu0
      %v5176 = vunpack.c.l.b16 %v4891
      %v5177 = vunpack.c.l.b16 %v4892
      %v5178 = vunpack.c.l.b16 %v4893
      %v5179 = vunpack.c.l.b16 %v4894
      %v5180 = vpack.c.b16 %v5177, %v5176
      %v5181 = vpack.c.b16 %v5179, %v5178
      %v5185 = vsel %vm2481, %v4959, 0
      %v5188 = vsel %vm2481, %v4960, 0
      %v5191 = vsel %vm2481, %v4961, 0
      %v5194 = vsel %vm2481, %v4962, 0
      %v5197 = vsel %vm2481, %v4963, 0
      %v5200 = vsel %vm2481, %v4964, 0
      %v5203 = vsel %vm2481, %v4965, 0
      %v5206 = vsel %vm2481, %v4966, 0
      %v5209 = vsel %vm2481, %v4967, 0
      %v5212 = vsel %vm2481, %v4968, 0
      %v5215 = vsel %vm2481, %v4969, 0
      %v5218 = vsel %vm2481, %v4970, 0
      %v5221 = vsel %vm2481, %v4971, 0
      %v5224 = vsel %vm2481, %v4972, 0
      %v5227 = vsel %vm2481, %v4973, 0
      %v5230 = vsel %vm2481, %v4974, 0
      %5232 = vmatpush.bf16.msra.mxu0 0
      %5233 = vmatpush.bf16.msra.mxu0 0
      %5234 = vmatpush.bf16.msra.mxu0 0
      %5235 = vmatpush.bf16.msra.mxu0 0
      %5236 = vmatpush.bf16.msra.mxu0 0
      %5237 = vmatpush.bf16.msra.mxu0 0
      %5238 = vmatpush.bf16.msra.mxu0 %v5181
      %5239 = vmatpush.bf16.msra.mxu0 %v5180
      %5240 = vmatmul.bf16.gmra.mxu0 %v5185
      %v5241 = vpop.f32.mrf.mxu0
      %v5242 = vadd.f32 %v5093, %v5241
      %v5243 = vpop.f32.mrf.mxu0
      %v5244 = vadd.f32 %v5095, %v5243
      %5245 = vmatmul.bf16.gmra.mxu0 %v5188
      %v5246 = vpop.f32.mrf.mxu0
      %v5247 = vadd.f32 %v5098, %v5246
      %v5248 = vpop.f32.mrf.mxu0
      %v5249 = vadd.f32 %v5100, %v5248
      %5250 = vmatmul.bf16.gmra.mxu0 %v5191
      %v5251 = vpop.f32.mrf.mxu0
      %v5252 = vadd.f32 %v5103, %v5251
      %v5253 = vpop.f32.mrf.mxu0
      %v5254 = vadd.f32 %v5105, %v5253
      %5255 = vmatmul.bf16.gmra.mxu0 %v5194
      %v5256 = vpop.f32.mrf.mxu0
      %v5257 = vadd.f32 %v5108, %v5256
      %v5258 = vpop.f32.mrf.mxu0
      %v5259 = vadd.f32 %v5110, %v5258
      %5260 = vmatmul.bf16.gmra.mxu0 %v5197
      %v5261 = vpop.f32.mrf.mxu0
      %v5262 = vadd.f32 %v5113, %v5261
      %v5263 = vpop.f32.mrf.mxu0
      %v5264 = vadd.f32 %v5115, %v5263
      %5265 = vmatmul.bf16.gmra.mxu0 %v5200
      %v5266 = vpop.f32.mrf.mxu0
      %v5267 = vadd.f32 %v5118, %v5266
      %v5268 = vpop.f32.mrf.mxu0
      %v5269 = vadd.f32 %v5120, %v5268
      %5270 = vmatmul.bf16.gmra.mxu0 %v5203
      %v5271 = vpop.f32.mrf.mxu0
      %v5272 = vadd.f32 %v5123, %v5271
      %v5273 = vpop.f32.mrf.mxu0
      %v5274 = vadd.f32 %v5125, %v5273
      %5275 = vmatmul.bf16.gmra.mxu0 %v5206
      %v5276 = vpop.f32.mrf.mxu0
      %v5277 = vadd.f32 %v5128, %v5276
      %v5278 = vpop.f32.mrf.mxu0
      %v5279 = vadd.f32 %v5130, %v5278
      %5280 = vmatmul.bf16.gmra.mxu0 %v5209
      %v5281 = vpop.f32.mrf.mxu0
      %v5282 = vadd.f32 %v5133, %v5281
      %v5283 = vpop.f32.mrf.mxu0
      %v5284 = vadd.f32 %v5135, %v5283
      %5285 = vmatmul.bf16.gmra.mxu0 %v5212
      %v5286 = vpop.f32.mrf.mxu0
      %v5287 = vadd.f32 %v5138, %v5286
      %v5288 = vpop.f32.mrf.mxu0
      %v5289 = vadd.f32 %v5140, %v5288
      %5290 = vmatmul.bf16.gmra.mxu0 %v5215
      %v5291 = vpop.f32.mrf.mxu0
      %v5292 = vadd.f32 %v5143, %v5291
      %v5293 = vpop.f32.mrf.mxu0
      %v5294 = vadd.f32 %v5145, %v5293
      %5295 = vmatmul.bf16.gmra.mxu0 %v5218
      %v5296 = vpop.f32.mrf.mxu0
      %v5297 = vadd.f32 %v5148, %v5296
      %v5298 = vpop.f32.mrf.mxu0
      %v5299 = vadd.f32 %v5150, %v5298
      %5300 = vmatmul.bf16.gmra.mxu0 %v5221
      %v5301 = vpop.f32.mrf.mxu0
      %v5302 = vadd.f32 %v5153, %v5301
      %v5303 = vpop.f32.mrf.mxu0
      %v5304 = vadd.f32 %v5155, %v5303
      %5305 = vmatmul.bf16.gmra.mxu0 %v5224
      %v5306 = vpop.f32.mrf.mxu0
      %v5307 = vadd.f32 %v5158, %v5306
      %v5308 = vpop.f32.mrf.mxu0
      %v5309 = vadd.f32 %v5160, %v5308
      %5310 = vmatmul.bf16.gmra.mxu0 %v5227
      %v5311 = vpop.f32.mrf.mxu0
      %v5312 = vadd.f32 %v5163, %v5311
      %v5313 = vpop.f32.mrf.mxu0
      %v5314 = vadd.f32 %v5165, %v5313
      %5315 = vmatmul.bf16.gmra.mxu0 %v5230
      %v5316 = vpop.f32.mrf.mxu0
      %v5317 = vadd.f32 %v5168, %v5316
      %v5318 = vpop.f32.mrf.mxu0
      %v5319 = vadd.f32 %v5170, %v5318
      %5320 = vdwg.mxu0
      %v5321 = vld [vmem:[#allocation4 + $0x2] sm:$0xff]
      %v5322 = vld [vmem:[#allocation4 + $0xa] sm:$0xff]
      %v5323 = vld [vmem:[#allocation4 + $0x1a] sm:$0xff]
      %v5324 = vld [vmem:[#allocation4 + $0x22] sm:$0xff]
      %v5325 = vld [vmem:[#allocation4 + $0x32] sm:$0xff]
      %v5326 = vld [vmem:[#allocation4 + $0x3a] sm:$0xff]
      %v5327 = vld [vmem:[#allocation4 + $0x4a] sm:$0xff]
      %v5328 = vld [vmem:[#allocation4 + $0x52] sm:$0xff]
      %v5329 = vld [vmem:[#allocation4 + $0x62] sm:$0xff]
      %v5330 = vld [vmem:[#allocation4 + $0x6a] sm:$0xff]
      %v5331 = vld [vmem:[#allocation4 + $0x7a] sm:$0xff]
      %v5332 = vld [vmem:[#allocation4 + $0x82] sm:$0xff]
      %v5333 = vld [vmem:[#allocation4 + $0x92] sm:$0xff]
      %v5334 = vld [vmem:[#allocation4 + $0x9a] sm:$0xff]
      %v5335 = vld [vmem:[#allocation4 + $0xaa] sm:$0xff]
      %v5336 = vld [vmem:[#allocation4 + $0xb2] sm:$0xff]
      %v5337 = vld [vmem:[#allocation4 + $0xc2] sm:$0xff]
      %v5338 = vld [vmem:[#allocation4 + $0xca] sm:$0xff]
      %v5339 = vld [vmem:[#allocation4 + $0xda] sm:$0xff]
      %v5340 = vld [vmem:[#allocation4 + $0xe2] sm:$0xff]
      %v5341 = vld [vmem:[#allocation4 + $0xf2] sm:$0xff]
      %v5342 = vld [vmem:[#allocation4 + $0xfa] sm:$0xff]
      %v5343 = vld [vmem:[#allocation4 + $0x10a] sm:$0xff]
      %v5344 = vld [vmem:[#allocation4 + $0x112] sm:$0xff]
      %v5345 = vld [vmem:[#allocation4 + $0x122] sm:$0xff]
      %v5346 = vld [vmem:[#allocation4 + $0x12a] sm:$0xff]
      %v5347 = vld [vmem:[#allocation4 + $0x13a] sm:$0xff]
      %v5348 = vld [vmem:[#allocation4 + $0x142] sm:$0xff]
      %v5349 = vld [vmem:[#allocation4 + $0x152] sm:$0xff]
      %v5350 = vld [vmem:[#allocation4 + $0x15a] sm:$0xff]
      %v5351 = vld [vmem:[#allocation4 + $0x16a] sm:$0xff]
      %v5352 = vld [vmem:[#allocation4 + $0x172] sm:$0xff]
      %v5353 = vpack.c.bf16 %v5322, %v5321
      %v5354 = vpack.c.bf16 %v5324, %v5323
      %v5355 = vpack.c.bf16 %v5326, %v5325
      %v5356 = vpack.c.bf16 %v5328, %v5327
      %v5357 = vpack.c.bf16 %v5330, %v5329
      %v5358 = vpack.c.bf16 %v5332, %v5331
      %v5359 = vpack.c.bf16 %v5334, %v5333
      %v5360 = vpack.c.bf16 %v5336, %v5335
      %v5361 = vpack.c.bf16 %v5338, %v5337
      %v5362 = vpack.c.bf16 %v5340, %v5339
      %v5363 = vpack.c.bf16 %v5342, %v5341
      %v5364 = vpack.c.bf16 %v5344, %v5343
      %v5365 = vpack.c.bf16 %v5346, %v5345
      %v5366 = vpack.c.bf16 %v5348, %v5347
      %v5367 = vpack.c.bf16 %v5350, %v5349
      %v5368 = vpack.c.bf16 %v5352, %v5351
      %v5373 = vunpack.c.l.b16 %v4899
      %v5374 = vunpack.c.l.b16 %v4900
      %v5375 = vunpack.c.l.b16 %v4901
      %v5376 = vunpack.c.l.b16 %v4902
      %v5377 = vpack.c.b16 %v5374, %v5373
      %v5378 = vpack.c.b16 %v5376, %v5375
      %v5382 = vsel %vm2481, %v5353, 0
      %v5385 = vsel %vm2481, %v5354, 0
      %v5388 = vsel %vm2481, %v5355, 0
      %v5391 = vsel %vm2481, %v5356, 0
      %v5394 = vsel %vm2481, %v5357, 0
      %v5397 = vsel %vm2481, %v5358, 0
      %v5400 = vsel %vm2481, %v5359, 0
      %v5403 = vsel %vm2481, %v5360, 0
      %v5406 = vsel %vm2481, %v5361, 0
      %v5409 = vsel %vm2481, %v5362, 0
      %v5412 = vsel %vm2481, %v5363, 0
      %v5415 = vsel %vm2481, %v5364, 0
      %v5418 = vsel %vm2481, %v5365, 0
      %v5421 = vsel %vm2481, %v5366, 0
      %v5424 = vsel %vm2481, %v5367, 0
      %v5427 = vsel %vm2481, %v5368, 0
      %5429 = vmatpush.bf16.msra.mxu0 0
      %5430 = vmatpush.bf16.msra.mxu0 0
      %5431 = vmatpush.bf16.msra.mxu0 0
      %5432 = vmatpush.bf16.msra.mxu0 0
      %5433 = vmatpush.bf16.msra.mxu0 0
      %5434 = vmatpush.bf16.msra.mxu0 0
      %5435 = vmatpush.bf16.msra.mxu0 %v5378
      %5436 = vmatpush.bf16.msra.mxu0 %v5377
      %5437 = vmatmul.bf16.gmra.mxu0 %v5382
      %v5438 = vpop.f32.mrf.mxu0
      %v5439 = vadd.f32 0.0, %v5438
      %v5440 = vpop.f32.mrf.mxu0
      %v5441 = vadd.f32 0.0, %v5440
      %5442 = vmatmul.bf16.gmra.mxu0 %v5385
      %v5443 = vpop.f32.mrf.mxu0
      %v5444 = vadd.f32 0.0, %v5443
      %v5445 = vpop.f32.mrf.mxu0
      %v5446 = vadd.f32 0.0, %v5445
      %5447 = vmatmul.bf16.gmra.mxu0 %v5388
      %v5448 = vpop.f32.mrf.mxu0
      %v5449 = vadd.f32 0.0, %v5448
      %v5450 = vpop.f32.mrf.mxu0
      %v5451 = vadd.f32 0.0, %v5450
      %5452 = vmatmul.bf16.gmra.mxu0 %v5391
      %v5453 = vpop.f32.mrf.mxu0
      %v5454 = vadd.f32 0.0, %v5453
      %v5455 = vpop.f32.mrf.mxu0
      %v5456 = vadd.f32 0.0, %v5455
      %5457 = vmatmul.bf16.gmra.mxu0 %v5394
      %v5458 = vpop.f32.mrf.mxu0
      %v5459 = vadd.f32 0.0, %v5458
      %v5460 = vpop.f32.mrf.mxu0
      %v5461 = vadd.f32 0.0, %v5460
      %5462 = vmatmul.bf16.gmra.mxu0 %v5397
      %v5463 = vpop.f32.mrf.mxu0
      %v5464 = vadd.f32 0.0, %v5463
      %v5465 = vpop.f32.mrf.mxu0
      %v5466 = vadd.f32 0.0, %v5465
      %5467 = vmatmul.bf16.gmra.mxu0 %v5400
      %v5468 = vpop.f32.mrf.mxu0
      %v5469 = vadd.f32 0.0, %v5468
      %v5470 = vpop.f32.mrf.mxu0
      %v5471 = vadd.f32 0.0, %v5470
      %5472 = vmatmul.bf16.gmra.mxu0 %v5403
      %v5473 = vpop.f32.mrf.mxu0
      %v5474 = vadd.f32 0.0, %v5473
      %v5475 = vpop.f32.mrf.mxu0
      %v5476 = vadd.f32 0.0, %v5475
      %5477 = vmatmul.bf16.gmra.mxu0 %v5406
      %v5478 = vpop.f32.mrf.mxu0
      %v5479 = vadd.f32 0.0, %v5478
      %v5480 = vpop.f32.mrf.mxu0
      %v5481 = vadd.f32 0.0, %v5480
      %5482 = vmatmul.bf16.gmra.mxu0 %v5409
      %v5483 = vpop.f32.mrf.mxu0
      %v5484 = vadd.f32 0.0, %v5483
      %v5485 = vpop.f32.mrf.mxu0
      %v5486 = vadd.f32 0.0, %v5485
      %5487 = vmatmul.bf16.gmra.mxu0 %v5412
      %v5488 = vpop.f32.mrf.mxu0
      %v5489 = vadd.f32 0.0, %v5488
      %v5490 = vpop.f32.mrf.mxu0
      %v5491 = vadd.f32 0.0, %v5490
      %5492 = vmatmul.bf16.gmra.mxu0 %v5415
      %v5493 = vpop.f32.mrf.mxu0
      %v5494 = vadd.f32 0.0, %v5493
      %v5495 = vpop.f32.mrf.mxu0
      %v5496 = vadd.f32 0.0, %v5495
      %5497 = vmatmul.bf16.gmra.mxu0 %v5418
      %v5498 = vpop.f32.mrf.mxu0
      %v5499 = vadd.f32 0.0, %v5498
      %v5500 = vpop.f32.mrf.mxu0
      %v5501 = vadd.f32 0.0, %v5500
      %5502 = vmatmul.bf16.gmra.mxu0 %v5421
      %v5503 = vpop.f32.mrf.mxu0
      %v5504 = vadd.f32 0.0, %v5503
      %v5505 = vpop.f32.mrf.mxu0
      %v5506 = vadd.f32 0.0, %v5505
      %5507 = vmatmul.bf16.gmra.mxu0 %v5424
      %v5508 = vpop.f32.mrf.mxu0
      %v5509 = vadd.f32 0.0, %v5508
      %v5510 = vpop.f32.mrf.mxu0
      %v5511 = vadd.f32 0.0, %v5510
      %5512 = vmatmul.bf16.gmra.mxu0 %v5427
      %v5513 = vpop.f32.mrf.mxu0
      %v5514 = vadd.f32 0.0, %v5513
      %v5515 = vpop.f32.mrf.mxu0
      %v5516 = vadd.f32 0.0, %v5515
      %5517 = vdwg.mxu0
      %v5518 = vadd.f32 %v5242, %v5439
      %v5519 = vadd.f32 %v5244, %v5441
      %v5520 = vadd.f32 %v5247, %v5444
      %v5521 = vadd.f32 %v5249, %v5446
      %v5522 = vadd.f32 %v5252, %v5449
      %v5523 = vadd.f32 %v5254, %v5451
      %v5524 = vadd.f32 %v5257, %v5454
      %v5525 = vadd.f32 %v5259, %v5456
      %v5526 = vadd.f32 %v5262, %v5459
      %v5527 = vadd.f32 %v5264, %v5461
      %v5528 = vadd.f32 %v5267, %v5464
      %v5529 = vadd.f32 %v5269, %v5466
      %v5530 = vadd.f32 %v5272, %v5469
      %v5531 = vadd.f32 %v5274, %v5471
      %v5532 = vadd.f32 %v5277, %v5474
      %v5533 = vadd.f32 %v5279, %v5476
      %v5534 = vadd.f32 %v5282, %v5479
      %v5535 = vadd.f32 %v5284, %v5481
      %v5536 = vadd.f32 %v5287, %v5484
      %v5537 = vadd.f32 %v5289, %v5486
      %v5538 = vadd.f32 %v5292, %v5489
      %v5539 = vadd.f32 %v5294, %v5491
      %v5540 = vadd.f32 %v5297, %v5494
      %v5541 = vadd.f32 %v5299, %v5496
      %v5542 = vadd.f32 %v5302, %v5499
      %v5543 = vadd.f32 %v5304, %v5501
      %v5544 = vadd.f32 %v5307, %v5504
      %v5545 = vadd.f32 %v5309, %v5506
      %v5546 = vadd.f32 %v5312, %v5509
      %v5547 = vadd.f32 %v5314, %v5511
      %v5548 = vadd.f32 %v5317, %v5514
      %v5549 = vadd.f32 %v5319, %v5516
      %v5550 = vld [vmem:[%s4858] sm:$0xff]
      %v5551 = vld [vmem:[%s4858 + $0x8] sm:$0xff]
      %v5552 = vld [vmem:[%s4858 + $0x18] sm:$0xff]
      %v5553 = vld [vmem:[%s4858 + $0x20] sm:$0xff]
      %v5554 = vld [vmem:[%s4858 + $0x30] sm:$0xff]
      %v5555 = vld [vmem:[%s4858 + $0x38] sm:$0xff]
      %v5556 = vld [vmem:[%s4858 + $0x48] sm:$0xff]
      %v5557 = vld [vmem:[%s4858 + $0x50] sm:$0xff]
      %v5558 = vld [vmem:[%s4858 + $0x60] sm:$0xff]
      %v5559 = vld [vmem:[%s4858 + $0x68] sm:$0xff]
      %v5560 = vld [vmem:[%s4858 + $0x78] sm:$0xff]
      %v5561 = vld [vmem:[%s4858 + $0x80] sm:$0xff]
      %v5562 = vld [vmem:[%s4858 + $0x90] sm:$0xff]
      %v5563 = vld [vmem:[%s4858 + $0x98] sm:$0xff]
      %v5564 = vld [vmem:[%s4858 + $0xa8] sm:$0xff]
      %v5565 = vld [vmem:[%s4858 + $0xb0] sm:$0xff]
      %v5566 = vld [vmem:[%s4858 + $0xc0] sm:$0xff]
      %v5567 = vld [vmem:[%s4858 + $0xc8] sm:$0xff]
      %v5568 = vld [vmem:[%s4858 + $0xd8] sm:$0xff]
      %v5569 = vld [vmem:[%s4858 + $0xe0] sm:$0xff]
      %v5570 = vld [vmem:[%s4858 + $0xf0] sm:$0xff]
      %v5571 = vld [vmem:[%s4858 + $0xf8] sm:$0xff]
      %v5572 = vld [vmem:[%s4858 + $0x108] sm:$0xff]
      %v5573 = vld [vmem:[%s4858 + $0x110] sm:$0xff]
      %v5574 = vld [vmem:[%s4858 + $0x120] sm:$0xff]
      %v5575 = vld [vmem:[%s4858 + $0x128] sm:$0xff]
      %v5576 = vld [vmem:[%s4858 + $0x138] sm:$0xff]
      %v5577 = vld [vmem:[%s4858 + $0x140] sm:$0xff]
      %v5578 = vld [vmem:[%s4858 + $0x150] sm:$0xff]
      %v5579 = vld [vmem:[%s4858 + $0x158] sm:$0xff]
      %v5580 = vld [vmem:[%s4858 + $0x168] sm:$0xff]
      %v5581 = vld [vmem:[%s4858 + $0x170] sm:$0xff]
      %v5582 = vpack.c.bf16 %v5551, %v5550
      %v5583 = vpack.c.bf16 %v5553, %v5552
      %v5584 = vpack.c.bf16 %v5555, %v5554
      %v5585 = vpack.c.bf16 %v5557, %v5556
      %v5586 = vpack.c.bf16 %v5559, %v5558
      %v5587 = vpack.c.bf16 %v5561, %v5560
      %v5588 = vpack.c.bf16 %v5563, %v5562
      %v5589 = vpack.c.bf16 %v5565, %v5564
      %v5590 = vpack.c.bf16 %v5567, %v5566
      %v5591 = vpack.c.bf16 %v5569, %v5568
      %v5592 = vpack.c.bf16 %v5571, %v5570
      %v5593 = vpack.c.bf16 %v5573, %v5572
      %v5594 = vpack.c.bf16 %v5575, %v5574
      %v5595 = vpack.c.bf16 %v5577, %v5576
      %v5596 = vpack.c.bf16 %v5579, %v5578
      %v5597 = vpack.c.bf16 %v5581, %v5580
      %v5602 = vunpack.c.l.b16 %v4903
      %v5603 = vunpack.c.l.b16 %v4904
      %v5604 = vunpack.c.l.b16 %v4905
      %v5605 = vunpack.c.l.b16 %v4906
      %v5606 = vpack.c.b16 %v5603, %v5602
      %v5607 = vpack.c.b16 %v5605, %v5604
      %v5611 = vsel %vm2481, %v5582, 0
      %v5614 = vsel %vm2481, %v5583, 0
      %v5617 = vsel %vm2481, %v5584, 0
      %v5620 = vsel %vm2481, %v5585, 0
      %v5623 = vsel %vm2481, %v5586, 0
      %v5626 = vsel %vm2481, %v5587, 0
      %v5629 = vsel %vm2481, %v5588, 0
      %v5632 = vsel %vm2481, %v5589, 0
      %v5635 = vsel %vm2481, %v5590, 0
      %v5638 = vsel %vm2481, %v5591, 0
      %v5641 = vsel %vm2481, %v5592, 0
      %v5644 = vsel %vm2481, %v5593, 0
      %v5647 = vsel %vm2481, %v5594, 0
      %v5650 = vsel %vm2481, %v5595, 0
      %v5653 = vsel %vm2481, %v5596, 0
      %v5656 = vsel %vm2481, %v5597, 0
      %5658 = vmatpush.bf16.msra.mxu0 0
      %5659 = vmatpush.bf16.msra.mxu0 0
      %5660 = vmatpush.bf16.msra.mxu0 0
      %5661 = vmatpush.bf16.msra.mxu0 0
      %5662 = vmatpush.bf16.msra.mxu0 0
      %5663 = vmatpush.bf16.msra.mxu0 0
      %5664 = vmatpush.bf16.msra.mxu0 %v5607
      %5665 = vmatpush.bf16.msra.mxu0 %v5606
      %5666 = vmatmul.bf16.gmra.mxu0 %v5611
      %v5667 = vpop.f32.mrf.mxu0
      %v5668 = vadd.f32 0.0, %v5667
      %v5669 = vpop.f32.mrf.mxu0
      %v5670 = vadd.f32 0.0, %v5669
      %5671 = vmatmul.bf16.gmra.mxu0 %v5614
      %v5672 = vpop.f32.mrf.mxu0
      %v5673 = vadd.f32 0.0, %v5672
      %v5674 = vpop.f32.mrf.mxu0
      %v5675 = vadd.f32 0.0, %v5674
      %5676 = vmatmul.bf16.gmra.mxu0 %v5617
      %v5677 = vpop.f32.mrf.mxu0
      %v5678 = vadd.f32 0.0, %v5677
      %v5679 = vpop.f32.mrf.mxu0
      %v5680 = vadd.f32 0.0, %v5679
      %5681 = vmatmul.bf16.gmra.mxu0 %v5620
      %v5682 = vpop.f32.mrf.mxu0
      %v5683 = vadd.f32 0.0, %v5682
      %v5684 = vpop.f32.mrf.mxu0
      %v5685 = vadd.f32 0.0, %v5684
      %5686 = vmatmul.bf16.gmra.mxu0 %v5623
      %v5687 = vpop.f32.mrf.mxu0
      %v5688 = vadd.f32 0.0, %v5687
      %v5689 = vpop.f32.mrf.mxu0
      %v5690 = vadd.f32 0.0, %v5689
      %5691 = vmatmul.bf16.gmra.mxu0 %v5626
      %v5692 = vpop.f32.mrf.mxu0
      %v5693 = vadd.f32 0.0, %v5692
      %v5694 = vpop.f32.mrf.mxu0
      %v5695 = vadd.f32 0.0, %v5694
      %5696 = vmatmul.bf16.gmra.mxu0 %v5629
      %v5697 = vpop.f32.mrf.mxu0
      %v5698 = vadd.f32 0.0, %v5697
      %v5699 = vpop.f32.mrf.mxu0
      %v5700 = vadd.f32 0.0, %v5699
      %5701 = vmatmul.bf16.gmra.mxu0 %v5632
      %v5702 = vpop.f32.mrf.mxu0
      %v5703 = vadd.f32 0.0, %v5702
      %v5704 = vpop.f32.mrf.mxu0
      %v5705 = vadd.f32 0.0, %v5704
      %5706 = vmatmul.bf16.gmra.mxu0 %v5635
      %v5707 = vpop.f32.mrf.mxu0
      %v5708 = vadd.f32 0.0, %v5707
      %v5709 = vpop.f32.mrf.mxu0
      %v5710 = vadd.f32 0.0, %v5709
      %5711 = vmatmul.bf16.gmra.mxu0 %v5638
      %v5712 = vpop.f32.mrf.mxu0
      %v5713 = vadd.f32 0.0, %v5712
      %v5714 = vpop.f32.mrf.mxu0
      %v5715 = vadd.f32 0.0, %v5714
      %5716 = vmatmul.bf16.gmra.mxu0 %v5641
      %v5717 = vpop.f32.mrf.mxu0
      %v5718 = vadd.f32 0.0, %v5717
      %v5719 = vpop.f32.mrf.mxu0
      %v5720 = vadd.f32 0.0, %v5719
      %5721 = vmatmul.bf16.gmra.mxu0 %v5644
      %v5722 = vpop.f32.mrf.mxu0
      %v5723 = vadd.f32 0.0, %v5722
      %v5724 = vpop.f32.mrf.mxu0
      %v5725 = vadd.f32 0.0, %v5724
      %5726 = vmatmul.bf16.gmra.mxu0 %v5647
      %v5727 = vpop.f32.mrf.mxu0
      %v5728 = vadd.f32 0.0, %v5727
      %v5729 = vpop.f32.mrf.mxu0
      %v5730 = vadd.f32 0.0, %v5729
      %5731 = vmatmul.bf16.gmra.mxu0 %v5650
      %v5732 = vpop.f32.mrf.mxu0
      %v5733 = vadd.f32 0.0, %v5732
      %v5734 = vpop.f32.mrf.mxu0
      %v5735 = vadd.f32 0.0, %v5734
      %5736 = vmatmul.bf16.gmra.mxu0 %v5653
      %v5737 = vpop.f32.mrf.mxu0
      %v5738 = vadd.f32 0.0, %v5737
      %v5739 = vpop.f32.mrf.mxu0
      %v5740 = vadd.f32 0.0, %v5739
      %5741 = vmatmul.bf16.gmra.mxu0 %v5656
      %v5742 = vpop.f32.mrf.mxu0
      %v5743 = vadd.f32 0.0, %v5742
      %v5744 = vpop.f32.mrf.mxu0
      %v5745 = vadd.f32 0.0, %v5744
      %5746 = vdwg.mxu0
      %v5747 = vadd.f32 %v5518, %v5668
      %v5748 = vadd.f32 %v5519, %v5670
      %v5749 = vadd.f32 %v5520, %v5673
      %v5750 = vadd.f32 %v5521, %v5675
      %v5751 = vadd.f32 %v5522, %v5678
      %v5752 = vadd.f32 %v5523, %v5680
      %v5753 = vadd.f32 %v5524, %v5683
      %v5754 = vadd.f32 %v5525, %v5685
      %v5755 = vadd.f32 %v5526, %v5688
      %v5756 = vadd.f32 %v5527, %v5690
      %v5757 = vadd.f32 %v5528, %v5693
      %v5758 = vadd.f32 %v5529, %v5695
      %v5759 = vadd.f32 %v5530, %v5698
      %v5760 = vadd.f32 %v5531, %v5700
      %v5761 = vadd.f32 %v5532, %v5703
      %v5762 = vadd.f32 %v5533, %v5705
      %v5763 = vadd.f32 %v5534, %v5708
      %v5764 = vadd.f32 %v5535, %v5710
      %v5765 = vadd.f32 %v5536, %v5713
      %v5766 = vadd.f32 %v5537, %v5715
      %v5767 = vadd.f32 %v5538, %v5718
      %v5768 = vadd.f32 %v5539, %v5720
      %v5769 = vadd.f32 %v5540, %v5723
      %v5770 = vadd.f32 %v5541, %v5725
      %v5771 = vadd.f32 %v5542, %v5728
      %v5772 = vadd.f32 %v5543, %v5730
      %v5773 = vadd.f32 %v5544, %v5733
      %v5774 = vadd.f32 %v5545, %v5735
      %v5775 = vadd.f32 %v5546, %v5738
      %v5776 = vadd.f32 %v5547, %v5740
      %v5777 = vadd.f32 %v5548, %v5743
      %v5778 = vadd.f32 %v5549, %v5745
      %v5779 = vld [vmem:[%s4858 + $0x1] sm:$0xff]
      %v5780 = vld [vmem:[%s4858 + $0x9] sm:$0xff]
      %v5781 = vld [vmem:[%s4858 + $0x19] sm:$0xff]
      %v5782 = vld [vmem:[%s4858 + $0x21] sm:$0xff]
      %v5783 = vld [vmem:[%s4858 + $0x31] sm:$0xff]
      %v5784 = vld [vmem:[%s4858 + $0x39] sm:$0xff]
      %v5785 = vld [vmem:[%s4858 + $0x49] sm:$0xff]
      %v5786 = vld [vmem:[%s4858 + $0x51] sm:$0xff]
      %v5787 = vld [vmem:[%s4858 + $0x61] sm:$0xff]
      %v5788 = vld [vmem:[%s4858 + $0x69] sm:$0xff]
      %v5789 = vld [vmem:[%s4858 + $0x79] sm:$0xff]
      %v5790 = vld [vmem:[%s4858 + $0x81] sm:$0xff]
      %v5791 = vld [vmem:[%s4858 + $0x91] sm:$0xff]
      %v5792 = vld [vmem:[%s4858 + $0x99] sm:$0xff]
      %v5793 = vld [vmem:[%s4858 + $0xa9] sm:$0xff]
      %v5794 = vld [vmem:[%s4858 + $0xb1] sm:$0xff]
      %v5795 = vld [vmem:[%s4858 + $0xc1] sm:$0xff]
      %v5796 = vld [vmem:[%s4858 + $0xc9] sm:$0xff]
      %v5797 = vld [vmem:[%s4858 + $0xd9] sm:$0xff]
      %v5798 = vld [vmem:[%s4858 + $0xe1] sm:$0xff]
      %v5799 = vld [vmem:[%s4858 + $0xf1] sm:$0xff]
      %v5800 = vld [vmem:[%s4858 + $0xf9] sm:$0xff]
      %v5801 = vld [vmem:[%s4858 + $0x109] sm:$0xff]
      %v5802 = vld [vmem:[%s4858 + $0x111] sm:$0xff]
      %v5803 = vld [vmem:[%s4858 + $0x121] sm:$0xff]
      %v5804 = vld [vmem:[%s4858 + $0x129] sm:$0xff]
      %v5805 = vld [vmem:[%s4858 + $0x139] sm:$0xff]
      %v5806 = vld [vmem:[%s4858 + $0x141] sm:$0xff]
      %v5807 = vld [vmem:[%s4858 + $0x151] sm:$0xff]
      %v5808 = vld [vmem:[%s4858 + $0x159] sm:$0xff]
      %v5809 = vld [vmem:[%s4858 + $0x169] sm:$0xff]
      %v5810 = vld [vmem:[%s4858 + $0x171] sm:$0xff]
      %v5811 = vpack.c.bf16 %v5780, %v5779
      %v5812 = vpack.c.bf16 %v5782, %v5781
      %v5813 = vpack.c.bf16 %v5784, %v5783
      %v5814 = vpack.c.bf16 %v5786, %v5785
      %v5815 = vpack.c.bf16 %v5788, %v5787
      %v5816 = vpack.c.bf16 %v5790, %v5789
      %v5817 = vpack.c.bf16 %v5792, %v5791
      %v5818 = vpack.c.bf16 %v5794, %v5793
      %v5819 = vpack.c.bf16 %v5796, %v5795
      %v5820 = vpack.c.bf16 %v5798, %v5797
      %v5821 = vpack.c.bf16 %v5800, %v5799
      %v5822 = vpack.c.bf16 %v5802, %v5801
      %v5823 = vpack.c.bf16 %v5804, %v5803
      %v5824 = vpack.c.bf16 %v5806, %v5805
      %v5825 = vpack.c.bf16 %v5808, %v5807
      %v5826 = vpack.c.bf16 %v5810, %v5809
      %v5831 = vunpack.c.l.b16 %v4907
      %v5832 = vunpack.c.l.b16 %v4908
      %v5833 = vunpack.c.l.b16 %v4909
      %v5834 = vunpack.c.l.b16 %v4910
      %v5835 = vpack.c.b16 %v5832, %v5831
      %v5836 = vpack.c.b16 %v5834, %v5833
      %v5840 = vsel %vm2481, %v5811, 0
      %v5843 = vsel %vm2481, %v5812, 0
      %v5846 = vsel %vm2481, %v5813, 0
      %v5849 = vsel %vm2481, %v5814, 0
      %v5852 = vsel %vm2481, %v5815, 0
      %v5855 = vsel %vm2481, %v5816, 0
      %v5858 = vsel %vm2481, %v5817, 0
      %v5861 = vsel %vm2481, %v5818, 0
      %v5864 = vsel %vm2481, %v5819, 0
      %v5867 = vsel %vm2481, %v5820, 0
      %v5870 = vsel %vm2481, %v5821, 0
      %v5873 = vsel %vm2481, %v5822, 0
      %v5876 = vsel %vm2481, %v5823, 0
      %v5879 = vsel %vm2481, %v5824, 0
      %v5882 = vsel %vm2481, %v5825, 0
      %v5885 = vsel %vm2481, %v5826, 0
      %5887 = vmatpush.bf16.msra.mxu0 0
      %5888 = vmatpush.bf16.msra.mxu0 0
      %5889 = vmatpush.bf16.msra.mxu0 0
      %5890 = vmatpush.bf16.msra.mxu0 0
      %5891 = vmatpush.bf16.msra.mxu0 0
      %5892 = vmatpush.bf16.msra.mxu0 0
      %5893 = vmatpush.bf16.msra.mxu0 %v5836
      %5894 = vmatpush.bf16.msra.mxu0 %v5835
      %5895 = vmatmul.bf16.gmra.mxu0 %v5840
      %v5896 = vpop.f32.mrf.mxu0
      %v5897 = vadd.f32 0.0, %v5896
      %v5898 = vpop.f32.mrf.mxu0
      %v5899 = vadd.f32 0.0, %v5898
      %5900 = vmatmul.bf16.gmra.mxu0 %v5843
      %v5901 = vpop.f32.mrf.mxu0
      %v5902 = vadd.f32 0.0, %v5901
      %v5903 = vpop.f32.mrf.mxu0
      %v5904 = vadd.f32 0.0, %v5903
      %5905 = vmatmul.bf16.gmra.mxu0 %v5846
      %v5906 = vpop.f32.mrf.mxu0
      %v5907 = vadd.f32 0.0, %v5906
      %v5908 = vpop.f32.mrf.mxu0
      %v5909 = vadd.f32 0.0, %v5908
      %5910 = vmatmul.bf16.gmra.mxu0 %v5849
      %v5911 = vpop.f32.mrf.mxu0
      %v5912 = vadd.f32 0.0, %v5911
      %v5913 = vpop.f32.mrf.mxu0
      %v5914 = vadd.f32 0.0, %v5913
      %5915 = vmatmul.bf16.gmra.mxu0 %v5852
      %v5916 = vpop.f32.mrf.mxu0
      %v5917 = vadd.f32 0.0, %v5916
      %v5918 = vpop.f32.mrf.mxu0
      %v5919 = vadd.f32 0.0, %v5918
      %5920 = vmatmul.bf16.gmra.mxu0 %v5855
      %v5921 = vpop.f32.mrf.mxu0
      %v5922 = vadd.f32 0.0, %v5921
      %v5923 = vpop.f32.mrf.mxu0
      %v5924 = vadd.f32 0.0, %v5923
      %5925 = vmatmul.bf16.gmra.mxu0 %v5858
      %v5926 = vpop.f32.mrf.mxu0
      %v5927 = vadd.f32 0.0, %v5926
      %v5928 = vpop.f32.mrf.mxu0
      %v5929 = vadd.f32 0.0, %v5928
      %5930 = vmatmul.bf16.gmra.mxu0 %v5861
      %v5931 = vpop.f32.mrf.mxu0
      %v5932 = vadd.f32 0.0, %v5931
      %v5933 = vpop.f32.mrf.mxu0
      %v5934 = vadd.f32 0.0, %v5933
      %5935 = vmatmul.bf16.gmra.mxu0 %v5864
      %v5936 = vpop.f32.mrf.mxu0
      %v5937 = vadd.f32 0.0, %v5936
      %v5938 = vpop.f32.mrf.mxu0
      %v5939 = vadd.f32 0.0, %v5938
      %5940 = vmatmul.bf16.gmra.mxu0 %v5867
      %v5941 = vpop.f32.mrf.mxu0
      %v5942 = vadd.f32 0.0, %v5941
      %v5943 = vpop.f32.mrf.mxu0
      %v5944 = vadd.f32 0.0, %v5943
      %5945 = vmatmul.bf16.gmra.mxu0 %v5870
      %v5946 = vpop.f32.mrf.mxu0
      %v5947 = vadd.f32 0.0, %v5946
      %v5948 = vpop.f32.mrf.mxu0
      %v5949 = vadd.f32 0.0, %v5948
      %5950 = vmatmul.bf16.gmra.mxu0 %v5873
      %v5951 = vpop.f32.mrf.mxu0
      %v5952 = vadd.f32 0.0, %v5951
      %v5953 = vpop.f32.mrf.mxu0
      %v5954 = vadd.f32 0.0, %v5953
      %5955 = vmatmul.bf16.gmra.mxu0 %v5876
      %v5956 = vpop.f32.mrf.mxu0
      %v5957 = vadd.f32 0.0, %v5956
      %v5958 = vpop.f32.mrf.mxu0
      %v5959 = vadd.f32 0.0, %v5958
      %5960 = vmatmul.bf16.gmra.mxu0 %v5879
      %v5961 = vpop.f32.mrf.mxu0
      %v5962 = vadd.f32 0.0, %v5961
      %v5963 = vpop.f32.mrf.mxu0
      %v5964 = vadd.f32 0.0, %v5963
      %5965 = vmatmul.bf16.gmra.mxu0 %v5882
      %v5966 = vpop.f32.mrf.mxu0
      %v5967 = vadd.f32 0.0, %v5966
      %v5968 = vpop.f32.mrf.mxu0
      %v5969 = vadd.f32 0.0, %v5968
      %5970 = vmatmul.bf16.gmra.mxu0 %v5885
      %v5971 = vpop.f32.mrf.mxu0
      %v5972 = vadd.f32 0.0, %v5971
      %v5973 = vpop.f32.mrf.mxu0
      %v5974 = vadd.f32 0.0, %v5973
      %5975 = vdwg.mxu0
      %v5976 = vadd.f32 %v5747, %v5897
      %v5977 = vadd.f32 %v5748, %v5899
      %v5978 = vadd.f32 %v5749, %v5902
      %v5979 = vadd.f32 %v5750, %v5904
      %v5980 = vadd.f32 %v5751, %v5907
      %v5981 = vadd.f32 %v5752, %v5909
      %v5982 = vadd.f32 %v5753, %v5912
      %v5983 = vadd.f32 %v5754, %v5914
      %v5984 = vadd.f32 %v5755, %v5917
      %v5985 = vadd.f32 %v5756, %v5919
      %v5986 = vadd.f32 %v5757, %v5922
      %v5987 = vadd.f32 %v5758, %v5924
      %v5988 = vadd.f32 %v5759, %v5927
      %v5989 = vadd.f32 %v5760, %v5929
      %v5990 = vadd.f32 %v5761, %v5932
      %v5991 = vadd.f32 %v5762, %v5934
      %v5992 = vadd.f32 %v5763, %v5937
      %v5993 = vadd.f32 %v5764, %v5939
      %v5994 = vadd.f32 %v5765, %v5942
      %v5995 = vadd.f32 %v5766, %v5944
      %v5996 = vadd.f32 %v5767, %v5947
      %v5997 = vadd.f32 %v5768, %v5949
      %v5998 = vadd.f32 %v5769, %v5952
      %v5999 = vadd.f32 %v5770, %v5954
      %v6000 = vadd.f32 %v5771, %v5957
      %v6001 = vadd.f32 %v5772, %v5959
      %v6002 = vadd.f32 %v5773, %v5962
      %v6003 = vadd.f32 %v5774, %v5964
      %v6004 = vadd.f32 %v5775, %v5967
      %v6005 = vadd.f32 %v5776, %v5969
      %v6006 = vadd.f32 %v5777, %v5972
      %v6007 = vadd.f32 %v5778, %v5974
      %v6008 = vld [vmem:[%s4858 + $0x2] sm:$0xff]
      %v6009 = vld [vmem:[%s4858 + $0xa] sm:$0xff]
      %v6010 = vld [vmem:[%s4858 + $0x1a] sm:$0xff]
      %v6011 = vld [vmem:[%s4858 + $0x22] sm:$0xff]
      %v6012 = vld [vmem:[%s4858 + $0x32] sm:$0xff]
      %v6013 = vld [vmem:[%s4858 + $0x3a] sm:$0xff]
      %v6014 = vld [vmem:[%s4858 + $0x4a] sm:$0xff]
      %v6015 = vld [vmem:[%s4858 + $0x52] sm:$0xff]
      %v6016 = vld [vmem:[%s4858 + $0x62] sm:$0xff]
      %v6017 = vld [vmem:[%s4858 + $0x6a] sm:$0xff]
      %v6018 = vld [vmem:[%s4858 + $0x7a] sm:$0xff]
      %v6019 = vld [vmem:[%s4858 + $0x82] sm:$0xff]
      %v6020 = vld [vmem:[%s4858 + $0x92] sm:$0xff]
      %v6021 = vld [vmem:[%s4858 + $0x9a] sm:$0xff]
      %v6022 = vld [vmem:[%s4858 + $0xaa] sm:$0xff]
      %v6023 = vld [vmem:[%s4858 + $0xb2] sm:$0xff]
      %v6024 = vld [vmem:[%s4858 + $0xc2] sm:$0xff]
      %v6025 = vld [vmem:[%s4858 + $0xca] sm:$0xff]
      %v6026 = vld [vmem:[%s4858 + $0xda] sm:$0xff]
      %v6027 = vld [vmem:[%s4858 + $0xe2] sm:$0xff]
      %v6028 = vld [vmem:[%s4858 + $0xf2] sm:$0xff]
      %v6029 = vld [vmem:[%s4858 + $0xfa] sm:$0xff]
      %v6030 = vld [vmem:[%s4858 + $0x10a] sm:$0xff]
      %v6031 = vld [vmem:[%s4858 + $0x112] sm:$0xff]
      %v6032 = vld [vmem:[%s4858 + $0x122] sm:$0xff]
      %v6033 = vld [vmem:[%s4858 + $0x12a] sm:$0xff]
      %v6034 = vld [vmem:[%s4858 + $0x13a] sm:$0xff]
      %v6035 = vld [vmem:[%s4858 + $0x142] sm:$0xff]
      %v6036 = vld [vmem:[%s4858 + $0x152] sm:$0xff]
      %v6037 = vld [vmem:[%s4858 + $0x15a] sm:$0xff]
      %v6038 = vld [vmem:[%s4858 + $0x16a] sm:$0xff]
      %v6039 = vld [vmem:[%s4858 + $0x172] sm:$0xff]
      %v6040 = vpack.c.bf16 %v6009, %v6008
      %v6041 = vpack.c.bf16 %v6011, %v6010
      %v6042 = vpack.c.bf16 %v6013, %v6012
      %v6043 = vpack.c.bf16 %v6015, %v6014
      %v6044 = vpack.c.bf16 %v6017, %v6016
      %v6045 = vpack.c.bf16 %v6019, %v6018
      %v6046 = vpack.c.bf16 %v6021, %v6020
      %v6047 = vpack.c.bf16 %v6023, %v6022
      %v6048 = vpack.c.bf16 %v6025, %v6024
      %v6049 = vpack.c.bf16 %v6027, %v6026
      %v6050 = vpack.c.bf16 %v6029, %v6028
      %v6051 = vpack.c.bf16 %v6031, %v6030
      %v6052 = vpack.c.bf16 %v6033, %v6032
      %v6053 = vpack.c.bf16 %v6035, %v6034
      %v6054 = vpack.c.bf16 %v6037, %v6036
      %v6055 = vpack.c.bf16 %v6039, %v6038
      %v6060 = vunpack.c.l.b16 %v4911
      %v6061 = vunpack.c.l.b16 %v4912
      %v6062 = vunpack.c.l.b16 %v4913
      %v6063 = vunpack.c.l.b16 %v4914
      %v6064 = vpack.c.b16 %v6061, %v6060
      %v6065 = vpack.c.b16 %v6063, %v6062
      %v6069 = vsel %vm2481, %v6040, 0
      %v6072 = vsel %vm2481, %v6041, 0
      %v6075 = vsel %vm2481, %v6042, 0
      %v6078 = vsel %vm2481, %v6043, 0
      %v6081 = vsel %vm2481, %v6044, 0
      %v6084 = vsel %vm2481, %v6045, 0
      %v6087 = vsel %vm2481, %v6046, 0
      %v6090 = vsel %vm2481, %v6047, 0
      %v6093 = vsel %vm2481, %v6048, 0
      %v6096 = vsel %vm2481, %v6049, 0
      %v6099 = vsel %vm2481, %v6050, 0
      %v6102 = vsel %vm2481, %v6051, 0
      %v6105 = vsel %vm2481, %v6052, 0
      %v6108 = vsel %vm2481, %v6053, 0
      %v6111 = vsel %vm2481, %v6054, 0
      %v6114 = vsel %vm2481, %v6055, 0
      %6116 = vmatpush.bf16.msra.mxu0 0
      %6117 = vmatpush.bf16.msra.mxu0 0
      %6118 = vmatpush.bf16.msra.mxu0 0
      %6119 = vmatpush.bf16.msra.mxu0 0
      %6120 = vmatpush.bf16.msra.mxu0 0
      %6121 = vmatpush.bf16.msra.mxu0 0
      %6122 = vmatpush.bf16.msra.mxu0 %v6065
      %6123 = vmatpush.bf16.msra.mxu0 %v6064
      %6124 = vmatmul.bf16.gmra.mxu0 %v6069
      %v6125 = vpop.f32.mrf.mxu0
      %v6126 = vadd.f32 0.0, %v6125
      %v6127 = vpop.f32.mrf.mxu0
      %v6128 = vadd.f32 0.0, %v6127
      %6129 = vmatmul.bf16.gmra.mxu0 %v6072
      %v6130 = vpop.f32.mrf.mxu0
      %v6131 = vadd.f32 0.0, %v6130
      %v6132 = vpop.f32.mrf.mxu0
      %v6133 = vadd.f32 0.0, %v6132
      %6134 = vmatmul.bf16.gmra.mxu0 %v6075
      %v6135 = vpop.f32.mrf.mxu0
      %v6136 = vadd.f32 0.0, %v6135
      %v6137 = vpop.f32.mrf.mxu0
      %v6138 = vadd.f32 0.0, %v6137
      %6139 = vmatmul.bf16.gmra.mxu0 %v6078
      %v6140 = vpop.f32.mrf.mxu0
      %v6141 = vadd.f32 0.0, %v6140
      %v6142 = vpop.f32.mrf.mxu0
      %v6143 = vadd.f32 0.0, %v6142
      %6144 = vmatmul.bf16.gmra.mxu0 %v6081
      %v6145 = vpop.f32.mrf.mxu0
      %v6146 = vadd.f32 0.0, %v6145
      %v6147 = vpop.f32.mrf.mxu0
      %v6148 = vadd.f32 0.0, %v6147
      %6149 = vmatmul.bf16.gmra.mxu0 %v6084
      %v6150 = vpop.f32.mrf.mxu0
      %v6151 = vadd.f32 0.0, %v6150
      %v6152 = vpop.f32.mrf.mxu0
      %v6153 = vadd.f32 0.0, %v6152
      %6154 = vmatmul.bf16.gmra.mxu0 %v6087
      %v6155 = vpop.f32.mrf.mxu0
      %v6156 = vadd.f32 0.0, %v6155
      %v6157 = vpop.f32.mrf.mxu0
      %v6158 = vadd.f32 0.0, %v6157
      %6159 = vmatmul.bf16.gmra.mxu0 %v6090
      %v6160 = vpop.f32.mrf.mxu0
      %v6161 = vadd.f32 0.0, %v6160
      %v6162 = vpop.f32.mrf.mxu0
      %v6163 = vadd.f32 0.0, %v6162
      %6164 = vmatmul.bf16.gmra.mxu0 %v6093
      %v6165 = vpop.f32.mrf.mxu0
      %v6166 = vadd.f32 0.0, %v6165
      %v6167 = vpop.f32.mrf.mxu0
      %v6168 = vadd.f32 0.0, %v6167
      %6169 = vmatmul.bf16.gmra.mxu0 %v6096
      %v6170 = vpop.f32.mrf.mxu0
      %v6171 = vadd.f32 0.0, %v6170
      %v6172 = vpop.f32.mrf.mxu0
      %v6173 = vadd.f32 0.0, %v6172
      %6174 = vmatmul.bf16.gmra.mxu0 %v6099
      %v6175 = vpop.f32.mrf.mxu0
      %v6176 = vadd.f32 0.0, %v6175
      %v6177 = vpop.f32.mrf.mxu0
      %v6178 = vadd.f32 0.0, %v6177
      %6179 = vmatmul.bf16.gmra.mxu0 %v6102
      %v6180 = vpop.f32.mrf.mxu0
      %v6181 = vadd.f32 0.0, %v6180
      %v6182 = vpop.f32.mrf.mxu0
      %v6183 = vadd.f32 0.0, %v6182
      %6184 = vmatmul.bf16.gmra.mxu0 %v6105
      %v6185 = vpop.f32.mrf.mxu0
      %v6186 = vadd.f32 0.0, %v6185
      %v6187 = vpop.f32.mrf.mxu0
      %v6188 = vadd.f32 0.0, %v6187
      %6189 = vmatmul.bf16.gmra.mxu0 %v6108
      %v6190 = vpop.f32.mrf.mxu0
      %v6191 = vadd.f32 0.0, %v6190
      %v6192 = vpop.f32.mrf.mxu0
      %v6193 = vadd.f32 0.0, %v6192
      %6194 = vmatmul.bf16.gmra.mxu0 %v6111
      %v6195 = vpop.f32.mrf.mxu0
      %v6196 = vadd.f32 0.0, %v6195
      %v6197 = vpop.f32.mrf.mxu0
      %v6198 = vadd.f32 0.0, %v6197
      %6199 = vmatmul.bf16.gmra.mxu0 %v6114
      %v6200 = vpop.f32.mrf.mxu0
      %v6201 = vadd.f32 0.0, %v6200
      %v6202 = vpop.f32.mrf.mxu0
      %v6203 = vadd.f32 0.0, %v6202
      %6204 = vdwg.mxu0
      %v6205 = vadd.f32 %v5976, %v6126
      %v6206 = vadd.f32 %v5977, %v6128
      %v6207 = vadd.f32 %v5978, %v6131
      %v6208 = vadd.f32 %v5979, %v6133
      %v6209 = vadd.f32 %v5980, %v6136
      %v6210 = vadd.f32 %v5981, %v6138
      %v6211 = vadd.f32 %v5982, %v6141
      %v6212 = vadd.f32 %v5983, %v6143
      %v6213 = vadd.f32 %v5984, %v6146
      %v6214 = vadd.f32 %v5985, %v6148
      %v6215 = vadd.f32 %v5986, %v6151
      %v6216 = vadd.f32 %v5987, %v6153
      %v6217 = vadd.f32 %v5988, %v6156
      %v6218 = vadd.f32 %v5989, %v6158
      %v6219 = vadd.f32 %v5990, %v6161
      %v6220 = vadd.f32 %v5991, %v6163
      %v6221 = vadd.f32 %v5992, %v6166
      %v6222 = vadd.f32 %v5993, %v6168
      %v6223 = vadd.f32 %v5994, %v6171
      %v6224 = vadd.f32 %v5995, %v6173
      %v6225 = vadd.f32 %v5996, %v6176
      %v6226 = vadd.f32 %v5997, %v6178
      %v6227 = vadd.f32 %v5998, %v6181
      %v6228 = vadd.f32 %v5999, %v6183
      %v6229 = vadd.f32 %v6000, %v6186
      %v6230 = vadd.f32 %v6001, %v6188
      %v6231 = vadd.f32 %v6002, %v6191
      %v6232 = vadd.f32 %v6003, %v6193
      %v6233 = vadd.f32 %v6004, %v6196
      %v6234 = vadd.f32 %v6005, %v6198
      %v6235 = vadd.f32 %v6006, %v6201
      %v6236 = vadd.f32 %v6007, %v6203
      %s6237 = scalar_lea.vmem [#allocation4], 48
      %v6238 = vld [vmem:[%s6237] sm:$0xff]
      %v6239 = vld [vmem:[%s6237 + $0x8] sm:$0xff]
      %v6240 = vld [vmem:[%s6237 + $0x18] sm:$0xff]
      %v6241 = vld [vmem:[%s6237 + $0x20] sm:$0xff]
      %v6242 = vld [vmem:[%s6237 + $0x30] sm:$0xff]
      %v6243 = vld [vmem:[%s6237 + $0x38] sm:$0xff]
      %v6244 = vld [vmem:[%s6237 + $0x48] sm:$0xff]
      %v6245 = vld [vmem:[%s6237 + $0x50] sm:$0xff]
      %v6246 = vld [vmem:[%s6237 + $0x60] sm:$0xff]
      %v6247 = vld [vmem:[%s6237 + $0x68] sm:$0xff]
      %v6248 = vld [vmem:[%s6237 + $0x78] sm:$0xff]
      %v6249 = vld [vmem:[%s6237 + $0x80] sm:$0xff]
      %v6250 = vld [vmem:[%s6237 + $0x90] sm:$0xff]
      %v6251 = vld [vmem:[%s6237 + $0x98] sm:$0xff]
      %v6252 = vld [vmem:[%s6237 + $0xa8] sm:$0xff]
      %v6253 = vld [vmem:[%s6237 + $0xb0] sm:$0xff]
      %v6254 = vld [vmem:[%s6237 + $0xc0] sm:$0xff]
      %v6255 = vld [vmem:[%s6237 + $0xc8] sm:$0xff]
      %v6256 = vld [vmem:[%s6237 + $0xd8] sm:$0xff]
      %v6257 = vld [vmem:[%s6237 + $0xe0] sm:$0xff]
      %v6258 = vld [vmem:[%s6237 + $0xf0] sm:$0xff]
      %v6259 = vld [vmem:[%s6237 + $0xf8] sm:$0xff]
      %v6260 = vld [vmem:[%s6237 + $0x108] sm:$0xff]
      %v6261 = vld [vmem:[%s6237 + $0x110] sm:$0xff]
      %v6262 = vld [vmem:[%s6237 + $0x120] sm:$0xff]
      %v6263 = vld [vmem:[%s6237 + $0x128] sm:$0xff]
      %v6264 = vld [vmem:[%s6237 + $0x138] sm:$0xff]
      %v6265 = vld [vmem:[%s6237 + $0x140] sm:$0xff]
      %v6266 = vld [vmem:[%s6237 + $0x150] sm:$0xff]
      %v6267 = vld [vmem:[%s6237 + $0x158] sm:$0xff]
      %v6268 = vld [vmem:[%s6237 + $0x168] sm:$0xff]
      %v6269 = vld [vmem:[%s6237 + $0x170] sm:$0xff]
      %v6270 = vpack.c.bf16 %v6239, %v6238
      %v6271 = vpack.c.bf16 %v6241, %v6240
      %v6272 = vpack.c.bf16 %v6243, %v6242
      %v6273 = vpack.c.bf16 %v6245, %v6244
      %v6274 = vpack.c.bf16 %v6247, %v6246
      %v6275 = vpack.c.bf16 %v6249, %v6248
      %v6276 = vpack.c.bf16 %v6251, %v6250
      %v6277 = vpack.c.bf16 %v6253, %v6252
      %v6278 = vpack.c.bf16 %v6255, %v6254
      %v6279 = vpack.c.bf16 %v6257, %v6256
      %v6280 = vpack.c.bf16 %v6259, %v6258
      %v6281 = vpack.c.bf16 %v6261, %v6260
      %v6282 = vpack.c.bf16 %v6263, %v6262
      %v6283 = vpack.c.bf16 %v6265, %v6264
      %v6284 = vpack.c.bf16 %v6267, %v6266
      %v6285 = vpack.c.bf16 %v6269, %v6268
      %v6290 = vunpack.c.l.b16 %v4915
      %v6291 = vunpack.c.l.b16 %v4916
      %v6292 = vunpack.c.l.b16 %v4917
      %v6293 = vunpack.c.l.b16 %v4918
      %v6294 = vpack.c.b16 %v6291, %v6290
      %v6295 = vpack.c.b16 %v6293, %v6292
      %v6299 = vsel %vm2481, %v6270, 0
      %v6302 = vsel %vm2481, %v6271, 0
      %v6305 = vsel %vm2481, %v6272, 0
      %v6308 = vsel %vm2481, %v6273, 0
      %v6311 = vsel %vm2481, %v6274, 0
      %v6314 = vsel %vm2481, %v6275, 0
      %v6317 = vsel %vm2481, %v6276, 0
      %v6320 = vsel %vm2481, %v6277, 0
      %v6323 = vsel %vm2481, %v6278, 0
      %v6326 = vsel %vm2481, %v6279, 0
      %v6329 = vsel %vm2481, %v6280, 0
      %v6332 = vsel %vm2481, %v6281, 0
      %v6335 = vsel %vm2481, %v6282, 0
      %v6338 = vsel %vm2481, %v6283, 0
      %v6341 = vsel %vm2481, %v6284, 0
      %v6344 = vsel %vm2481, %v6285, 0
      %6346 = vmatpush.bf16.msra.mxu0 0
      %6347 = vmatpush.bf16.msra.mxu0 0
      %6348 = vmatpush.bf16.msra.mxu0 0
      %6349 = vmatpush.bf16.msra.mxu0 0
      %6350 = vmatpush.bf16.msra.mxu0 0
      %6351 = vmatpush.bf16.msra.mxu0 0
      %6352 = vmatpush.bf16.msra.mxu0 %v6295
      %6353 = vmatpush.bf16.msra.mxu0 %v6294
      %6354 = vmatmul.bf16.gmra.mxu0 %v6299
      %v6355 = vpop.f32.mrf.mxu0
      %v6356 = vadd.f32 0.0, %v6355
      %v6357 = vpop.f32.mrf.mxu0
      %v6358 = vadd.f32 0.0, %v6357
      %6359 = vmatmul.bf16.gmra.mxu0 %v6302
      %v6360 = vpop.f32.mrf.mxu0
      %v6361 = vadd.f32 0.0, %v6360
      %v6362 = vpop.f32.mrf.mxu0
      %v6363 = vadd.f32 0.0, %v6362
      %6364 = vmatmul.bf16.gmra.mxu0 %v6305
      %v6365 = vpop.f32.mrf.mxu0
      %v6366 = vadd.f32 0.0, %v6365
      %v6367 = vpop.f32.mrf.mxu0
      %v6368 = vadd.f32 0.0, %v6367
      %6369 = vmatmul.bf16.gmra.mxu0 %v6308
      %v6370 = vpop.f32.mrf.mxu0
      %v6371 = vadd.f32 0.0, %v6370
      %v6372 = vpop.f32.mrf.mxu0
      %v6373 = vadd.f32 0.0, %v6372
      %6374 = vmatmul.bf16.gmra.mxu0 %v6311
      %v6375 = vpop.f32.mrf.mxu0
      %v6376 = vadd.f32 0.0, %v6375
      %v6377 = vpop.f32.mrf.mxu0
      %v6378 = vadd.f32 0.0, %v6377
      %6379 = vmatmul.bf16.gmra.mxu0 %v6314
      %v6380 = vpop.f32.mrf.mxu0
      %v6381 = vadd.f32 0.0, %v6380
      %v6382 = vpop.f32.mrf.mxu0
      %v6383 = vadd.f32 0.0, %v6382
      %6384 = vmatmul.bf16.gmra.mxu0 %v6317
      %v6385 = vpop.f32.mrf.mxu0
      %v6386 = vadd.f32 0.0, %v6385
      %v6387 = vpop.f32.mrf.mxu0
      %v6388 = vadd.f32 0.0, %v6387
      %6389 = vmatmul.bf16.gmra.mxu0 %v6320
      %v6390 = vpop.f32.mrf.mxu0
      %v6391 = vadd.f32 0.0, %v6390
      %v6392 = vpop.f32.mrf.mxu0
      %v6393 = vadd.f32 0.0, %v6392
      %6394 = vmatmul.bf16.gmra.mxu0 %v6323
      %v6395 = vpop.f32.mrf.mxu0
      %v6396 = vadd.f32 0.0, %v6395
      %v6397 = vpop.f32.mrf.mxu0
      %v6398 = vadd.f32 0.0, %v6397
      %6399 = vmatmul.bf16.gmra.mxu0 %v6326
      %v6400 = vpop.f32.mrf.mxu0
      %v6401 = vadd.f32 0.0, %v6400
      %v6402 = vpop.f32.mrf.mxu0
      %v6403 = vadd.f32 0.0, %v6402
      %6404 = vmatmul.bf16.gmra.mxu0 %v6329
      %v6405 = vpop.f32.mrf.mxu0
      %v6406 = vadd.f32 0.0, %v6405
      %v6407 = vpop.f32.mrf.mxu0
      %v6408 = vadd.f32 0.0, %v6407
      %6409 = vmatmul.bf16.gmra.mxu0 %v6332
      %v6410 = vpop.f32.mrf.mxu0
      %v6411 = vadd.f32 0.0, %v6410
      %v6412 = vpop.f32.mrf.mxu0
      %v6413 = vadd.f32 0.0, %v6412
      %6414 = vmatmul.bf16.gmra.mxu0 %v6335
      %v6415 = vpop.f32.mrf.mxu0
      %v6416 = vadd.f32 0.0, %v6415
      %v6417 = vpop.f32.mrf.mxu0
      %v6418 = vadd.f32 0.0, %v6417
      %6419 = vmatmul.bf16.gmra.mxu0 %v6338
      %v6420 = vpop.f32.mrf.mxu0
      %v6421 = vadd.f32 0.0, %v6420
      %v6422 = vpop.f32.mrf.mxu0
      %v6423 = vadd.f32 0.0, %v6422
      %6424 = vmatmul.bf16.gmra.mxu0 %v6341
      %v6425 = vpop.f32.mrf.mxu0
      %v6426 = vadd.f32 0.0, %v6425
      %v6427 = vpop.f32.mrf.mxu0
      %v6428 = vadd.f32 0.0, %v6427
      %6429 = vmatmul.bf16.gmra.mxu0 %v6344
      %v6430 = vpop.f32.mrf.mxu0
      %v6431 = vadd.f32 0.0, %v6430
      %v6432 = vpop.f32.mrf.mxu0
      %v6433 = vadd.f32 0.0, %v6432
      %6434 = vdwg.mxu0
      %v6435 = vadd.f32 %v6205, %v6356
      %v6436 = vadd.f32 %v6206, %v6358
      %v6437 = vadd.f32 %v6207, %v6361
      %v6438 = vadd.f32 %v6208, %v6363
      %v6439 = vadd.f32 %v6209, %v6366
      %v6440 = vadd.f32 %v6210, %v6368
      %v6441 = vadd.f32 %v6211, %v6371
      %v6442 = vadd.f32 %v6212, %v6373
      %v6443 = vadd.f32 %v6213, %v6376
      %v6444 = vadd.f32 %v6214, %v6378
      %v6445 = vadd.f32 %v6215, %v6381
      %v6446 = vadd.f32 %v6216, %v6383
      %v6447 = vadd.f32 %v6217, %v6386
      %v6448 = vadd.f32 %v6218, %v6388
      %v6449 = vadd.f32 %v6219, %v6391
      %v6450 = vadd.f32 %v6220, %v6393
      %v6451 = vadd.f32 %v6221, %v6396
      %v6452 = vadd.f32 %v6222, %v6398
      %v6453 = vadd.f32 %v6223, %v6401
      %v6454 = vadd.f32 %v6224, %v6403
      %v6455 = vadd.f32 %v6225, %v6406
      %v6456 = vadd.f32 %v6226, %v6408
      %v6457 = vadd.f32 %v6227, %v6411
      %v6458 = vadd.f32 %v6228, %v6413
      %v6459 = vadd.f32 %v6229, %v6416
      %v6460 = vadd.f32 %v6230, %v6418
      %v6461 = vadd.f32 %v6231, %v6421
      %v6462 = vadd.f32 %v6232, %v6423
      %v6463 = vadd.f32 %v6233, %v6426
      %v6464 = vadd.f32 %v6234, %v6428
      %v6465 = vadd.f32 %v6235, %v6431
      %v6466 = vadd.f32 %v6236, %v6433
      %v6467 = vld [vmem:[%s6237 + $0x1] sm:$0xff]
      %v6468 = vld [vmem:[%s6237 + $0x9] sm:$0xff]
      %v6469 = vld [vmem:[%s6237 + $0x19] sm:$0xff]
      %v6470 = vld [vmem:[%s6237 + $0x21] sm:$0xff]
      %v6471 = vld [vmem:[%s6237 + $0x31] sm:$0xff]
      %v6472 = vld [vmem:[%s6237 + $0x39] sm:$0xff]
      %v6473 = vld [vmem:[%s6237 + $0x49] sm:$0xff]
      %v6474 = vld [vmem:[%s6237 + $0x51] sm:$0xff]
      %v6475 = vld [vmem:[%s6237 + $0x61] sm:$0xff]
      %v6476 = vld [vmem:[%s6237 + $0x69] sm:$0xff]
      %v6477 = vld [vmem:[%s6237 + $0x79] sm:$0xff]
      %v6478 = vld [vmem:[%s6237 + $0x81] sm:$0xff]
      %v6479 = vld [vmem:[%s6237 + $0x91] sm:$0xff]
      %v6480 = vld [vmem:[%s6237 + $0x99] sm:$0xff]
      %v6481 = vld [vmem:[%s6237 + $0xa9] sm:$0xff]
      %v6482 = vld [vmem:[%s6237 + $0xb1] sm:$0xff]
      %v6483 = vld [vmem:[%s6237 + $0xc1] sm:$0xff]
      %v6484 = vld [vmem:[%s6237 + $0xc9] sm:$0xff]
      %v6485 = vld [vmem:[%s6237 + $0xd9] sm:$0xff]
      %v6486 = vld [vmem:[%s6237 + $0xe1] sm:$0xff]
      %v6487 = vld [vmem:[%s6237 + $0xf1] sm:$0xff]
      %v6488 = vld [vmem:[%s6237 + $0xf9] sm:$0xff]
      %v6489 = vld [vmem:[%s6237 + $0x109] sm:$0xff]
      %v6490 = vld [vmem:[%s6237 + $0x111] sm:$0xff]
      %v6491 = vld [vmem:[%s6237 + $0x121] sm:$0xff]
      %v6492 = vld [vmem:[%s6237 + $0x129] sm:$0xff]
      %v6493 = vld [vmem:[%s6237 + $0x139] sm:$0xff]
      %v6494 = vld [vmem:[%s6237 + $0x141] sm:$0xff]
      %v6495 = vld [vmem:[%s6237 + $0x151] sm:$0xff]
      %v6496 = vld [vmem:[%s6237 + $0x159] sm:$0xff]
      %v6497 = vld [vmem:[%s6237 + $0x169] sm:$0xff]
      %v6498 = vld [vmem:[%s6237 + $0x171] sm:$0xff]
      %v6499 = vpack.c.bf16 %v6468, %v6467
      %v6500 = vpack.c.bf16 %v6470, %v6469
      %v6501 = vpack.c.bf16 %v6472, %v6471
      %v6502 = vpack.c.bf16 %v6474, %v6473
      %v6503 = vpack.c.bf16 %v6476, %v6475
      %v6504 = vpack.c.bf16 %v6478, %v6477
      %v6505 = vpack.c.bf16 %v6480, %v6479
      %v6506 = vpack.c.bf16 %v6482, %v6481
      %v6507 = vpack.c.bf16 %v6484, %v6483
      %v6508 = vpack.c.bf16 %v6486, %v6485
      %v6509 = vpack.c.bf16 %v6488, %v6487
      %v6510 = vpack.c.bf16 %v6490, %v6489
      %v6511 = vpack.c.bf16 %v6492, %v6491
      %v6512 = vpack.c.bf16 %v6494, %v6493
      %v6513 = vpack.c.bf16 %v6496, %v6495
      %v6514 = vpack.c.bf16 %v6498, %v6497
      %v6519 = vunpack.c.l.b16 %v4919
      %v6520 = vunpack.c.l.b16 %v4920
      %v6521 = vunpack.c.l.b16 %v4921
      %v6522 = vunpack.c.l.b16 %v4922
      %v6523 = vpack.c.b16 %v6520, %v6519
      %v6524 = vpack.c.b16 %v6522, %v6521
      %v6528 = vsel %vm2481, %v6499, 0
      %v6531 = vsel %vm2481, %v6500, 0
      %v6534 = vsel %vm2481, %v6501, 0
      %v6537 = vsel %vm2481, %v6502, 0
      %v6540 = vsel %vm2481, %v6503, 0
      %v6543 = vsel %vm2481, %v6504, 0
      %v6546 = vsel %vm2481, %v6505, 0
      %v6549 = vsel %vm2481, %v6506, 0
      %v6552 = vsel %vm2481, %v6507, 0
      %v6555 = vsel %vm2481, %v6508, 0
      %v6558 = vsel %vm2481, %v6509, 0
      %v6561 = vsel %vm2481, %v6510, 0
      %v6564 = vsel %vm2481, %v6511, 0
      %v6567 = vsel %vm2481, %v6512, 0
      %v6570 = vsel %vm2481, %v6513, 0
      %v6573 = vsel %vm2481, %v6514, 0
      %6575 = vmatpush.bf16.msra.mxu0 0
      %6576 = vmatpush.bf16.msra.mxu0 0
      %6577 = vmatpush.bf16.msra.mxu0 0
      %6578 = vmatpush.bf16.msra.mxu0 0
      %6579 = vmatpush.bf16.msra.mxu0 0
      %6580 = vmatpush.bf16.msra.mxu0 0
      %6581 = vmatpush.bf16.msra.mxu0 %v6524
      %6582 = vmatpush.bf16.msra.mxu0 %v6523
      %6583 = vmatmul.bf16.gmra.mxu0 %v6528
      %v6584 = vpop.f32.mrf.mxu0
      %v6585 = vadd.f32 0.0, %v6584
      %v6586 = vpop.f32.mrf.mxu0
      %v6587 = vadd.f32 0.0, %v6586
      %6588 = vmatmul.bf16.gmra.mxu0 %v6531
      %v6589 = vpop.f32.mrf.mxu0
      %v6590 = vadd.f32 0.0, %v6589
      %v6591 = vpop.f32.mrf.mxu0
      %v6592 = vadd.f32 0.0, %v6591
      %6593 = vmatmul.bf16.gmra.mxu0 %v6534
      %v6594 = vpop.f32.mrf.mxu0
      %v6595 = vadd.f32 0.0, %v6594
      %v6596 = vpop.f32.mrf.mxu0
      %v6597 = vadd.f32 0.0, %v6596
      %6598 = vmatmul.bf16.gmra.mxu0 %v6537
      %v6599 = vpop.f32.mrf.mxu0
      %v6600 = vadd.f32 0.0, %v6599
      %v6601 = vpop.f32.mrf.mxu0
      %v6602 = vadd.f32 0.0, %v6601
      %6603 = vmatmul.bf16.gmra.mxu0 %v6540
      %v6604 = vpop.f32.mrf.mxu0
      %v6605 = vadd.f32 0.0, %v6604
      %v6606 = vpop.f32.mrf.mxu0
      %v6607 = vadd.f32 0.0, %v6606
      %6608 = vmatmul.bf16.gmra.mxu0 %v6543
      %v6609 = vpop.f32.mrf.mxu0
      %v6610 = vadd.f32 0.0, %v6609
      %v6611 = vpop.f32.mrf.mxu0
      %v6612 = vadd.f32 0.0, %v6611
      %6613 = vmatmul.bf16.gmra.mxu0 %v6546
      %v6614 = vpop.f32.mrf.mxu0
      %v6615 = vadd.f32 0.0, %v6614
      %v6616 = vpop.f32.mrf.mxu0
      %v6617 = vadd.f32 0.0, %v6616
      %6618 = vmatmul.bf16.gmra.mxu0 %v6549
      %v6619 = vpop.f32.mrf.mxu0
      %v6620 = vadd.f32 0.0, %v6619
      %v6621 = vpop.f32.mrf.mxu0
      %v6622 = vadd.f32 0.0, %v6621
      %6623 = vmatmul.bf16.gmra.mxu0 %v6552
      %v6624 = vpop.f32.mrf.mxu0
      %v6625 = vadd.f32 0.0, %v6624
      %v6626 = vpop.f32.mrf.mxu0
      %v6627 = vadd.f32 0.0, %v6626
      %6628 = vmatmul.bf16.gmra.mxu0 %v6555
      %v6629 = vpop.f32.mrf.mxu0
      %v6630 = vadd.f32 0.0, %v6629
      %v6631 = vpop.f32.mrf.mxu0
      %v6632 = vadd.f32 0.0, %v6631
      %6633 = vmatmul.bf16.gmra.mxu0 %v6558
      %v6634 = vpop.f32.mrf.mxu0
      %v6635 = vadd.f32 0.0, %v6634
      %v6636 = vpop.f32.mrf.mxu0
      %v6637 = vadd.f32 0.0, %v6636
      %6638 = vmatmul.bf16.gmra.mxu0 %v6561
      %v6639 = vpop.f32.mrf.mxu0
      %v6640 = vadd.f32 0.0, %v6639
      %v6641 = vpop.f32.mrf.mxu0
      %v6642 = vadd.f32 0.0, %v6641
      %6643 = vmatmul.bf16.gmra.mxu0 %v6564
      %v6644 = vpop.f32.mrf.mxu0
      %v6645 = vadd.f32 0.0, %v6644
      %v6646 = vpop.f32.mrf.mxu0
      %v6647 = vadd.f32 0.0, %v6646
      %6648 = vmatmul.bf16.gmra.mxu0 %v6567
      %v6649 = vpop.f32.mrf.mxu0
      %v6650 = vadd.f32 0.0, %v6649
      %v6651 = vpop.f32.mrf.mxu0
      %v6652 = vadd.f32 0.0, %v6651
      %6653 = vmatmul.bf16.gmra.mxu0 %v6570
      %v6654 = vpop.f32.mrf.mxu0
      %v6655 = vadd.f32 0.0, %v6654
      %v6656 = vpop.f32.mrf.mxu0
      %v6657 = vadd.f32 0.0, %v6656
      %6658 = vmatmul.bf16.gmra.mxu0 %v6573
      %v6659 = vpop.f32.mrf.mxu0
      %v6660 = vadd.f32 0.0, %v6659
      %v6661 = vpop.f32.mrf.mxu0
      %v6662 = vadd.f32 0.0, %v6661
      %6663 = vdwg.mxu0
      %v6664 = vadd.f32 %v6435, %v6585
      %v6665 = vadd.f32 %v6436, %v6587
      %v6666 = vadd.f32 %v6437, %v6590
      %v6667 = vadd.f32 %v6438, %v6592
      %v6668 = vadd.f32 %v6439, %v6595
      %v6669 = vadd.f32 %v6440, %v6597
      %v6670 = vadd.f32 %v6441, %v6600
      %v6671 = vadd.f32 %v6442, %v6602
      %v6672 = vadd.f32 %v6443, %v6605
      %v6673 = vadd.f32 %v6444, %v6607
      %v6674 = vadd.f32 %v6445, %v6610
      %v6675 = vadd.f32 %v6446, %v6612
      %v6676 = vadd.f32 %v6447, %v6615
      %v6677 = vadd.f32 %v6448, %v6617
      %v6678 = vadd.f32 %v6449, %v6620
      %v6679 = vadd.f32 %v6450, %v6622
      %v6680 = vadd.f32 %v6451, %v6625
      %v6681 = vadd.f32 %v6452, %v6627
      %v6682 = vadd.f32 %v6453, %v6630
      %v6683 = vadd.f32 %v6454, %v6632
      %v6684 = vadd.f32 %v6455, %v6635
      %v6685 = vadd.f32 %v6456, %v6637
      %v6686 = vadd.f32 %v6457, %v6640
      %v6687 = vadd.f32 %v6458, %v6642
      %v6688 = vadd.f32 %v6459, %v6645
      %v6689 = vadd.f32 %v6460, %v6647
      %v6690 = vadd.f32 %v6461, %v6650
      %v6691 = vadd.f32 %v6462, %v6652
      %v6692 = vadd.f32 %v6463, %v6655
      %v6693 = vadd.f32 %v6464, %v6657
      %v6694 = vadd.f32 %v6465, %v6660
      %v6695 = vadd.f32 %v6466, %v6662
      %v6696 = vld [vmem:[%s6237 + $0x2] sm:$0xff]
      %v6697 = vld [vmem:[%s6237 + $0xa] sm:$0xff]
      %v6698 = vld [vmem:[%s6237 + $0x1a] sm:$0xff]
      %v6699 = vld [vmem:[%s6237 + $0x22] sm:$0xff]
      %v6700 = vld [vmem:[%s6237 + $0x32] sm:$0xff]
      %v6701 = vld [vmem:[%s6237 + $0x3a] sm:$0xff]
      %v6702 = vld [vmem:[%s6237 + $0x4a] sm:$0xff]
      %v6703 = vld [vmem:[%s6237 + $0x52] sm:$0xff]
      %v6704 = vld [vmem:[%s6237 + $0x62] sm:$0xff]
      %v6705 = vld [vmem:[%s6237 + $0x6a] sm:$0xff]
      %v6706 = vld [vmem:[%s6237 + $0x7a] sm:$0xff]
      %v6707 = vld [vmem:[%s6237 + $0x82] sm:$0xff]
      %v6708 = vld [vmem:[%s6237 + $0x92] sm:$0xff]
      %v6709 = vld [vmem:[%s6237 + $0x9a] sm:$0xff]
      %v6710 = vld [vmem:[%s6237 + $0xaa] sm:$0xff]
      %v6711 = vld [vmem:[%s6237 + $0xb2] sm:$0xff]
      %v6712 = vld [vmem:[%s6237 + $0xc2] sm:$0xff]
      %v6713 = vld [vmem:[%s6237 + $0xca] sm:$0xff]
      %v6714 = vld [vmem:[%s6237 + $0xda] sm:$0xff]
      %v6715 = vld [vmem:[%s6237 + $0xe2] sm:$0xff]
      %v6716 = vld [vmem:[%s6237 + $0xf2] sm:$0xff]
      %v6717 = vld [vmem:[%s6237 + $0xfa] sm:$0xff]
      %v6718 = vld [vmem:[%s6237 + $0x10a] sm:$0xff]
      %v6719 = vld [vmem:[%s6237 + $0x112] sm:$0xff]
      %v6720 = vld [vmem:[%s6237 + $0x122] sm:$0xff]
      %v6721 = vld [vmem:[%s6237 + $0x12a] sm:$0xff]
      %v6722 = vld [vmem:[%s6237 + $0x13a] sm:$0xff]
      %v6723 = vld [vmem:[%s6237 + $0x142] sm:$0xff]
      %v6724 = vld [vmem:[%s6237 + $0x152] sm:$0xff]
      %v6725 = vld [vmem:[%s6237 + $0x15a] sm:$0xff]
      %v6726 = vld [vmem:[%s6237 + $0x16a] sm:$0xff]
      %v6727 = vld [vmem:[%s6237 + $0x172] sm:$0xff]
      %v6728 = vpack.c.bf16 %v6697, %v6696
      %v6729 = vpack.c.bf16 %v6699, %v6698
      %v6730 = vpack.c.bf16 %v6701, %v6700
      %v6731 = vpack.c.bf16 %v6703, %v6702
      %v6732 = vpack.c.bf16 %v6705, %v6704
      %v6733 = vpack.c.bf16 %v6707, %v6706
      %v6734 = vpack.c.bf16 %v6709, %v6708
      %v6735 = vpack.c.bf16 %v6711, %v6710
      %v6736 = vpack.c.bf16 %v6713, %v6712
      %v6737 = vpack.c.bf16 %v6715, %v6714
      %v6738 = vpack.c.bf16 %v6717, %v6716
      %v6739 = vpack.c.bf16 %v6719, %v6718
      %v6740 = vpack.c.bf16 %v6721, %v6720
      %v6741 = vpack.c.bf16 %v6723, %v6722
      %v6742 = vpack.c.bf16 %v6725, %v6724
      %v6743 = vpack.c.bf16 %v6727, %v6726
      %v6748 = vunpack.c.l.b16 %v4923
      %v6749 = vunpack.c.l.b16 %v4924
      %v6750 = vunpack.c.l.b16 %v4925
      %v6751 = vunpack.c.l.b16 %v4926
      %v6752 = vpack.c.b16 %v6749, %v6748
      %v6753 = vpack.c.b16 %v6751, %v6750
      %v6757 = vsel %vm2481, %v6728, 0
      %v6760 = vsel %vm2481, %v6729, 0
      %v6763 = vsel %vm2481, %v6730, 0
      %v6766 = vsel %vm2481, %v6731, 0
      %v6769 = vsel %vm2481, %v6732, 0
      %v6772 = vsel %vm2481, %v6733, 0
      %v6775 = vsel %vm2481, %v6734, 0
      %v6778 = vsel %vm2481, %v6735, 0
      %v6781 = vsel %vm2481, %v6736, 0
      %v6784 = vsel %vm2481, %v6737, 0
      %v6787 = vsel %vm2481, %v6738, 0
      %v6790 = vsel %vm2481, %v6739, 0
      %v6793 = vsel %vm2481, %v6740, 0
      %v6796 = vsel %vm2481, %v6741, 0
      %v6799 = vsel %vm2481, %v6742, 0
      %v6802 = vsel %vm2481, %v6743, 0
      %6804 = vmatpush.bf16.msra.mxu0 0
      %6805 = vmatpush.bf16.msra.mxu0 0
      %6806 = vmatpush.bf16.msra.mxu0 0
      %6807 = vmatpush.bf16.msra.mxu0 0
      %6808 = vmatpush.bf16.msra.mxu0 0
      %6809 = vmatpush.bf16.msra.mxu0 0
      %6810 = vmatpush.bf16.msra.mxu0 %v6753
      %6811 = vmatpush.bf16.msra.mxu0 %v6752
      %6812 = vmatmul.bf16.gmra.mxu0 %v6757
      %v6813 = vpop.f32.mrf.mxu0
      %v6814 = vadd.f32 0.0, %v6813
      %v6815 = vpop.f32.mrf.mxu0
      %v6816 = vadd.f32 0.0, %v6815
      %6817 = vmatmul.bf16.gmra.mxu0 %v6760
      %v6818 = vpop.f32.mrf.mxu0
      %v6819 = vadd.f32 0.0, %v6818
      %v6820 = vpop.f32.mrf.mxu0
      %v6821 = vadd.f32 0.0, %v6820
      %6822 = vmatmul.bf16.gmra.mxu0 %v6763
      %v6823 = vpop.f32.mrf.mxu0
      %v6824 = vadd.f32 0.0, %v6823
      %v6825 = vpop.f32.mrf.mxu0
      %v6826 = vadd.f32 0.0, %v6825
      %6827 = vmatmul.bf16.gmra.mxu0 %v6766
      %v6828 = vpop.f32.mrf.mxu0
      %v6829 = vadd.f32 0.0, %v6828
      %v6830 = vpop.f32.mrf.mxu0
      %v6831 = vadd.f32 0.0, %v6830
      %6832 = vmatmul.bf16.gmra.mxu0 %v6769
      %v6833 = vpop.f32.mrf.mxu0
      %v6834 = vadd.f32 0.0, %v6833
      %v6835 = vpop.f32.mrf.mxu0
      %v6836 = vadd.f32 0.0, %v6835
      %6837 = vmatmul.bf16.gmra.mxu0 %v6772
      %v6838 = vpop.f32.mrf.mxu0
      %v6839 = vadd.f32 0.0, %v6838
      %v6840 = vpop.f32.mrf.mxu0
      %v6841 = vadd.f32 0.0, %v6840
      %6842 = vmatmul.bf16.gmra.mxu0 %v6775
      %v6843 = vpop.f32.mrf.mxu0
      %v6844 = vadd.f32 0.0, %v6843
      %v6845 = vpop.f32.mrf.mxu0
      %v6846 = vadd.f32 0.0, %v6845
      %6847 = vmatmul.bf16.gmra.mxu0 %v6778
      %v6848 = vpop.f32.mrf.mxu0
      %v6849 = vadd.f32 0.0, %v6848
      %v6850 = vpop.f32.mrf.mxu0
      %v6851 = vadd.f32 0.0, %v6850
      %6852 = vmatmul.bf16.gmra.mxu0 %v6781
      %v6853 = vpop.f32.mrf.mxu0
      %v6854 = vadd.f32 0.0, %v6853
      %v6855 = vpop.f32.mrf.mxu0
      %v6856 = vadd.f32 0.0, %v6855
      %6857 = vmatmul.bf16.gmra.mxu0 %v6784
      %v6858 = vpop.f32.mrf.mxu0
      %v6859 = vadd.f32 0.0, %v6858
      %v6860 = vpop.f32.mrf.mxu0
      %v6861 = vadd.f32 0.0, %v6860
      %6862 = vmatmul.bf16.gmra.mxu0 %v6787
      %v6863 = vpop.f32.mrf.mxu0
      %v6864 = vadd.f32 0.0, %v6863
      %v6865 = vpop.f32.mrf.mxu0
      %v6866 = vadd.f32 0.0, %v6865
      %6867 = vmatmul.bf16.gmra.mxu0 %v6790
      %v6868 = vpop.f32.mrf.mxu0
      %v6869 = vadd.f32 0.0, %v6868
      %v6870 = vpop.f32.mrf.mxu0
      %v6871 = vadd.f32 0.0, %v6870
      %6872 = vmatmul.bf16.gmra.mxu0 %v6793
      %v6873 = vpop.f32.mrf.mxu0
      %v6874 = vadd.f32 0.0, %v6873
      %v6875 = vpop.f32.mrf.mxu0
      %v6876 = vadd.f32 0.0, %v6875
      %6877 = vmatmul.bf16.gmra.mxu0 %v6796
      %v6878 = vpop.f32.mrf.mxu0
      %v6879 = vadd.f32 0.0, %v6878
      %v6880 = vpop.f32.mrf.mxu0
      %v6881 = vadd.f32 0.0, %v6880
      %6882 = vmatmul.bf16.gmra.mxu0 %v6799
      %v6883 = vpop.f32.mrf.mxu0
      %v6884 = vadd.f32 0.0, %v6883
      %v6885 = vpop.f32.mrf.mxu0
      %v6886 = vadd.f32 0.0, %v6885
      %6887 = vmatmul.bf16.gmra.mxu0 %v6802
      %v6888 = vpop.f32.mrf.mxu0
      %v6889 = vadd.f32 0.0, %v6888
      %v6890 = vpop.f32.mrf.mxu0
      %v6891 = vadd.f32 0.0, %v6890
      %6892 = vdwg.mxu0
      %v6893 = vadd.f32 %v6664, %v6814
      %v6894 = vadd.f32 %v6665, %v6816
      %v6895 = vadd.f32 %v6666, %v6819
      %v6896 = vadd.f32 %v6667, %v6821
      %v6897 = vadd.f32 %v6668, %v6824
      %v6898 = vadd.f32 %v6669, %v6826
      %v6899 = vadd.f32 %v6670, %v6829
      %v6900 = vadd.f32 %v6671, %v6831
      %v6901 = vadd.f32 %v6672, %v6834
      %v6902 = vadd.f32 %v6673, %v6836
      %v6903 = vadd.f32 %v6674, %v6839
      %v6904 = vadd.f32 %v6675, %v6841
      %v6905 = vadd.f32 %v6676, %v6844
      %v6906 = vadd.f32 %v6677, %v6846
      %v6907 = vadd.f32 %v6678, %v6849
      %v6908 = vadd.f32 %v6679, %v6851
      %v6909 = vadd.f32 %v6680, %v6854
      %v6910 = vadd.f32 %v6681, %v6856
      %v6911 = vadd.f32 %v6682, %v6859
      %v6912 = vadd.f32 %v6683, %v6861
      %v6913 = vadd.f32 %v6684, %v6864
      %v6914 = vadd.f32 %v6685, %v6866
      %v6915 = vadd.f32 %v6686, %v6869
      %v6916 = vadd.f32 %v6687, %v6871
      %v6917 = vadd.f32 %v6688, %v6874
      %v6918 = vadd.f32 %v6689, %v6876
      %v6919 = vadd.f32 %v6690, %v6879
      %v6920 = vadd.f32 %v6691, %v6881
      %v6921 = vadd.f32 %v6692, %v6884
      %v6922 = vadd.f32 %v6693, %v6886
      %v6923 = vadd.f32 %v6694, %v6889
      %v6924 = vadd.f32 %v6695, %v6891
      %v6925 = vld [vmem:[%s8] sm:$0x1]
      %v6927 = vperm.slane %v6925, 0
      %v6929 = vmul.f32 %v6893, %v6927
      %v6930 = vmul.f32 %v6894, %v6927
      %v6931 = vmul.f32 %v6895, %v6927
      %v6932 = vmul.f32 %v6896, %v6927
      %v6933 = vmul.f32 %v6897, %v6927
      %v6934 = vmul.f32 %v6898, %v6927
      %v6935 = vmul.f32 %v6899, %v6927
      %v6936 = vmul.f32 %v6900, %v6927
      %v6937 = vmul.f32 %v6901, %v6927
      %v6938 = vmul.f32 %v6902, %v6927
      %v6939 = vmul.f32 %v6903, %v6927
      %v6940 = vmul.f32 %v6904, %v6927
      %v6941 = vmul.f32 %v6905, %v6927
      %v6942 = vmul.f32 %v6906, %v6927
      %v6943 = vmul.f32 %v6907, %v6927
      %v6944 = vmul.f32 %v6908, %v6927
      %v6945 = vmul.f32 %v6909, %v6927
      %v6946 = vmul.f32 %v6910, %v6927
      %v6947 = vmul.f32 %v6911, %v6927
      %v6948 = vmul.f32 %v6912, %v6927
      %v6949 = vmul.f32 %v6913, %v6927
      %v6950 = vmul.f32 %v6914, %v6927
      %v6951 = vmul.f32 %v6915, %v6927
      %v6952 = vmul.f32 %v6916, %v6927
      %v6953 = vmul.f32 %v6917, %v6927
      %v6954 = vmul.f32 %v6918, %v6927
      %v6955 = vmul.f32 %v6919, %v6927
      %v6956 = vmul.f32 %v6920, %v6927
      %v6957 = vmul.f32 %v6921, %v6927
      %v6958 = vmul.f32 %v6922, %v6927
      %v6959 = vmul.f32 %v6923, %v6927
      %v6960 = vmul.f32 %v6924, %v6927
      %v6961 = vld [vmem:[%s9] sm:$0x1]
      %v6963 = vperm.slane %v6961, 0
      %v6965 = vadd.f32 %v6929, %v6963
      %v6966 = vadd.f32 %v6930, %v6963
      %v6967 = vadd.f32 %v6931, %v6963
      %v6968 = vadd.f32 %v6932, %v6963
      %v6969 = vadd.f32 %v6933, %v6963
      %v6970 = vadd.f32 %v6934, %v6963
      %v6971 = vadd.f32 %v6935, %v6963
      %v6972 = vadd.f32 %v6936, %v6963
      %v6973 = vadd.f32 %v6937, %v6963
      %v6974 = vadd.f32 %v6938, %v6963
      %v6975 = vadd.f32 %v6939, %v6963
      %v6976 = vadd.f32 %v6940, %v6963
      %v6977 = vadd.f32 %v6941, %v6963
      %v6978 = vadd.f32 %v6942, %v6963
      %v6979 = vadd.f32 %v6943, %v6963
      %v6980 = vadd.f32 %v6944, %v6963
      %v6981 = vadd.f32 %v6945, %v6963
      %v6982 = vadd.f32 %v6946, %v6963
      %v6983 = vadd.f32 %v6947, %v6963
      %v6984 = vadd.f32 %v6948, %v6963
      %v6985 = vadd.f32 %v6949, %v6963
      %v6986 = vadd.f32 %v6950, %v6963
      %v6987 = vadd.f32 %v6951, %v6963
      %v6988 = vadd.f32 %v6952, %v6963
      %v6989 = vadd.f32 %v6953, %v6963
      %v6990 = vadd.f32 %v6954, %v6963
      %v6991 = vadd.f32 %v6955, %v6963
      %v6992 = vadd.f32 %v6956, %v6963
      %v6993 = vadd.f32 %v6957, %v6963
      %v6994 = vadd.f32 %v6958, %v6963
      %v6995 = vadd.f32 %v6959, %v6963
      %v6996 = vadd.f32 %v6960, %v6963
      %v6997 = vsel %vm361, %v6965, -inf
      %6998 = vmax.xlane.f32.xlu0 %v6997
      %v6999 = vpop.xlane.xlu0 %6998
      %v7000 = vsel %vm361, %v6966, -inf
      %7001 = vmax.xlane.f32.xlu0 %v7000
      %v7002 = vpop.xlane.xlu0 %7001
      %v7003 = vsel %vm361, %v6967, -inf
      %7004 = vmax.xlane.f32.xlu0 %v7003
      %v7005 = vpop.xlane.xlu0 %7004
      %v7006 = vsel %vm361, %v6968, -inf
      %7007 = vmax.xlane.f32.xlu0 %v7006
      %v7008 = vpop.xlane.xlu0 %7007
      %v7009 = vsel %vm361, %v6969, -inf
      %7010 = vmax.xlane.f32.xlu0 %v7009
      %v7011 = vpop.xlane.xlu0 %7010
      %v7012 = vsel %vm361, %v6970, -inf
      %7013 = vmax.xlane.f32.xlu0 %v7012
      %v7014 = vpop.xlane.xlu0 %7013
      %v7015 = vsel %vm361, %v6971, -inf
      %7016 = vmax.xlane.f32.xlu0 %v7015
      %v7017 = vpop.xlane.xlu0 %7016
      %v7018 = vsel %vm361, %v6972, -inf
      %7019 = vmax.xlane.f32.xlu0 %v7018
      %v7020 = vpop.xlane.xlu0 %7019
      %v7021 = vsel %vm361, %v6973, -inf
      %7022 = vmax.xlane.f32.xlu0 %v7021
      %v7023 = vpop.xlane.xlu0 %7022
      %v7024 = vsel %vm361, %v6974, -inf
      %7025 = vmax.xlane.f32.xlu0 %v7024
      %v7026 = vpop.xlane.xlu0 %7025
      %v7027 = vsel %vm361, %v6975, -inf
      %7028 = vmax.xlane.f32.xlu0 %v7027
      %v7029 = vpop.xlane.xlu0 %7028
      %v7030 = vsel %vm361, %v6976, -inf
      %7031 = vmax.xlane.f32.xlu0 %v7030
      %v7032 = vpop.xlane.xlu0 %7031
      %v7033 = vsel %vm361, %v6977, -inf
      %7034 = vmax.xlane.f32.xlu0 %v7033
      %v7035 = vpop.xlane.xlu0 %7034
      %v7036 = vsel %vm361, %v6978, -inf
      %7037 = vmax.xlane.f32.xlu0 %v7036
      %v7038 = vpop.xlane.xlu0 %7037
      %v7039 = vsel %vm361, %v6979, -inf
      %7040 = vmax.xlane.f32.xlu0 %v7039
      %v7041 = vpop.xlane.xlu0 %7040
      %v7042 = vsel %vm361, %v6980, -inf
      %7043 = vmax.xlane.f32.xlu0 %v7042
      %v7044 = vpop.xlane.xlu0 %7043
      %v7045 = vsel %vm361, %v6981, -inf
      %7046 = vmax.xlane.f32.xlu0 %v7045
      %v7047 = vpop.xlane.xlu0 %7046
      %v7048 = vsel %vm361, %v6982, -inf
      %7049 = vmax.xlane.f32.xlu0 %v7048
      %v7050 = vpop.xlane.xlu0 %7049
      %v7051 = vsel %vm361, %v6983, -inf
      %7052 = vmax.xlane.f32.xlu0 %v7051
      %v7053 = vpop.xlane.xlu0 %7052
      %v7054 = vsel %vm361, %v6984, -inf
      %7055 = vmax.xlane.f32.xlu0 %v7054
      %v7056 = vpop.xlane.xlu0 %7055
      %v7057 = vsel %vm361, %v6985, -inf
      %7058 = vmax.xlane.f32.xlu0 %v7057
      %v7059 = vpop.xlane.xlu0 %7058
      %v7060 = vsel %vm361, %v6986, -inf
      %7061 = vmax.xlane.f32.xlu0 %v7060
      %v7062 = vpop.xlane.xlu0 %7061
      %v7063 = vsel %vm361, %v6987, -inf
      %7064 = vmax.xlane.f32.xlu0 %v7063
      %v7065 = vpop.xlane.xlu0 %7064
      %v7066 = vsel %vm361, %v6988, -inf
      %7067 = vmax.xlane.f32.xlu0 %v7066
      %v7068 = vpop.xlane.xlu0 %7067
      %v7069 = vsel %vm361, %v6989, -inf
      %7070 = vmax.xlane.f32.xlu0 %v7069
      %v7071 = vpop.xlane.xlu0 %7070
      %v7072 = vsel %vm361, %v6990, -inf
      %7073 = vmax.xlane.f32.xlu0 %v7072
      %v7074 = vpop.xlane.xlu0 %7073
      %v7075 = vsel %vm361, %v6991, -inf
      %7076 = vmax.xlane.f32.xlu0 %v7075
      %v7077 = vpop.xlane.xlu0 %7076
      %v7078 = vsel %vm361, %v6992, -inf
      %7079 = vmax.xlane.f32.xlu0 %v7078
      %v7080 = vpop.xlane.xlu0 %7079
      %v7081 = vsel %vm361, %v6993, -inf
      %7082 = vmax.xlane.f32.xlu0 %v7081
      %v7083 = vpop.xlane.xlu0 %7082
      %v7084 = vsel %vm361, %v6994, -inf
      %7085 = vmax.xlane.f32.xlu0 %v7084
      %v7086 = vpop.xlane.xlu0 %7085
      %v7087 = vsel %vm361, %v6995, -inf
      %7088 = vmax.xlane.f32.xlu0 %v7087
      %v7089 = vpop.xlane.xlu0 %7088
      %v7090 = vsel %vm361, %v6996, -inf
      %7091 = vmax.xlane.f32.xlu0 %v7090
      %v7092 = vpop.xlane.xlu0 %7091
      %v7093 = vsub.f32 %v6965, %v6999
      %v7094 = vsub.f32 %v6966, %v7002
      %v7095 = vsub.f32 %v6967, %v7005
      %v7096 = vsub.f32 %v6968, %v7008
      %v7097 = vsub.f32 %v6969, %v7011
      %v7098 = vsub.f32 %v6970, %v7014
      %v7099 = vsub.f32 %v6971, %v7017
      %v7100 = vsub.f32 %v6972, %v7020
      %v7101 = vsub.f32 %v6973, %v7023
      %v7102 = vsub.f32 %v6974, %v7026
      %v7103 = vsub.f32 %v6975, %v7029
      %v7104 = vsub.f32 %v6976, %v7032
      %v7105 = vsub.f32 %v6977, %v7035
      %v7106 = vsub.f32 %v6978, %v7038
      %v7107 = vsub.f32 %v6979, %v7041
      %v7108 = vsub.f32 %v6980, %v7044
      %v7109 = vsub.f32 %v6981, %v7047
      %v7110 = vsub.f32 %v6982, %v7050
      %v7111 = vsub.f32 %v6983, %v7053
      %v7112 = vsub.f32 %v6984, %v7056
      %v7113 = vsub.f32 %v6985, %v7059
      %v7114 = vsub.f32 %v6986, %v7062
      %v7115 = vsub.f32 %v6987, %v7065
      %v7116 = vsub.f32 %v6988, %v7068
      %v7117 = vsub.f32 %v6989, %v7071
      %v7118 = vsub.f32 %v6990, %v7074
      %v7119 = vsub.f32 %v6991, %v7077
      %v7120 = vsub.f32 %v6992, %v7080
      %v7121 = vsub.f32 %v6993, %v7083
      %v7122 = vsub.f32 %v6994, %v7086
      %v7123 = vsub.f32 %v6995, %v7089
      %v7124 = vsub.f32 %v6996, %v7092
      %v7125 = vmul.f32 %v7093, 1.442695
      %v7126 = vpow.pop %v7125
      %v7127 = vmul.f32 %v7094, 1.442695
      %v7128 = vpow.pop %v7127
      %v7129 = vmul.f32 %v7095, 1.442695
      %v7130 = vpow.pop %v7129
      %v7131 = vmul.f32 %v7096, 1.442695
      %v7132 = vpow.pop %v7131
      %v7133 = vmul.f32 %v7097, 1.442695
      %v7134 = vpow.pop %v7133
      %v7135 = vmul.f32 %v7098, 1.442695
      %v7136 = vpow.pop %v7135
      %v7137 = vmul.f32 %v7099, 1.442695
      %v7138 = vpow.pop %v7137
      %v7139 = vmul.f32 %v7100, 1.442695
      %v7140 = vpow.pop %v7139
      %v7141 = vmul.f32 %v7101, 1.442695
      %v7142 = vpow.pop %v7141
      %v7143 = vmul.f32 %v7102, 1.442695
      %v7144 = vpow.pop %v7143
      %v7145 = vmul.f32 %v7103, 1.442695
      %v7146 = vpow.pop %v7145
      %v7147 = vmul.f32 %v7104, 1.442695
      %v7148 = vpow.pop %v7147
      %v7149 = vmul.f32 %v7105, 1.442695
      %v7150 = vpow.pop %v7149
      %v7151 = vmul.f32 %v7106, 1.442695
      %v7152 = vpow.pop %v7151
      %v7153 = vmul.f32 %v7107, 1.442695
      %v7154 = vpow.pop %v7153
      %v7155 = vmul.f32 %v7108, 1.442695
      %v7156 = vpow.pop %v7155
      %v7157 = vmul.f32 %v7109, 1.442695
      %v7158 = vpow.pop %v7157
      %v7159 = vmul.f32 %v7110, 1.442695
      %v7160 = vpow.pop %v7159
      %v7161 = vmul.f32 %v7111, 1.442695
      %v7162 = vpow.pop %v7161
      %v7163 = vmul.f32 %v7112, 1.442695
      %v7164 = vpow.pop %v7163
      %v7165 = vmul.f32 %v7113, 1.442695
      %v7166 = vpow.pop %v7165
      %v7167 = vmul.f32 %v7114, 1.442695
      %v7168 = vpow.pop %v7167
      %v7169 = vmul.f32 %v7115, 1.442695
      %v7170 = vpow.pop %v7169
      %v7171 = vmul.f32 %v7116, 1.442695
      %v7172 = vpow.pop %v7171
      %v7173 = vmul.f32 %v7117, 1.442695
      %v7174 = vpow.pop %v7173
      %v7175 = vmul.f32 %v7118, 1.442695
      %v7176 = vpow.pop %v7175
      %v7177 = vmul.f32 %v7119, 1.442695
      %v7178 = vpow.pop %v7177
      %v7179 = vmul.f32 %v7120, 1.442695
      %v7180 = vpow.pop %v7179
      %v7181 = vmul.f32 %v7121, 1.442695
      %v7182 = vpow.pop %v7181
      %v7183 = vmul.f32 %v7122, 1.442695
      %v7184 = vpow.pop %v7183
      %v7185 = vmul.f32 %v7123, 1.442695
      %v7186 = vpow.pop %v7185
      %v7187 = vmul.f32 %v7124, 1.442695
      %v7188 = vpow.pop %v7187
      %v7189 = vsel %vm361, %v7126, 0.0
      %7190 = vadd.xlane.f32.xlu0 %v7189
      %v7191 = vpop.xlane.xlu0 %7190
      %v7192 = vsel %vm361, %v7128, 0.0
      %7193 = vadd.xlane.f32.xlu0 %v7192
      %v7194 = vpop.xlane.xlu0 %7193
      %v7195 = vsel %vm361, %v7130, 0.0
      %7196 = vadd.xlane.f32.xlu0 %v7195
      %v7197 = vpop.xlane.xlu0 %7196
      %v7198 = vsel %vm361, %v7132, 0.0
      %7199 = vadd.xlane.f32.xlu0 %v7198
      %v7200 = vpop.xlane.xlu0 %7199
      %v7201 = vsel %vm361, %v7134, 0.0
      %7202 = vadd.xlane.f32.xlu0 %v7201
      %v7203 = vpop.xlane.xlu0 %7202
      %v7204 = vsel %vm361, %v7136, 0.0
      %7205 = vadd.xlane.f32.xlu0 %v7204
      %v7206 = vpop.xlane.xlu0 %7205
      %v7207 = vsel %vm361, %v7138, 0.0
      %7208 = vadd.xlane.f32.xlu0 %v7207
      %v7209 = vpop.xlane.xlu0 %7208
      %v7210 = vsel %vm361, %v7140, 0.0
      %7211 = vadd.xlane.f32.xlu0 %v7210
      %v7212 = vpop.xlane.xlu0 %7211
      %v7213 = vsel %vm361, %v7142, 0.0
      %7214 = vadd.xlane.f32.xlu0 %v7213
      %v7215 = vpop.xlane.xlu0 %7214
      %v7216 = vsel %vm361, %v7144, 0.0
      %7217 = vadd.xlane.f32.xlu0 %v7216
      %v7218 = vpop.xlane.xlu0 %7217
      %v7219 = vsel %vm361, %v7146, 0.0
      %7220 = vadd.xlane.f32.xlu0 %v7219
      %v7221 = vpop.xlane.xlu0 %7220
      %v7222 = vsel %vm361, %v7148, 0.0
      %7223 = vadd.xlane.f32.xlu0 %v7222
      %v7224 = vpop.xlane.xlu0 %7223
      %v7225 = vsel %vm361, %v7150, 0.0
      %7226 = vadd.xlane.f32.xlu0 %v7225
      %v7227 = vpop.xlane.xlu0 %7226
      %v7228 = vsel %vm361, %v7152, 0.0
      %7229 = vadd.xlane.f32.xlu0 %v7228
      %v7230 = vpop.xlane.xlu0 %7229
      %v7231 = vsel %vm361, %v7154, 0.0
      %7232 = vadd.xlane.f32.xlu0 %v7231
      %v7233 = vpop.xlane.xlu0 %7232
      %v7234 = vsel %vm361, %v7156, 0.0
      %7235 = vadd.xlane.f32.xlu0 %v7234
      %v7236 = vpop.xlane.xlu0 %7235
      %v7237 = vsel %vm361, %v7158, 0.0
      %7238 = vadd.xlane.f32.xlu0 %v7237
      %v7239 = vpop.xlane.xlu0 %7238
      %v7240 = vsel %vm361, %v7160, 0.0
      %7241 = vadd.xlane.f32.xlu0 %v7240
      %v7242 = vpop.xlane.xlu0 %7241
      %v7243 = vsel %vm361, %v7162, 0.0
      %7244 = vadd.xlane.f32.xlu0 %v7243
      %v7245 = vpop.xlane.xlu0 %7244
      %v7246 = vsel %vm361, %v7164, 0.0
      %7247 = vadd.xlane.f32.xlu0 %v7246
      %v7248 = vpop.xlane.xlu0 %7247
      %v7249 = vsel %vm361, %v7166, 0.0
      %7250 = vadd.xlane.f32.xlu0 %v7249
      %v7251 = vpop.xlane.xlu0 %7250
      %v7252 = vsel %vm361, %v7168, 0.0
      %7253 = vadd.xlane.f32.xlu0 %v7252
      %v7254 = vpop.xlane.xlu0 %7253
      %v7255 = vsel %vm361, %v7170, 0.0
      %7256 = vadd.xlane.f32.xlu0 %v7255
      %v7257 = vpop.xlane.xlu0 %7256
      %v7258 = vsel %vm361, %v7172, 0.0
      %7259 = vadd.xlane.f32.xlu0 %v7258
      %v7260 = vpop.xlane.xlu0 %7259
      %v7261 = vsel %vm361, %v7174, 0.0
      %7262 = vadd.xlane.f32.xlu0 %v7261
      %v7263 = vpop.xlane.xlu0 %7262
      %v7264 = vsel %vm361, %v7176, 0.0
      %7265 = vadd.xlane.f32.xlu0 %v7264
      %v7266 = vpop.xlane.xlu0 %7265
      %v7267 = vsel %vm361, %v7178, 0.0
      %7268 = vadd.xlane.f32.xlu0 %v7267
      %v7269 = vpop.xlane.xlu0 %7268
      %v7270 = vsel %vm361, %v7180, 0.0
      %7271 = vadd.xlane.f32.xlu0 %v7270
      %v7272 = vpop.xlane.xlu0 %7271
      %v7273 = vsel %vm361, %v7182, 0.0
      %7274 = vadd.xlane.f32.xlu0 %v7273
      %v7275 = vpop.xlane.xlu0 %7274
      %v7276 = vsel %vm361, %v7184, 0.0
      %7277 = vadd.xlane.f32.xlu0 %v7276
      %v7278 = vpop.xlane.xlu0 %7277
      %v7279 = vsel %vm361, %v7186, 0.0
      %7280 = vadd.xlane.f32.xlu0 %v7279
      %v7281 = vpop.xlane.xlu0 %7280
      %v7282 = vsel %vm361, %v7188, 0.0
      %7283 = vadd.xlane.f32.xlu0 %v7282
      %v7284 = vpop.xlane.xlu0 %7283
      %v7285 = vrcp.pop %v7191
      %v7286 = vmul.f32 %v7191, %v7285
      %v7287 = vsub.f32 1.0, %v7286
      %v7288 = vmul.f32 %v7285, %v7287
      %v7289 = vadd.f32 %v7285, %v7288
      %vm7290 = vweird.f32 %v7191
      %vm7291 = vweird.f32 %v7285
      %vm7292 = vmor %vm7290, %vm7291
      %v7293 = vsel %vm7292, %v7285, %v7289
      %v7294 = vand.u32 2147483647, %v7191
      %vm7295 = vcmp.eq.f32.partialorder %v7294, 8.507059e+37
      %v7296 = vand.u32 %v7191, 2147483648
      %v7297 = vor.u32 1.1754944e-38, %v7296
      %v7298 = vsel %vm7295, %v7297, %v7293
      %v7299 = vmul.f32 %v7126, %v7298
      %v7300 = vrcp.pop %v7194
      %v7301 = vmul.f32 %v7194, %v7300
      %v7302 = vsub.f32 1.0, %v7301
      %v7303 = vmul.f32 %v7300, %v7302
      %v7304 = vadd.f32 %v7300, %v7303
      %vm7305 = vweird.f32 %v7194
      %vm7306 = vweird.f32 %v7300
      %vm7307 = vmor %vm7305, %vm7306
      %v7308 = vsel %vm7307, %v7300, %v7304
      %v7309 = vand.u32 2147483647, %v7194
      %vm7310 = vcmp.eq.f32.partialorder %v7309, 8.507059e+37
      %v7311 = vand.u32 %v7194, 2147483648
      %v7312 = vor.u32 1.1754944e-38, %v7311
      %v7313 = vsel %vm7310, %v7312, %v7308
      %v7314 = vmul.f32 %v7128, %v7313
      %v7315 = vrcp.pop %v7197
      %v7316 = vmul.f32 %v7197, %v7315
      %v7317 = vsub.f32 1.0, %v7316
      %v7318 = vmul.f32 %v7315, %v7317
      %v7319 = vadd.f32 %v7315, %v7318
      %vm7320 = vweird.f32 %v7197
      %vm7321 = vweird.f32 %v7315
      %vm7322 = vmor %vm7320, %vm7321
      %v7323 = vsel %vm7322, %v7315, %v7319
      %v7324 = vand.u32 2147483647, %v7197
      %vm7325 = vcmp.eq.f32.partialorder %v7324, 8.507059e+37
      %v7326 = vand.u32 %v7197, 2147483648
      %v7327 = vor.u32 1.1754944e-38, %v7326
      %v7328 = vsel %vm7325, %v7327, %v7323
      %v7329 = vmul.f32 %v7130, %v7328
      %v7330 = vrcp.pop %v7200
      %v7331 = vmul.f32 %v7200, %v7330
      %v7332 = vsub.f32 1.0, %v7331
      %v7333 = vmul.f32 %v7330, %v7332
      %v7334 = vadd.f32 %v7330, %v7333
      %vm7335 = vweird.f32 %v7200
      %vm7336 = vweird.f32 %v7330
      %vm7337 = vmor %vm7335, %vm7336
      %v7338 = vsel %vm7337, %v7330, %v7334
      %v7339 = vand.u32 2147483647, %v7200
      %vm7340 = vcmp.eq.f32.partialorder %v7339, 8.507059e+37
      %v7341 = vand.u32 %v7200, 2147483648
      %v7342 = vor.u32 1.1754944e-38, %v7341
      %v7343 = vsel %vm7340, %v7342, %v7338
      %v7344 = vmul.f32 %v7132, %v7343
      %v7345 = vrcp.pop %v7203
      %v7346 = vmul.f32 %v7203, %v7345
      %v7347 = vsub.f32 1.0, %v7346
      %v7348 = vmul.f32 %v7345, %v7347
      %v7349 = vadd.f32 %v7345, %v7348
      %vm7350 = vweird.f32 %v7203
      %vm7351 = vweird.f32 %v7345
      %vm7352 = vmor %vm7350, %vm7351
      %v7353 = vsel %vm7352, %v7345, %v7349
      %v7354 = vand.u32 2147483647, %v7203
      %vm7355 = vcmp.eq.f32.partialorder %v7354, 8.507059e+37
      %v7356 = vand.u32 %v7203, 2147483648
      %v7357 = vor.u32 1.1754944e-38, %v7356
      %v7358 = vsel %vm7355, %v7357, %v7353
      %v7359 = vmul.f32 %v7134, %v7358
      %v7360 = vrcp.pop %v7206
      %v7361 = vmul.f32 %v7206, %v7360
      %v7362 = vsub.f32 1.0, %v7361
      %v7363 = vmul.f32 %v7360, %v7362
      %v7364 = vadd.f32 %v7360, %v7363
      %vm7365 = vweird.f32 %v7206
      %vm7366 = vweird.f32 %v7360
      %vm7367 = vmor %vm7365, %vm7366
      %v7368 = vsel %vm7367, %v7360, %v7364
      %v7369 = vand.u32 2147483647, %v7206
      %vm7370 = vcmp.eq.f32.partialorder %v7369, 8.507059e+37
      %v7371 = vand.u32 %v7206, 2147483648
      %v7372 = vor.u32 1.1754944e-38, %v7371
      %v7373 = vsel %vm7370, %v7372, %v7368
      %v7374 = vmul.f32 %v7136, %v7373
      %v7375 = vrcp.pop %v7209
      %v7376 = vmul.f32 %v7209, %v7375
      %v7377 = vsub.f32 1.0, %v7376
      %v7378 = vmul.f32 %v7375, %v7377
      %v7379 = vadd.f32 %v7375, %v7378
      %vm7380 = vweird.f32 %v7209
      %vm7381 = vweird.f32 %v7375
      %vm7382 = vmor %vm7380, %vm7381
      %v7383 = vsel %vm7382, %v7375, %v7379
      %v7384 = vand.u32 2147483647, %v7209
      %vm7385 = vcmp.eq.f32.partialorder %v7384, 8.507059e+37
      %v7386 = vand.u32 %v7209, 2147483648
      %v7387 = vor.u32 1.1754944e-38, %v7386
      %v7388 = vsel %vm7385, %v7387, %v7383
      %v7389 = vmul.f32 %v7138, %v7388
      %v7390 = vrcp.pop %v7212
      %v7391 = vmul.f32 %v7212, %v7390
      %v7392 = vsub.f32 1.0, %v7391
      %v7393 = vmul.f32 %v7390, %v7392
      %v7394 = vadd.f32 %v7390, %v7393
      %vm7395 = vweird.f32 %v7212
      %vm7396 = vweird.f32 %v7390
      %vm7397 = vmor %vm7395, %vm7396
      %v7398 = vsel %vm7397, %v7390, %v7394
      %v7399 = vand.u32 2147483647, %v7212
      %vm7400 = vcmp.eq.f32.partialorder %v7399, 8.507059e+37
      %v7401 = vand.u32 %v7212, 2147483648
      %v7402 = vor.u32 1.1754944e-38, %v7401
      %v7403 = vsel %vm7400, %v7402, %v7398
      %v7404 = vmul.f32 %v7140, %v7403
      %v7405 = vrcp.pop %v7215
      %v7406 = vmul.f32 %v7215, %v7405
      %v7407 = vsub.f32 1.0, %v7406
      %v7408 = vmul.f32 %v7405, %v7407
      %v7409 = vadd.f32 %v7405, %v7408
      %vm7410 = vweird.f32 %v7215
      %vm7411 = vweird.f32 %v7405
      %vm7412 = vmor %vm7410, %vm7411
      %v7413 = vsel %vm7412, %v7405, %v7409
      %v7414 = vand.u32 2147483647, %v7215
      %vm7415 = vcmp.eq.f32.partialorder %v7414, 8.507059e+37
      %v7416 = vand.u32 %v7215, 2147483648
      %v7417 = vor.u32 1.1754944e-38, %v7416
      %v7418 = vsel %vm7415, %v7417, %v7413
      %v7419 = vmul.f32 %v7142, %v7418
      %v7420 = vrcp.pop %v7218
      %v7421 = vmul.f32 %v7218, %v7420
      %v7422 = vsub.f32 1.0, %v7421
      %v7423 = vmul.f32 %v7420, %v7422
      %v7424 = vadd.f32 %v7420, %v7423
      %vm7425 = vweird.f32 %v7218
      %vm7426 = vweird.f32 %v7420
      %vm7427 = vmor %vm7425, %vm7426
      %v7428 = vsel %vm7427, %v7420, %v7424
      %v7429 = vand.u32 2147483647, %v7218
      %vm7430 = vcmp.eq.f32.partialorder %v7429, 8.507059e+37
      %v7431 = vand.u32 %v7218, 2147483648
      %v7432 = vor.u32 1.1754944e-38, %v7431
      %v7433 = vsel %vm7430, %v7432, %v7428
      %v7434 = vmul.f32 %v7144, %v7433
      %v7435 = vrcp.pop %v7221
      %v7436 = vmul.f32 %v7221, %v7435
      %v7437 = vsub.f32 1.0, %v7436
      %v7438 = vmul.f32 %v7435, %v7437
      %v7439 = vadd.f32 %v7435, %v7438
      %vm7440 = vweird.f32 %v7221
      %vm7441 = vweird.f32 %v7435
      %vm7442 = vmor %vm7440, %vm7441
      %v7443 = vsel %vm7442, %v7435, %v7439
      %v7444 = vand.u32 2147483647, %v7221
      %vm7445 = vcmp.eq.f32.partialorder %v7444, 8.507059e+37
      %v7446 = vand.u32 %v7221, 2147483648
      %v7447 = vor.u32 1.1754944e-38, %v7446
      %v7448 = vsel %vm7445, %v7447, %v7443
      %v7449 = vmul.f32 %v7146, %v7448
      %v7450 = vrcp.pop %v7224
      %v7451 = vmul.f32 %v7224, %v7450
      %v7452 = vsub.f32 1.0, %v7451
      %v7453 = vmul.f32 %v7450, %v7452
      %v7454 = vadd.f32 %v7450, %v7453
      %vm7455 = vweird.f32 %v7224
      %vm7456 = vweird.f32 %v7450
      %vm7457 = vmor %vm7455, %vm7456
      %v7458 = vsel %vm7457, %v7450, %v7454
      %v7459 = vand.u32 2147483647, %v7224
      %vm7460 = vcmp.eq.f32.partialorder %v7459, 8.507059e+37
      %v7461 = vand.u32 %v7224, 2147483648
      %v7462 = vor.u32 1.1754944e-38, %v7461
      %v7463 = vsel %vm7460, %v7462, %v7458
      %v7464 = vmul.f32 %v7148, %v7463
      %v7465 = vrcp.pop %v7227
      %v7466 = vmul.f32 %v7227, %v7465
      %v7467 = vsub.f32 1.0, %v7466
      %v7468 = vmul.f32 %v7465, %v7467
      %v7469 = vadd.f32 %v7465, %v7468
      %vm7470 = vweird.f32 %v7227
      %vm7471 = vweird.f32 %v7465
      %vm7472 = vmor %vm7470, %vm7471
      %v7473 = vsel %vm7472, %v7465, %v7469
      %v7474 = vand.u32 2147483647, %v7227
      %vm7475 = vcmp.eq.f32.partialorder %v7474, 8.507059e+37
      %v7476 = vand.u32 %v7227, 2147483648
      %v7477 = vor.u32 1.1754944e-38, %v7476
      %v7478 = vsel %vm7475, %v7477, %v7473
      %v7479 = vmul.f32 %v7150, %v7478
      %v7480 = vrcp.pop %v7230
      %v7481 = vmul.f32 %v7230, %v7480
      %v7482 = vsub.f32 1.0, %v7481
      %v7483 = vmul.f32 %v7480, %v7482
      %v7484 = vadd.f32 %v7480, %v7483
      %vm7485 = vweird.f32 %v7230
      %vm7486 = vweird.f32 %v7480
      %vm7487 = vmor %vm7485, %vm7486
      %v7488 = vsel %vm7487, %v7480, %v7484
      %v7489 = vand.u32 2147483647, %v7230
      %vm7490 = vcmp.eq.f32.partialorder %v7489, 8.507059e+37
      %v7491 = vand.u32 %v7230, 2147483648
      %v7492 = vor.u32 1.1754944e-38, %v7491
      %v7493 = vsel %vm7490, %v7492, %v7488
      %v7494 = vmul.f32 %v7152, %v7493
      %v7495 = vrcp.pop %v7233
      %v7496 = vmul.f32 %v7233, %v7495
      %v7497 = vsub.f32 1.0, %v7496
      %v7498 = vmul.f32 %v7495, %v7497
      %v7499 = vadd.f32 %v7495, %v7498
      %vm7500 = vweird.f32 %v7233
      %vm7501 = vweird.f32 %v7495
      %vm7502 = vmor %vm7500, %vm7501
      %v7503 = vsel %vm7502, %v7495, %v7499
      %v7504 = vand.u32 2147483647, %v7233
      %vm7505 = vcmp.eq.f32.partialorder %v7504, 8.507059e+37
      %v7506 = vand.u32 %v7233, 2147483648
      %v7507 = vor.u32 1.1754944e-38, %v7506
      %v7508 = vsel %vm7505, %v7507, %v7503
      %v7509 = vmul.f32 %v7154, %v7508
      %v7510 = vrcp.pop %v7236
      %v7511 = vmul.f32 %v7236, %v7510
      %v7512 = vsub.f32 1.0, %v7511
      %v7513 = vmul.f32 %v7510, %v7512
      %v7514 = vadd.f32 %v7510, %v7513
      %vm7515 = vweird.f32 %v7236
      %vm7516 = vweird.f32 %v7510
      %vm7517 = vmor %vm7515, %vm7516
      %v7518 = vsel %vm7517, %v7510, %v7514
      %v7519 = vand.u32 2147483647, %v7236
      %vm7520 = vcmp.eq.f32.partialorder %v7519, 8.507059e+37
      %v7521 = vand.u32 %v7236, 2147483648
      %v7522 = vor.u32 1.1754944e-38, %v7521
      %v7523 = vsel %vm7520, %v7522, %v7518
      %v7524 = vmul.f32 %v7156, %v7523
      %v7525 = vrcp.pop %v7239
      %v7526 = vmul.f32 %v7239, %v7525
      %v7527 = vsub.f32 1.0, %v7526
      %v7528 = vmul.f32 %v7525, %v7527
      %v7529 = vadd.f32 %v7525, %v7528
      %vm7530 = vweird.f32 %v7239
      %vm7531 = vweird.f32 %v7525
      %vm7532 = vmor %vm7530, %vm7531
      %v7533 = vsel %vm7532, %v7525, %v7529
      %v7534 = vand.u32 2147483647, %v7239
      %vm7535 = vcmp.eq.f32.partialorder %v7534, 8.507059e+37
      %v7536 = vand.u32 %v7239, 2147483648
      %v7537 = vor.u32 1.1754944e-38, %v7536
      %v7538 = vsel %vm7535, %v7537, %v7533
      %v7539 = vmul.f32 %v7158, %v7538
      %v7540 = vrcp.pop %v7242
      %v7541 = vmul.f32 %v7242, %v7540
      %v7542 = vsub.f32 1.0, %v7541
      %v7543 = vmul.f32 %v7540, %v7542
      %v7544 = vadd.f32 %v7540, %v7543
      %vm7545 = vweird.f32 %v7242
      %vm7546 = vweird.f32 %v7540
      %vm7547 = vmor %vm7545, %vm7546
      %v7548 = vsel %vm7547, %v7540, %v7544
      %v7549 = vand.u32 2147483647, %v7242
      %vm7550 = vcmp.eq.f32.partialorder %v7549, 8.507059e+37
      %v7551 = vand.u32 %v7242, 2147483648
      %v7552 = vor.u32 1.1754944e-38, %v7551
      %v7553 = vsel %vm7550, %v7552, %v7548
      %v7554 = vmul.f32 %v7160, %v7553
      %v7555 = vrcp.pop %v7245
      %v7556 = vmul.f32 %v7245, %v7555
      %v7557 = vsub.f32 1.0, %v7556
      %v7558 = vmul.f32 %v7555, %v7557
      %v7559 = vadd.f32 %v7555, %v7558
      %vm7560 = vweird.f32 %v7245
      %vm7561 = vweird.f32 %v7555
      %vm7562 = vmor %vm7560, %vm7561
      %v7563 = vsel %vm7562, %v7555, %v7559
      %v7564 = vand.u32 2147483647, %v7245
      %vm7565 = vcmp.eq.f32.partialorder %v7564, 8.507059e+37
      %v7566 = vand.u32 %v7245, 2147483648
      %v7567 = vor.u32 1.1754944e-38, %v7566
      %v7568 = vsel %vm7565, %v7567, %v7563
      %v7569 = vmul.f32 %v7162, %v7568
      %v7570 = vrcp.pop %v7248
      %v7571 = vmul.f32 %v7248, %v7570
      %v7572 = vsub.f32 1.0, %v7571
      %v7573 = vmul.f32 %v7570, %v7572
      %v7574 = vadd.f32 %v7570, %v7573
      %vm7575 = vweird.f32 %v7248
      %vm7576 = vweird.f32 %v7570
      %vm7577 = vmor %vm7575, %vm7576
      %v7578 = vsel %vm7577, %v7570, %v7574
      %v7579 = vand.u32 2147483647, %v7248
      %vm7580 = vcmp.eq.f32.partialorder %v7579, 8.507059e+37
      %v7581 = vand.u32 %v7248, 2147483648
      %v7582 = vor.u32 1.1754944e-38, %v7581
      %v7583 = vsel %vm7580, %v7582, %v7578
      %v7584 = vmul.f32 %v7164, %v7583
      %v7585 = vrcp.pop %v7251
      %v7586 = vmul.f32 %v7251, %v7585
      %v7587 = vsub.f32 1.0, %v7586
      %v7588 = vmul.f32 %v7585, %v7587
      %v7589 = vadd.f32 %v7585, %v7588
      %vm7590 = vweird.f32 %v7251
      %vm7591 = vweird.f32 %v7585
      %vm7592 = vmor %vm7590, %vm7591
      %v7593 = vsel %vm7592, %v7585, %v7589
      %v7594 = vand.u32 2147483647, %v7251
      %vm7595 = vcmp.eq.f32.partialorder %v7594, 8.507059e+37
      %v7596 = vand.u32 %v7251, 2147483648
      %v7597 = vor.u32 1.1754944e-38, %v7596
      %v7598 = vsel %vm7595, %v7597, %v7593
      %v7599 = vmul.f32 %v7166, %v7598
      %v7600 = vrcp.pop %v7254
      %v7601 = vmul.f32 %v7254, %v7600
      %v7602 = vsub.f32 1.0, %v7601
      %v7603 = vmul.f32 %v7600, %v7602
      %v7604 = vadd.f32 %v7600, %v7603
      %vm7605 = vweird.f32 %v7254
      %vm7606 = vweird.f32 %v7600
      %vm7607 = vmor %vm7605, %vm7606
      %v7608 = vsel %vm7607, %v7600, %v7604
      %v7609 = vand.u32 2147483647, %v7254
      %vm7610 = vcmp.eq.f32.partialorder %v7609, 8.507059e+37
      %v7611 = vand.u32 %v7254, 2147483648
      %v7612 = vor.u32 1.1754944e-38, %v7611
      %v7613 = vsel %vm7610, %v7612, %v7608
      %v7614 = vmul.f32 %v7168, %v7613
      %v7615 = vrcp.pop %v7257
      %v7616 = vmul.f32 %v7257, %v7615
      %v7617 = vsub.f32 1.0, %v7616
      %v7618 = vmul.f32 %v7615, %v7617
      %v7619 = vadd.f32 %v7615, %v7618
      %vm7620 = vweird.f32 %v7257
      %vm7621 = vweird.f32 %v7615
      %vm7622 = vmor %vm7620, %vm7621
      %v7623 = vsel %vm7622, %v7615, %v7619
      %v7624 = vand.u32 2147483647, %v7257
      %vm7625 = vcmp.eq.f32.partialorder %v7624, 8.507059e+37
      %v7626 = vand.u32 %v7257, 2147483648
      %v7627 = vor.u32 1.1754944e-38, %v7626
      %v7628 = vsel %vm7625, %v7627, %v7623
      %v7629 = vmul.f32 %v7170, %v7628
      %v7630 = vrcp.pop %v7260
      %v7631 = vmul.f32 %v7260, %v7630
      %v7632 = vsub.f32 1.0, %v7631
      %v7633 = vmul.f32 %v7630, %v7632
      %v7634 = vadd.f32 %v7630, %v7633
      %vm7635 = vweird.f32 %v7260
      %vm7636 = vweird.f32 %v7630
      %vm7637 = vmor %vm7635, %vm7636
      %v7638 = vsel %vm7637, %v7630, %v7634
      %v7639 = vand.u32 2147483647, %v7260
      %vm7640 = vcmp.eq.f32.partialorder %v7639, 8.507059e+37
      %v7641 = vand.u32 %v7260, 2147483648
      %v7642 = vor.u32 1.1754944e-38, %v7641
      %v7643 = vsel %vm7640, %v7642, %v7638
      %v7644 = vmul.f32 %v7172, %v7643
      %v7645 = vrcp.pop %v7263
      %v7646 = vmul.f32 %v7263, %v7645
      %v7647 = vsub.f32 1.0, %v7646
      %v7648 = vmul.f32 %v7645, %v7647
      %v7649 = vadd.f32 %v7645, %v7648
      %vm7650 = vweird.f32 %v7263
      %vm7651 = vweird.f32 %v7645
      %vm7652 = vmor %vm7650, %vm7651
      %v7653 = vsel %vm7652, %v7645, %v7649
      %v7654 = vand.u32 2147483647, %v7263
      %vm7655 = vcmp.eq.f32.partialorder %v7654, 8.507059e+37
      %v7656 = vand.u32 %v7263, 2147483648
      %v7657 = vor.u32 1.1754944e-38, %v7656
      %v7658 = vsel %vm7655, %v7657, %v7653
      %v7659 = vmul.f32 %v7174, %v7658
      %v7660 = vrcp.pop %v7266
      %v7661 = vmul.f32 %v7266, %v7660
      %v7662 = vsub.f32 1.0, %v7661
      %v7663 = vmul.f32 %v7660, %v7662
      %v7664 = vadd.f32 %v7660, %v7663
      %vm7665 = vweird.f32 %v7266
      %vm7666 = vweird.f32 %v7660
      %vm7667 = vmor %vm7665, %vm7666
      %v7668 = vsel %vm7667, %v7660, %v7664
      %v7669 = vand.u32 2147483647, %v7266
      %vm7670 = vcmp.eq.f32.partialorder %v7669, 8.507059e+37
      %v7671 = vand.u32 %v7266, 2147483648
      %v7672 = vor.u32 1.1754944e-38, %v7671
      %v7673 = vsel %vm7670, %v7672, %v7668
      %v7674 = vmul.f32 %v7176, %v7673
      %v7675 = vrcp.pop %v7269
      %v7676 = vmul.f32 %v7269, %v7675
      %v7677 = vsub.f32 1.0, %v7676
      %v7678 = vmul.f32 %v7675, %v7677
      %v7679 = vadd.f32 %v7675, %v7678
      %vm7680 = vweird.f32 %v7269
      %vm7681 = vweird.f32 %v7675
      %vm7682 = vmor %vm7680, %vm7681
      %v7683 = vsel %vm7682, %v7675, %v7679
      %v7684 = vand.u32 2147483647, %v7269
      %vm7685 = vcmp.eq.f32.partialorder %v7684, 8.507059e+37
      %v7686 = vand.u32 %v7269, 2147483648
      %v7687 = vor.u32 1.1754944e-38, %v7686
      %v7688 = vsel %vm7685, %v7687, %v7683
      %v7689 = vmul.f32 %v7178, %v7688
      %v7690 = vrcp.pop %v7272
      %v7691 = vmul.f32 %v7272, %v7690
      %v7692 = vsub.f32 1.0, %v7691
      %v7693 = vmul.f32 %v7690, %v7692
      %v7694 = vadd.f32 %v7690, %v7693
      %vm7695 = vweird.f32 %v7272
      %vm7696 = vweird.f32 %v7690
      %vm7697 = vmor %vm7695, %vm7696
      %v7698 = vsel %vm7697, %v7690, %v7694
      %v7699 = vand.u32 2147483647, %v7272
      %vm7700 = vcmp.eq.f32.partialorder %v7699, 8.507059e+37
      %v7701 = vand.u32 %v7272, 2147483648
      %v7702 = vor.u32 1.1754944e-38, %v7701
      %v7703 = vsel %vm7700, %v7702, %v7698
      %v7704 = vmul.f32 %v7180, %v7703
      %v7705 = vrcp.pop %v7275
      %v7706 = vmul.f32 %v7275, %v7705
      %v7707 = vsub.f32 1.0, %v7706
      %v7708 = vmul.f32 %v7705, %v7707
      %v7709 = vadd.f32 %v7705, %v7708
      %vm7710 = vweird.f32 %v7275
      %vm7711 = vweird.f32 %v7705
      %vm7712 = vmor %vm7710, %vm7711
      %v7713 = vsel %vm7712, %v7705, %v7709
      %v7714 = vand.u32 2147483647, %v7275
      %vm7715 = vcmp.eq.f32.partialorder %v7714, 8.507059e+37
      %v7716 = vand.u32 %v7275, 2147483648
      %v7717 = vor.u32 1.1754944e-38, %v7716
      %v7718 = vsel %vm7715, %v7717, %v7713
      %v7719 = vmul.f32 %v7182, %v7718
      %v7720 = vrcp.pop %v7278
      %v7721 = vmul.f32 %v7278, %v7720
      %v7722 = vsub.f32 1.0, %v7721
      %v7723 = vmul.f32 %v7720, %v7722
      %v7724 = vadd.f32 %v7720, %v7723
      %vm7725 = vweird.f32 %v7278
      %vm7726 = vweird.f32 %v7720
      %vm7727 = vmor %vm7725, %vm7726
      %v7728 = vsel %vm7727, %v7720, %v7724
      %v7729 = vand.u32 2147483647, %v7278
      %vm7730 = vcmp.eq.f32.partialorder %v7729, 8.507059e+37
      %v7731 = vand.u32 %v7278, 2147483648
      %v7732 = vor.u32 1.1754944e-38, %v7731
      %v7733 = vsel %vm7730, %v7732, %v7728
      %v7734 = vmul.f32 %v7184, %v7733
      %v7735 = vrcp.pop %v7281
      %v7736 = vmul.f32 %v7281, %v7735
      %v7737 = vsub.f32 1.0, %v7736
      %v7738 = vmul.f32 %v7735, %v7737
      %v7739 = vadd.f32 %v7735, %v7738
      %vm7740 = vweird.f32 %v7281
      %vm7741 = vweird.f32 %v7735
      %vm7742 = vmor %vm7740, %vm7741
      %v7743 = vsel %vm7742, %v7735, %v7739
      %v7744 = vand.u32 2147483647, %v7281
      %vm7745 = vcmp.eq.f32.partialorder %v7744, 8.507059e+37
      %v7746 = vand.u32 %v7281, 2147483648
      %v7747 = vor.u32 1.1754944e-38, %v7746
      %v7748 = vsel %vm7745, %v7747, %v7743
      %v7749 = vmul.f32 %v7186, %v7748
      %v7750 = vrcp.pop %v7284
      %v7751 = vmul.f32 %v7284, %v7750
      %v7752 = vsub.f32 1.0, %v7751
      %v7753 = vmul.f32 %v7750, %v7752
      %v7754 = vadd.f32 %v7750, %v7753
      %vm7755 = vweird.f32 %v7284
      %vm7756 = vweird.f32 %v7750
      %vm7757 = vmor %vm7755, %vm7756
      %v7758 = vsel %vm7757, %v7750, %v7754
      %v7759 = vand.u32 2147483647, %v7284
      %vm7760 = vcmp.eq.f32.partialorder %v7759, 8.507059e+37
      %v7761 = vand.u32 %v7284, 2147483648
      %v7762 = vor.u32 1.1754944e-38, %v7761
      %v7763 = vsel %vm7760, %v7762, %v7758
      %v7764 = vmul.f32 %v7188, %v7763
      %7765 = vst.msk [vmem:[%s359] sm:$0xff] %vm361, %v7299
      %7766 = vst.msk [vmem:[%s359 + $0x8] sm:$0xff] %vm361, %v7314
      %7767 = vst.msk [vmem:[%s359 + $0x10] sm:$0xff] %vm361, %v7329
      %7768 = vst.msk [vmem:[%s359 + $0x18] sm:$0xff] %vm361, %v7344
      %7769 = vst.msk [vmem:[%s359 + $0x20] sm:$0xff] %vm361, %v7359
      %7770 = vst.msk [vmem:[%s359 + $0x28] sm:$0xff] %vm361, %v7374
      %7771 = vst.msk [vmem:[%s359 + $0x30] sm:$0xff] %vm361, %v7389
      %7772 = vst.msk [vmem:[%s359 + $0x38] sm:$0xff] %vm361, %v7404
      %7773 = vst.msk [vmem:[%s359 + $0x40] sm:$0xff] %vm361, %v7419
      %7774 = vst.msk [vmem:[%s359 + $0x48] sm:$0xff] %vm361, %v7434
      %7775 = vst.msk [vmem:[%s359 + $0x50] sm:$0xff] %vm361, %v7449
      %7776 = vst.msk [vmem:[%s359 + $0x58] sm:$0xff] %vm361, %v7464
      %7777 = vst.msk [vmem:[%s359 + $0x60] sm:$0xff] %vm361, %v7479
      %7778 = vst.msk [vmem:[%s359 + $0x68] sm:$0xff] %vm361, %v7494
      %7779 = vst.msk [vmem:[%s359 + $0x70] sm:$0xff] %vm361, %v7509
      %7780 = vst.msk [vmem:[%s359 + $0x78] sm:$0xff] %vm361, %v7524
      %7781 = vst.msk [vmem:[%s359 + $0x80] sm:$0xff] %vm361, %v7539
      %7782 = vst.msk [vmem:[%s359 + $0x88] sm:$0xff] %vm361, %v7554
      %7783 = vst.msk [vmem:[%s359 + $0x90] sm:$0xff] %vm361, %v7569
      %7784 = vst.msk [vmem:[%s359 + $0x98] sm:$0xff] %vm361, %v7584
      %7785 = vst.msk [vmem:[%s359 + $0xa0] sm:$0xff] %vm361, %v7599
      %7786 = vst.msk [vmem:[%s359 + $0xa8] sm:$0xff] %vm361, %v7614
      %7787 = vst.msk [vmem:[%s359 + $0xb0] sm:$0xff] %vm361, %v7629
      %7788 = vst.msk [vmem:[%s359 + $0xb8] sm:$0xff] %vm361, %v7644
      %7789 = vst.msk [vmem:[%s359 + $0xc0] sm:$0xff] %vm361, %v7659
      %7790 = vst.msk [vmem:[%s359 + $0xc8] sm:$0xff] %vm361, %v7674
      %7791 = vst.msk [vmem:[%s359 + $0xd0] sm:$0xff] %vm361, %v7689
      %7792 = vst.msk [vmem:[%s359 + $0xd8] sm:$0xff] %vm361, %v7704
      %7793 = vst.msk [vmem:[%s359 + $0xe0] sm:$0xff] %vm361, %v7719
      %7794 = vst.msk [vmem:[%s359 + $0xe8] sm:$0xff] %vm361, %v7734
      %7795 = vst.msk [vmem:[%s359 + $0xf0] sm:$0xff] %vm361, %v7749
      %7796 = vst.msk [vmem:[%s359 + $0xf8] sm:$0xff] %vm361, %v7764
      %p7797 = scmp.lt.s32.totalorder %s21, 1
      %s7798 = scalar_select %p7797, %s21, 1
      %s7799 = smul.addr %s7798, 32
      %s7800 = smul.addr %s7799, 8
      %s7801 = scalar_lea.vmem %s10, %s7800
      // Predicated region
      $region61: #{foveation_forward.1} parent=59 // pred_check
        %p7802 = pneg %p254
      $region62: #{foveation_forward.1} parent=59 // pred_check_branch
        %7804 = sbr.rel (%p7802) target = $region64
      $region63: #{foveation_forward.1} parent=59 // pred_region
        _
      $region64: #{foveation_forward.1} parent=59 // pred_fallthru
        _
    $region60: #{foveation_forward.1} parent=5 // pred_fallthru
      _
    %p7805 = scmp.le.s32.totalorder 2, %s16
    // Predicated region
    $region65: #{foveation_forward.1} parent=5 // pred_check
      %p7806 = pneg %p7805
    $region66: #{foveation_forward.1} parent=5 // pred_check_branch
      %7808 = sbr.rel (%p7806) target = $region68
    $region67: #{foveation_forward.1} parent=5 // pred_region
      %s7809 = ssub.s32 %s16, 2
      // Predicated region
      $region69: #{foveation_forward.1} parent=67 // pred_check
        %p7810 = pneg %p260
      $region70: #{foveation_forward.1} parent=67 // pred_check_branch
        %7812 = sbr.rel (%p7810) target = $region72
      $region71: #{foveation_forward.1} parent=67 // pred_region
        %p7813 = scmp.lt.s32.totalorder %s22, 1
        %s7814 = scalar_select %p7813, %s22, 1
        %s7815 = smul.addr %s7814, 32
        %s7816 = smul.addr %s7815, 8
        %s7817 = scalar_lea.vmem %s10, %s7816
      $region72: #{foveation_forward.1} parent=67 // pred_fallthru
        _
    $region68: #{foveation_forward.1} parent=5 // pred_fallthru
      _
  $region6: #{foveation_forward.1} parent=0 // loop_footer
    %s20 = sadd.s32 1, %s16
  $region7: #{foveation_forward.1} parent=0 // loop_footer_branch
    %15 = sbr.rel target = $region3
  $region8: #{foveation_forward.1} parent=0 // loop_exit
    _

</llo_original>
